<compile_context>
chip_gen: v5e
topology: v5e:2x2
jax: 0.10.0
libtpu: 0.0.40
codegen_flags: <defaults>
</compile_context>

<pallas_src>
import math

import numpy as np

import jax
import jax.numpy as jnp
from jax.experimental import pallas as pl
from jax.experimental.pallas import tpu as pltpu

# --- small, shape-consistent configuration (d_model % nhead == 0) ---
D_MODEL = 32
NHEAD = 4
HEAD_DIM = D_MODEL // NHEAD
DIM_FF = 64
NUM_ENC = 2
NUM_DEC = 2
OUTPUT_DIM = 1
LN_EPS = 1e-5                      # PyTorch layer_norm_eps default
MAX_LEN = 64
ATTN_SCALE = 1.0 / math.sqrt(HEAD_DIM)

MM_DTYPE = jnp.bfloat16            # matmul operand dtype (f32 accumulation)

N_ATT = NUM_ENC + 2 * NUM_DEC      # 6 attention blocks (enc self, dec self+cross)
N_FFN = NUM_ENC + NUM_DEC          # 4 feed-forward blocks
N_LN = 2 * NUM_ENC + 3 * NUM_DEC   # 10 layer norms

VP_WIDTH = max(DIM_FF, D_MODEL, HEAD_DIM)   # 64 lanes for the vector-param buffer


# ---------------- packed vector-parameter buffer layout (host & kernel) ----------------

def _build_vp_layout():
    layout = {}
    n = 0

    def add(name, rows=1):
        nonlocal n
        layout[name] = n
        n += rows

    add("pe", MAX_LEN)                                   # positional encoding table
    for a in range(N_ATT):
        for p in range(3):                               # q / k / v biases, per head
            for h in range(NHEAD):
                add(f"attb_{a}_{p}_{h}")
        add(f"atto_{a}")                                 # output-projection bias
    for i in range(N_LN):
        add(f"lng_{i}")
        add(f"lnb_{i}")
    for f in range(N_FFN):
        add(f"ffb1_{f}")
        add(f"ffb2_{f}")
    return layout, n


VP_LAYOUT, VP_ROWS = _build_vp_layout()


# ---------------------------- in-kernel helpers ----------------------------

def _vrow(vp_ref, name, width):
    r = VP_LAYOUT[name]
    return vp_ref[r:r + 1, 0:width]                      # (1, width) f32


def _att_w(watt_ref, a, p, h):
    # p: 0=q, 1=k, 2=v, 3=Wo_h^T; each weight is (D_MODEL, HEAD_DIM) bf16.
    return watt_ref[(a * 4 + p) * NHEAD + h]


def _nn_dot(a, b):
    return jnp.dot(a, b, preferred_element_type=jnp.float32)


def _nt_dot(a, b):
    # A (M, K) x B (N, K) -> (M, N); contracting last dims avoids transposes.
    return jax.lax.dot_general(a, b, (((1,), (1,)), ((), ())),
                               preferred_element_type=jnp.float32)


def _softmax_rows(s):
    m = jnp.max(s, axis=-1, keepdims=True)
    p = jnp.exp(s - m)
    return p / jnp.sum(p, axis=-1, keepdims=True)        # exact division (f32)


def _layer_norm(x, idx, vp_ref):
    g = _vrow(vp_ref, f"lng_{idx}", D_MODEL)
    b = _vrow(vp_ref, f"lnb_{idx}", D_MODEL)
    mu = jnp.mean(x, axis=-1, keepdims=True)
    var = jnp.mean((x - mu) ** 2, axis=-1, keepdims=True)
    return (x - mu) * jax.lax.rsqrt(var + LN_EPS) * g + b


def _attention(xq, xkv, a, watt_ref, vp_ref, bias):
    """Multi-head attention with head-blocked weights: no transposes, no
    lane-offset slicing.  xq: (Rq, D) f32, xkv: (Rk, D) f32.  `bias` is an
    additive block-diagonal mask (or None) keeping folded batch rows apart."""
    xq_b = xq.astype(MM_DTYPE)
    xkv_b = xkv.astype(MM_DTYPE)
    out = None
    for h in range(NHEAD):
        qh = _nn_dot(xq_b, _att_w(watt_ref, a, 0, h)) + _vrow(vp_ref, f"attb_{a}_0_{h}", HEAD_DIM)
        kh = _nn_dot(xkv_b, _att_w(watt_ref, a, 1, h)) + _vrow(vp_ref, f"attb_{a}_1_{h}", HEAD_DIM)
        vh = _nn_dot(xkv_b, _att_w(watt_ref, a, 2, h)) + _vrow(vp_ref, f"attb_{a}_2_{h}", HEAD_DIM)
        s = _nt_dot(qh.astype(MM_DTYPE), kh.astype(MM_DTYPE)) * ATTN_SCALE
        if bias is not None:
            s = s + bias
        p = _softmax_rows(s)
        oh = _nn_dot(p.astype(MM_DTYPE), vh.astype(MM_DTYPE))            # (Rq, HEAD_DIM)
        c = _nt_dot(oh.astype(MM_DTYPE), _att_w(watt_ref, a, 3, h))      # (Rq, D) via Wo_h^T
        out = c if out is None else out + c
    return out + _vrow(vp_ref, f"atto_{a}", D_MODEL)


def _ffn(x, f, wffn_ref, vp_ref):
    x_b = x.astype(MM_DTYPE)
    w1 = wffn_ref[2 * f]                                  # (D, DIM_FF)
    w2t = wffn_ref[2 * f + 1]                             # (D, DIM_FF) == W2^T
    h = jnp.maximum(_nn_dot(x_b, w1) + _vrow(vp_ref, f"ffb1_{f}", DIM_FF), 0.0)
    return _nt_dot(h.astype(MM_DTYPE), w2t) + _vrow(vp_ref, f"ffb2_{f}", D_MODEL)


def _block_diag_bias(bb, sq, sk):
    """(bb*sq, bb*sk) additive bias: 0 on per-batch diagonal blocks, -1e30
    elsewhere, so folded batch elements never attend across each other."""
    rows = jax.lax.broadcasted_iota(jnp.int32, (bb * sq, bb * sk), 0)
    cols = jax.lax.broadcasted_iota(jnp.int32, (bb * sq, bb * sk), 1)
    rb = rows >> int(math.log2(sq)) if (sq & (sq - 1)) == 0 else rows // sq
    cb = cols >> int(math.log2(sk)) if (sk & (sk - 1)) == 0 else cols // sk
    return jnp.where(rb == cb, 0.0, -1e30).astype(jnp.float32)


# ---------------------------- fused forward kernel ----------------------------

def _make_kernel(bb, s_src, s_tgt):
    pe0 = VP_LAYOUT["pe"]

    def kernel(src_ref, tgt_ref, watt_ref, wffn_ref, vp_ref, out_ref):
        # positional encoding, tiled over the folded batch
        pe_src = vp_ref[pe0:pe0 + s_src, 0:D_MODEL]
        pe_tgt = vp_ref[pe0:pe0 + s_tgt, 0:D_MODEL]
        if bb > 1:
            pe_src = jnp.concatenate([pe_src] * bb, axis=0)
            pe_tgt = jnp.concatenate([pe_tgt] * bb, axis=0)

        # block-diagonal attention biases, hoisted & shared across layers/heads
        bias_cache = {}

        def bias(sq, sk):
            if bb == 1:
                return None
            if (sq, sk) not in bias_cache:
                bias_cache[(sq, sk)] = _block_diag_bias(bb, sq, sk)
            return bias_cache[(sq, sk)]

        # ---------------- encoder ----------------
        x = src_ref[...] + pe_src                           # (bb*s_src, D) f32
        for l in range(NUM_ENC):
            attn = _attention(x, x, l, watt_ref, vp_ref, bias(s_src, s_src))
            x = _layer_norm(x + attn, 2 * l, vp_ref)
            ff = _ffn(x, l, wffn_ref, vp_ref)
            x = _layer_norm(x + ff, 2 * l + 1, vp_ref)
        memory = x

        # ---------------- decoder ----------------
        y = tgt_ref[...] + pe_tgt                           # (bb*s_tgt, D) f32
        for l in range(NUM_DEC):
            sa_idx = NUM_ENC + 2 * l
            ca_idx = sa_idx + 1
            ln0 = 2 * NUM_ENC + 3 * l
            sa = _attention(y, y, sa_idx, watt_ref, vp_ref, bias(s_tgt, s_tgt))
            y = _layer_norm(y + sa, ln0, vp_ref)
            ca = _attention(y, memory, ca_idx, watt_ref, vp_ref, bias(s_tgt, s_src))
            y = _layer_norm(y + ca, ln0 + 1, vp_ref)
            ff = _ffn(y, NUM_ENC + l, wffn_ref, vp_ref)
            y = _layer_norm(y + ff, ln0 + 2, vp_ref)

        out_ref[...] = y.astype(out_ref.dtype)              # lane-dense (bb*s_tgt, D)

    return kernel


# ---------------------------- host-side wrapper ----------------------------

def _tensorcores_per_chip():
    try:
        kind = jax.devices()[0].device_kind.lower().replace(" ", "")
    except Exception:
        return 1
    return 2 if ("v7" in kind or "tpu7" in kind) else 1


def _const_spec(shape):
    nd = len(shape)
    return pl.BlockSpec(shape, lambda g, _nd=nd: (0,) * _nd)


def transformer_forward(params, src, tgt):
    """src, tgt: (S, B, D_MODEL) (PyTorch batch_first=False layout).
    Returns (S_tgt, B, OUTPUT_DIM)."""
    s_src, b, d = src.shape
    s_tgt = tgt.shape[0]
    assert d == D_MODEL and tgt.shape[1] == b and s_src <= MAX_LEN and s_tgt <= MAX_LEN

    # One grid step per TensorCore: fold the whole batch on single-TC chips
    # (v5e/v6e), split it across the two TCs on v7x.
    n_tc = _tensorcores_per_chip()
    grid_n = n_tc if (n_tc > 1 and b % n_tc == 0) else 1
    bb = b // grid_n

    # Single boundary relayout to batch-major contiguous (B*S, D) slabs.
    src_x = jnp.transpose(src, (1, 0, 2)).reshape(b * s_src, d)
    tgt_x = jnp.transpose(tgt, (1, 0, 2)).reshape(b * s_tgt, d)

    dec = pl.pallas_call(
        _make_kernel(bb, s_src, s_tgt),
        out_shape=jax.ShapeDtypeStruct((b * s_tgt, D_MODEL), jnp.float32),
        grid=(grid_n,),
        in_specs=[
            pl.BlockSpec((bb * s_src, D_MODEL), lambda g: (g, 0)),
            pl.BlockSpec((bb * s_tgt, D_MODEL), lambda g: (g, 0)),
            _const_spec(params["w_att"].shape),
            _const_spec(params["w_ffn"].shape),
            _const_spec(params["vp"].shape),
        ],
        out_specs=pl.BlockSpec((bb * s_tgt, D_MODEL), lambda g: (g, 0)),
        compiler_params=pltpu.CompilerParams(dimension_semantics=("parallel",)),
        # TODO(synk): if d_model/dim_ff/seq grow, move the stacked layer
        # weights onto an "arbitrary" layer grid axis and set vmem_limit_bytes
        # explicitly (v7x only has 64 MiB of VMEM).
    )(src_x, tgt_x, params["w_att"], params["w_ffn"], params["vp"])

    # Tiny 32 -> 1 projection + relayout to (S_tgt, B, 1) outside the kernel
    # (keeps the kernel's output store lane-dense).
    dec = dec.reshape(b, s_tgt, D_MODEL)
    return jnp.einsum("bsd,dk->sbk", dec, params["fc_w"]) + params["fc_b"]


# ---------------------------- parameter init / packing ----------------------------

def _make_pe(max_len, d_model):
    position = np.arange(max_len, dtype=np.float32)[:, None]
    div_term = np.exp(np.arange(0, d_model, 2, dtype=np.float32)
                      * (-math.log(10000.0) / d_model))
    pe = np.zeros((max_len, d_model), np.float32)
    pe[:, 0::2] = np.sin(position * div_term)
    pe[:, 1::2] = np.cos(position * div_term)
    return pe


def init_params(key, scale=0.05):
    keys = jax.random.split(key, N_ATT + N_FFN + 1)

    vp = np.zeros((VP_ROWS, VP_WIDTH), np.float32)
    vp[VP_LAYOUT["pe"]:VP_LAYOUT["pe"] + MAX_LEN, :D_MODEL] = _make_pe(MAX_LEN, D_MODEL)
    for i in range(N_LN):
        vp[VP_LAYOUT[f"lng_{i}"], :D_MODEL] = 1.0          # LN gains; biases stay 0

    # Attention: per-head Q/K/V weights (D, HEAD_DIM) and Wo_h^T (D, HEAD_DIM),
    # stacked flat so the kernel indexes a single leading axis.
    att_w = np.zeros((N_ATT * 4 * NHEAD, D_MODEL, HEAD_DIM), np.float32)
    for a in range(N_ATT):
        ka = jax.random.split(keys[a], 8)
        wq, wk, wv, wo = (np.asarray(jax.random.normal(ka[i], (D_MODEL, D_MODEL),
                                                       jnp.float32)) * scale
                          for i in range(4))
        bq, bk, bv, bo = (np.asarray(jax.random.normal(ka[4 + i], (D_MODEL,),
                                                       jnp.float32)) * scale
                          for i in range(4))
        for h in range(NHEAD):
            lo, hi = h * HEAD_DIM, (h + 1) * HEAD_DIM
            att_w[(a * 4 + 0) * NHEAD + h] = wq[:, lo:hi]
            att_w[(a * 4 + 1) * NHEAD + h] = wk[:, lo:hi]
            att_w[(a * 4 + 2) * NHEAD + h] = wv[:, lo:hi]
            att_w[(a * 4 + 3) * NHEAD + h] = wo[lo:hi, :].T
            vp[VP_LAYOUT[f"attb_{a}_0_{h}"], :HEAD_DIM] = bq[lo:hi]
            vp[VP_LAYOUT[f"attb_{a}_1_{h}"], :HEAD_DIM] = bk[lo:hi]
            vp[VP_LAYOUT[f"attb_{a}_2_{h}"], :HEAD_DIM] = bv[lo:hi]
        vp[VP_LAYOUT[f"atto_{a}"], :D_MODEL] = bo

    # Feed-forward: [2f] = W1 (D, DIM_FF), [2f+1] = W2^T (D, DIM_FF).
    ffn_w = np.zeros((2 * N_FFN, D_MODEL, DIM_FF), np.float32)
    for f in range(N_FFN):
        kf = jax.random.split(keys[N_ATT + f], 4)
        w1 = np.asarray(jax.random.normal(kf[0], (D_MODEL, DIM_FF), jnp.float32)) * scale
        w2 = np.asarray(jax.random.normal(kf[1], (DIM_FF, D_MODEL), jnp.float32)) * scale
        b1 = np.asarray(jax.random.normal(kf[2], (DIM_FF,), jnp.float32)) * scale
        b2 = np.asarray(jax.random.normal(kf[3], (D_MODEL,), jnp.float32)) * scale
        ffn_w[2 * f] = w1
        ffn_w[2 * f + 1] = w2.T
        vp[VP_LAYOUT[f"ffb1_{f}"], :DIM_FF] = b1
        vp[VP_LAYOUT[f"ffb2_{f}"], :D_MODEL] = b2

    kfc = jax.random.split(keys[-1], 2)
    fc_w = jax.random.normal(kfc[0], (D_MODEL, OUTPUT_DIM), jnp.float32) * scale
    fc_b = jax.random.normal(kfc[1], (OUTPUT_DIM,), jnp.float32) * scale

    return dict(w_att=jnp.asarray(att_w, MM_DTYPE),
                w_ffn=jnp.asarray(ffn_w, MM_DTYPE),
                vp=jnp.asarray(vp),
                fc_w=fc_w, fc_b=fc_b)


# ---------------------------- main ----------------------------

if __name__ == "__main__":
    key = jax.random.PRNGKey(0)
    kp, ks, kt = jax.random.split(key, 3)
    params = init_params(kp)

    S_SRC, S_TGT, BATCH = 8, 8, 2
    src = jax.random.normal(ks, (S_SRC, BATCH, D_MODEL), jnp.float32)
    tgt = jax.random.normal(kt, (S_TGT, BATCH, D_MODEL), jnp.float32)

    out = jax.jit(transformer_forward)(params, src, tgt)
    jax.block_until_ready(out)
    assert out.shape == (S_TGT, BATCH, OUTPUT_DIM)
    assert bool(jnp.all(jnp.isfinite(out)))
    print("KERNEL_OK")
</pallas_src>

<mosaic_0001>
module attributes {stable_mosaic.version = 11 : i64} {
  func.func @kernel(%arg0: i32, %arg1: memref<16x32xf32, #tpu.memory_space<vmem>>, %arg2: memref<16x32xf32, #tpu.memory_space<vmem>>, %arg3: memref<96x32x8xbf16, #tpu.memory_space<vmem>>, %arg4: memref<8x32x64xbf16, #tpu.memory_space<vmem>>, %arg5: memref<170x64xf32, #tpu.memory_space<vmem>>, %arg6: memref<16x32xf32, #tpu.memory_space<vmem>>) attributes {dimension_semantics = [#tpu.dimension_semantics<parallel>], iteration_bounds = array<i64: 1>, scalar_prefetch = 0 : i64, scratch_operands = 0 : i64, tpu.core_type = #tpu.core_type<tc>, window_params = [{transform_indices = @transform_0, window_bounds = array<i64: 16, 32>}, {transform_indices = @transform_1, window_bounds = array<i64: 16, 32>}, {pipeline_mode = #tpu.pipeline_mode<synchronous>, transform_indices = @transform_2, window_bounds = array<i64: 96, 32, 8>}, {pipeline_mode = #tpu.pipeline_mode<synchronous>, transform_indices = @transform_3, window_bounds = array<i64: 8, 32, 64>}, {pipeline_mode = #tpu.pipeline_mode<synchronous>, transform_indices = @transform_4, window_bounds = array<i64: 170, 64>}, {transform_indices = @transform_5, window_bounds = array<i64: 16, 32>}]} {
    %c0 = arith.constant 0 : index
    %c0_0 = arith.constant 0 : index
    %0 = vector.load %arg5[%c0, %c0_0] : memref<170x64xf32, #tpu.memory_space<vmem>>, vector<8x32xf32>
    %c0_1 = arith.constant 0 : index
    %c0_2 = arith.constant 0 : index
    %1 = vector.load %arg5[%c0_1, %c0_2] : memref<170x64xf32, #tpu.memory_space<vmem>>, vector<8x32xf32>
    %2 = tpu.concatenate %0, %0 in 0 : vector<8x32xf32>, vector<8x32xf32> -> vector<16x32xf32>
    %3 = tpu.concatenate %1, %1 in 0 : vector<8x32xf32>, vector<8x32xf32> -> vector<16x32xf32>
    %c0_3 = arith.constant 0 : index
    %c0_4 = arith.constant 0 : index
    %4 = vector.load %arg1[%c0_3, %c0_4] : memref<16x32xf32, #tpu.memory_space<vmem>>, vector<16x32xf32>
    %5 = arith.addf %4, %2 : vector<16x32xf32>
    %6 = tpu.iota {dimensions = array<i32: 0>} : vector<16x16xi32>
    %7 = tpu.iota {dimensions = array<i32: 1>} : vector<16x16xi32>
    %c3_i32 = arith.constant 3 : i32
    %8 = vector.broadcast %c3_i32 : i32 to vector<16x16xi32>
    %9 = arith.shrsi %6, %8 : vector<16x16xi32>
    %c3_i32_5 = arith.constant 3 : i32
    %10 = vector.broadcast %c3_i32_5 : i32 to vector<16x16xi32>
    %11 = arith.shrsi %7, %10 : vector<16x16xi32>
    %12 = arith.cmpi eq, %9, %11 : vector<16x16xi32>
    %cst = arith.constant 0.000000e+00 : f32
    %cst_6 = arith.constant -1.000000e+30 : f32
    %13 = vector.broadcast %cst : f32 to vector<16x16xf32>
    %14 = vector.broadcast %cst_6 : f32 to vector<16x16xf32>
    %15 = arith.select %12, %13, %14 : vector<16x16xi1>, vector<16x16xf32>
    %16 = arith.truncf %5 : vector<16x32xf32> to vector<16x32xbf16>
    %17 = arith.truncf %5 : vector<16x32xf32> to vector<16x32xbf16>
    %c0_7 = arith.constant 0 : index
    %c0_8 = arith.constant 0 : index
    %c0_9 = arith.constant 0 : index
    %18 = vector.load %arg3[%c0_7, %c0_8, %c0_9] : memref<96x32x8xbf16, #tpu.memory_space<vmem>>, vector<1x32x8xbf16>
    %19 = vector.shape_cast %18 : vector<1x32x8xbf16> to vector<32x8xbf16>
    %cst_10 = arith.constant dense<0.000000e+00> : vector<16x8xf32>
    %20 = tpu.matmul %16, %19, %cst_10 {dimension_numbers = #tpu.dot_dimension_numbers<[1], [0], [0], [1], [0, 0, 1, 1], [], []>} : vector<16x32xbf16>, vector<32x8xbf16>, vector<16x8xf32> -> vector<16x8xf32>
    %c64 = arith.constant 64 : index
    %c0_11 = arith.constant 0 : index
    %21 = vector.load %arg5[%c64, %c0_11] : memref<170x64xf32, #tpu.memory_space<vmem>>, vector<1x8xf32>
    %22 = vector.broadcast %21 : vector<1x8xf32> to vector<16x8xf32>
    %23 = arith.addf %20, %22 : vector<16x8xf32>
    %c4 = arith.constant 4 : index
    %c0_12 = arith.constant 0 : index
    %c0_13 = arith.constant 0 : index
    %24 = vector.load %arg3[%c4, %c0_12, %c0_13] : memref<96x32x8xbf16, #tpu.memory_space<vmem>>, vector<1x32x8xbf16>
    %25 = vector.shape_cast %24 : vector<1x32x8xbf16> to vector<32x8xbf16>
    %cst_14 = arith.constant dense<0.000000e+00> : vector<16x8xf32>
    %26 = tpu.matmul %17, %25, %cst_14 {dimension_numbers = #tpu.dot_dimension_numbers<[1], [0], [0], [1], [0, 0, 1, 1], [], []>} : vector<16x32xbf16>, vector<32x8xbf16>, vector<16x8xf32> -> vector<16x8xf32>
    %c68 = arith.constant 68 : index
    %c0_15 = arith.constant 0 : index
    %27 = vector.load %arg5[%c68, %c0_15] : memref<170x64xf32, #tpu.memory_space<vmem>>, vector<1x8xf32>
    %28 = vector.broadcast %27 : vector<1x8xf32> to vector<16x8xf32>
    %29 = arith.addf %26, %28 : vector<16x8xf32>
    %c8 = arith.constant 8 : index
    %c0_16 = arith.constant 0 : index
    %c0_17 = arith.constant 0 : index
    %30 = vector.load %arg3[%c8, %c0_16, %c0_17] : memref<96x32x8xbf16, #tpu.memory_space<vmem>>, vector<1x32x8xbf16>
    %31 = vector.shape_cast %30 : vector<1x32x8xbf16> to vector<32x8xbf16>
    %cst_18 = arith.constant dense<0.000000e+00> : vector<16x8xf32>
    %32 = tpu.matmul %17, %31, %cst_18 {dimension_numbers = #tpu.dot_dimension_numbers<[1], [0], [0], [1], [0, 0, 1, 1], [], []>} : vector<16x32xbf16>, vector<32x8xbf16>, vector<16x8xf32> -> vector<16x8xf32>
    %c72 = arith.constant 72 : index
    %c0_19 = arith.constant 0 : index
    %33 = vector.load %arg5[%c72, %c0_19] : memref<170x64xf32, #tpu.memory_space<vmem>>, vector<1x8xf32>
    %34 = vector.broadcast %33 : vector<1x8xf32> to vector<16x8xf32>
    %35 = arith.addf %32, %34 : vector<16x8xf32>
    %36 = arith.truncf %23 : vector<16x8xf32> to vector<16x8xbf16>
    %37 = arith.truncf %29 : vector<16x8xf32> to vector<16x8xbf16>
    %cst_20 = arith.constant dense<0.000000e+00> : vector<16x16xf32>
    %38 = tpu.matmul %36, %37, %cst_20 {dimension_numbers = #tpu.dot_dimension_numbers<[1], [1], [0], [0], [0, 0, 1, 0], [], []>} : vector<16x8xbf16>, vector<16x8xbf16>, vector<16x16xf32> -> vector<16x16xf32>
    %cst_21 = arith.constant 0.353553385 : f32
    %39 = vector.broadcast %cst_21 : f32 to vector<16x16xf32>
    %40 = arith.mulf %38, %39 : vector<16x16xf32>
    %41 = arith.addf %40, %15 : vector<16x16xf32>
    %cst_22 = arith.constant dense<0xFF800000> : vector<16xf32>
    %42 = vector.multi_reduction <maximumf>, %41, %cst_22 [1] : vector<16x16xf32> to vector<16xf32>
    %43 = vector.shape_cast %42 : vector<16xf32> to vector<16x1xf32>
    %44 = vector.broadcast %43 : vector<16x1xf32> to vector<16x16xf32>
    %45 = arith.subf %41, %44 : vector<16x16xf32>
    %46 = math.exp %45 : vector<16x16xf32>
    %cst_23 = arith.constant dense<0.000000e+00> : vector<16xf32>
    %47 = vector.multi_reduction <add>, %46, %cst_23 [1] : vector<16x16xf32> to vector<16xf32>
    %48 = vector.shape_cast %47 : vector<16xf32> to vector<16x1xf32>
    %49 = vector.broadcast %48 : vector<16x1xf32> to vector<16x16xf32>
    %50 = arith.divf %46, %49 : vector<16x16xf32>
    %51 = arith.truncf %50 : vector<16x16xf32> to vector<16x16xbf16>
    %52 = arith.truncf %35 : vector<16x8xf32> to vector<16x8xbf16>
    %cst_24 = arith.constant dense<0.000000e+00> : vector<16x8xf32>
    %53 = tpu.matmul %51, %52, %cst_24 {dimension_numbers = #tpu.dot_dimension_numbers<[1], [0], [0], [1], [0, 0, 1, 1], [], []>} : vector<16x16xbf16>, vector<16x8xbf16>, vector<16x8xf32> -> vector<16x8xf32>
    %54 = arith.truncf %53 : vector<16x8xf32> to vector<16x8xbf16>
    %c12 = arith.constant 12 : index
    %c0_25 = arith.constant 0 : index
    %c0_26 = arith.constant 0 : index
    %55 = vector.load %arg3[%c12, %c0_25, %c0_26] : memref<96x32x8xbf16, #tpu.memory_space<vmem>>, vector<1x32x8xbf16>
    %56 = vector.shape_cast %55 : vector<1x32x8xbf16> to vector<32x8xbf16>
    %cst_27 = arith.constant dense<0.000000e+00> : vector<16x32xf32>
    %57 = tpu.matmul %54, %56, %cst_27 {dimension_numbers = #tpu.dot_dimension_numbers<[1], [1], [0], [0], [0, 0, 1, 0], [], []>} : vector<16x8xbf16>, vector<32x8xbf16>, vector<16x32xf32> -> vector<16x32xf32>
    %c1 = arith.constant 1 : index
    %c0_28 = arith.constant 0 : index
    %c0_29 = arith.constant 0 : index
    %58 = vector.load %arg3[%c1, %c0_28, %c0_29] : memref<96x32x8xbf16, #tpu.memory_space<vmem>>, vector<1x32x8xbf16>
    %59 = vector.shape_cast %58 : vector<1x32x8xbf16> to vector<32x8xbf16>
    %cst_30 = arith.constant dense<0.000000e+00> : vector<16x8xf32>
    %60 = tpu.matmul %16, %59, %cst_30 {dimension_numbers = #tpu.dot_dimension_numbers<[1], [0], [0], [1], [0, 0, 1, 1], [], []>} : vector<16x32xbf16>, vector<32x8xbf16>, vector<16x8xf32> -> vector<16x8xf32>
    %c65 = arith.constant 65 : index
    %c0_31 = arith.constant 0 : index
    %61 = vector.load %arg5[%c65, %c0_31] : memref<170x64xf32, #tpu.memory_space<vmem>>, vector<1x8xf32>
    %62 = vector.broadcast %61 : vector<1x8xf32> to vector<16x8xf32>
    %63 = arith.addf %60, %62 : vector<16x8xf32>
    %c5 = arith.constant 5 : index
    %c0_32 = arith.constant 0 : index
    %c0_33 = arith.constant 0 : index
    %64 = vector.load %arg3[%c5, %c0_32, %c0_33] : memref<96x32x8xbf16, #tpu.memory_space<vmem>>, vector<1x32x8xbf16>
    %65 = vector.shape_cast %64 : vector<1x32x8xbf16> to vector<32x8xbf16>
    %cst_34 = arith.constant dense<0.000000e+00> : vector<16x8xf32>
    %66 = tpu.matmul %17, %65, %cst_34 {dimension_numbers = #tpu.dot_dimension_numbers<[1], [0], [0], [1], [0, 0, 1, 1], [], []>} : vector<16x32xbf16>, vector<32x8xbf16>, vector<16x8xf32> -> vector<16x8xf32>
    %c69 = arith.constant 69 : index
    %c0_35 = arith.constant 0 : index
    %67 = vector.load %arg5[%c69, %c0_35] : memref<170x64xf32, #tpu.memory_space<vmem>>, vector<1x8xf32>
    %68 = vector.broadcast %67 : vector<1x8xf32> to vector<16x8xf32>
    %69 = arith.addf %66, %68 : vector<16x8xf32>
    %c9 = arith.constant 9 : index
    %c0_36 = arith.constant 0 : index
    %c0_37 = arith.constant 0 : index
    %70 = vector.load %arg3[%c9, %c0_36, %c0_37] : memref<96x32x8xbf16, #tpu.memory_space<vmem>>, vector<1x32x8xbf16>
    %71 = vector.shape_cast %70 : vector<1x32x8xbf16> to vector<32x8xbf16>
    %cst_38 = arith.constant dense<0.000000e+00> : vector<16x8xf32>
    %72 = tpu.matmul %17, %71, %cst_38 {dimension_numbers = #tpu.dot_dimension_numbers<[1], [0], [0], [1], [0, 0, 1, 1], [], []>} : vector<16x32xbf16>, vector<32x8xbf16>, vector<16x8xf32> -> vector<16x8xf32>
    %c73 = arith.constant 73 : index
    %c0_39 = arith.constant 0 : index
    %73 = vector.load %arg5[%c73, %c0_39] : memref<170x64xf32, #tpu.memory_space<vmem>>, vector<1x8xf32>
    %74 = vector.broadcast %73 : vector<1x8xf32> to vector<16x8xf32>
    %75 = arith.addf %72, %74 : vector<16x8xf32>
    %76 = arith.truncf %63 : vector<16x8xf32> to vector<16x8xbf16>
    %77 = arith.truncf %69 : vector<16x8xf32> to vector<16x8xbf16>
    %cst_40 = arith.constant dense<0.000000e+00> : vector<16x16xf32>
    %78 = tpu.matmul %76, %77, %cst_40 {dimension_numbers = #tpu.dot_dimension_numbers<[1], [1], [0], [0], [0, 0, 1, 0], [], []>} : vector<16x8xbf16>, vector<16x8xbf16>, vector<16x16xf32> -> vector<16x16xf32>
    %cst_41 = arith.constant 0.353553385 : f32
    %79 = vector.broadcast %cst_41 : f32 to vector<16x16xf32>
    %80 = arith.mulf %78, %79 : vector<16x16xf32>
    %81 = arith.addf %80, %15 : vector<16x16xf32>
    %cst_42 = arith.constant dense<0xFF800000> : vector<16xf32>
    %82 = vector.multi_reduction <maximumf>, %81, %cst_42 [1] : vector<16x16xf32> to vector<16xf32>
    %83 = vector.shape_cast %82 : vector<16xf32> to vector<16x1xf32>
    %84 = vector.broadcast %83 : vector<16x1xf32> to vector<16x16xf32>
    %85 = arith.subf %81, %84 : vector<16x16xf32>
    %86 = math.exp %85 : vector<16x16xf32>
    %cst_43 = arith.constant dense<0.000000e+00> : vector<16xf32>
    %87 = vector.multi_reduction <add>, %86, %cst_43 [1] : vector<16x16xf32> to vector<16xf32>
    %88 = vector.shape_cast %87 : vector<16xf32> to vector<16x1xf32>
    %89 = vector.broadcast %88 : vector<16x1xf32> to vector<16x16xf32>
    %90 = arith.divf %86, %89 : vector<16x16xf32>
    %91 = arith.truncf %90 : vector<16x16xf32> to vector<16x16xbf16>
    %92 = arith.truncf %75 : vector<16x8xf32> to vector<16x8xbf16>
    %cst_44 = arith.constant dense<0.000000e+00> : vector<16x8xf32>
    %93 = tpu.matmul %91, %92, %cst_44 {dimension_numbers = #tpu.dot_dimension_numbers<[1], [0], [0], [1], [0, 0, 1, 1], [], []>} : vector<16x16xbf16>, vector<16x8xbf16>, vector<16x8xf32> -> vector<16x8xf32>
    %94 = arith.truncf %93 : vector<16x8xf32> to vector<16x8xbf16>
    %c13 = arith.constant 13 : index
    %c0_45 = arith.constant 0 : index
    %c0_46 = arith.constant 0 : index
    %95 = vector.load %arg3[%c13, %c0_45, %c0_46] : memref<96x32x8xbf16, #tpu.memory_space<vmem>>, vector<1x32x8xbf16>
    %96 = vector.shape_cast %95 : vector<1x32x8xbf16> to vector<32x8xbf16>
    %cst_47 = arith.constant dense<0.000000e+00> : vector<16x32xf32>
    %97 = tpu.matmul %94, %96, %cst_47 {dimension_numbers = #tpu.dot_dimension_numbers<[1], [1], [0], [0], [0, 0, 1, 0], [], []>} : vector<16x8xbf16>, vector<32x8xbf16>, vector<16x32xf32> -> vector<16x32xf32>
    %98 = arith.addf %57, %97 : vector<16x32xf32>
    %c2 = arith.constant 2 : index
    %c0_48 = arith.constant 0 : index
    %c0_49 = arith.constant 0 : index
    %99 = vector.load %arg3[%c2, %c0_48, %c0_49] : memref<96x32x8xbf16, #tpu.memory_space<vmem>>, vector<1x32x8xbf16>
    %100 = vector.shape_cast %99 : vector<1x32x8xbf16> to vector<32x8xbf16>
    %cst_50 = arith.constant dense<0.000000e+00> : vector<16x8xf32>
    %101 = tpu.matmul %16, %100, %cst_50 {dimension_numbers = #tpu.dot_dimension_numbers<[1], [0], [0], [1], [0, 0, 1, 1], [], []>} : vector<16x32xbf16>, vector<32x8xbf16>, vector<16x8xf32> -> vector<16x8xf32>
    %c66 = arith.constant 66 : index
    %c0_51 = arith.constant 0 : index
    %102 = vector.load %arg5[%c66, %c0_51] : memref<170x64xf32, #tpu.memory_space<vmem>>, vector<1x8xf32>
    %103 = vector.broadcast %102 : vector<1x8xf32> to vector<16x8xf32>
    %104 = arith.addf %101, %103 : vector<16x8xf32>
    %c6 = arith.constant 6 : index
    %c0_52 = arith.constant 0 : index
    %c0_53 = arith.constant 0 : index
    %105 = vector.load %arg3[%c6, %c0_52, %c0_53] : memref<96x32x8xbf16, #tpu.memory_space<vmem>>, vector<1x32x8xbf16>
    %106 = vector.shape_cast %105 : vector<1x32x8xbf16> to vector<32x8xbf16>
    %cst_54 = arith.constant dense<0.000000e+00> : vector<16x8xf32>
    %107 = tpu.matmul %17, %106, %cst_54 {dimension_numbers = #tpu.dot_dimension_numbers<[1], [0], [0], [1], [0, 0, 1, 1], [], []>} : vector<16x32xbf16>, vector<32x8xbf16>, vector<16x8xf32> -> vector<16x8xf32>
    %c70 = arith.constant 70 : index
    %c0_55 = arith.constant 0 : index
    %108 = vector.load %arg5[%c70, %c0_55] : memref<170x64xf32, #tpu.memory_space<vmem>>, vector<1x8xf32>
    %109 = vector.broadcast %108 : vector<1x8xf32> to vector<16x8xf32>
    %110 = arith.addf %107, %109 : vector<16x8xf32>
    %c10 = arith.constant 10 : index
    %c0_56 = arith.constant 0 : index
    %c0_57 = arith.constant 0 : index
    %111 = vector.load %arg3[%c10, %c0_56, %c0_57] : memref<96x32x8xbf16, #tpu.memory_space<vmem>>, vector<1x32x8xbf16>
    %112 = vector.shape_cast %111 : vector<1x32x8xbf16> to vector<32x8xbf16>
    %cst_58 = arith.constant dense<0.000000e+00> : vector<16x8xf32>
    %113 = tpu.matmul %17, %112, %cst_58 {dimension_numbers = #tpu.dot_dimension_numbers<[1], [0], [0], [1], [0, 0, 1, 1], [], []>} : vector<16x32xbf16>, vector<32x8xbf16>, vector<16x8xf32> -> vector<16x8xf32>
    %c74 = arith.constant 74 : index
    %c0_59 = arith.constant 0 : index
    %114 = vector.load %arg5[%c74, %c0_59] : memref<170x64xf32, #tpu.memory_space<vmem>>, vector<1x8xf32>
    %115 = vector.broadcast %114 : vector<1x8xf32> to vector<16x8xf32>
    %116 = arith.addf %113, %115 : vector<16x8xf32>
    %117 = arith.truncf %104 : vector<16x8xf32> to vector<16x8xbf16>
    %118 = arith.truncf %110 : vector<16x8xf32> to vector<16x8xbf16>
    %cst_60 = arith.constant dense<0.000000e+00> : vector<16x16xf32>
    %119 = tpu.matmul %117, %118, %cst_60 {dimension_numbers = #tpu.dot_dimension_numbers<[1], [1], [0], [0], [0, 0, 1, 0], [], []>} : vector<16x8xbf16>, vector<16x8xbf16>, vector<16x16xf32> -> vector<16x16xf32>
    %cst_61 = arith.constant 0.353553385 : f32
    %120 = vector.broadcast %cst_61 : f32 to vector<16x16xf32>
    %121 = arith.mulf %119, %120 : vector<16x16xf32>
    %122 = arith.addf %121, %15 : vector<16x16xf32>
    %cst_62 = arith.constant dense<0xFF800000> : vector<16xf32>
    %123 = vector.multi_reduction <maximumf>, %122, %cst_62 [1] : vector<16x16xf32> to vector<16xf32>
    %124 = vector.shape_cast %123 : vector<16xf32> to vector<16x1xf32>
    %125 = vector.broadcast %124 : vector<16x1xf32> to vector<16x16xf32>
    %126 = arith.subf %122, %125 : vector<16x16xf32>
    %127 = math.exp %126 : vector<16x16xf32>
    %cst_63 = arith.constant dense<0.000000e+00> : vector<16xf32>
    %128 = vector.multi_reduction <add>, %127, %cst_63 [1] : vector<16x16xf32> to vector<16xf32>
    %129 = vector.shape_cast %128 : vector<16xf32> to vector<16x1xf32>
    %130 = vector.broadcast %129 : vector<16x1xf32> to vector<16x16xf32>
    %131 = arith.divf %127, %130 : vector<16x16xf32>
    %132 = arith.truncf %131 : vector<16x16xf32> to vector<16x16xbf16>
    %133 = arith.truncf %116 : vector<16x8xf32> to vector<16x8xbf16>
    %cst_64 = arith.constant dense<0.000000e+00> : vector<16x8xf32>
    %134 = tpu.matmul %132, %133, %cst_64 {dimension_numbers = #tpu.dot_dimension_numbers<[1], [0], [0], [1], [0, 0, 1, 1], [], []>} : vector<16x16xbf16>, vector<16x8xbf16>, vector<16x8xf32> -> vector<16x8xf32>
    %135 = arith.truncf %134 : vector<16x8xf32> to vector<16x8xbf16>
    %c14 = arith.constant 14 : index
    %c0_65 = arith.constant 0 : index
    %c0_66 = arith.constant 0 : index
    %136 = vector.load %arg3[%c14, %c0_65, %c0_66] : memref<96x32x8xbf16, #tpu.memory_space<vmem>>, vector<1x32x8xbf16>
    %137 = vector.shape_cast %136 : vector<1x32x8xbf16> to vector<32x8xbf16>
    %cst_67 = arith.constant dense<0.000000e+00> : vector<16x32xf32>
    %138 = tpu.matmul %135, %137, %cst_67 {dimension_numbers = #tpu.dot_dimension_numbers<[1], [1], [0], [0], [0, 0, 1, 0], [], []>} : vector<16x8xbf16>, vector<32x8xbf16>, vector<16x32xf32> -> vector<16x32xf32>
    %139 = arith.addf %98, %138 : vector<16x32xf32>
    %c3 = arith.constant 3 : index
    %c0_68 = arith.constant 0 : index
    %c0_69 = arith.constant 0 : index
    %140 = vector.load %arg3[%c3, %c0_68, %c0_69] : memref<96x32x8xbf16, #tpu.memory_space<vmem>>, vector<1x32x8xbf16>
    %141 = vector.shape_cast %140 : vector<1x32x8xbf16> to vector<32x8xbf16>
    %cst_70 = arith.constant dense<0.000000e+00> : vector<16x8xf32>
    %142 = tpu.matmul %16, %141, %cst_70 {dimension_numbers = #tpu.dot_dimension_numbers<[1], [0], [0], [1], [0, 0, 1, 1], [], []>} : vector<16x32xbf16>, vector<32x8xbf16>, vector<16x8xf32> -> vector<16x8xf32>
    %c67 = arith.constant 67 : index
    %c0_71 = arith.constant 0 : index
    %143 = vector.load %arg5[%c67, %c0_71] : memref<170x64xf32, #tpu.memory_space<vmem>>, vector<1x8xf32>
    %144 = vector.broadcast %143 : vector<1x8xf32> to vector<16x8xf32>
    %145 = arith.addf %142, %144 : vector<16x8xf32>
    %c7 = arith.constant 7 : index
    %c0_72 = arith.constant 0 : index
    %c0_73 = arith.constant 0 : index
    %146 = vector.load %arg3[%c7, %c0_72, %c0_73] : memref<96x32x8xbf16, #tpu.memory_space<vmem>>, vector<1x32x8xbf16>
    %147 = vector.shape_cast %146 : vector<1x32x8xbf16> to vector<32x8xbf16>
    %cst_74 = arith.constant dense<0.000000e+00> : vector<16x8xf32>
    %148 = tpu.matmul %17, %147, %cst_74 {dimension_numbers = #tpu.dot_dimension_numbers<[1], [0], [0], [1], [0, 0, 1, 1], [], []>} : vector<16x32xbf16>, vector<32x8xbf16>, vector<16x8xf32> -> vector<16x8xf32>
    %c71 = arith.constant 71 : index
    %c0_75 = arith.constant 0 : index
    %149 = vector.load %arg5[%c71, %c0_75] : memref<170x64xf32, #tpu.memory_space<vmem>>, vector<1x8xf32>
    %150 = vector.broadcast %149 : vector<1x8xf32> to vector<16x8xf32>
    %151 = arith.addf %148, %150 : vector<16x8xf32>
    %c11 = arith.constant 11 : index
    %c0_76 = arith.constant 0 : index
    %c0_77 = arith.constant 0 : index
    %152 = vector.load %arg3[%c11, %c0_76, %c0_77] : memref<96x32x8xbf16, #tpu.memory_space<vmem>>, vector<1x32x8xbf16>
    %153 = vector.shape_cast %152 : vector<1x32x8xbf16> to vector<32x8xbf16>
    %cst_78 = arith.constant dense<0.000000e+00> : vector<16x8xf32>
    %154 = tpu.matmul %17, %153, %cst_78 {dimension_numbers = #tpu.dot_dimension_numbers<[1], [0], [0], [1], [0, 0, 1, 1], [], []>} : vector<16x32xbf16>, vector<32x8xbf16>, vector<16x8xf32> -> vector<16x8xf32>
    %c75 = arith.constant 75 : index
    %c0_79 = arith.constant 0 : index
    %155 = vector.load %arg5[%c75, %c0_79] : memref<170x64xf32, #tpu.memory_space<vmem>>, vector<1x8xf32>
    %156 = vector.broadcast %155 : vector<1x8xf32> to vector<16x8xf32>
    %157 = arith.addf %154, %156 : vector<16x8xf32>
    %158 = arith.truncf %145 : vector<16x8xf32> to vector<16x8xbf16>
    %159 = arith.truncf %151 : vector<16x8xf32> to vector<16x8xbf16>
    %cst_80 = arith.constant dense<0.000000e+00> : vector<16x16xf32>
    %160 = tpu.matmul %158, %159, %cst_80 {dimension_numbers = #tpu.dot_dimension_numbers<[1], [1], [0], [0], [0, 0, 1, 0], [], []>} : vector<16x8xbf16>, vector<16x8xbf16>, vector<16x16xf32> -> vector<16x16xf32>
    %cst_81 = arith.constant 0.353553385 : f32
    %161 = vector.broadcast %cst_81 : f32 to vector<16x16xf32>
    %162 = arith.mulf %160, %161 : vector<16x16xf32>
    %163 = arith.addf %162, %15 : vector<16x16xf32>
    %cst_82 = arith.constant dense<0xFF800000> : vector<16xf32>
    %164 = vector.multi_reduction <maximumf>, %163, %cst_82 [1] : vector<16x16xf32> to vector<16xf32>
    %165 = vector.shape_cast %164 : vector<16xf32> to vector<16x1xf32>
    %166 = vector.broadcast %165 : vector<16x1xf32> to vector<16x16xf32>
    %167 = arith.subf %163, %166 : vector<16x16xf32>
    %168 = math.exp %167 : vector<16x16xf32>
    %cst_83 = arith.constant dense<0.000000e+00> : vector<16xf32>
    %169 = vector.multi_reduction <add>, %168, %cst_83 [1] : vector<16x16xf32> to vector<16xf32>
    %170 = vector.shape_cast %169 : vector<16xf32> to vector<16x1xf32>
    %171 = vector.broadcast %170 : vector<16x1xf32> to vector<16x16xf32>
    %172 = arith.divf %168, %171 : vector<16x16xf32>
    %173 = arith.truncf %172 : vector<16x16xf32> to vector<16x16xbf16>
    %174 = arith.truncf %157 : vector<16x8xf32> to vector<16x8xbf16>
    %cst_84 = arith.constant dense<0.000000e+00> : vector<16x8xf32>
    %175 = tpu.matmul %173, %174, %cst_84 {dimension_numbers = #tpu.dot_dimension_numbers<[1], [0], [0], [1], [0, 0, 1, 1], [], []>} : vector<16x16xbf16>, vector<16x8xbf16>, vector<16x8xf32> -> vector<16x8xf32>
    %176 = arith.truncf %175 : vector<16x8xf32> to vector<16x8xbf16>
    %c15 = arith.constant 15 : index
    %c0_85 = arith.constant 0 : index
    %c0_86 = arith.constant 0 : index
    %177 = vector.load %arg3[%c15, %c0_85, %c0_86] : memref<96x32x8xbf16, #tpu.memory_space<vmem>>, vector<1x32x8xbf16>
    %178 = vector.shape_cast %177 : vector<1x32x8xbf16> to vector<32x8xbf16>
    %cst_87 = arith.constant dense<0.000000e+00> : vector<16x32xf32>
    %179 = tpu.matmul %176, %178, %cst_87 {dimension_numbers = #tpu.dot_dimension_numbers<[1], [1], [0], [0], [0, 0, 1, 0], [], []>} : vector<16x8xbf16>, vector<32x8xbf16>, vector<16x32xf32> -> vector<16x32xf32>
    %180 = arith.addf %139, %179 : vector<16x32xf32>
    %c76 = arith.constant 76 : index
    %c0_88 = arith.constant 0 : index
    %181 = vector.load %arg5[%c76, %c0_88] : memref<170x64xf32, #tpu.memory_space<vmem>>, vector<1x32xf32>
    %182 = vector.broadcast %181 : vector<1x32xf32> to vector<16x32xf32>
    %183 = arith.addf %180, %182 : vector<16x32xf32>
    %184 = arith.addf %5, %183 : vector<16x32xf32>
    %c142 = arith.constant 142 : index
    %c0_89 = arith.constant 0 : index
    %185 = vector.load %arg5[%c142, %c0_89] : memref<170x64xf32, #tpu.memory_space<vmem>>, vector<1x32xf32>
    %c143 = arith.constant 143 : index
    %c0_90 = arith.constant 0 : index
    %186 = vector.load %arg5[%c143, %c0_90] : memref<170x64xf32, #tpu.memory_space<vmem>>, vector<1x32xf32>
    %cst_91 = arith.constant dense<0.000000e+00> : vector<16xf32>
    %187 = vector.multi_reduction <add>, %184, %cst_91 [1] : vector<16x32xf32> to vector<16xf32>
    %188 = vector.shape_cast %187 : vector<16xf32> to vector<16x1xf32>
    %cst_92 = arith.constant 3.200000e+01 : f32
    %189 = vector.broadcast %cst_92 : f32 to vector<16x1xf32>
    %190 = arith.divf %188, %189 : vector<16x1xf32>
    %191 = vector.broadcast %190 : vector<16x1xf32> to vector<16x32xf32>
    %192 = arith.subf %184, %191 : vector<16x32xf32>
    %193 = arith.mulf %192, %192 : vector<16x32xf32>
    %cst_93 = arith.constant dense<0.000000e+00> : vector<16xf32>
    %194 = vector.multi_reduction <add>, %193, %cst_93 [1] : vector<16x32xf32> to vector<16xf32>
    %195 = vector.shape_cast %194 : vector<16xf32> to vector<16x1xf32>
    %cst_94 = arith.constant 3.200000e+01 : f32
    %196 = vector.broadcast %cst_94 : f32 to vector<16x1xf32>
    %197 = arith.divf %195, %196 : vector<16x1xf32>
    %198 = vector.broadcast %190 : vector<16x1xf32> to vector<16x32xf32>
    %199 = arith.subf %184, %198 : vector<16x32xf32>
    %cst_95 = arith.constant 9.99999974E-6 : f32
    %200 = vector.broadcast %cst_95 : f32 to vector<16x1xf32>
    %201 = arith.addf %197, %200 : vector<16x1xf32>
    %202 = math.rsqrt %201 : vector<16x1xf32>
    %203 = vector.broadcast %202 : vector<16x1xf32> to vector<16x32xf32>
    %204 = arith.mulf %199, %203 : vector<16x32xf32>
    %205 = vector.broadcast %185 : vector<1x32xf32> to vector<16x32xf32>
    %206 = arith.mulf %204, %205 : vector<16x32xf32>
    %207 = vector.broadcast %186 : vector<1x32xf32> to vector<16x32xf32>
    %208 = arith.addf %206, %207 : vector<16x32xf32>
    %209 = arith.truncf %208 : vector<16x32xf32> to vector<16x32xbf16>
    %c0_96 = arith.constant 0 : index
    %c0_97 = arith.constant 0 : index
    %c0_98 = arith.constant 0 : index
    %210 = vector.load %arg4[%c0_96, %c0_97, %c0_98] : memref<8x32x64xbf16, #tpu.memory_space<vmem>>, vector<1x32x64xbf16>
    %211 = vector.shape_cast %210 : vector<1x32x64xbf16> to vector<32x64xbf16>
    %c1_99 = arith.constant 1 : index
    %c0_100 = arith.constant 0 : index
    %c0_101 = arith.constant 0 : index
    %212 = vector.load %arg4[%c1_99, %c0_100, %c0_101] : memref<8x32x64xbf16, #tpu.memory_space<vmem>>, vector<1x32x64xbf16>
    %213 = vector.shape_cast %212 : vector<1x32x64xbf16> to vector<32x64xbf16>
    %cst_102 = arith.constant dense<0.000000e+00> : vector<16x64xf32>
    %214 = tpu.matmul %209, %211, %cst_102 {dimension_numbers = #tpu.dot_dimension_numbers<[1], [0], [0], [1], [0, 0, 1, 1], [], []>} : vector<16x32xbf16>, vector<32x64xbf16>, vector<16x64xf32> -> vector<16x64xf32>
    %c162 = arith.constant 162 : index
    %c0_103 = arith.constant 0 : index
    %215 = vector.load %arg5[%c162, %c0_103] : memref<170x64xf32, #tpu.memory_space<vmem>>, vector<1x64xf32>
    %216 = vector.broadcast %215 : vector<1x64xf32> to vector<16x64xf32>
    %217 = arith.addf %214, %216 : vector<16x64xf32>
    %cst_104 = arith.constant 0.000000e+00 : f32
    %218 = vector.broadcast %cst_104 : f32 to vector<16x64xf32>
    %219 = arith.maximumf %217, %218 : vector<16x64xf32>
    %220 = arith.truncf %219 : vector<16x64xf32> to vector<16x64xbf16>
    %cst_105 = arith.constant dense<0.000000e+00> : vector<16x32xf32>
    %221 = tpu.matmul %220, %213, %cst_105 {dimension_numbers = #tpu.dot_dimension_numbers<[1], [1], [0], [0], [0, 0, 1, 0], [], []>} : vector<16x64xbf16>, vector<32x64xbf16>, vector<16x32xf32> -> vector<16x32xf32>
    %c163 = arith.constant 163 : index
    %c0_106 = arith.constant 0 : index
    %222 = vector.load %arg5[%c163, %c0_106] : memref<170x64xf32, #tpu.memory_space<vmem>>, vector<1x32xf32>
    %223 = vector.broadcast %222 : vector<1x32xf32> to vector<16x32xf32>
    %224 = arith.addf %221, %223 : vector<16x32xf32>
    %225 = arith.addf %208, %224 : vector<16x32xf32>
    %c144 = arith.constant 144 : index
    %c0_107 = arith.constant 0 : index
    %226 = vector.load %arg5[%c144, %c0_107] : memref<170x64xf32, #tpu.memory_space<vmem>>, vector<1x32xf32>
    %c145 = arith.constant 145 : index
    %c0_108 = arith.constant 0 : index
    %227 = vector.load %arg5[%c145, %c0_108] : memref<170x64xf32, #tpu.memory_space<vmem>>, vector<1x32xf32>
    %cst_109 = arith.constant dense<0.000000e+00> : vector<16xf32>
    %228 = vector.multi_reduction <add>, %225, %cst_109 [1] : vector<16x32xf32> to vector<16xf32>
    %229 = vector.shape_cast %228 : vector<16xf32> to vector<16x1xf32>
    %cst_110 = arith.constant 3.200000e+01 : f32
    %230 = vector.broadcast %cst_110 : f32 to vector<16x1xf32>
    %231 = arith.divf %229, %230 : vector<16x1xf32>
    %232 = vector.broadcast %231 : vector<16x1xf32> to vector<16x32xf32>
    %233 = arith.subf %225, %232 : vector<16x32xf32>
    %234 = arith.mulf %233, %233 : vector<16x32xf32>
    %cst_111 = arith.constant dense<0.000000e+00> : vector<16xf32>
    %235 = vector.multi_reduction <add>, %234, %cst_111 [1] : vector<16x32xf32> to vector<16xf32>
    %236 = vector.shape_cast %235 : vector<16xf32> to vector<16x1xf32>
    %cst_112 = arith.constant 3.200000e+01 : f32
    %237 = vector.broadcast %cst_112 : f32 to vector<16x1xf32>
    %238 = arith.divf %236, %237 : vector<16x1xf32>
    %239 = vector.broadcast %231 : vector<16x1xf32> to vector<16x32xf32>
    %240 = arith.subf %225, %239 : vector<16x32xf32>
    %cst_113 = arith.constant 9.99999974E-6 : f32
    %241 = vector.broadcast %cst_113 : f32 to vector<16x1xf32>
    %242 = arith.addf %238, %241 : vector<16x1xf32>
    %243 = math.rsqrt %242 : vector<16x1xf32>
    %244 = vector.broadcast %243 : vector<16x1xf32> to vector<16x32xf32>
    %245 = arith.mulf %240, %244 : vector<16x32xf32>
    %246 = vector.broadcast %226 : vector<1x32xf32> to vector<16x32xf32>
    %247 = arith.mulf %245, %246 : vector<16x32xf32>
    %248 = vector.broadcast %227 : vector<1x32xf32> to vector<16x32xf32>
    %249 = arith.addf %247, %248 : vector<16x32xf32>
    %250 = arith.truncf %249 : vector<16x32xf32> to vector<16x32xbf16>
    %251 = arith.truncf %249 : vector<16x32xf32> to vector<16x32xbf16>
    %c16 = arith.constant 16 : index
    %c0_114 = arith.constant 0 : index
    %c0_115 = arith.constant 0 : index
    %252 = vector.load %arg3[%c16, %c0_114, %c0_115] : memref<96x32x8xbf16, #tpu.memory_space<vmem>>, vector<1x32x8xbf16>
    %253 = vector.shape_cast %252 : vector<1x32x8xbf16> to vector<32x8xbf16>
    %cst_116 = arith.constant dense<0.000000e+00> : vector<16x8xf32>
    %254 = tpu.matmul %250, %253, %cst_116 {dimension_numbers = #tpu.dot_dimension_numbers<[1], [0], [0], [1], [0, 0, 1, 1], [], []>} : vector<16x32xbf16>, vector<32x8xbf16>, vector<16x8xf32> -> vector<16x8xf32>
    %c77 = arith.constant 77 : index
    %c0_117 = arith.constant 0 : index
    %255 = vector.load %arg5[%c77, %c0_117] : memref<170x64xf32, #tpu.memory_space<vmem>>, vector<1x8xf32>
    %256 = vector.broadcast %255 : vector<1x8xf32> to vector<16x8xf32>
    %257 = arith.addf %254, %256 : vector<16x8xf32>
    %c20 = arith.constant 20 : index
    %c0_118 = arith.constant 0 : index
    %c0_119 = arith.constant 0 : index
    %258 = vector.load %arg3[%c20, %c0_118, %c0_119] : memref<96x32x8xbf16, #tpu.memory_space<vmem>>, vector<1x32x8xbf16>
    %259 = vector.shape_cast %258 : vector<1x32x8xbf16> to vector<32x8xbf16>
    %cst_120 = arith.constant dense<0.000000e+00> : vector<16x8xf32>
    %260 = tpu.matmul %251, %259, %cst_120 {dimension_numbers = #tpu.dot_dimension_numbers<[1], [0], [0], [1], [0, 0, 1, 1], [], []>} : vector<16x32xbf16>, vector<32x8xbf16>, vector<16x8xf32> -> vector<16x8xf32>
    %c81 = arith.constant 81 : index
    %c0_121 = arith.constant 0 : index
    %261 = vector.load %arg5[%c81, %c0_121] : memref<170x64xf32, #tpu.memory_space<vmem>>, vector<1x8xf32>
    %262 = vector.broadcast %261 : vector<1x8xf32> to vector<16x8xf32>
    %263 = arith.addf %260, %262 : vector<16x8xf32>
    %c24 = arith.constant 24 : index
    %c0_122 = arith.constant 0 : index
    %c0_123 = arith.constant 0 : index
    %264 = vector.load %arg3[%c24, %c0_122, %c0_123] : memref<96x32x8xbf16, #tpu.memory_space<vmem>>, vector<1x32x8xbf16>
    %265 = vector.shape_cast %264 : vector<1x32x8xbf16> to vector<32x8xbf16>
    %cst_124 = arith.constant dense<0.000000e+00> : vector<16x8xf32>
    %266 = tpu.matmul %251, %265, %cst_124 {dimension_numbers = #tpu.dot_dimension_numbers<[1], [0], [0], [1], [0, 0, 1, 1], [], []>} : vector<16x32xbf16>, vector<32x8xbf16>, vector<16x8xf32> -> vector<16x8xf32>
    %c85 = arith.constant 85 : index
    %c0_125 = arith.constant 0 : index
    %267 = vector.load %arg5[%c85, %c0_125] : memref<170x64xf32, #tpu.memory_space<vmem>>, vector<1x8xf32>
    %268 = vector.broadcast %267 : vector<1x8xf32> to vector<16x8xf32>
    %269 = arith.addf %266, %268 : vector<16x8xf32>
    %270 = arith.truncf %257 : vector<16x8xf32> to vector<16x8xbf16>
    %271 = arith.truncf %263 : vector<16x8xf32> to vector<16x8xbf16>
    %cst_126 = arith.constant dense<0.000000e+00> : vector<16x16xf32>
    %272 = tpu.matmul %270, %271, %cst_126 {dimension_numbers = #tpu.dot_dimension_numbers<[1], [1], [0], [0], [0, 0, 1, 0], [], []>} : vector<16x8xbf16>, vector<16x8xbf16>, vector<16x16xf32> -> vector<16x16xf32>
    %cst_127 = arith.constant 0.353553385 : f32
    %273 = vector.broadcast %cst_127 : f32 to vector<16x16xf32>
    %274 = arith.mulf %272, %273 : vector<16x16xf32>
    %275 = arith.addf %274, %15 : vector<16x16xf32>
    %cst_128 = arith.constant dense<0xFF800000> : vector<16xf32>
    %276 = vector.multi_reduction <maximumf>, %275, %cst_128 [1] : vector<16x16xf32> to vector<16xf32>
    %277 = vector.shape_cast %276 : vector<16xf32> to vector<16x1xf32>
    %278 = vector.broadcast %277 : vector<16x1xf32> to vector<16x16xf32>
    %279 = arith.subf %275, %278 : vector<16x16xf32>
    %280 = math.exp %279 : vector<16x16xf32>
    %cst_129 = arith.constant dense<0.000000e+00> : vector<16xf32>
    %281 = vector.multi_reduction <add>, %280, %cst_129 [1] : vector<16x16xf32> to vector<16xf32>
    %282 = vector.shape_cast %281 : vector<16xf32> to vector<16x1xf32>
    %283 = vector.broadcast %282 : vector<16x1xf32> to vector<16x16xf32>
    %284 = arith.divf %280, %283 : vector<16x16xf32>
    %285 = arith.truncf %284 : vector<16x16xf32> to vector<16x16xbf16>
    %286 = arith.truncf %269 : vector<16x8xf32> to vector<16x8xbf16>
    %cst_130 = arith.constant dense<0.000000e+00> : vector<16x8xf32>
    %287 = tpu.matmul %285, %286, %cst_130 {dimension_numbers = #tpu.dot_dimension_numbers<[1], [0], [0], [1], [0, 0, 1, 1], [], []>} : vector<16x16xbf16>, vector<16x8xbf16>, vector<16x8xf32> -> vector<16x8xf32>
    %288 = arith.truncf %287 : vector<16x8xf32> to vector<16x8xbf16>
    %c28 = arith.constant 28 : index
    %c0_131 = arith.constant 0 : index
    %c0_132 = arith.constant 0 : index
    %289 = vector.load %arg3[%c28, %c0_131, %c0_132] : memref<96x32x8xbf16, #tpu.memory_space<vmem>>, vector<1x32x8xbf16>
    %290 = vector.shape_cast %289 : vector<1x32x8xbf16> to vector<32x8xbf16>
    %cst_133 = arith.constant dense<0.000000e+00> : vector<16x32xf32>
    %291 = tpu.matmul %288, %290, %cst_133 {dimension_numbers = #tpu.dot_dimension_numbers<[1], [1], [0], [0], [0, 0, 1, 0], [], []>} : vector<16x8xbf16>, vector<32x8xbf16>, vector<16x32xf32> -> vector<16x32xf32>
    %c17 = arith.constant 17 : index
    %c0_134 = arith.constant 0 : index
    %c0_135 = arith.constant 0 : index
    %292 = vector.load %arg3[%c17, %c0_134, %c0_135] : memref<96x32x8xbf16, #tpu.memory_space<vmem>>, vector<1x32x8xbf16>
    %293 = vector.shape_cast %292 : vector<1x32x8xbf16> to vector<32x8xbf16>
    %cst_136 = arith.constant dense<0.000000e+00> : vector<16x8xf32>
    %294 = tpu.matmul %250, %293, %cst_136 {dimension_numbers = #tpu.dot_dimension_numbers<[1], [0], [0], [1], [0, 0, 1, 1], [], []>} : vector<16x32xbf16>, vector<32x8xbf16>, vector<16x8xf32> -> vector<16x8xf32>
    %c78 = arith.constant 78 : index
    %c0_137 = arith.constant 0 : index
    %295 = vector.load %arg5[%c78, %c0_137] : memref<170x64xf32, #tpu.memory_space<vmem>>, vector<1x8xf32>
    %296 = vector.broadcast %295 : vector<1x8xf32> to vector<16x8xf32>
    %297 = arith.addf %294, %296 : vector<16x8xf32>
    %c21 = arith.constant 21 : index
    %c0_138 = arith.constant 0 : index
    %c0_139 = arith.constant 0 : index
    %298 = vector.load %arg3[%c21, %c0_138, %c0_139] : memref<96x32x8xbf16, #tpu.memory_space<vmem>>, vector<1x32x8xbf16>
    %299 = vector.shape_cast %298 : vector<1x32x8xbf16> to vector<32x8xbf16>
    %cst_140 = arith.constant dense<0.000000e+00> : vector<16x8xf32>
    %300 = tpu.matmul %251, %299, %cst_140 {dimension_numbers = #tpu.dot_dimension_numbers<[1], [0], [0], [1], [0, 0, 1, 1], [], []>} : vector<16x32xbf16>, vector<32x8xbf16>, vector<16x8xf32> -> vector<16x8xf32>
    %c82 = arith.constant 82 : index
    %c0_141 = arith.constant 0 : index
    %301 = vector.load %arg5[%c82, %c0_141] : memref<170x64xf32, #tpu.memory_space<vmem>>, vector<1x8xf32>
    %302 = vector.broadcast %301 : vector<1x8xf32> to vector<16x8xf32>
    %303 = arith.addf %300, %302 : vector<16x8xf32>
    %c25 = arith.constant 25 : index
    %c0_142 = arith.constant 0 : index
    %c0_143 = arith.constant 0 : index
    %304 = vector.load %arg3[%c25, %c0_142, %c0_143] : memref<96x32x8xbf16, #tpu.memory_space<vmem>>, vector<1x32x8xbf16>
    %305 = vector.shape_cast %304 : vector<1x32x8xbf16> to vector<32x8xbf16>
    %cst_144 = arith.constant dense<0.000000e+00> : vector<16x8xf32>
    %306 = tpu.matmul %251, %305, %cst_144 {dimension_numbers = #tpu.dot_dimension_numbers<[1], [0], [0], [1], [0, 0, 1, 1], [], []>} : vector<16x32xbf16>, vector<32x8xbf16>, vector<16x8xf32> -> vector<16x8xf32>
    %c86 = arith.constant 86 : index
    %c0_145 = arith.constant 0 : index
    %307 = vector.load %arg5[%c86, %c0_145] : memref<170x64xf32, #tpu.memory_space<vmem>>, vector<1x8xf32>
    %308 = vector.broadcast %307 : vector<1x8xf32> to vector<16x8xf32>
    %309 = arith.addf %306, %308 : vector<16x8xf32>
    %310 = arith.truncf %297 : vector<16x8xf32> to vector<16x8xbf16>
    %311 = arith.truncf %303 : vector<16x8xf32> to vector<16x8xbf16>
    %cst_146 = arith.constant dense<0.000000e+00> : vector<16x16xf32>
    %312 = tpu.matmul %310, %311, %cst_146 {dimension_numbers = #tpu.dot_dimension_numbers<[1], [1], [0], [0], [0, 0, 1, 0], [], []>} : vector<16x8xbf16>, vector<16x8xbf16>, vector<16x16xf32> -> vector<16x16xf32>
    %cst_147 = arith.constant 0.353553385 : f32
    %313 = vector.broadcast %cst_147 : f32 to vector<16x16xf32>
    %314 = arith.mulf %312, %313 : vector<16x16xf32>
    %315 = arith.addf %314, %15 : vector<16x16xf32>
    %cst_148 = arith.constant dense<0xFF800000> : vector<16xf32>
    %316 = vector.multi_reduction <maximumf>, %315, %cst_148 [1] : vector<16x16xf32> to vector<16xf32>
    %317 = vector.shape_cast %316 : vector<16xf32> to vector<16x1xf32>
    %318 = vector.broadcast %317 : vector<16x1xf32> to vector<16x16xf32>
    %319 = arith.subf %315, %318 : vector<16x16xf32>
    %320 = math.exp %319 : vector<16x16xf32>
    %cst_149 = arith.constant dense<0.000000e+00> : vector<16xf32>
    %321 = vector.multi_reduction <add>, %320, %cst_149 [1] : vector<16x16xf32> to vector<16xf32>
    %322 = vector.shape_cast %321 : vector<16xf32> to vector<16x1xf32>
    %323 = vector.broadcast %322 : vector<16x1xf32> to vector<16x16xf32>
    %324 = arith.divf %320, %323 : vector<16x16xf32>
    %325 = arith.truncf %324 : vector<16x16xf32> to vector<16x16xbf16>
    %326 = arith.truncf %309 : vector<16x8xf32> to vector<16x8xbf16>
    %cst_150 = arith.constant dense<0.000000e+00> : vector<16x8xf32>
    %327 = tpu.matmul %325, %326, %cst_150 {dimension_numbers = #tpu.dot_dimension_numbers<[1], [0], [0], [1], [0, 0, 1, 1], [], []>} : vector<16x16xbf16>, vector<16x8xbf16>, vector<16x8xf32> -> vector<16x8xf32>
    %328 = arith.truncf %327 : vector<16x8xf32> to vector<16x8xbf16>
    %c29 = arith.constant 29 : index
    %c0_151 = arith.constant 0 : index
    %c0_152 = arith.constant 0 : index
    %329 = vector.load %arg3[%c29, %c0_151, %c0_152] : memref<96x32x8xbf16, #tpu.memory_space<vmem>>, vector<1x32x8xbf16>
    %330 = vector.shape_cast %329 : vector<1x32x8xbf16> to vector<32x8xbf16>
    %cst_153 = arith.constant dense<0.000000e+00> : vector<16x32xf32>
    %331 = tpu.matmul %328, %330, %cst_153 {dimension_numbers = #tpu.dot_dimension_numbers<[1], [1], [0], [0], [0, 0, 1, 0], [], []>} : vector<16x8xbf16>, vector<32x8xbf16>, vector<16x32xf32> -> vector<16x32xf32>
    %332 = arith.addf %291, %331 : vector<16x32xf32>
    %c18 = arith.constant 18 : index
    %c0_154 = arith.constant 0 : index
    %c0_155 = arith.constant 0 : index
    %333 = vector.load %arg3[%c18, %c0_154, %c0_155] : memref<96x32x8xbf16, #tpu.memory_space<vmem>>, vector<1x32x8xbf16>
    %334 = vector.shape_cast %333 : vector<1x32x8xbf16> to vector<32x8xbf16>
    %cst_156 = arith.constant dense<0.000000e+00> : vector<16x8xf32>
    %335 = tpu.matmul %250, %334, %cst_156 {dimension_numbers = #tpu.dot_dimension_numbers<[1], [0], [0], [1], [0, 0, 1, 1], [], []>} : vector<16x32xbf16>, vector<32x8xbf16>, vector<16x8xf32> -> vector<16x8xf32>
    %c79 = arith.constant 79 : index
    %c0_157 = arith.constant 0 : index
    %336 = vector.load %arg5[%c79, %c0_157] : memref<170x64xf32, #tpu.memory_space<vmem>>, vector<1x8xf32>
    %337 = vector.broadcast %336 : vector<1x8xf32> to vector<16x8xf32>
    %338 = arith.addf %335, %337 : vector<16x8xf32>
    %c22 = arith.constant 22 : index
    %c0_158 = arith.constant 0 : index
    %c0_159 = arith.constant 0 : index
    %339 = vector.load %arg3[%c22, %c0_158, %c0_159] : memref<96x32x8xbf16, #tpu.memory_space<vmem>>, vector<1x32x8xbf16>
    %340 = vector.shape_cast %339 : vector<1x32x8xbf16> to vector<32x8xbf16>
    %cst_160 = arith.constant dense<0.000000e+00> : vector<16x8xf32>
    %341 = tpu.matmul %251, %340, %cst_160 {dimension_numbers = #tpu.dot_dimension_numbers<[1], [0], [0], [1], [0, 0, 1, 1], [], []>} : vector<16x32xbf16>, vector<32x8xbf16>, vector<16x8xf32> -> vector<16x8xf32>
    %c83 = arith.constant 83 : index
    %c0_161 = arith.constant 0 : index
    %342 = vector.load %arg5[%c83, %c0_161] : memref<170x64xf32, #tpu.memory_space<vmem>>, vector<1x8xf32>
    %343 = vector.broadcast %342 : vector<1x8xf32> to vector<16x8xf32>
    %344 = arith.addf %341, %343 : vector<16x8xf32>
    %c26 = arith.constant 26 : index
    %c0_162 = arith.constant 0 : index
    %c0_163 = arith.constant 0 : index
    %345 = vector.load %arg3[%c26, %c0_162, %c0_163] : memref<96x32x8xbf16, #tpu.memory_space<vmem>>, vector<1x32x8xbf16>
    %346 = vector.shape_cast %345 : vector<1x32x8xbf16> to vector<32x8xbf16>
    %cst_164 = arith.constant dense<0.000000e+00> : vector<16x8xf32>
    %347 = tpu.matmul %251, %346, %cst_164 {dimension_numbers = #tpu.dot_dimension_numbers<[1], [0], [0], [1], [0, 0, 1, 1], [], []>} : vector<16x32xbf16>, vector<32x8xbf16>, vector<16x8xf32> -> vector<16x8xf32>
    %c87 = arith.constant 87 : index
    %c0_165 = arith.constant 0 : index
    %348 = vector.load %arg5[%c87, %c0_165] : memref<170x64xf32, #tpu.memory_space<vmem>>, vector<1x8xf32>
    %349 = vector.broadcast %348 : vector<1x8xf32> to vector<16x8xf32>
    %350 = arith.addf %347, %349 : vector<16x8xf32>
    %351 = arith.truncf %338 : vector<16x8xf32> to vector<16x8xbf16>
    %352 = arith.truncf %344 : vector<16x8xf32> to vector<16x8xbf16>
    %cst_166 = arith.constant dense<0.000000e+00> : vector<16x16xf32>
    %353 = tpu.matmul %351, %352, %cst_166 {dimension_numbers = #tpu.dot_dimension_numbers<[1], [1], [0], [0], [0, 0, 1, 0], [], []>} : vector<16x8xbf16>, vector<16x8xbf16>, vector<16x16xf32> -> vector<16x16xf32>
    %cst_167 = arith.constant 0.353553385 : f32
    %354 = vector.broadcast %cst_167 : f32 to vector<16x16xf32>
    %355 = arith.mulf %353, %354 : vector<16x16xf32>
    %356 = arith.addf %355, %15 : vector<16x16xf32>
    %cst_168 = arith.constant dense<0xFF800000> : vector<16xf32>
    %357 = vector.multi_reduction <maximumf>, %356, %cst_168 [1] : vector<16x16xf32> to vector<16xf32>
    %358 = vector.shape_cast %357 : vector<16xf32> to vector<16x1xf32>
    %359 = vector.broadcast %358 : vector<16x1xf32> to vector<16x16xf32>
    %360 = arith.subf %356, %359 : vector<16x16xf32>
    %361 = math.exp %360 : vector<16x16xf32>
    %cst_169 = arith.constant dense<0.000000e+00> : vector<16xf32>
    %362 = vector.multi_reduction <add>, %361, %cst_169 [1] : vector<16x16xf32> to vector<16xf32>
    %363 = vector.shape_cast %362 : vector<16xf32> to vector<16x1xf32>
    %364 = vector.broadcast %363 : vector<16x1xf32> to vector<16x16xf32>
    %365 = arith.divf %361, %364 : vector<16x16xf32>
    %366 = arith.truncf %365 : vector<16x16xf32> to vector<16x16xbf16>
    %367 = arith.truncf %350 : vector<16x8xf32> to vector<16x8xbf16>
    %cst_170 = arith.constant dense<0.000000e+00> : vector<16x8xf32>
    %368 = tpu.matmul %366, %367, %cst_170 {dimension_numbers = #tpu.dot_dimension_numbers<[1], [0], [0], [1], [0, 0, 1, 1], [], []>} : vector<16x16xbf16>, vector<16x8xbf16>, vector<16x8xf32> -> vector<16x8xf32>
    %369 = arith.truncf %368 : vector<16x8xf32> to vector<16x8xbf16>
    %c30 = arith.constant 30 : index
    %c0_171 = arith.constant 0 : index
    %c0_172 = arith.constant 0 : index
    %370 = vector.load %arg3[%c30, %c0_171, %c0_172] : memref<96x32x8xbf16, #tpu.memory_space<vmem>>, vector<1x32x8xbf16>
    %371 = vector.shape_cast %370 : vector<1x32x8xbf16> to vector<32x8xbf16>
    %cst_173 = arith.constant dense<0.000000e+00> : vector<16x32xf32>
    %372 = tpu.matmul %369, %371, %cst_173 {dimension_numbers = #tpu.dot_dimension_numbers<[1], [1], [0], [0], [0, 0, 1, 0], [], []>} : vector<16x8xbf16>, vector<32x8xbf16>, vector<16x32xf32> -> vector<16x32xf32>
    %373 = arith.addf %332, %372 : vector<16x32xf32>
    %c19 = arith.constant 19 : index
    %c0_174 = arith.constant 0 : index
    %c0_175 = arith.constant 0 : index
    %374 = vector.load %arg3[%c19, %c0_174, %c0_175] : memref<96x32x8xbf16, #tpu.memory_space<vmem>>, vector<1x32x8xbf16>
    %375 = vector.shape_cast %374 : vector<1x32x8xbf16> to vector<32x8xbf16>
    %cst_176 = arith.constant dense<0.000000e+00> : vector<16x8xf32>
    %376 = tpu.matmul %250, %375, %cst_176 {dimension_numbers = #tpu.dot_dimension_numbers<[1], [0], [0], [1], [0, 0, 1, 1], [], []>} : vector<16x32xbf16>, vector<32x8xbf16>, vector<16x8xf32> -> vector<16x8xf32>
    %c80 = arith.constant 80 : index
    %c0_177 = arith.constant 0 : index
    %377 = vector.load %arg5[%c80, %c0_177] : memref<170x64xf32, #tpu.memory_space<vmem>>, vector<1x8xf32>
    %378 = vector.broadcast %377 : vector<1x8xf32> to vector<16x8xf32>
    %379 = arith.addf %376, %378 : vector<16x8xf32>
    %c23 = arith.constant 23 : index
    %c0_178 = arith.constant 0 : index
    %c0_179 = arith.constant 0 : index
    %380 = vector.load %arg3[%c23, %c0_178, %c0_179] : memref<96x32x8xbf16, #tpu.memory_space<vmem>>, vector<1x32x8xbf16>
    %381 = vector.shape_cast %380 : vector<1x32x8xbf16> to vector<32x8xbf16>
    %cst_180 = arith.constant dense<0.000000e+00> : vector<16x8xf32>
    %382 = tpu.matmul %251, %381, %cst_180 {dimension_numbers = #tpu.dot_dimension_numbers<[1], [0], [0], [1], [0, 0, 1, 1], [], []>} : vector<16x32xbf16>, vector<32x8xbf16>, vector<16x8xf32> -> vector<16x8xf32>
    %c84 = arith.constant 84 : index
    %c0_181 = arith.constant 0 : index
    %383 = vector.load %arg5[%c84, %c0_181] : memref<170x64xf32, #tpu.memory_space<vmem>>, vector<1x8xf32>
    %384 = vector.broadcast %383 : vector<1x8xf32> to vector<16x8xf32>
    %385 = arith.addf %382, %384 : vector<16x8xf32>
    %c27 = arith.constant 27 : index
    %c0_182 = arith.constant 0 : index
    %c0_183 = arith.constant 0 : index
    %386 = vector.load %arg3[%c27, %c0_182, %c0_183] : memref<96x32x8xbf16, #tpu.memory_space<vmem>>, vector<1x32x8xbf16>
    %387 = vector.shape_cast %386 : vector<1x32x8xbf16> to vector<32x8xbf16>
    %cst_184 = arith.constant dense<0.000000e+00> : vector<16x8xf32>
    %388 = tpu.matmul %251, %387, %cst_184 {dimension_numbers = #tpu.dot_dimension_numbers<[1], [0], [0], [1], [0, 0, 1, 1], [], []>} : vector<16x32xbf16>, vector<32x8xbf16>, vector<16x8xf32> -> vector<16x8xf32>
    %c88 = arith.constant 88 : index
    %c0_185 = arith.constant 0 : index
    %389 = vector.load %arg5[%c88, %c0_185] : memref<170x64xf32, #tpu.memory_space<vmem>>, vector<1x8xf32>
    %390 = vector.broadcast %389 : vector<1x8xf32> to vector<16x8xf32>
    %391 = arith.addf %388, %390 : vector<16x8xf32>
    %392 = arith.truncf %379 : vector<16x8xf32> to vector<16x8xbf16>
    %393 = arith.truncf %385 : vector<16x8xf32> to vector<16x8xbf16>
    %cst_186 = arith.constant dense<0.000000e+00> : vector<16x16xf32>
    %394 = tpu.matmul %392, %393, %cst_186 {dimension_numbers = #tpu.dot_dimension_numbers<[1], [1], [0], [0], [0, 0, 1, 0], [], []>} : vector<16x8xbf16>, vector<16x8xbf16>, vector<16x16xf32> -> vector<16x16xf32>
    %cst_187 = arith.constant 0.353553385 : f32
    %395 = vector.broadcast %cst_187 : f32 to vector<16x16xf32>
    %396 = arith.mulf %394, %395 : vector<16x16xf32>
    %397 = arith.addf %396, %15 : vector<16x16xf32>
    %cst_188 = arith.constant dense<0xFF800000> : vector<16xf32>
    %398 = vector.multi_reduction <maximumf>, %397, %cst_188 [1] : vector<16x16xf32> to vector<16xf32>
    %399 = vector.shape_cast %398 : vector<16xf32> to vector<16x1xf32>
    %400 = vector.broadcast %399 : vector<16x1xf32> to vector<16x16xf32>
    %401 = arith.subf %397, %400 : vector<16x16xf32>
    %402 = math.exp %401 : vector<16x16xf32>
    %cst_189 = arith.constant dense<0.000000e+00> : vector<16xf32>
    %403 = vector.multi_reduction <add>, %402, %cst_189 [1] : vector<16x16xf32> to vector<16xf32>
    %404 = vector.shape_cast %403 : vector<16xf32> to vector<16x1xf32>
    %405 = vector.broadcast %404 : vector<16x1xf32> to vector<16x16xf32>
    %406 = arith.divf %402, %405 : vector<16x16xf32>
    %407 = arith.truncf %406 : vector<16x16xf32> to vector<16x16xbf16>
    %408 = arith.truncf %391 : vector<16x8xf32> to vector<16x8xbf16>
    %cst_190 = arith.constant dense<0.000000e+00> : vector<16x8xf32>
    %409 = tpu.matmul %407, %408, %cst_190 {dimension_numbers = #tpu.dot_dimension_numbers<[1], [0], [0], [1], [0, 0, 1, 1], [], []>} : vector<16x16xbf16>, vector<16x8xbf16>, vector<16x8xf32> -> vector<16x8xf32>
    %410 = arith.truncf %409 : vector<16x8xf32> to vector<16x8xbf16>
    %c31 = arith.constant 31 : index
    %c0_191 = arith.constant 0 : index
    %c0_192 = arith.constant 0 : index
    %411 = vector.load %arg3[%c31, %c0_191, %c0_192] : memref<96x32x8xbf16, #tpu.memory_space<vmem>>, vector<1x32x8xbf16>
    %412 = vector.shape_cast %411 : vector<1x32x8xbf16> to vector<32x8xbf16>
    %cst_193 = arith.constant dense<0.000000e+00> : vector<16x32xf32>
    %413 = tpu.matmul %410, %412, %cst_193 {dimension_numbers = #tpu.dot_dimension_numbers<[1], [1], [0], [0], [0, 0, 1, 0], [], []>} : vector<16x8xbf16>, vector<32x8xbf16>, vector<16x32xf32> -> vector<16x32xf32>
    %414 = arith.addf %373, %413 : vector<16x32xf32>
    %c89 = arith.constant 89 : index
    %c0_194 = arith.constant 0 : index
    %415 = vector.load %arg5[%c89, %c0_194] : memref<170x64xf32, #tpu.memory_space<vmem>>, vector<1x32xf32>
    %416 = vector.broadcast %415 : vector<1x32xf32> to vector<16x32xf32>
    %417 = arith.addf %414, %416 : vector<16x32xf32>
    %418 = arith.addf %249, %417 : vector<16x32xf32>
    %c146 = arith.constant 146 : index
    %c0_195 = arith.constant 0 : index
    %419 = vector.load %arg5[%c146, %c0_195] : memref<170x64xf32, #tpu.memory_space<vmem>>, vector<1x32xf32>
    %c147 = arith.constant 147 : index
    %c0_196 = arith.constant 0 : index
    %420 = vector.load %arg5[%c147, %c0_196] : memref<170x64xf32, #tpu.memory_space<vmem>>, vector<1x32xf32>
    %cst_197 = arith.constant dense<0.000000e+00> : vector<16xf32>
    %421 = vector.multi_reduction <add>, %418, %cst_197 [1] : vector<16x32xf32> to vector<16xf32>
    %422 = vector.shape_cast %421 : vector<16xf32> to vector<16x1xf32>
    %cst_198 = arith.constant 3.200000e+01 : f32
    %423 = vector.broadcast %cst_198 : f32 to vector<16x1xf32>
    %424 = arith.divf %422, %423 : vector<16x1xf32>
    %425 = vector.broadcast %424 : vector<16x1xf32> to vector<16x32xf32>
    %426 = arith.subf %418, %425 : vector<16x32xf32>
    %427 = arith.mulf %426, %426 : vector<16x32xf32>
    %cst_199 = arith.constant dense<0.000000e+00> : vector<16xf32>
    %428 = vector.multi_reduction <add>, %427, %cst_199 [1] : vector<16x32xf32> to vector<16xf32>
    %429 = vector.shape_cast %428 : vector<16xf32> to vector<16x1xf32>
    %cst_200 = arith.constant 3.200000e+01 : f32
    %430 = vector.broadcast %cst_200 : f32 to vector<16x1xf32>
    %431 = arith.divf %429, %430 : vector<16x1xf32>
    %432 = vector.broadcast %424 : vector<16x1xf32> to vector<16x32xf32>
    %433 = arith.subf %418, %432 : vector<16x32xf32>
    %cst_201 = arith.constant 9.99999974E-6 : f32
    %434 = vector.broadcast %cst_201 : f32 to vector<16x1xf32>
    %435 = arith.addf %431, %434 : vector<16x1xf32>
    %436 = math.rsqrt %435 : vector<16x1xf32>
    %437 = vector.broadcast %436 : vector<16x1xf32> to vector<16x32xf32>
    %438 = arith.mulf %433, %437 : vector<16x32xf32>
    %439 = vector.broadcast %419 : vector<1x32xf32> to vector<16x32xf32>
    %440 = arith.mulf %438, %439 : vector<16x32xf32>
    %441 = vector.broadcast %420 : vector<1x32xf32> to vector<16x32xf32>
    %442 = arith.addf %440, %441 : vector<16x32xf32>
    %443 = arith.truncf %442 : vector<16x32xf32> to vector<16x32xbf16>
    %c2_202 = arith.constant 2 : index
    %c0_203 = arith.constant 0 : index
    %c0_204 = arith.constant 0 : index
    %444 = vector.load %arg4[%c2_202, %c0_203, %c0_204] : memref<8x32x64xbf16, #tpu.memory_space<vmem>>, vector<1x32x64xbf16>
    %445 = vector.shape_cast %444 : vector<1x32x64xbf16> to vector<32x64xbf16>
    %c3_205 = arith.constant 3 : index
    %c0_206 = arith.constant 0 : index
    %c0_207 = arith.constant 0 : index
    %446 = vector.load %arg4[%c3_205, %c0_206, %c0_207] : memref<8x32x64xbf16, #tpu.memory_space<vmem>>, vector<1x32x64xbf16>
    %447 = vector.shape_cast %446 : vector<1x32x64xbf16> to vector<32x64xbf16>
    %cst_208 = arith.constant dense<0.000000e+00> : vector<16x64xf32>
    %448 = tpu.matmul %443, %445, %cst_208 {dimension_numbers = #tpu.dot_dimension_numbers<[1], [0], [0], [1], [0, 0, 1, 1], [], []>} : vector<16x32xbf16>, vector<32x64xbf16>, vector<16x64xf32> -> vector<16x64xf32>
    %c164 = arith.constant 164 : index
    %c0_209 = arith.constant 0 : index
    %449 = vector.load %arg5[%c164, %c0_209] : memref<170x64xf32, #tpu.memory_space<vmem>>, vector<1x64xf32>
    %450 = vector.broadcast %449 : vector<1x64xf32> to vector<16x64xf32>
    %451 = arith.addf %448, %450 : vector<16x64xf32>
    %cst_210 = arith.constant 0.000000e+00 : f32
    %452 = vector.broadcast %cst_210 : f32 to vector<16x64xf32>
    %453 = arith.maximumf %451, %452 : vector<16x64xf32>
    %454 = arith.truncf %453 : vector<16x64xf32> to vector<16x64xbf16>
    %cst_211 = arith.constant dense<0.000000e+00> : vector<16x32xf32>
    %455 = tpu.matmul %454, %447, %cst_211 {dimension_numbers = #tpu.dot_dimension_numbers<[1], [1], [0], [0], [0, 0, 1, 0], [], []>} : vector<16x64xbf16>, vector<32x64xbf16>, vector<16x32xf32> -> vector<16x32xf32>
    %c165 = arith.constant 165 : index
    %c0_212 = arith.constant 0 : index
    %456 = vector.load %arg5[%c165, %c0_212] : memref<170x64xf32, #tpu.memory_space<vmem>>, vector<1x32xf32>
    %457 = vector.broadcast %456 : vector<1x32xf32> to vector<16x32xf32>
    %458 = arith.addf %455, %457 : vector<16x32xf32>
    %459 = arith.addf %442, %458 : vector<16x32xf32>
    %c148 = arith.constant 148 : index
    %c0_213 = arith.constant 0 : index
    %460 = vector.load %arg5[%c148, %c0_213] : memref<170x64xf32, #tpu.memory_space<vmem>>, vector<1x32xf32>
    %c149 = arith.constant 149 : index
    %c0_214 = arith.constant 0 : index
    %461 = vector.load %arg5[%c149, %c0_214] : memref<170x64xf32, #tpu.memory_space<vmem>>, vector<1x32xf32>
    %cst_215 = arith.constant dense<0.000000e+00> : vector<16xf32>
    %462 = vector.multi_reduction <add>, %459, %cst_215 [1] : vector<16x32xf32> to vector<16xf32>
    %463 = vector.shape_cast %462 : vector<16xf32> to vector<16x1xf32>
    %cst_216 = arith.constant 3.200000e+01 : f32
    %464 = vector.broadcast %cst_216 : f32 to vector<16x1xf32>
    %465 = arith.divf %463, %464 : vector<16x1xf32>
    %466 = vector.broadcast %465 : vector<16x1xf32> to vector<16x32xf32>
    %467 = arith.subf %459, %466 : vector<16x32xf32>
    %468 = arith.mulf %467, %467 : vector<16x32xf32>
    %cst_217 = arith.constant dense<0.000000e+00> : vector<16xf32>
    %469 = vector.multi_reduction <add>, %468, %cst_217 [1] : vector<16x32xf32> to vector<16xf32>
    %470 = vector.shape_cast %469 : vector<16xf32> to vector<16x1xf32>
    %cst_218 = arith.constant 3.200000e+01 : f32
    %471 = vector.broadcast %cst_218 : f32 to vector<16x1xf32>
    %472 = arith.divf %470, %471 : vector<16x1xf32>
    %473 = vector.broadcast %465 : vector<16x1xf32> to vector<16x32xf32>
    %474 = arith.subf %459, %473 : vector<16x32xf32>
    %cst_219 = arith.constant 9.99999974E-6 : f32
    %475 = vector.broadcast %cst_219 : f32 to vector<16x1xf32>
    %476 = arith.addf %472, %475 : vector<16x1xf32>
    %477 = math.rsqrt %476 : vector<16x1xf32>
    %478 = vector.broadcast %477 : vector<16x1xf32> to vector<16x32xf32>
    %479 = arith.mulf %474, %478 : vector<16x32xf32>
    %480 = vector.broadcast %460 : vector<1x32xf32> to vector<16x32xf32>
    %481 = arith.mulf %479, %480 : vector<16x32xf32>
    %482 = vector.broadcast %461 : vector<1x32xf32> to vector<16x32xf32>
    %483 = arith.addf %481, %482 : vector<16x32xf32>
    %c0_220 = arith.constant 0 : index
    %c0_221 = arith.constant 0 : index
    %484 = vector.load %arg2[%c0_220, %c0_221] : memref<16x32xf32, #tpu.memory_space<vmem>>, vector<16x32xf32>
    %485 = arith.addf %484, %3 : vector<16x32xf32>
    %486 = arith.truncf %485 : vector<16x32xf32> to vector<16x32xbf16>
    %487 = arith.truncf %485 : vector<16x32xf32> to vector<16x32xbf16>
    %c32 = arith.constant 32 : index
    %c0_222 = arith.constant 0 : index
    %c0_223 = arith.constant 0 : index
    %488 = vector.load %arg3[%c32, %c0_222, %c0_223] : memref<96x32x8xbf16, #tpu.memory_space<vmem>>, vector<1x32x8xbf16>
    %489 = vector.shape_cast %488 : vector<1x32x8xbf16> to vector<32x8xbf16>
    %cst_224 = arith.constant dense<0.000000e+00> : vector<16x8xf32>
    %490 = tpu.matmul %486, %489, %cst_224 {dimension_numbers = #tpu.dot_dimension_numbers<[1], [0], [0], [1], [0, 0, 1, 1], [], []>} : vector<16x32xbf16>, vector<32x8xbf16>, vector<16x8xf32> -> vector<16x8xf32>
    %c90 = arith.constant 90 : index
    %c0_225 = arith.constant 0 : index
    %491 = vector.load %arg5[%c90, %c0_225] : memref<170x64xf32, #tpu.memory_space<vmem>>, vector<1x8xf32>
    %492 = vector.broadcast %491 : vector<1x8xf32> to vector<16x8xf32>
    %493 = arith.addf %490, %492 : vector<16x8xf32>
    %c36 = arith.constant 36 : index
    %c0_226 = arith.constant 0 : index
    %c0_227 = arith.constant 0 : index
    %494 = vector.load %arg3[%c36, %c0_226, %c0_227] : memref<96x32x8xbf16, #tpu.memory_space<vmem>>, vector<1x32x8xbf16>
    %495 = vector.shape_cast %494 : vector<1x32x8xbf16> to vector<32x8xbf16>
    %cst_228 = arith.constant dense<0.000000e+00> : vector<16x8xf32>
    %496 = tpu.matmul %487, %495, %cst_228 {dimension_numbers = #tpu.dot_dimension_numbers<[1], [0], [0], [1], [0, 0, 1, 1], [], []>} : vector<16x32xbf16>, vector<32x8xbf16>, vector<16x8xf32> -> vector<16x8xf32>
    %c94 = arith.constant 94 : index
    %c0_229 = arith.constant 0 : index
    %497 = vector.load %arg5[%c94, %c0_229] : memref<170x64xf32, #tpu.memory_space<vmem>>, vector<1x8xf32>
    %498 = vector.broadcast %497 : vector<1x8xf32> to vector<16x8xf32>
    %499 = arith.addf %496, %498 : vector<16x8xf32>
    %c40 = arith.constant 40 : index
    %c0_230 = arith.constant 0 : index
    %c0_231 = arith.constant 0 : index
    %500 = vector.load %arg3[%c40, %c0_230, %c0_231] : memref<96x32x8xbf16, #tpu.memory_space<vmem>>, vector<1x32x8xbf16>
    %501 = vector.shape_cast %500 : vector<1x32x8xbf16> to vector<32x8xbf16>
    %cst_232 = arith.constant dense<0.000000e+00> : vector<16x8xf32>
    %502 = tpu.matmul %487, %501, %cst_232 {dimension_numbers = #tpu.dot_dimension_numbers<[1], [0], [0], [1], [0, 0, 1, 1], [], []>} : vector<16x32xbf16>, vector<32x8xbf16>, vector<16x8xf32> -> vector<16x8xf32>
    %c98 = arith.constant 98 : index
    %c0_233 = arith.constant 0 : index
    %503 = vector.load %arg5[%c98, %c0_233] : memref<170x64xf32, #tpu.memory_space<vmem>>, vector<1x8xf32>
    %504 = vector.broadcast %503 : vector<1x8xf32> to vector<16x8xf32>
    %505 = arith.addf %502, %504 : vector<16x8xf32>
    %506 = arith.truncf %493 : vector<16x8xf32> to vector<16x8xbf16>
    %507 = arith.truncf %499 : vector<16x8xf32> to vector<16x8xbf16>
    %cst_234 = arith.constant dense<0.000000e+00> : vector<16x16xf32>
    %508 = tpu.matmul %506, %507, %cst_234 {dimension_numbers = #tpu.dot_dimension_numbers<[1], [1], [0], [0], [0, 0, 1, 0], [], []>} : vector<16x8xbf16>, vector<16x8xbf16>, vector<16x16xf32> -> vector<16x16xf32>
    %cst_235 = arith.constant 0.353553385 : f32
    %509 = vector.broadcast %cst_235 : f32 to vector<16x16xf32>
    %510 = arith.mulf %508, %509 : vector<16x16xf32>
    %511 = arith.addf %510, %15 : vector<16x16xf32>
    %cst_236 = arith.constant dense<0xFF800000> : vector<16xf32>
    %512 = vector.multi_reduction <maximumf>, %511, %cst_236 [1] : vector<16x16xf32> to vector<16xf32>
    %513 = vector.shape_cast %512 : vector<16xf32> to vector<16x1xf32>
    %514 = vector.broadcast %513 : vector<16x1xf32> to vector<16x16xf32>
    %515 = arith.subf %511, %514 : vector<16x16xf32>
    %516 = math.exp %515 : vector<16x16xf32>
    %cst_237 = arith.constant dense<0.000000e+00> : vector<16xf32>
    %517 = vector.multi_reduction <add>, %516, %cst_237 [1] : vector<16x16xf32> to vector<16xf32>
    %518 = vector.shape_cast %517 : vector<16xf32> to vector<16x1xf32>
    %519 = vector.broadcast %518 : vector<16x1xf32> to vector<16x16xf32>
    %520 = arith.divf %516, %519 : vector<16x16xf32>
    %521 = arith.truncf %520 : vector<16x16xf32> to vector<16x16xbf16>
    %522 = arith.truncf %505 : vector<16x8xf32> to vector<16x8xbf16>
    %cst_238 = arith.constant dense<0.000000e+00> : vector<16x8xf32>
    %523 = tpu.matmul %521, %522, %cst_238 {dimension_numbers = #tpu.dot_dimension_numbers<[1], [0], [0], [1], [0, 0, 1, 1], [], []>} : vector<16x16xbf16>, vector<16x8xbf16>, vector<16x8xf32> -> vector<16x8xf32>
    %524 = arith.truncf %523 : vector<16x8xf32> to vector<16x8xbf16>
    %c44 = arith.constant 44 : index
    %c0_239 = arith.constant 0 : index
    %c0_240 = arith.constant 0 : index
    %525 = vector.load %arg3[%c44, %c0_239, %c0_240] : memref<96x32x8xbf16, #tpu.memory_space<vmem>>, vector<1x32x8xbf16>
    %526 = vector.shape_cast %525 : vector<1x32x8xbf16> to vector<32x8xbf16>
    %cst_241 = arith.constant dense<0.000000e+00> : vector<16x32xf32>
    %527 = tpu.matmul %524, %526, %cst_241 {dimension_numbers = #tpu.dot_dimension_numbers<[1], [1], [0], [0], [0, 0, 1, 0], [], []>} : vector<16x8xbf16>, vector<32x8xbf16>, vector<16x32xf32> -> vector<16x32xf32>
    %c33 = arith.constant 33 : index
    %c0_242 = arith.constant 0 : index
    %c0_243 = arith.constant 0 : index
    %528 = vector.load %arg3[%c33, %c0_242, %c0_243] : memref<96x32x8xbf16, #tpu.memory_space<vmem>>, vector<1x32x8xbf16>
    %529 = vector.shape_cast %528 : vector<1x32x8xbf16> to vector<32x8xbf16>
    %cst_244 = arith.constant dense<0.000000e+00> : vector<16x8xf32>
    %530 = tpu.matmul %486, %529, %cst_244 {dimension_numbers = #tpu.dot_dimension_numbers<[1], [0], [0], [1], [0, 0, 1, 1], [], []>} : vector<16x32xbf16>, vector<32x8xbf16>, vector<16x8xf32> -> vector<16x8xf32>
    %c91 = arith.constant 91 : index
    %c0_245 = arith.constant 0 : index
    %531 = vector.load %arg5[%c91, %c0_245] : memref<170x64xf32, #tpu.memory_space<vmem>>, vector<1x8xf32>
    %532 = vector.broadcast %531 : vector<1x8xf32> to vector<16x8xf32>
    %533 = arith.addf %530, %532 : vector<16x8xf32>
    %c37 = arith.constant 37 : index
    %c0_246 = arith.constant 0 : index
    %c0_247 = arith.constant 0 : index
    %534 = vector.load %arg3[%c37, %c0_246, %c0_247] : memref<96x32x8xbf16, #tpu.memory_space<vmem>>, vector<1x32x8xbf16>
    %535 = vector.shape_cast %534 : vector<1x32x8xbf16> to vector<32x8xbf16>
    %cst_248 = arith.constant dense<0.000000e+00> : vector<16x8xf32>
    %536 = tpu.matmul %487, %535, %cst_248 {dimension_numbers = #tpu.dot_dimension_numbers<[1], [0], [0], [1], [0, 0, 1, 1], [], []>} : vector<16x32xbf16>, vector<32x8xbf16>, vector<16x8xf32> -> vector<16x8xf32>
    %c95 = arith.constant 95 : index
    %c0_249 = arith.constant 0 : index
    %537 = vector.load %arg5[%c95, %c0_249] : memref<170x64xf32, #tpu.memory_space<vmem>>, vector<1x8xf32>
    %538 = vector.broadcast %537 : vector<1x8xf32> to vector<16x8xf32>
    %539 = arith.addf %536, %538 : vector<16x8xf32>
    %c41 = arith.constant 41 : index
    %c0_250 = arith.constant 0 : index
    %c0_251 = arith.constant 0 : index
    %540 = vector.load %arg3[%c41, %c0_250, %c0_251] : memref<96x32x8xbf16, #tpu.memory_space<vmem>>, vector<1x32x8xbf16>
    %541 = vector.shape_cast %540 : vector<1x32x8xbf16> to vector<32x8xbf16>
    %cst_252 = arith.constant dense<0.000000e+00> : vector<16x8xf32>
    %542 = tpu.matmul %487, %541, %cst_252 {dimension_numbers = #tpu.dot_dimension_numbers<[1], [0], [0], [1], [0, 0, 1, 1], [], []>} : vector<16x32xbf16>, vector<32x8xbf16>, vector<16x8xf32> -> vector<16x8xf32>
    %c99 = arith.constant 99 : index
    %c0_253 = arith.constant 0 : index
    %543 = vector.load %arg5[%c99, %c0_253] : memref<170x64xf32, #tpu.memory_space<vmem>>, vector<1x8xf32>
    %544 = vector.broadcast %543 : vector<1x8xf32> to vector<16x8xf32>
    %545 = arith.addf %542, %544 : vector<16x8xf32>
    %546 = arith.truncf %533 : vector<16x8xf32> to vector<16x8xbf16>
    %547 = arith.truncf %539 : vector<16x8xf32> to vector<16x8xbf16>
    %cst_254 = arith.constant dense<0.000000e+00> : vector<16x16xf32>
    %548 = tpu.matmul %546, %547, %cst_254 {dimension_numbers = #tpu.dot_dimension_numbers<[1], [1], [0], [0], [0, 0, 1, 0], [], []>} : vector<16x8xbf16>, vector<16x8xbf16>, vector<16x16xf32> -> vector<16x16xf32>
    %cst_255 = arith.constant 0.353553385 : f32
    %549 = vector.broadcast %cst_255 : f32 to vector<16x16xf32>
    %550 = arith.mulf %548, %549 : vector<16x16xf32>
    %551 = arith.addf %550, %15 : vector<16x16xf32>
    %cst_256 = arith.constant dense<0xFF800000> : vector<16xf32>
    %552 = vector.multi_reduction <maximumf>, %551, %cst_256 [1] : vector<16x16xf32> to vector<16xf32>
    %553 = vector.shape_cast %552 : vector<16xf32> to vector<16x1xf32>
    %554 = vector.broadcast %553 : vector<16x1xf32> to vector<16x16xf32>
    %555 = arith.subf %551, %554 : vector<16x16xf32>
    %556 = math.exp %555 : vector<16x16xf32>
    %cst_257 = arith.constant dense<0.000000e+00> : vector<16xf32>
    %557 = vector.multi_reduction <add>, %556, %cst_257 [1] : vector<16x16xf32> to vector<16xf32>
    %558 = vector.shape_cast %557 : vector<16xf32> to vector<16x1xf32>
    %559 = vector.broadcast %558 : vector<16x1xf32> to vector<16x16xf32>
    %560 = arith.divf %556, %559 : vector<16x16xf32>
    %561 = arith.truncf %560 : vector<16x16xf32> to vector<16x16xbf16>
    %562 = arith.truncf %545 : vector<16x8xf32> to vector<16x8xbf16>
    %cst_258 = arith.constant dense<0.000000e+00> : vector<16x8xf32>
    %563 = tpu.matmul %561, %562, %cst_258 {dimension_numbers = #tpu.dot_dimension_numbers<[1], [0], [0], [1], [0, 0, 1, 1], [], []>} : vector<16x16xbf16>, vector<16x8xbf16>, vector<16x8xf32> -> vector<16x8xf32>
    %564 = arith.truncf %563 : vector<16x8xf32> to vector<16x8xbf16>
    %c45 = arith.constant 45 : index
    %c0_259 = arith.constant 0 : index
    %c0_260 = arith.constant 0 : index
    %565 = vector.load %arg3[%c45, %c0_259, %c0_260] : memref<96x32x8xbf16, #tpu.memory_space<vmem>>, vector<1x32x8xbf16>
    %566 = vector.shape_cast %565 : vector<1x32x8xbf16> to vector<32x8xbf16>
    %cst_261 = arith.constant dense<0.000000e+00> : vector<16x32xf32>
    %567 = tpu.matmul %564, %566, %cst_261 {dimension_numbers = #tpu.dot_dimension_numbers<[1], [1], [0], [0], [0, 0, 1, 0], [], []>} : vector<16x8xbf16>, vector<32x8xbf16>, vector<16x32xf32> -> vector<16x32xf32>
    %568 = arith.addf %527, %567 : vector<16x32xf32>
    %c34 = arith.constant 34 : index
    %c0_262 = arith.constant 0 : index
    %c0_263 = arith.constant 0 : index
    %569 = vector.load %arg3[%c34, %c0_262, %c0_263] : memref<96x32x8xbf16, #tpu.memory_space<vmem>>, vector<1x32x8xbf16>
    %570 = vector.shape_cast %569 : vector<1x32x8xbf16> to vector<32x8xbf16>
    %cst_264 = arith.constant dense<0.000000e+00> : vector<16x8xf32>
    %571 = tpu.matmul %486, %570, %cst_264 {dimension_numbers = #tpu.dot_dimension_numbers<[1], [0], [0], [1], [0, 0, 1, 1], [], []>} : vector<16x32xbf16>, vector<32x8xbf16>, vector<16x8xf32> -> vector<16x8xf32>
    %c92 = arith.constant 92 : index
    %c0_265 = arith.constant 0 : index
    %572 = vector.load %arg5[%c92, %c0_265] : memref<170x64xf32, #tpu.memory_space<vmem>>, vector<1x8xf32>
    %573 = vector.broadcast %572 : vector<1x8xf32> to vector<16x8xf32>
    %574 = arith.addf %571, %573 : vector<16x8xf32>
    %c38 = arith.constant 38 : index
    %c0_266 = arith.constant 0 : index
    %c0_267 = arith.constant 0 : index
    %575 = vector.load %arg3[%c38, %c0_266, %c0_267] : memref<96x32x8xbf16, #tpu.memory_space<vmem>>, vector<1x32x8xbf16>
    %576 = vector.shape_cast %575 : vector<1x32x8xbf16> to vector<32x8xbf16>
    %cst_268 = arith.constant dense<0.000000e+00> : vector<16x8xf32>
    %577 = tpu.matmul %487, %576, %cst_268 {dimension_numbers = #tpu.dot_dimension_numbers<[1], [0], [0], [1], [0, 0, 1, 1], [], []>} : vector<16x32xbf16>, vector<32x8xbf16>, vector<16x8xf32> -> vector<16x8xf32>
    %c96 = arith.constant 96 : index
    %c0_269 = arith.constant 0 : index
    %578 = vector.load %arg5[%c96, %c0_269] : memref<170x64xf32, #tpu.memory_space<vmem>>, vector<1x8xf32>
    %579 = vector.broadcast %578 : vector<1x8xf32> to vector<16x8xf32>
    %580 = arith.addf %577, %579 : vector<16x8xf32>
    %c42 = arith.constant 42 : index
    %c0_270 = arith.constant 0 : index
    %c0_271 = arith.constant 0 : index
    %581 = vector.load %arg3[%c42, %c0_270, %c0_271] : memref<96x32x8xbf16, #tpu.memory_space<vmem>>, vector<1x32x8xbf16>
    %582 = vector.shape_cast %581 : vector<1x32x8xbf16> to vector<32x8xbf16>
    %cst_272 = arith.constant dense<0.000000e+00> : vector<16x8xf32>
    %583 = tpu.matmul %487, %582, %cst_272 {dimension_numbers = #tpu.dot_dimension_numbers<[1], [0], [0], [1], [0, 0, 1, 1], [], []>} : vector<16x32xbf16>, vector<32x8xbf16>, vector<16x8xf32> -> vector<16x8xf32>
    %c100 = arith.constant 100 : index
    %c0_273 = arith.constant 0 : index
    %584 = vector.load %arg5[%c100, %c0_273] : memref<170x64xf32, #tpu.memory_space<vmem>>, vector<1x8xf32>
    %585 = vector.broadcast %584 : vector<1x8xf32> to vector<16x8xf32>
    %586 = arith.addf %583, %585 : vector<16x8xf32>
    %587 = arith.truncf %574 : vector<16x8xf32> to vector<16x8xbf16>
    %588 = arith.truncf %580 : vector<16x8xf32> to vector<16x8xbf16>
    %cst_274 = arith.constant dense<0.000000e+00> : vector<16x16xf32>
    %589 = tpu.matmul %587, %588, %cst_274 {dimension_numbers = #tpu.dot_dimension_numbers<[1], [1], [0], [0], [0, 0, 1, 0], [], []>} : vector<16x8xbf16>, vector<16x8xbf16>, vector<16x16xf32> -> vector<16x16xf32>
    %cst_275 = arith.constant 0.353553385 : f32
    %590 = vector.broadcast %cst_275 : f32 to vector<16x16xf32>
    %591 = arith.mulf %589, %590 : vector<16x16xf32>
    %592 = arith.addf %591, %15 : vector<16x16xf32>
    %cst_276 = arith.constant dense<0xFF800000> : vector<16xf32>
    %593 = vector.multi_reduction <maximumf>, %592, %cst_276 [1] : vector<16x16xf32> to vector<16xf32>
    %594 = vector.shape_cast %593 : vector<16xf32> to vector<16x1xf32>
    %595 = vector.broadcast %594 : vector<16x1xf32> to vector<16x16xf32>
    %596 = arith.subf %592, %595 : vector<16x16xf32>
    %597 = math.exp %596 : vector<16x16xf32>
    %cst_277 = arith.constant dense<0.000000e+00> : vector<16xf32>
    %598 = vector.multi_reduction <add>, %597, %cst_277 [1] : vector<16x16xf32> to vector<16xf32>
    %599 = vector.shape_cast %598 : vector<16xf32> to vector<16x1xf32>
    %600 = vector.broadcast %599 : vector<16x1xf32> to vector<16x16xf32>
    %601 = arith.divf %597, %600 : vector<16x16xf32>
    %602 = arith.truncf %601 : vector<16x16xf32> to vector<16x16xbf16>
    %603 = arith.truncf %586 : vector<16x8xf32> to vector<16x8xbf16>
    %cst_278 = arith.constant dense<0.000000e+00> : vector<16x8xf32>
    %604 = tpu.matmul %602, %603, %cst_278 {dimension_numbers = #tpu.dot_dimension_numbers<[1], [0], [0], [1], [0, 0, 1, 1], [], []>} : vector<16x16xbf16>, vector<16x8xbf16>, vector<16x8xf32> -> vector<16x8xf32>
    %605 = arith.truncf %604 : vector<16x8xf32> to vector<16x8xbf16>
    %c46 = arith.constant 46 : index
    %c0_279 = arith.constant 0 : index
    %c0_280 = arith.constant 0 : index
    %606 = vector.load %arg3[%c46, %c0_279, %c0_280] : memref<96x32x8xbf16, #tpu.memory_space<vmem>>, vector<1x32x8xbf16>
    %607 = vector.shape_cast %606 : vector<1x32x8xbf16> to vector<32x8xbf16>
    %cst_281 = arith.constant dense<0.000000e+00> : vector<16x32xf32>
    %608 = tpu.matmul %605, %607, %cst_281 {dimension_numbers = #tpu.dot_dimension_numbers<[1], [1], [0], [0], [0, 0, 1, 0], [], []>} : vector<16x8xbf16>, vector<32x8xbf16>, vector<16x32xf32> -> vector<16x32xf32>
    %609 = arith.addf %568, %608 : vector<16x32xf32>
    %c35 = arith.constant 35 : index
    %c0_282 = arith.constant 0 : index
    %c0_283 = arith.constant 0 : index
    %610 = vector.load %arg3[%c35, %c0_282, %c0_283] : memref<96x32x8xbf16, #tpu.memory_space<vmem>>, vector<1x32x8xbf16>
    %611 = vector.shape_cast %610 : vector<1x32x8xbf16> to vector<32x8xbf16>
    %cst_284 = arith.constant dense<0.000000e+00> : vector<16x8xf32>
    %612 = tpu.matmul %486, %611, %cst_284 {dimension_numbers = #tpu.dot_dimension_numbers<[1], [0], [0], [1], [0, 0, 1, 1], [], []>} : vector<16x32xbf16>, vector<32x8xbf16>, vector<16x8xf32> -> vector<16x8xf32>
    %c93 = arith.constant 93 : index
    %c0_285 = arith.constant 0 : index
    %613 = vector.load %arg5[%c93, %c0_285] : memref<170x64xf32, #tpu.memory_space<vmem>>, vector<1x8xf32>
    %614 = vector.broadcast %613 : vector<1x8xf32> to vector<16x8xf32>
    %615 = arith.addf %612, %614 : vector<16x8xf32>
    %c39 = arith.constant 39 : index
    %c0_286 = arith.constant 0 : index
    %c0_287 = arith.constant 0 : index
    %616 = vector.load %arg3[%c39, %c0_286, %c0_287] : memref<96x32x8xbf16, #tpu.memory_space<vmem>>, vector<1x32x8xbf16>
    %617 = vector.shape_cast %616 : vector<1x32x8xbf16> to vector<32x8xbf16>
    %cst_288 = arith.constant dense<0.000000e+00> : vector<16x8xf32>
    %618 = tpu.matmul %487, %617, %cst_288 {dimension_numbers = #tpu.dot_dimension_numbers<[1], [0], [0], [1], [0, 0, 1, 1], [], []>} : vector<16x32xbf16>, vector<32x8xbf16>, vector<16x8xf32> -> vector<16x8xf32>
    %c97 = arith.constant 97 : index
    %c0_289 = arith.constant 0 : index
    %619 = vector.load %arg5[%c97, %c0_289] : memref<170x64xf32, #tpu.memory_space<vmem>>, vector<1x8xf32>
    %620 = vector.broadcast %619 : vector<1x8xf32> to vector<16x8xf32>
    %621 = arith.addf %618, %620 : vector<16x8xf32>
    %c43 = arith.constant 43 : index
    %c0_290 = arith.constant 0 : index
    %c0_291 = arith.constant 0 : index
    %622 = vector.load %arg3[%c43, %c0_290, %c0_291] : memref<96x32x8xbf16, #tpu.memory_space<vmem>>, vector<1x32x8xbf16>
    %623 = vector.shape_cast %622 : vector<1x32x8xbf16> to vector<32x8xbf16>
    %cst_292 = arith.constant dense<0.000000e+00> : vector<16x8xf32>
    %624 = tpu.matmul %487, %623, %cst_292 {dimension_numbers = #tpu.dot_dimension_numbers<[1], [0], [0], [1], [0, 0, 1, 1], [], []>} : vector<16x32xbf16>, vector<32x8xbf16>, vector<16x8xf32> -> vector<16x8xf32>
    %c101 = arith.constant 101 : index
    %c0_293 = arith.constant 0 : index
    %625 = vector.load %arg5[%c101, %c0_293] : memref<170x64xf32, #tpu.memory_space<vmem>>, vector<1x8xf32>
    %626 = vector.broadcast %625 : vector<1x8xf32> to vector<16x8xf32>
    %627 = arith.addf %624, %626 : vector<16x8xf32>
    %628 = arith.truncf %615 : vector<16x8xf32> to vector<16x8xbf16>
    %629 = arith.truncf %621 : vector<16x8xf32> to vector<16x8xbf16>
    %cst_294 = arith.constant dense<0.000000e+00> : vector<16x16xf32>
    %630 = tpu.matmul %628, %629, %cst_294 {dimension_numbers = #tpu.dot_dimension_numbers<[1], [1], [0], [0], [0, 0, 1, 0], [], []>} : vector<16x8xbf16>, vector<16x8xbf16>, vector<16x16xf32> -> vector<16x16xf32>
    %cst_295 = arith.constant 0.353553385 : f32
    %631 = vector.broadcast %cst_295 : f32 to vector<16x16xf32>
    %632 = arith.mulf %630, %631 : vector<16x16xf32>
    %633 = arith.addf %632, %15 : vector<16x16xf32>
    %cst_296 = arith.constant dense<0xFF800000> : vector<16xf32>
    %634 = vector.multi_reduction <maximumf>, %633, %cst_296 [1] : vector<16x16xf32> to vector<16xf32>
    %635 = vector.shape_cast %634 : vector<16xf32> to vector<16x1xf32>
    %636 = vector.broadcast %635 : vector<16x1xf32> to vector<16x16xf32>
    %637 = arith.subf %633, %636 : vector<16x16xf32>
    %638 = math.exp %637 : vector<16x16xf32>
    %cst_297 = arith.constant dense<0.000000e+00> : vector<16xf32>
    %639 = vector.multi_reduction <add>, %638, %cst_297 [1] : vector<16x16xf32> to vector<16xf32>
    %640 = vector.shape_cast %639 : vector<16xf32> to vector<16x1xf32>
    %641 = vector.broadcast %640 : vector<16x1xf32> to vector<16x16xf32>
    %642 = arith.divf %638, %641 : vector<16x16xf32>
    %643 = arith.truncf %642 : vector<16x16xf32> to vector<16x16xbf16>
    %644 = arith.truncf %627 : vector<16x8xf32> to vector<16x8xbf16>
    %cst_298 = arith.constant dense<0.000000e+00> : vector<16x8xf32>
    %645 = tpu.matmul %643, %644, %cst_298 {dimension_numbers = #tpu.dot_dimension_numbers<[1], [0], [0], [1], [0, 0, 1, 1], [], []>} : vector<16x16xbf16>, vector<16x8xbf16>, vector<16x8xf32> -> vector<16x8xf32>
    %646 = arith.truncf %645 : vector<16x8xf32> to vector<16x8xbf16>
    %c47 = arith.constant 47 : index
    %c0_299 = arith.constant 0 : index
    %c0_300 = arith.constant 0 : index
    %647 = vector.load %arg3[%c47, %c0_299, %c0_300] : memref<96x32x8xbf16, #tpu.memory_space<vmem>>, vector<1x32x8xbf16>
    %648 = vector.shape_cast %647 : vector<1x32x8xbf16> to vector<32x8xbf16>
    %cst_301 = arith.constant dense<0.000000e+00> : vector<16x32xf32>
    %649 = tpu.matmul %646, %648, %cst_301 {dimension_numbers = #tpu.dot_dimension_numbers<[1], [1], [0], [0], [0, 0, 1, 0], [], []>} : vector<16x8xbf16>, vector<32x8xbf16>, vector<16x32xf32> -> vector<16x32xf32>
    %650 = arith.addf %609, %649 : vector<16x32xf32>
    %c102 = arith.constant 102 : index
    %c0_302 = arith.constant 0 : index
    %651 = vector.load %arg5[%c102, %c0_302] : memref<170x64xf32, #tpu.memory_space<vmem>>, vector<1x32xf32>
    %652 = vector.broadcast %651 : vector<1x32xf32> to vector<16x32xf32>
    %653 = arith.addf %650, %652 : vector<16x32xf32>
    %654 = arith.addf %485, %653 : vector<16x32xf32>
    %c150 = arith.constant 150 : index
    %c0_303 = arith.constant 0 : index
    %655 = vector.load %arg5[%c150, %c0_303] : memref<170x64xf32, #tpu.memory_space<vmem>>, vector<1x32xf32>
    %c151 = arith.constant 151 : index
    %c0_304 = arith.constant 0 : index
    %656 = vector.load %arg5[%c151, %c0_304] : memref<170x64xf32, #tpu.memory_space<vmem>>, vector<1x32xf32>
    %cst_305 = arith.constant dense<0.000000e+00> : vector<16xf32>
    %657 = vector.multi_reduction <add>, %654, %cst_305 [1] : vector<16x32xf32> to vector<16xf32>
    %658 = vector.shape_cast %657 : vector<16xf32> to vector<16x1xf32>
    %cst_306 = arith.constant 3.200000e+01 : f32
    %659 = vector.broadcast %cst_306 : f32 to vector<16x1xf32>
    %660 = arith.divf %658, %659 : vector<16x1xf32>
    %661 = vector.broadcast %660 : vector<16x1xf32> to vector<16x32xf32>
    %662 = arith.subf %654, %661 : vector<16x32xf32>
    %663 = arith.mulf %662, %662 : vector<16x32xf32>
    %cst_307 = arith.constant dense<0.000000e+00> : vector<16xf32>
    %664 = vector.multi_reduction <add>, %663, %cst_307 [1] : vector<16x32xf32> to vector<16xf32>
    %665 = vector.shape_cast %664 : vector<16xf32> to vector<16x1xf32>
    %cst_308 = arith.constant 3.200000e+01 : f32
    %666 = vector.broadcast %cst_308 : f32 to vector<16x1xf32>
    %667 = arith.divf %665, %666 : vector<16x1xf32>
    %668 = vector.broadcast %660 : vector<16x1xf32> to vector<16x32xf32>
    %669 = arith.subf %654, %668 : vector<16x32xf32>
    %cst_309 = arith.constant 9.99999974E-6 : f32
    %670 = vector.broadcast %cst_309 : f32 to vector<16x1xf32>
    %671 = arith.addf %667, %670 : vector<16x1xf32>
    %672 = math.rsqrt %671 : vector<16x1xf32>
    %673 = vector.broadcast %672 : vector<16x1xf32> to vector<16x32xf32>
    %674 = arith.mulf %669, %673 : vector<16x32xf32>
    %675 = vector.broadcast %655 : vector<1x32xf32> to vector<16x32xf32>
    %676 = arith.mulf %674, %675 : vector<16x32xf32>
    %677 = vector.broadcast %656 : vector<1x32xf32> to vector<16x32xf32>
    %678 = arith.addf %676, %677 : vector<16x32xf32>
    %679 = arith.truncf %678 : vector<16x32xf32> to vector<16x32xbf16>
    %680 = arith.truncf %483 : vector<16x32xf32> to vector<16x32xbf16>
    %c48 = arith.constant 48 : index
    %c0_310 = arith.constant 0 : index
    %c0_311 = arith.constant 0 : index
    %681 = vector.load %arg3[%c48, %c0_310, %c0_311] : memref<96x32x8xbf16, #tpu.memory_space<vmem>>, vector<1x32x8xbf16>
    %682 = vector.shape_cast %681 : vector<1x32x8xbf16> to vector<32x8xbf16>
    %cst_312 = arith.constant dense<0.000000e+00> : vector<16x8xf32>
    %683 = tpu.matmul %679, %682, %cst_312 {dimension_numbers = #tpu.dot_dimension_numbers<[1], [0], [0], [1], [0, 0, 1, 1], [], []>} : vector<16x32xbf16>, vector<32x8xbf16>, vector<16x8xf32> -> vector<16x8xf32>
    %c103 = arith.constant 103 : index
    %c0_313 = arith.constant 0 : index
    %684 = vector.load %arg5[%c103, %c0_313] : memref<170x64xf32, #tpu.memory_space<vmem>>, vector<1x8xf32>
    %685 = vector.broadcast %684 : vector<1x8xf32> to vector<16x8xf32>
    %686 = arith.addf %683, %685 : vector<16x8xf32>
    %c52 = arith.constant 52 : index
    %c0_314 = arith.constant 0 : index
    %c0_315 = arith.constant 0 : index
    %687 = vector.load %arg3[%c52, %c0_314, %c0_315] : memref<96x32x8xbf16, #tpu.memory_space<vmem>>, vector<1x32x8xbf16>
    %688 = vector.shape_cast %687 : vector<1x32x8xbf16> to vector<32x8xbf16>
    %cst_316 = arith.constant dense<0.000000e+00> : vector<16x8xf32>
    %689 = tpu.matmul %680, %688, %cst_316 {dimension_numbers = #tpu.dot_dimension_numbers<[1], [0], [0], [1], [0, 0, 1, 1], [], []>} : vector<16x32xbf16>, vector<32x8xbf16>, vector<16x8xf32> -> vector<16x8xf32>
    %c107 = arith.constant 107 : index
    %c0_317 = arith.constant 0 : index
    %690 = vector.load %arg5[%c107, %c0_317] : memref<170x64xf32, #tpu.memory_space<vmem>>, vector<1x8xf32>
    %691 = vector.broadcast %690 : vector<1x8xf32> to vector<16x8xf32>
    %692 = arith.addf %689, %691 : vector<16x8xf32>
    %c56 = arith.constant 56 : index
    %c0_318 = arith.constant 0 : index
    %c0_319 = arith.constant 0 : index
    %693 = vector.load %arg3[%c56, %c0_318, %c0_319] : memref<96x32x8xbf16, #tpu.memory_space<vmem>>, vector<1x32x8xbf16>
    %694 = vector.shape_cast %693 : vector<1x32x8xbf16> to vector<32x8xbf16>
    %cst_320 = arith.constant dense<0.000000e+00> : vector<16x8xf32>
    %695 = tpu.matmul %680, %694, %cst_320 {dimension_numbers = #tpu.dot_dimension_numbers<[1], [0], [0], [1], [0, 0, 1, 1], [], []>} : vector<16x32xbf16>, vector<32x8xbf16>, vector<16x8xf32> -> vector<16x8xf32>
    %c111 = arith.constant 111 : index
    %c0_321 = arith.constant 0 : index
    %696 = vector.load %arg5[%c111, %c0_321] : memref<170x64xf32, #tpu.memory_space<vmem>>, vector<1x8xf32>
    %697 = vector.broadcast %696 : vector<1x8xf32> to vector<16x8xf32>
    %698 = arith.addf %695, %697 : vector<16x8xf32>
    %699 = arith.truncf %686 : vector<16x8xf32> to vector<16x8xbf16>
    %700 = arith.truncf %692 : vector<16x8xf32> to vector<16x8xbf16>
    %cst_322 = arith.constant dense<0.000000e+00> : vector<16x16xf32>
    %701 = tpu.matmul %699, %700, %cst_322 {dimension_numbers = #tpu.dot_dimension_numbers<[1], [1], [0], [0], [0, 0, 1, 0], [], []>} : vector<16x8xbf16>, vector<16x8xbf16>, vector<16x16xf32> -> vector<16x16xf32>
    %cst_323 = arith.constant 0.353553385 : f32
    %702 = vector.broadcast %cst_323 : f32 to vector<16x16xf32>
    %703 = arith.mulf %701, %702 : vector<16x16xf32>
    %704 = arith.addf %703, %15 : vector<16x16xf32>
    %cst_324 = arith.constant dense<0xFF800000> : vector<16xf32>
    %705 = vector.multi_reduction <maximumf>, %704, %cst_324 [1] : vector<16x16xf32> to vector<16xf32>
    %706 = vector.shape_cast %705 : vector<16xf32> to vector<16x1xf32>
    %707 = vector.broadcast %706 : vector<16x1xf32> to vector<16x16xf32>
    %708 = arith.subf %704, %707 : vector<16x16xf32>
    %709 = math.exp %708 : vector<16x16xf32>
    %cst_325 = arith.constant dense<0.000000e+00> : vector<16xf32>
    %710 = vector.multi_reduction <add>, %709, %cst_325 [1] : vector<16x16xf32> to vector<16xf32>
    %711 = vector.shape_cast %710 : vector<16xf32> to vector<16x1xf32>
    %712 = vector.broadcast %711 : vector<16x1xf32> to vector<16x16xf32>
    %713 = arith.divf %709, %712 : vector<16x16xf32>
    %714 = arith.truncf %713 : vector<16x16xf32> to vector<16x16xbf16>
    %715 = arith.truncf %698 : vector<16x8xf32> to vector<16x8xbf16>
    %cst_326 = arith.constant dense<0.000000e+00> : vector<16x8xf32>
    %716 = tpu.matmul %714, %715, %cst_326 {dimension_numbers = #tpu.dot_dimension_numbers<[1], [0], [0], [1], [0, 0, 1, 1], [], []>} : vector<16x16xbf16>, vector<16x8xbf16>, vector<16x8xf32> -> vector<16x8xf32>
    %717 = arith.truncf %716 : vector<16x8xf32> to vector<16x8xbf16>
    %c60 = arith.constant 60 : index
    %c0_327 = arith.constant 0 : index
    %c0_328 = arith.constant 0 : index
    %718 = vector.load %arg3[%c60, %c0_327, %c0_328] : memref<96x32x8xbf16, #tpu.memory_space<vmem>>, vector<1x32x8xbf16>
    %719 = vector.shape_cast %718 : vector<1x32x8xbf16> to vector<32x8xbf16>
    %cst_329 = arith.constant dense<0.000000e+00> : vector<16x32xf32>
    %720 = tpu.matmul %717, %719, %cst_329 {dimension_numbers = #tpu.dot_dimension_numbers<[1], [1], [0], [0], [0, 0, 1, 0], [], []>} : vector<16x8xbf16>, vector<32x8xbf16>, vector<16x32xf32> -> vector<16x32xf32>
    %c49 = arith.constant 49 : index
    %c0_330 = arith.constant 0 : index
    %c0_331 = arith.constant 0 : index
    %721 = vector.load %arg3[%c49, %c0_330, %c0_331] : memref<96x32x8xbf16, #tpu.memory_space<vmem>>, vector<1x32x8xbf16>
    %722 = vector.shape_cast %721 : vector<1x32x8xbf16> to vector<32x8xbf16>
    %cst_332 = arith.constant dense<0.000000e+00> : vector<16x8xf32>
    %723 = tpu.matmul %679, %722, %cst_332 {dimension_numbers = #tpu.dot_dimension_numbers<[1], [0], [0], [1], [0, 0, 1, 1], [], []>} : vector<16x32xbf16>, vector<32x8xbf16>, vector<16x8xf32> -> vector<16x8xf32>
    %c104 = arith.constant 104 : index
    %c0_333 = arith.constant 0 : index
    %724 = vector.load %arg5[%c104, %c0_333] : memref<170x64xf32, #tpu.memory_space<vmem>>, vector<1x8xf32>
    %725 = vector.broadcast %724 : vector<1x8xf32> to vector<16x8xf32>
    %726 = arith.addf %723, %725 : vector<16x8xf32>
    %c53 = arith.constant 53 : index
    %c0_334 = arith.constant 0 : index
    %c0_335 = arith.constant 0 : index
    %727 = vector.load %arg3[%c53, %c0_334, %c0_335] : memref<96x32x8xbf16, #tpu.memory_space<vmem>>, vector<1x32x8xbf16>
    %728 = vector.shape_cast %727 : vector<1x32x8xbf16> to vector<32x8xbf16>
    %cst_336 = arith.constant dense<0.000000e+00> : vector<16x8xf32>
    %729 = tpu.matmul %680, %728, %cst_336 {dimension_numbers = #tpu.dot_dimension_numbers<[1], [0], [0], [1], [0, 0, 1, 1], [], []>} : vector<16x32xbf16>, vector<32x8xbf16>, vector<16x8xf32> -> vector<16x8xf32>
    %c108 = arith.constant 108 : index
    %c0_337 = arith.constant 0 : index
    %730 = vector.load %arg5[%c108, %c0_337] : memref<170x64xf32, #tpu.memory_space<vmem>>, vector<1x8xf32>
    %731 = vector.broadcast %730 : vector<1x8xf32> to vector<16x8xf32>
    %732 = arith.addf %729, %731 : vector<16x8xf32>
    %c57 = arith.constant 57 : index
    %c0_338 = arith.constant 0 : index
    %c0_339 = arith.constant 0 : index
    %733 = vector.load %arg3[%c57, %c0_338, %c0_339] : memref<96x32x8xbf16, #tpu.memory_space<vmem>>, vector<1x32x8xbf16>
    %734 = vector.shape_cast %733 : vector<1x32x8xbf16> to vector<32x8xbf16>
    %cst_340 = arith.constant dense<0.000000e+00> : vector<16x8xf32>
    %735 = tpu.matmul %680, %734, %cst_340 {dimension_numbers = #tpu.dot_dimension_numbers<[1], [0], [0], [1], [0, 0, 1, 1], [], []>} : vector<16x32xbf16>, vector<32x8xbf16>, vector<16x8xf32> -> vector<16x8xf32>
    %c112 = arith.constant 112 : index
    %c0_341 = arith.constant 0 : index
    %736 = vector.load %arg5[%c112, %c0_341] : memref<170x64xf32, #tpu.memory_space<vmem>>, vector<1x8xf32>
    %737 = vector.broadcast %736 : vector<1x8xf32> to vector<16x8xf32>
    %738 = arith.addf %735, %737 : vector<16x8xf32>
    %739 = arith.truncf %726 : vector<16x8xf32> to vector<16x8xbf16>
    %740 = arith.truncf %732 : vector<16x8xf32> to vector<16x8xbf16>
    %cst_342 = arith.constant dense<0.000000e+00> : vector<16x16xf32>
    %741 = tpu.matmul %739, %740, %cst_342 {dimension_numbers = #tpu.dot_dimension_numbers<[1], [1], [0], [0], [0, 0, 1, 0], [], []>} : vector<16x8xbf16>, vector<16x8xbf16>, vector<16x16xf32> -> vector<16x16xf32>
    %cst_343 = arith.constant 0.353553385 : f32
    %742 = vector.broadcast %cst_343 : f32 to vector<16x16xf32>
    %743 = arith.mulf %741, %742 : vector<16x16xf32>
    %744 = arith.addf %743, %15 : vector<16x16xf32>
    %cst_344 = arith.constant dense<0xFF800000> : vector<16xf32>
    %745 = vector.multi_reduction <maximumf>, %744, %cst_344 [1] : vector<16x16xf32> to vector<16xf32>
    %746 = vector.shape_cast %745 : vector<16xf32> to vector<16x1xf32>
    %747 = vector.broadcast %746 : vector<16x1xf32> to vector<16x16xf32>
    %748 = arith.subf %744, %747 : vector<16x16xf32>
    %749 = math.exp %748 : vector<16x16xf32>
    %cst_345 = arith.constant dense<0.000000e+00> : vector<16xf32>
    %750 = vector.multi_reduction <add>, %749, %cst_345 [1] : vector<16x16xf32> to vector<16xf32>
    %751 = vector.shape_cast %750 : vector<16xf32> to vector<16x1xf32>
    %752 = vector.broadcast %751 : vector<16x1xf32> to vector<16x16xf32>
    %753 = arith.divf %749, %752 : vector<16x16xf32>
    %754 = arith.truncf %753 : vector<16x16xf32> to vector<16x16xbf16>
    %755 = arith.truncf %738 : vector<16x8xf32> to vector<16x8xbf16>
    %cst_346 = arith.constant dense<0.000000e+00> : vector<16x8xf32>
    %756 = tpu.matmul %754, %755, %cst_346 {dimension_numbers = #tpu.dot_dimension_numbers<[1], [0], [0], [1], [0, 0, 1, 1], [], []>} : vector<16x16xbf16>, vector<16x8xbf16>, vector<16x8xf32> -> vector<16x8xf32>
    %757 = arith.truncf %756 : vector<16x8xf32> to vector<16x8xbf16>
    %c61 = arith.constant 61 : index
    %c0_347 = arith.constant 0 : index
    %c0_348 = arith.constant 0 : index
    %758 = vector.load %arg3[%c61, %c0_347, %c0_348] : memref<96x32x8xbf16, #tpu.memory_space<vmem>>, vector<1x32x8xbf16>
    %759 = vector.shape_cast %758 : vector<1x32x8xbf16> to vector<32x8xbf16>
    %cst_349 = arith.constant dense<0.000000e+00> : vector<16x32xf32>
    %760 = tpu.matmul %757, %759, %cst_349 {dimension_numbers = #tpu.dot_dimension_numbers<[1], [1], [0], [0], [0, 0, 1, 0], [], []>} : vector<16x8xbf16>, vector<32x8xbf16>, vector<16x32xf32> -> vector<16x32xf32>
    %761 = arith.addf %720, %760 : vector<16x32xf32>
    %c50 = arith.constant 50 : index
    %c0_350 = arith.constant 0 : index
    %c0_351 = arith.constant 0 : index
    %762 = vector.load %arg3[%c50, %c0_350, %c0_351] : memref<96x32x8xbf16, #tpu.memory_space<vmem>>, vector<1x32x8xbf16>
    %763 = vector.shape_cast %762 : vector<1x32x8xbf16> to vector<32x8xbf16>
    %cst_352 = arith.constant dense<0.000000e+00> : vector<16x8xf32>
    %764 = tpu.matmul %679, %763, %cst_352 {dimension_numbers = #tpu.dot_dimension_numbers<[1], [0], [0], [1], [0, 0, 1, 1], [], []>} : vector<16x32xbf16>, vector<32x8xbf16>, vector<16x8xf32> -> vector<16x8xf32>
    %c105 = arith.constant 105 : index
    %c0_353 = arith.constant 0 : index
    %765 = vector.load %arg5[%c105, %c0_353] : memref<170x64xf32, #tpu.memory_space<vmem>>, vector<1x8xf32>
    %766 = vector.broadcast %765 : vector<1x8xf32> to vector<16x8xf32>
    %767 = arith.addf %764, %766 : vector<16x8xf32>
    %c54 = arith.constant 54 : index
    %c0_354 = arith.constant 0 : index
    %c0_355 = arith.constant 0 : index
    %768 = vector.load %arg3[%c54, %c0_354, %c0_355] : memref<96x32x8xbf16, #tpu.memory_space<vmem>>, vector<1x32x8xbf16>
    %769 = vector.shape_cast %768 : vector<1x32x8xbf16> to vector<32x8xbf16>
    %cst_356 = arith.constant dense<0.000000e+00> : vector<16x8xf32>
    %770 = tpu.matmul %680, %769, %cst_356 {dimension_numbers = #tpu.dot_dimension_numbers<[1], [0], [0], [1], [0, 0, 1, 1], [], []>} : vector<16x32xbf16>, vector<32x8xbf16>, vector<16x8xf32> -> vector<16x8xf32>
    %c109 = arith.constant 109 : index
    %c0_357 = arith.constant 0 : index
    %771 = vector.load %arg5[%c109, %c0_357] : memref<170x64xf32, #tpu.memory_space<vmem>>, vector<1x8xf32>
    %772 = vector.broadcast %771 : vector<1x8xf32> to vector<16x8xf32>
    %773 = arith.addf %770, %772 : vector<16x8xf32>
    %c58 = arith.constant 58 : index
    %c0_358 = arith.constant 0 : index
    %c0_359 = arith.constant 0 : index
    %774 = vector.load %arg3[%c58, %c0_358, %c0_359] : memref<96x32x8xbf16, #tpu.memory_space<vmem>>, vector<1x32x8xbf16>
    %775 = vector.shape_cast %774 : vector<1x32x8xbf16> to vector<32x8xbf16>
    %cst_360 = arith.constant dense<0.000000e+00> : vector<16x8xf32>
    %776 = tpu.matmul %680, %775, %cst_360 {dimension_numbers = #tpu.dot_dimension_numbers<[1], [0], [0], [1], [0, 0, 1, 1], [], []>} : vector<16x32xbf16>, vector<32x8xbf16>, vector<16x8xf32> -> vector<16x8xf32>
    %c113 = arith.constant 113 : index
    %c0_361 = arith.constant 0 : index
    %777 = vector.load %arg5[%c113, %c0_361] : memref<170x64xf32, #tpu.memory_space<vmem>>, vector<1x8xf32>
    %778 = vector.broadcast %777 : vector<1x8xf32> to vector<16x8xf32>
    %779 = arith.addf %776, %778 : vector<16x8xf32>
    %780 = arith.truncf %767 : vector<16x8xf32> to vector<16x8xbf16>
    %781 = arith.truncf %773 : vector<16x8xf32> to vector<16x8xbf16>
    %cst_362 = arith.constant dense<0.000000e+00> : vector<16x16xf32>
    %782 = tpu.matmul %780, %781, %cst_362 {dimension_numbers = #tpu.dot_dimension_numbers<[1], [1], [0], [0], [0, 0, 1, 0], [], []>} : vector<16x8xbf16>, vector<16x8xbf16>, vector<16x16xf32> -> vector<16x16xf32>
    %cst_363 = arith.constant 0.353553385 : f32
    %783 = vector.broadcast %cst_363 : f32 to vector<16x16xf32>
    %784 = arith.mulf %782, %783 : vector<16x16xf32>
    %785 = arith.addf %784, %15 : vector<16x16xf32>
    %cst_364 = arith.constant dense<0xFF800000> : vector<16xf32>
    %786 = vector.multi_reduction <maximumf>, %785, %cst_364 [1] : vector<16x16xf32> to vector<16xf32>
    %787 = vector.shape_cast %786 : vector<16xf32> to vector<16x1xf32>
    %788 = vector.broadcast %787 : vector<16x1xf32> to vector<16x16xf32>
    %789 = arith.subf %785, %788 : vector<16x16xf32>
    %790 = math.exp %789 : vector<16x16xf32>
    %cst_365 = arith.constant dense<0.000000e+00> : vector<16xf32>
    %791 = vector.multi_reduction <add>, %790, %cst_365 [1] : vector<16x16xf32> to vector<16xf32>
    %792 = vector.shape_cast %791 : vector<16xf32> to vector<16x1xf32>
    %793 = vector.broadcast %792 : vector<16x1xf32> to vector<16x16xf32>
    %794 = arith.divf %790, %793 : vector<16x16xf32>
    %795 = arith.truncf %794 : vector<16x16xf32> to vector<16x16xbf16>
    %796 = arith.truncf %779 : vector<16x8xf32> to vector<16x8xbf16>
    %cst_366 = arith.constant dense<0.000000e+00> : vector<16x8xf32>
    %797 = tpu.matmul %795, %796, %cst_366 {dimension_numbers = #tpu.dot_dimension_numbers<[1], [0], [0], [1], [0, 0, 1, 1], [], []>} : vector<16x16xbf16>, vector<16x8xbf16>, vector<16x8xf32> -> vector<16x8xf32>
    %798 = arith.truncf %797 : vector<16x8xf32> to vector<16x8xbf16>
    %c62 = arith.constant 62 : index
    %c0_367 = arith.constant 0 : index
    %c0_368 = arith.constant 0 : index
    %799 = vector.load %arg3[%c62, %c0_367, %c0_368] : memref<96x32x8xbf16, #tpu.memory_space<vmem>>, vector<1x32x8xbf16>
    %800 = vector.shape_cast %799 : vector<1x32x8xbf16> to vector<32x8xbf16>
    %cst_369 = arith.constant dense<0.000000e+00> : vector<16x32xf32>
    %801 = tpu.matmul %798, %800, %cst_369 {dimension_numbers = #tpu.dot_dimension_numbers<[1], [1], [0], [0], [0, 0, 1, 0], [], []>} : vector<16x8xbf16>, vector<32x8xbf16>, vector<16x32xf32> -> vector<16x32xf32>
    %802 = arith.addf %761, %801 : vector<16x32xf32>
    %c51 = arith.constant 51 : index
    %c0_370 = arith.constant 0 : index
    %c0_371 = arith.constant 0 : index
    %803 = vector.load %arg3[%c51, %c0_370, %c0_371] : memref<96x32x8xbf16, #tpu.memory_space<vmem>>, vector<1x32x8xbf16>
    %804 = vector.shape_cast %803 : vector<1x32x8xbf16> to vector<32x8xbf16>
    %cst_372 = arith.constant dense<0.000000e+00> : vector<16x8xf32>
    %805 = tpu.matmul %679, %804, %cst_372 {dimension_numbers = #tpu.dot_dimension_numbers<[1], [0], [0], [1], [0, 0, 1, 1], [], []>} : vector<16x32xbf16>, vector<32x8xbf16>, vector<16x8xf32> -> vector<16x8xf32>
    %c106 = arith.constant 106 : index
    %c0_373 = arith.constant 0 : index
    %806 = vector.load %arg5[%c106, %c0_373] : memref<170x64xf32, #tpu.memory_space<vmem>>, vector<1x8xf32>
    %807 = vector.broadcast %806 : vector<1x8xf32> to vector<16x8xf32>
    %808 = arith.addf %805, %807 : vector<16x8xf32>
    %c55 = arith.constant 55 : index
    %c0_374 = arith.constant 0 : index
    %c0_375 = arith.constant 0 : index
    %809 = vector.load %arg3[%c55, %c0_374, %c0_375] : memref<96x32x8xbf16, #tpu.memory_space<vmem>>, vector<1x32x8xbf16>
    %810 = vector.shape_cast %809 : vector<1x32x8xbf16> to vector<32x8xbf16>
    %cst_376 = arith.constant dense<0.000000e+00> : vector<16x8xf32>
    %811 = tpu.matmul %680, %810, %cst_376 {dimension_numbers = #tpu.dot_dimension_numbers<[1], [0], [0], [1], [0, 0, 1, 1], [], []>} : vector<16x32xbf16>, vector<32x8xbf16>, vector<16x8xf32> -> vector<16x8xf32>
    %c110 = arith.constant 110 : index
    %c0_377 = arith.constant 0 : index
    %812 = vector.load %arg5[%c110, %c0_377] : memref<170x64xf32, #tpu.memory_space<vmem>>, vector<1x8xf32>
    %813 = vector.broadcast %812 : vector<1x8xf32> to vector<16x8xf32>
    %814 = arith.addf %811, %813 : vector<16x8xf32>
    %c59 = arith.constant 59 : index
    %c0_378 = arith.constant 0 : index
    %c0_379 = arith.constant 0 : index
    %815 = vector.load %arg3[%c59, %c0_378, %c0_379] : memref<96x32x8xbf16, #tpu.memory_space<vmem>>, vector<1x32x8xbf16>
    %816 = vector.shape_cast %815 : vector<1x32x8xbf16> to vector<32x8xbf16>
    %cst_380 = arith.constant dense<0.000000e+00> : vector<16x8xf32>
    %817 = tpu.matmul %680, %816, %cst_380 {dimension_numbers = #tpu.dot_dimension_numbers<[1], [0], [0], [1], [0, 0, 1, 1], [], []>} : vector<16x32xbf16>, vector<32x8xbf16>, vector<16x8xf32> -> vector<16x8xf32>
    %c114 = arith.constant 114 : index
    %c0_381 = arith.constant 0 : index
    %818 = vector.load %arg5[%c114, %c0_381] : memref<170x64xf32, #tpu.memory_space<vmem>>, vector<1x8xf32>
    %819 = vector.broadcast %818 : vector<1x8xf32> to vector<16x8xf32>
    %820 = arith.addf %817, %819 : vector<16x8xf32>
    %821 = arith.truncf %808 : vector<16x8xf32> to vector<16x8xbf16>
    %822 = arith.truncf %814 : vector<16x8xf32> to vector<16x8xbf16>
    %cst_382 = arith.constant dense<0.000000e+00> : vector<16x16xf32>
    %823 = tpu.matmul %821, %822, %cst_382 {dimension_numbers = #tpu.dot_dimension_numbers<[1], [1], [0], [0], [0, 0, 1, 0], [], []>} : vector<16x8xbf16>, vector<16x8xbf16>, vector<16x16xf32> -> vector<16x16xf32>
    %cst_383 = arith.constant 0.353553385 : f32
    %824 = vector.broadcast %cst_383 : f32 to vector<16x16xf32>
    %825 = arith.mulf %823, %824 : vector<16x16xf32>
    %826 = arith.addf %825, %15 : vector<16x16xf32>
    %cst_384 = arith.constant dense<0xFF800000> : vector<16xf32>
    %827 = vector.multi_reduction <maximumf>, %826, %cst_384 [1] : vector<16x16xf32> to vector<16xf32>
    %828 = vector.shape_cast %827 : vector<16xf32> to vector<16x1xf32>
    %829 = vector.broadcast %828 : vector<16x1xf32> to vector<16x16xf32>
    %830 = arith.subf %826, %829 : vector<16x16xf32>
    %831 = math.exp %830 : vector<16x16xf32>
    %cst_385 = arith.constant dense<0.000000e+00> : vector<16xf32>
    %832 = vector.multi_reduction <add>, %831, %cst_385 [1] : vector<16x16xf32> to vector<16xf32>
    %833 = vector.shape_cast %832 : vector<16xf32> to vector<16x1xf32>
    %834 = vector.broadcast %833 : vector<16x1xf32> to vector<16x16xf32>
    %835 = arith.divf %831, %834 : vector<16x16xf32>
    %836 = arith.truncf %835 : vector<16x16xf32> to vector<16x16xbf16>
    %837 = arith.truncf %820 : vector<16x8xf32> to vector<16x8xbf16>
    %cst_386 = arith.constant dense<0.000000e+00> : vector<16x8xf32>
    %838 = tpu.matmul %836, %837, %cst_386 {dimension_numbers = #tpu.dot_dimension_numbers<[1], [0], [0], [1], [0, 0, 1, 1], [], []>} : vector<16x16xbf16>, vector<16x8xbf16>, vector<16x8xf32> -> vector<16x8xf32>
    %839 = arith.truncf %838 : vector<16x8xf32> to vector<16x8xbf16>
    %c63 = arith.constant 63 : index
    %c0_387 = arith.constant 0 : index
    %c0_388 = arith.constant 0 : index
    %840 = vector.load %arg3[%c63, %c0_387, %c0_388] : memref<96x32x8xbf16, #tpu.memory_space<vmem>>, vector<1x32x8xbf16>
    %841 = vector.shape_cast %840 : vector<1x32x8xbf16> to vector<32x8xbf16>
    %cst_389 = arith.constant dense<0.000000e+00> : vector<16x32xf32>
    %842 = tpu.matmul %839, %841, %cst_389 {dimension_numbers = #tpu.dot_dimension_numbers<[1], [1], [0], [0], [0, 0, 1, 0], [], []>} : vector<16x8xbf16>, vector<32x8xbf16>, vector<16x32xf32> -> vector<16x32xf32>
    %843 = arith.addf %802, %842 : vector<16x32xf32>
    %c115 = arith.constant 115 : index
    %c0_390 = arith.constant 0 : index
    %844 = vector.load %arg5[%c115, %c0_390] : memref<170x64xf32, #tpu.memory_space<vmem>>, vector<1x32xf32>
    %845 = vector.broadcast %844 : vector<1x32xf32> to vector<16x32xf32>
    %846 = arith.addf %843, %845 : vector<16x32xf32>
    %847 = arith.addf %678, %846 : vector<16x32xf32>
    %c152 = arith.constant 152 : index
    %c0_391 = arith.constant 0 : index
    %848 = vector.load %arg5[%c152, %c0_391] : memref<170x64xf32, #tpu.memory_space<vmem>>, vector<1x32xf32>
    %c153 = arith.constant 153 : index
    %c0_392 = arith.constant 0 : index
    %849 = vector.load %arg5[%c153, %c0_392] : memref<170x64xf32, #tpu.memory_space<vmem>>, vector<1x32xf32>
    %cst_393 = arith.constant dense<0.000000e+00> : vector<16xf32>
    %850 = vector.multi_reduction <add>, %847, %cst_393 [1] : vector<16x32xf32> to vector<16xf32>
    %851 = vector.shape_cast %850 : vector<16xf32> to vector<16x1xf32>
    %cst_394 = arith.constant 3.200000e+01 : f32
    %852 = vector.broadcast %cst_394 : f32 to vector<16x1xf32>
    %853 = arith.divf %851, %852 : vector<16x1xf32>
    %854 = vector.broadcast %853 : vector<16x1xf32> to vector<16x32xf32>
    %855 = arith.subf %847, %854 : vector<16x32xf32>
    %856 = arith.mulf %855, %855 : vector<16x32xf32>
    %cst_395 = arith.constant dense<0.000000e+00> : vector<16xf32>
    %857 = vector.multi_reduction <add>, %856, %cst_395 [1] : vector<16x32xf32> to vector<16xf32>
    %858 = vector.shape_cast %857 : vector<16xf32> to vector<16x1xf32>
    %cst_396 = arith.constant 3.200000e+01 : f32
    %859 = vector.broadcast %cst_396 : f32 to vector<16x1xf32>
    %860 = arith.divf %858, %859 : vector<16x1xf32>
    %861 = vector.broadcast %853 : vector<16x1xf32> to vector<16x32xf32>
    %862 = arith.subf %847, %861 : vector<16x32xf32>
    %cst_397 = arith.constant 9.99999974E-6 : f32
    %863 = vector.broadcast %cst_397 : f32 to vector<16x1xf32>
    %864 = arith.addf %860, %863 : vector<16x1xf32>
    %865 = math.rsqrt %864 : vector<16x1xf32>
    %866 = vector.broadcast %865 : vector<16x1xf32> to vector<16x32xf32>
    %867 = arith.mulf %862, %866 : vector<16x32xf32>
    %868 = vector.broadcast %848 : vector<1x32xf32> to vector<16x32xf32>
    %869 = arith.mulf %867, %868 : vector<16x32xf32>
    %870 = vector.broadcast %849 : vector<1x32xf32> to vector<16x32xf32>
    %871 = arith.addf %869, %870 : vector<16x32xf32>
    %872 = arith.truncf %871 : vector<16x32xf32> to vector<16x32xbf16>
    %c4_398 = arith.constant 4 : index
    %c0_399 = arith.constant 0 : index
    %c0_400 = arith.constant 0 : index
    %873 = vector.load %arg4[%c4_398, %c0_399, %c0_400] : memref<8x32x64xbf16, #tpu.memory_space<vmem>>, vector<1x32x64xbf16>
    %874 = vector.shape_cast %873 : vector<1x32x64xbf16> to vector<32x64xbf16>
    %c5_401 = arith.constant 5 : index
    %c0_402 = arith.constant 0 : index
    %c0_403 = arith.constant 0 : index
    %875 = vector.load %arg4[%c5_401, %c0_402, %c0_403] : memref<8x32x64xbf16, #tpu.memory_space<vmem>>, vector<1x32x64xbf16>
    %876 = vector.shape_cast %875 : vector<1x32x64xbf16> to vector<32x64xbf16>
    %cst_404 = arith.constant dense<0.000000e+00> : vector<16x64xf32>
    %877 = tpu.matmul %872, %874, %cst_404 {dimension_numbers = #tpu.dot_dimension_numbers<[1], [0], [0], [1], [0, 0, 1, 1], [], []>} : vector<16x32xbf16>, vector<32x64xbf16>, vector<16x64xf32> -> vector<16x64xf32>
    %c166 = arith.constant 166 : index
    %c0_405 = arith.constant 0 : index
    %878 = vector.load %arg5[%c166, %c0_405] : memref<170x64xf32, #tpu.memory_space<vmem>>, vector<1x64xf32>
    %879 = vector.broadcast %878 : vector<1x64xf32> to vector<16x64xf32>
    %880 = arith.addf %877, %879 : vector<16x64xf32>
    %cst_406 = arith.constant 0.000000e+00 : f32
    %881 = vector.broadcast %cst_406 : f32 to vector<16x64xf32>
    %882 = arith.maximumf %880, %881 : vector<16x64xf32>
    %883 = arith.truncf %882 : vector<16x64xf32> to vector<16x64xbf16>
    %cst_407 = arith.constant dense<0.000000e+00> : vector<16x32xf32>
    %884 = tpu.matmul %883, %876, %cst_407 {dimension_numbers = #tpu.dot_dimension_numbers<[1], [1], [0], [0], [0, 0, 1, 0], [], []>} : vector<16x64xbf16>, vector<32x64xbf16>, vector<16x32xf32> -> vector<16x32xf32>
    %c167 = arith.constant 167 : index
    %c0_408 = arith.constant 0 : index
    %885 = vector.load %arg5[%c167, %c0_408] : memref<170x64xf32, #tpu.memory_space<vmem>>, vector<1x32xf32>
    %886 = vector.broadcast %885 : vector<1x32xf32> to vector<16x32xf32>
    %887 = arith.addf %884, %886 : vector<16x32xf32>
    %888 = arith.addf %871, %887 : vector<16x32xf32>
    %c154 = arith.constant 154 : index
    %c0_409 = arith.constant 0 : index
    %889 = vector.load %arg5[%c154, %c0_409] : memref<170x64xf32, #tpu.memory_space<vmem>>, vector<1x32xf32>
    %c155 = arith.constant 155 : index
    %c0_410 = arith.constant 0 : index
    %890 = vector.load %arg5[%c155, %c0_410] : memref<170x64xf32, #tpu.memory_space<vmem>>, vector<1x32xf32>
    %cst_411 = arith.constant dense<0.000000e+00> : vector<16xf32>
    %891 = vector.multi_reduction <add>, %888, %cst_411 [1] : vector<16x32xf32> to vector<16xf32>
    %892 = vector.shape_cast %891 : vector<16xf32> to vector<16x1xf32>
    %cst_412 = arith.constant 3.200000e+01 : f32
    %893 = vector.broadcast %cst_412 : f32 to vector<16x1xf32>
    %894 = arith.divf %892, %893 : vector<16x1xf32>
    %895 = vector.broadcast %894 : vector<16x1xf32> to vector<16x32xf32>
    %896 = arith.subf %888, %895 : vector<16x32xf32>
    %897 = arith.mulf %896, %896 : vector<16x32xf32>
    %cst_413 = arith.constant dense<0.000000e+00> : vector<16xf32>
    %898 = vector.multi_reduction <add>, %897, %cst_413 [1] : vector<16x32xf32> to vector<16xf32>
    %899 = vector.shape_cast %898 : vector<16xf32> to vector<16x1xf32>
    %cst_414 = arith.constant 3.200000e+01 : f32
    %900 = vector.broadcast %cst_414 : f32 to vector<16x1xf32>
    %901 = arith.divf %899, %900 : vector<16x1xf32>
    %902 = vector.broadcast %894 : vector<16x1xf32> to vector<16x32xf32>
    %903 = arith.subf %888, %902 : vector<16x32xf32>
    %cst_415 = arith.constant 9.99999974E-6 : f32
    %904 = vector.broadcast %cst_415 : f32 to vector<16x1xf32>
    %905 = arith.addf %901, %904 : vector<16x1xf32>
    %906 = math.rsqrt %905 : vector<16x1xf32>
    %907 = vector.broadcast %906 : vector<16x1xf32> to vector<16x32xf32>
    %908 = arith.mulf %903, %907 : vector<16x32xf32>
    %909 = vector.broadcast %889 : vector<1x32xf32> to vector<16x32xf32>
    %910 = arith.mulf %908, %909 : vector<16x32xf32>
    %911 = vector.broadcast %890 : vector<1x32xf32> to vector<16x32xf32>
    %912 = arith.addf %910, %911 : vector<16x32xf32>
    %913 = arith.truncf %912 : vector<16x32xf32> to vector<16x32xbf16>
    %914 = arith.truncf %912 : vector<16x32xf32> to vector<16x32xbf16>
    %c64_416 = arith.constant 64 : index
    %c0_417 = arith.constant 0 : index
    %c0_418 = arith.constant 0 : index
    %915 = vector.load %arg3[%c64_416, %c0_417, %c0_418] : memref<96x32x8xbf16, #tpu.memory_space<vmem>>, vector<1x32x8xbf16>
    %916 = vector.shape_cast %915 : vector<1x32x8xbf16> to vector<32x8xbf16>
    %cst_419 = arith.constant dense<0.000000e+00> : vector<16x8xf32>
    %917 = tpu.matmul %913, %916, %cst_419 {dimension_numbers = #tpu.dot_dimension_numbers<[1], [0], [0], [1], [0, 0, 1, 1], [], []>} : vector<16x32xbf16>, vector<32x8xbf16>, vector<16x8xf32> -> vector<16x8xf32>
    %c116 = arith.constant 116 : index
    %c0_420 = arith.constant 0 : index
    %918 = vector.load %arg5[%c116, %c0_420] : memref<170x64xf32, #tpu.memory_space<vmem>>, vector<1x8xf32>
    %919 = vector.broadcast %918 : vector<1x8xf32> to vector<16x8xf32>
    %920 = arith.addf %917, %919 : vector<16x8xf32>
    %c68_421 = arith.constant 68 : index
    %c0_422 = arith.constant 0 : index
    %c0_423 = arith.constant 0 : index
    %921 = vector.load %arg3[%c68_421, %c0_422, %c0_423] : memref<96x32x8xbf16, #tpu.memory_space<vmem>>, vector<1x32x8xbf16>
    %922 = vector.shape_cast %921 : vector<1x32x8xbf16> to vector<32x8xbf16>
    %cst_424 = arith.constant dense<0.000000e+00> : vector<16x8xf32>
    %923 = tpu.matmul %914, %922, %cst_424 {dimension_numbers = #tpu.dot_dimension_numbers<[1], [0], [0], [1], [0, 0, 1, 1], [], []>} : vector<16x32xbf16>, vector<32x8xbf16>, vector<16x8xf32> -> vector<16x8xf32>
    %c120 = arith.constant 120 : index
    %c0_425 = arith.constant 0 : index
    %924 = vector.load %arg5[%c120, %c0_425] : memref<170x64xf32, #tpu.memory_space<vmem>>, vector<1x8xf32>
    %925 = vector.broadcast %924 : vector<1x8xf32> to vector<16x8xf32>
    %926 = arith.addf %923, %925 : vector<16x8xf32>
    %c72_426 = arith.constant 72 : index
    %c0_427 = arith.constant 0 : index
    %c0_428 = arith.constant 0 : index
    %927 = vector.load %arg3[%c72_426, %c0_427, %c0_428] : memref<96x32x8xbf16, #tpu.memory_space<vmem>>, vector<1x32x8xbf16>
    %928 = vector.shape_cast %927 : vector<1x32x8xbf16> to vector<32x8xbf16>
    %cst_429 = arith.constant dense<0.000000e+00> : vector<16x8xf32>
    %929 = tpu.matmul %914, %928, %cst_429 {dimension_numbers = #tpu.dot_dimension_numbers<[1], [0], [0], [1], [0, 0, 1, 1], [], []>} : vector<16x32xbf16>, vector<32x8xbf16>, vector<16x8xf32> -> vector<16x8xf32>
    %c124 = arith.constant 124 : index
    %c0_430 = arith.constant 0 : index
    %930 = vector.load %arg5[%c124, %c0_430] : memref<170x64xf32, #tpu.memory_space<vmem>>, vector<1x8xf32>
    %931 = vector.broadcast %930 : vector<1x8xf32> to vector<16x8xf32>
    %932 = arith.addf %929, %931 : vector<16x8xf32>
    %933 = arith.truncf %920 : vector<16x8xf32> to vector<16x8xbf16>
    %934 = arith.truncf %926 : vector<16x8xf32> to vector<16x8xbf16>
    %cst_431 = arith.constant dense<0.000000e+00> : vector<16x16xf32>
    %935 = tpu.matmul %933, %934, %cst_431 {dimension_numbers = #tpu.dot_dimension_numbers<[1], [1], [0], [0], [0, 0, 1, 0], [], []>} : vector<16x8xbf16>, vector<16x8xbf16>, vector<16x16xf32> -> vector<16x16xf32>
    %cst_432 = arith.constant 0.353553385 : f32
    %936 = vector.broadcast %cst_432 : f32 to vector<16x16xf32>
    %937 = arith.mulf %935, %936 : vector<16x16xf32>
    %938 = arith.addf %937, %15 : vector<16x16xf32>
    %cst_433 = arith.constant dense<0xFF800000> : vector<16xf32>
    %939 = vector.multi_reduction <maximumf>, %938, %cst_433 [1] : vector<16x16xf32> to vector<16xf32>
    %940 = vector.shape_cast %939 : vector<16xf32> to vector<16x1xf32>
    %941 = vector.broadcast %940 : vector<16x1xf32> to vector<16x16xf32>
    %942 = arith.subf %938, %941 : vector<16x16xf32>
    %943 = math.exp %942 : vector<16x16xf32>
    %cst_434 = arith.constant dense<0.000000e+00> : vector<16xf32>
    %944 = vector.multi_reduction <add>, %943, %cst_434 [1] : vector<16x16xf32> to vector<16xf32>
    %945 = vector.shape_cast %944 : vector<16xf32> to vector<16x1xf32>
    %946 = vector.broadcast %945 : vector<16x1xf32> to vector<16x16xf32>
    %947 = arith.divf %943, %946 : vector<16x16xf32>
    %948 = arith.truncf %947 : vector<16x16xf32> to vector<16x16xbf16>
    %949 = arith.truncf %932 : vector<16x8xf32> to vector<16x8xbf16>
    %cst_435 = arith.constant dense<0.000000e+00> : vector<16x8xf32>
    %950 = tpu.matmul %948, %949, %cst_435 {dimension_numbers = #tpu.dot_dimension_numbers<[1], [0], [0], [1], [0, 0, 1, 1], [], []>} : vector<16x16xbf16>, vector<16x8xbf16>, vector<16x8xf32> -> vector<16x8xf32>
    %951 = arith.truncf %950 : vector<16x8xf32> to vector<16x8xbf16>
    %c76_436 = arith.constant 76 : index
    %c0_437 = arith.constant 0 : index
    %c0_438 = arith.constant 0 : index
    %952 = vector.load %arg3[%c76_436, %c0_437, %c0_438] : memref<96x32x8xbf16, #tpu.memory_space<vmem>>, vector<1x32x8xbf16>
    %953 = vector.shape_cast %952 : vector<1x32x8xbf16> to vector<32x8xbf16>
    %cst_439 = arith.constant dense<0.000000e+00> : vector<16x32xf32>
    %954 = tpu.matmul %951, %953, %cst_439 {dimension_numbers = #tpu.dot_dimension_numbers<[1], [1], [0], [0], [0, 0, 1, 0], [], []>} : vector<16x8xbf16>, vector<32x8xbf16>, vector<16x32xf32> -> vector<16x32xf32>
    %c65_440 = arith.constant 65 : index
    %c0_441 = arith.constant 0 : index
    %c0_442 = arith.constant 0 : index
    %955 = vector.load %arg3[%c65_440, %c0_441, %c0_442] : memref<96x32x8xbf16, #tpu.memory_space<vmem>>, vector<1x32x8xbf16>
    %956 = vector.shape_cast %955 : vector<1x32x8xbf16> to vector<32x8xbf16>
    %cst_443 = arith.constant dense<0.000000e+00> : vector<16x8xf32>
    %957 = tpu.matmul %913, %956, %cst_443 {dimension_numbers = #tpu.dot_dimension_numbers<[1], [0], [0], [1], [0, 0, 1, 1], [], []>} : vector<16x32xbf16>, vector<32x8xbf16>, vector<16x8xf32> -> vector<16x8xf32>
    %c117 = arith.constant 117 : index
    %c0_444 = arith.constant 0 : index
    %958 = vector.load %arg5[%c117, %c0_444] : memref<170x64xf32, #tpu.memory_space<vmem>>, vector<1x8xf32>
    %959 = vector.broadcast %958 : vector<1x8xf32> to vector<16x8xf32>
    %960 = arith.addf %957, %959 : vector<16x8xf32>
    %c69_445 = arith.constant 69 : index
    %c0_446 = arith.constant 0 : index
    %c0_447 = arith.constant 0 : index
    %961 = vector.load %arg3[%c69_445, %c0_446, %c0_447] : memref<96x32x8xbf16, #tpu.memory_space<vmem>>, vector<1x32x8xbf16>
    %962 = vector.shape_cast %961 : vector<1x32x8xbf16> to vector<32x8xbf16>
    %cst_448 = arith.constant dense<0.000000e+00> : vector<16x8xf32>
    %963 = tpu.matmul %914, %962, %cst_448 {dimension_numbers = #tpu.dot_dimension_numbers<[1], [0], [0], [1], [0, 0, 1, 1], [], []>} : vector<16x32xbf16>, vector<32x8xbf16>, vector<16x8xf32> -> vector<16x8xf32>
    %c121 = arith.constant 121 : index
    %c0_449 = arith.constant 0 : index
    %964 = vector.load %arg5[%c121, %c0_449] : memref<170x64xf32, #tpu.memory_space<vmem>>, vector<1x8xf32>
    %965 = vector.broadcast %964 : vector<1x8xf32> to vector<16x8xf32>
    %966 = arith.addf %963, %965 : vector<16x8xf32>
    %c73_450 = arith.constant 73 : index
    %c0_451 = arith.constant 0 : index
    %c0_452 = arith.constant 0 : index
    %967 = vector.load %arg3[%c73_450, %c0_451, %c0_452] : memref<96x32x8xbf16, #tpu.memory_space<vmem>>, vector<1x32x8xbf16>
    %968 = vector.shape_cast %967 : vector<1x32x8xbf16> to vector<32x8xbf16>
    %cst_453 = arith.constant dense<0.000000e+00> : vector<16x8xf32>
    %969 = tpu.matmul %914, %968, %cst_453 {dimension_numbers = #tpu.dot_dimension_numbers<[1], [0], [0], [1], [0, 0, 1, 1], [], []>} : vector<16x32xbf16>, vector<32x8xbf16>, vector<16x8xf32> -> vector<16x8xf32>
    %c125 = arith.constant 125 : index
    %c0_454 = arith.constant 0 : index
    %970 = vector.load %arg5[%c125, %c0_454] : memref<170x64xf32, #tpu.memory_space<vmem>>, vector<1x8xf32>
    %971 = vector.broadcast %970 : vector<1x8xf32> to vector<16x8xf32>
    %972 = arith.addf %969, %971 : vector<16x8xf32>
    %973 = arith.truncf %960 : vector<16x8xf32> to vector<16x8xbf16>
    %974 = arith.truncf %966 : vector<16x8xf32> to vector<16x8xbf16>
    %cst_455 = arith.constant dense<0.000000e+00> : vector<16x16xf32>
    %975 = tpu.matmul %973, %974, %cst_455 {dimension_numbers = #tpu.dot_dimension_numbers<[1], [1], [0], [0], [0, 0, 1, 0], [], []>} : vector<16x8xbf16>, vector<16x8xbf16>, vector<16x16xf32> -> vector<16x16xf32>
    %cst_456 = arith.constant 0.353553385 : f32
    %976 = vector.broadcast %cst_456 : f32 to vector<16x16xf32>
    %977 = arith.mulf %975, %976 : vector<16x16xf32>
    %978 = arith.addf %977, %15 : vector<16x16xf32>
    %cst_457 = arith.constant dense<0xFF800000> : vector<16xf32>
    %979 = vector.multi_reduction <maximumf>, %978, %cst_457 [1] : vector<16x16xf32> to vector<16xf32>
    %980 = vector.shape_cast %979 : vector<16xf32> to vector<16x1xf32>
    %981 = vector.broadcast %980 : vector<16x1xf32> to vector<16x16xf32>
    %982 = arith.subf %978, %981 : vector<16x16xf32>
    %983 = math.exp %982 : vector<16x16xf32>
    %cst_458 = arith.constant dense<0.000000e+00> : vector<16xf32>
    %984 = vector.multi_reduction <add>, %983, %cst_458 [1] : vector<16x16xf32> to vector<16xf32>
    %985 = vector.shape_cast %984 : vector<16xf32> to vector<16x1xf32>
    %986 = vector.broadcast %985 : vector<16x1xf32> to vector<16x16xf32>
    %987 = arith.divf %983, %986 : vector<16x16xf32>
    %988 = arith.truncf %987 : vector<16x16xf32> to vector<16x16xbf16>
    %989 = arith.truncf %972 : vector<16x8xf32> to vector<16x8xbf16>
    %cst_459 = arith.constant dense<0.000000e+00> : vector<16x8xf32>
    %990 = tpu.matmul %988, %989, %cst_459 {dimension_numbers = #tpu.dot_dimension_numbers<[1], [0], [0], [1], [0, 0, 1, 1], [], []>} : vector<16x16xbf16>, vector<16x8xbf16>, vector<16x8xf32> -> vector<16x8xf32>
    %991 = arith.truncf %990 : vector<16x8xf32> to vector<16x8xbf16>
    %c77_460 = arith.constant 77 : index
    %c0_461 = arith.constant 0 : index
    %c0_462 = arith.constant 0 : index
    %992 = vector.load %arg3[%c77_460, %c0_461, %c0_462] : memref<96x32x8xbf16, #tpu.memory_space<vmem>>, vector<1x32x8xbf16>
    %993 = vector.shape_cast %992 : vector<1x32x8xbf16> to vector<32x8xbf16>
    %cst_463 = arith.constant dense<0.000000e+00> : vector<16x32xf32>
    %994 = tpu.matmul %991, %993, %cst_463 {dimension_numbers = #tpu.dot_dimension_numbers<[1], [1], [0], [0], [0, 0, 1, 0], [], []>} : vector<16x8xbf16>, vector<32x8xbf16>, vector<16x32xf32> -> vector<16x32xf32>
    %995 = arith.addf %954, %994 : vector<16x32xf32>
    %c66_464 = arith.constant 66 : index
    %c0_465 = arith.constant 0 : index
    %c0_466 = arith.constant 0 : index
    %996 = vector.load %arg3[%c66_464, %c0_465, %c0_466] : memref<96x32x8xbf16, #tpu.memory_space<vmem>>, vector<1x32x8xbf16>
    %997 = vector.shape_cast %996 : vector<1x32x8xbf16> to vector<32x8xbf16>
    %cst_467 = arith.constant dense<0.000000e+00> : vector<16x8xf32>
    %998 = tpu.matmul %913, %997, %cst_467 {dimension_numbers = #tpu.dot_dimension_numbers<[1], [0], [0], [1], [0, 0, 1, 1], [], []>} : vector<16x32xbf16>, vector<32x8xbf16>, vector<16x8xf32> -> vector<16x8xf32>
    %c118 = arith.constant 118 : index
    %c0_468 = arith.constant 0 : index
    %999 = vector.load %arg5[%c118, %c0_468] : memref<170x64xf32, #tpu.memory_space<vmem>>, vector<1x8xf32>
    %1000 = vector.broadcast %999 : vector<1x8xf32> to vector<16x8xf32>
    %1001 = arith.addf %998, %1000 : vector<16x8xf32>
    %c70_469 = arith.constant 70 : index
    %c0_470 = arith.constant 0 : index
    %c0_471 = arith.constant 0 : index
    %1002 = vector.load %arg3[%c70_469, %c0_470, %c0_471] : memref<96x32x8xbf16, #tpu.memory_space<vmem>>, vector<1x32x8xbf16>
    %1003 = vector.shape_cast %1002 : vector<1x32x8xbf16> to vector<32x8xbf16>
    %cst_472 = arith.constant dense<0.000000e+00> : vector<16x8xf32>
    %1004 = tpu.matmul %914, %1003, %cst_472 {dimension_numbers = #tpu.dot_dimension_numbers<[1], [0], [0], [1], [0, 0, 1, 1], [], []>} : vector<16x32xbf16>, vector<32x8xbf16>, vector<16x8xf32> -> vector<16x8xf32>
    %c122 = arith.constant 122 : index
    %c0_473 = arith.constant 0 : index
    %1005 = vector.load %arg5[%c122, %c0_473] : memref<170x64xf32, #tpu.memory_space<vmem>>, vector<1x8xf32>
    %1006 = vector.broadcast %1005 : vector<1x8xf32> to vector<16x8xf32>
    %1007 = arith.addf %1004, %1006 : vector<16x8xf32>
    %c74_474 = arith.constant 74 : index
    %c0_475 = arith.constant 0 : index
    %c0_476 = arith.constant 0 : index
    %1008 = vector.load %arg3[%c74_474, %c0_475, %c0_476] : memref<96x32x8xbf16, #tpu.memory_space<vmem>>, vector<1x32x8xbf16>
    %1009 = vector.shape_cast %1008 : vector<1x32x8xbf16> to vector<32x8xbf16>
    %cst_477 = arith.constant dense<0.000000e+00> : vector<16x8xf32>
    %1010 = tpu.matmul %914, %1009, %cst_477 {dimension_numbers = #tpu.dot_dimension_numbers<[1], [0], [0], [1], [0, 0, 1, 1], [], []>} : vector<16x32xbf16>, vector<32x8xbf16>, vector<16x8xf32> -> vector<16x8xf32>
    %c126 = arith.constant 126 : index
    %c0_478 = arith.constant 0 : index
    %1011 = vector.load %arg5[%c126, %c0_478] : memref<170x64xf32, #tpu.memory_space<vmem>>, vector<1x8xf32>
    %1012 = vector.broadcast %1011 : vector<1x8xf32> to vector<16x8xf32>
    %1013 = arith.addf %1010, %1012 : vector<16x8xf32>
    %1014 = arith.truncf %1001 : vector<16x8xf32> to vector<16x8xbf16>
    %1015 = arith.truncf %1007 : vector<16x8xf32> to vector<16x8xbf16>
    %cst_479 = arith.constant dense<0.000000e+00> : vector<16x16xf32>
    %1016 = tpu.matmul %1014, %1015, %cst_479 {dimension_numbers = #tpu.dot_dimension_numbers<[1], [1], [0], [0], [0, 0, 1, 0], [], []>} : vector<16x8xbf16>, vector<16x8xbf16>, vector<16x16xf32> -> vector<16x16xf32>
    %cst_480 = arith.constant 0.353553385 : f32
    %1017 = vector.broadcast %cst_480 : f32 to vector<16x16xf32>
    %1018 = arith.mulf %1016, %1017 : vector<16x16xf32>
    %1019 = arith.addf %1018, %15 : vector<16x16xf32>
    %cst_481 = arith.constant dense<0xFF800000> : vector<16xf32>
    %1020 = vector.multi_reduction <maximumf>, %1019, %cst_481 [1] : vector<16x16xf32> to vector<16xf32>
    %1021 = vector.shape_cast %1020 : vector<16xf32> to vector<16x1xf32>
    %1022 = vector.broadcast %1021 : vector<16x1xf32> to vector<16x16xf32>
    %1023 = arith.subf %1019, %1022 : vector<16x16xf32>
    %1024 = math.exp %1023 : vector<16x16xf32>
    %cst_482 = arith.constant dense<0.000000e+00> : vector<16xf32>
    %1025 = vector.multi_reduction <add>, %1024, %cst_482 [1] : vector<16x16xf32> to vector<16xf32>
    %1026 = vector.shape_cast %1025 : vector<16xf32> to vector<16x1xf32>
    %1027 = vector.broadcast %1026 : vector<16x1xf32> to vector<16x16xf32>
    %1028 = arith.divf %1024, %1027 : vector<16x16xf32>
    %1029 = arith.truncf %1028 : vector<16x16xf32> to vector<16x16xbf16>
    %1030 = arith.truncf %1013 : vector<16x8xf32> to vector<16x8xbf16>
    %cst_483 = arith.constant dense<0.000000e+00> : vector<16x8xf32>
    %1031 = tpu.matmul %1029, %1030, %cst_483 {dimension_numbers = #tpu.dot_dimension_numbers<[1], [0], [0], [1], [0, 0, 1, 1], [], []>} : vector<16x16xbf16>, vector<16x8xbf16>, vector<16x8xf32> -> vector<16x8xf32>
    %1032 = arith.truncf %1031 : vector<16x8xf32> to vector<16x8xbf16>
    %c78_484 = arith.constant 78 : index
    %c0_485 = arith.constant 0 : index
    %c0_486 = arith.constant 0 : index
    %1033 = vector.load %arg3[%c78_484, %c0_485, %c0_486] : memref<96x32x8xbf16, #tpu.memory_space<vmem>>, vector<1x32x8xbf16>
    %1034 = vector.shape_cast %1033 : vector<1x32x8xbf16> to vector<32x8xbf16>
    %cst_487 = arith.constant dense<0.000000e+00> : vector<16x32xf32>
    %1035 = tpu.matmul %1032, %1034, %cst_487 {dimension_numbers = #tpu.dot_dimension_numbers<[1], [1], [0], [0], [0, 0, 1, 0], [], []>} : vector<16x8xbf16>, vector<32x8xbf16>, vector<16x32xf32> -> vector<16x32xf32>
    %1036 = arith.addf %995, %1035 : vector<16x32xf32>
    %c67_488 = arith.constant 67 : index
    %c0_489 = arith.constant 0 : index
    %c0_490 = arith.constant 0 : index
    %1037 = vector.load %arg3[%c67_488, %c0_489, %c0_490] : memref<96x32x8xbf16, #tpu.memory_space<vmem>>, vector<1x32x8xbf16>
    %1038 = vector.shape_cast %1037 : vector<1x32x8xbf16> to vector<32x8xbf16>
    %cst_491 = arith.constant dense<0.000000e+00> : vector<16x8xf32>
    %1039 = tpu.matmul %913, %1038, %cst_491 {dimension_numbers = #tpu.dot_dimension_numbers<[1], [0], [0], [1], [0, 0, 1, 1], [], []>} : vector<16x32xbf16>, vector<32x8xbf16>, vector<16x8xf32> -> vector<16x8xf32>
    %c119 = arith.constant 119 : index
    %c0_492 = arith.constant 0 : index
    %1040 = vector.load %arg5[%c119, %c0_492] : memref<170x64xf32, #tpu.memory_space<vmem>>, vector<1x8xf32>
    %1041 = vector.broadcast %1040 : vector<1x8xf32> to vector<16x8xf32>
    %1042 = arith.addf %1039, %1041 : vector<16x8xf32>
    %c71_493 = arith.constant 71 : index
    %c0_494 = arith.constant 0 : index
    %c0_495 = arith.constant 0 : index
    %1043 = vector.load %arg3[%c71_493, %c0_494, %c0_495] : memref<96x32x8xbf16, #tpu.memory_space<vmem>>, vector<1x32x8xbf16>
    %1044 = vector.shape_cast %1043 : vector<1x32x8xbf16> to vector<32x8xbf16>
    %cst_496 = arith.constant dense<0.000000e+00> : vector<16x8xf32>
    %1045 = tpu.matmul %914, %1044, %cst_496 {dimension_numbers = #tpu.dot_dimension_numbers<[1], [0], [0], [1], [0, 0, 1, 1], [], []>} : vector<16x32xbf16>, vector<32x8xbf16>, vector<16x8xf32> -> vector<16x8xf32>
    %c123 = arith.constant 123 : index
    %c0_497 = arith.constant 0 : index
    %1046 = vector.load %arg5[%c123, %c0_497] : memref<170x64xf32, #tpu.memory_space<vmem>>, vector<1x8xf32>
    %1047 = vector.broadcast %1046 : vector<1x8xf32> to vector<16x8xf32>
    %1048 = arith.addf %1045, %1047 : vector<16x8xf32>
    %c75_498 = arith.constant 75 : index
    %c0_499 = arith.constant 0 : index
    %c0_500 = arith.constant 0 : index
    %1049 = vector.load %arg3[%c75_498, %c0_499, %c0_500] : memref<96x32x8xbf16, #tpu.memory_space<vmem>>, vector<1x32x8xbf16>
    %1050 = vector.shape_cast %1049 : vector<1x32x8xbf16> to vector<32x8xbf16>
    %cst_501 = arith.constant dense<0.000000e+00> : vector<16x8xf32>
    %1051 = tpu.matmul %914, %1050, %cst_501 {dimension_numbers = #tpu.dot_dimension_numbers<[1], [0], [0], [1], [0, 0, 1, 1], [], []>} : vector<16x32xbf16>, vector<32x8xbf16>, vector<16x8xf32> -> vector<16x8xf32>
    %c127 = arith.constant 127 : index
    %c0_502 = arith.constant 0 : index
    %1052 = vector.load %arg5[%c127, %c0_502] : memref<170x64xf32, #tpu.memory_space<vmem>>, vector<1x8xf32>
    %1053 = vector.broadcast %1052 : vector<1x8xf32> to vector<16x8xf32>
    %1054 = arith.addf %1051, %1053 : vector<16x8xf32>
    %1055 = arith.truncf %1042 : vector<16x8xf32> to vector<16x8xbf16>
    %1056 = arith.truncf %1048 : vector<16x8xf32> to vector<16x8xbf16>
    %cst_503 = arith.constant dense<0.000000e+00> : vector<16x16xf32>
    %1057 = tpu.matmul %1055, %1056, %cst_503 {dimension_numbers = #tpu.dot_dimension_numbers<[1], [1], [0], [0], [0, 0, 1, 0], [], []>} : vector<16x8xbf16>, vector<16x8xbf16>, vector<16x16xf32> -> vector<16x16xf32>
    %cst_504 = arith.constant 0.353553385 : f32
    %1058 = vector.broadcast %cst_504 : f32 to vector<16x16xf32>
    %1059 = arith.mulf %1057, %1058 : vector<16x16xf32>
    %1060 = arith.addf %1059, %15 : vector<16x16xf32>
    %cst_505 = arith.constant dense<0xFF800000> : vector<16xf32>
    %1061 = vector.multi_reduction <maximumf>, %1060, %cst_505 [1] : vector<16x16xf32> to vector<16xf32>
    %1062 = vector.shape_cast %1061 : vector<16xf32> to vector<16x1xf32>
    %1063 = vector.broadcast %1062 : vector<16x1xf32> to vector<16x16xf32>
    %1064 = arith.subf %1060, %1063 : vector<16x16xf32>
    %1065 = math.exp %1064 : vector<16x16xf32>
    %cst_506 = arith.constant dense<0.000000e+00> : vector<16xf32>
    %1066 = vector.multi_reduction <add>, %1065, %cst_506 [1] : vector<16x16xf32> to vector<16xf32>
    %1067 = vector.shape_cast %1066 : vector<16xf32> to vector<16x1xf32>
    %1068 = vector.broadcast %1067 : vector<16x1xf32> to vector<16x16xf32>
    %1069 = arith.divf %1065, %1068 : vector<16x16xf32>
    %1070 = arith.truncf %1069 : vector<16x16xf32> to vector<16x16xbf16>
    %1071 = arith.truncf %1054 : vector<16x8xf32> to vector<16x8xbf16>
    %cst_507 = arith.constant dense<0.000000e+00> : vector<16x8xf32>
    %1072 = tpu.matmul %1070, %1071, %cst_507 {dimension_numbers = #tpu.dot_dimension_numbers<[1], [0], [0], [1], [0, 0, 1, 1], [], []>} : vector<16x16xbf16>, vector<16x8xbf16>, vector<16x8xf32> -> vector<16x8xf32>
    %1073 = arith.truncf %1072 : vector<16x8xf32> to vector<16x8xbf16>
    %c79_508 = arith.constant 79 : index
    %c0_509 = arith.constant 0 : index
    %c0_510 = arith.constant 0 : index
    %1074 = vector.load %arg3[%c79_508, %c0_509, %c0_510] : memref<96x32x8xbf16, #tpu.memory_space<vmem>>, vector<1x32x8xbf16>
    %1075 = vector.shape_cast %1074 : vector<1x32x8xbf16> to vector<32x8xbf16>
    %cst_511 = arith.constant dense<0.000000e+00> : vector<16x32xf32>
    %1076 = tpu.matmul %1073, %1075, %cst_511 {dimension_numbers = #tpu.dot_dimension_numbers<[1], [1], [0], [0], [0, 0, 1, 0], [], []>} : vector<16x8xbf16>, vector<32x8xbf16>, vector<16x32xf32> -> vector<16x32xf32>
    %1077 = arith.addf %1036, %1076 : vector<16x32xf32>
    %c128 = arith.constant 128 : index
    %c0_512 = arith.constant 0 : index
    %1078 = vector.load %arg5[%c128, %c0_512] : memref<170x64xf32, #tpu.memory_space<vmem>>, vector<1x32xf32>
    %1079 = vector.broadcast %1078 : vector<1x32xf32> to vector<16x32xf32>
    %1080 = arith.addf %1077, %1079 : vector<16x32xf32>
    %1081 = arith.addf %912, %1080 : vector<16x32xf32>
    %c156 = arith.constant 156 : index
    %c0_513 = arith.constant 0 : index
    %1082 = vector.load %arg5[%c156, %c0_513] : memref<170x64xf32, #tpu.memory_space<vmem>>, vector<1x32xf32>
    %c157 = arith.constant 157 : index
    %c0_514 = arith.constant 0 : index
    %1083 = vector.load %arg5[%c157, %c0_514] : memref<170x64xf32, #tpu.memory_space<vmem>>, vector<1x32xf32>
    %cst_515 = arith.constant dense<0.000000e+00> : vector<16xf32>
    %1084 = vector.multi_reduction <add>, %1081, %cst_515 [1] : vector<16x32xf32> to vector<16xf32>
    %1085 = vector.shape_cast %1084 : vector<16xf32> to vector<16x1xf32>
    %cst_516 = arith.constant 3.200000e+01 : f32
    %1086 = vector.broadcast %cst_516 : f32 to vector<16x1xf32>
    %1087 = arith.divf %1085, %1086 : vector<16x1xf32>
    %1088 = vector.broadcast %1087 : vector<16x1xf32> to vector<16x32xf32>
    %1089 = arith.subf %1081, %1088 : vector<16x32xf32>
    %1090 = arith.mulf %1089, %1089 : vector<16x32xf32>
    %cst_517 = arith.constant dense<0.000000e+00> : vector<16xf32>
    %1091 = vector.multi_reduction <add>, %1090, %cst_517 [1] : vector<16x32xf32> to vector<16xf32>
    %1092 = vector.shape_cast %1091 : vector<16xf32> to vector<16x1xf32>
    %cst_518 = arith.constant 3.200000e+01 : f32
    %1093 = vector.broadcast %cst_518 : f32 to vector<16x1xf32>
    %1094 = arith.divf %1092, %1093 : vector<16x1xf32>
    %1095 = vector.broadcast %1087 : vector<16x1xf32> to vector<16x32xf32>
    %1096 = arith.subf %1081, %1095 : vector<16x32xf32>
    %cst_519 = arith.constant 9.99999974E-6 : f32
    %1097 = vector.broadcast %cst_519 : f32 to vector<16x1xf32>
    %1098 = arith.addf %1094, %1097 : vector<16x1xf32>
    %1099 = math.rsqrt %1098 : vector<16x1xf32>
    %1100 = vector.broadcast %1099 : vector<16x1xf32> to vector<16x32xf32>
    %1101 = arith.mulf %1096, %1100 : vector<16x32xf32>
    %1102 = vector.broadcast %1082 : vector<1x32xf32> to vector<16x32xf32>
    %1103 = arith.mulf %1101, %1102 : vector<16x32xf32>
    %1104 = vector.broadcast %1083 : vector<1x32xf32> to vector<16x32xf32>
    %1105 = arith.addf %1103, %1104 : vector<16x32xf32>
    %1106 = arith.truncf %1105 : vector<16x32xf32> to vector<16x32xbf16>
    %1107 = arith.truncf %483 : vector<16x32xf32> to vector<16x32xbf16>
    %c80_520 = arith.constant 80 : index
    %c0_521 = arith.constant 0 : index
    %c0_522 = arith.constant 0 : index
    %1108 = vector.load %arg3[%c80_520, %c0_521, %c0_522] : memref<96x32x8xbf16, #tpu.memory_space<vmem>>, vector<1x32x8xbf16>
    %1109 = vector.shape_cast %1108 : vector<1x32x8xbf16> to vector<32x8xbf16>
    %cst_523 = arith.constant dense<0.000000e+00> : vector<16x8xf32>
    %1110 = tpu.matmul %1106, %1109, %cst_523 {dimension_numbers = #tpu.dot_dimension_numbers<[1], [0], [0], [1], [0, 0, 1, 1], [], []>} : vector<16x32xbf16>, vector<32x8xbf16>, vector<16x8xf32> -> vector<16x8xf32>
    %c129 = arith.constant 129 : index
    %c0_524 = arith.constant 0 : index
    %1111 = vector.load %arg5[%c129, %c0_524] : memref<170x64xf32, #tpu.memory_space<vmem>>, vector<1x8xf32>
    %1112 = vector.broadcast %1111 : vector<1x8xf32> to vector<16x8xf32>
    %1113 = arith.addf %1110, %1112 : vector<16x8xf32>
    %c84_525 = arith.constant 84 : index
    %c0_526 = arith.constant 0 : index
    %c0_527 = arith.constant 0 : index
    %1114 = vector.load %arg3[%c84_525, %c0_526, %c0_527] : memref<96x32x8xbf16, #tpu.memory_space<vmem>>, vector<1x32x8xbf16>
    %1115 = vector.shape_cast %1114 : vector<1x32x8xbf16> to vector<32x8xbf16>
    %cst_528 = arith.constant dense<0.000000e+00> : vector<16x8xf32>
    %1116 = tpu.matmul %1107, %1115, %cst_528 {dimension_numbers = #tpu.dot_dimension_numbers<[1], [0], [0], [1], [0, 0, 1, 1], [], []>} : vector<16x32xbf16>, vector<32x8xbf16>, vector<16x8xf32> -> vector<16x8xf32>
    %c133 = arith.constant 133 : index
    %c0_529 = arith.constant 0 : index
    %1117 = vector.load %arg5[%c133, %c0_529] : memref<170x64xf32, #tpu.memory_space<vmem>>, vector<1x8xf32>
    %1118 = vector.broadcast %1117 : vector<1x8xf32> to vector<16x8xf32>
    %1119 = arith.addf %1116, %1118 : vector<16x8xf32>
    %c88_530 = arith.constant 88 : index
    %c0_531 = arith.constant 0 : index
    %c0_532 = arith.constant 0 : index
    %1120 = vector.load %arg3[%c88_530, %c0_531, %c0_532] : memref<96x32x8xbf16, #tpu.memory_space<vmem>>, vector<1x32x8xbf16>
    %1121 = vector.shape_cast %1120 : vector<1x32x8xbf16> to vector<32x8xbf16>
    %cst_533 = arith.constant dense<0.000000e+00> : vector<16x8xf32>
    %1122 = tpu.matmul %1107, %1121, %cst_533 {dimension_numbers = #tpu.dot_dimension_numbers<[1], [0], [0], [1], [0, 0, 1, 1], [], []>} : vector<16x32xbf16>, vector<32x8xbf16>, vector<16x8xf32> -> vector<16x8xf32>
    %c137 = arith.constant 137 : index
    %c0_534 = arith.constant 0 : index
    %1123 = vector.load %arg5[%c137, %c0_534] : memref<170x64xf32, #tpu.memory_space<vmem>>, vector<1x8xf32>
    %1124 = vector.broadcast %1123 : vector<1x8xf32> to vector<16x8xf32>
    %1125 = arith.addf %1122, %1124 : vector<16x8xf32>
    %1126 = arith.truncf %1113 : vector<16x8xf32> to vector<16x8xbf16>
    %1127 = arith.truncf %1119 : vector<16x8xf32> to vector<16x8xbf16>
    %cst_535 = arith.constant dense<0.000000e+00> : vector<16x16xf32>
    %1128 = tpu.matmul %1126, %1127, %cst_535 {dimension_numbers = #tpu.dot_dimension_numbers<[1], [1], [0], [0], [0, 0, 1, 0], [], []>} : vector<16x8xbf16>, vector<16x8xbf16>, vector<16x16xf32> -> vector<16x16xf32>
    %cst_536 = arith.constant 0.353553385 : f32
    %1129 = vector.broadcast %cst_536 : f32 to vector<16x16xf32>
    %1130 = arith.mulf %1128, %1129 : vector<16x16xf32>
    %1131 = arith.addf %1130, %15 : vector<16x16xf32>
    %cst_537 = arith.constant dense<0xFF800000> : vector<16xf32>
    %1132 = vector.multi_reduction <maximumf>, %1131, %cst_537 [1] : vector<16x16xf32> to vector<16xf32>
    %1133 = vector.shape_cast %1132 : vector<16xf32> to vector<16x1xf32>
    %1134 = vector.broadcast %1133 : vector<16x1xf32> to vector<16x16xf32>
    %1135 = arith.subf %1131, %1134 : vector<16x16xf32>
    %1136 = math.exp %1135 : vector<16x16xf32>
    %cst_538 = arith.constant dense<0.000000e+00> : vector<16xf32>
    %1137 = vector.multi_reduction <add>, %1136, %cst_538 [1] : vector<16x16xf32> to vector<16xf32>
    %1138 = vector.shape_cast %1137 : vector<16xf32> to vector<16x1xf32>
    %1139 = vector.broadcast %1138 : vector<16x1xf32> to vector<16x16xf32>
    %1140 = arith.divf %1136, %1139 : vector<16x16xf32>
    %1141 = arith.truncf %1140 : vector<16x16xf32> to vector<16x16xbf16>
    %1142 = arith.truncf %1125 : vector<16x8xf32> to vector<16x8xbf16>
    %cst_539 = arith.constant dense<0.000000e+00> : vector<16x8xf32>
    %1143 = tpu.matmul %1141, %1142, %cst_539 {dimension_numbers = #tpu.dot_dimension_numbers<[1], [0], [0], [1], [0, 0, 1, 1], [], []>} : vector<16x16xbf16>, vector<16x8xbf16>, vector<16x8xf32> -> vector<16x8xf32>
    %1144 = arith.truncf %1143 : vector<16x8xf32> to vector<16x8xbf16>
    %c92_540 = arith.constant 92 : index
    %c0_541 = arith.constant 0 : index
    %c0_542 = arith.constant 0 : index
    %1145 = vector.load %arg3[%c92_540, %c0_541, %c0_542] : memref<96x32x8xbf16, #tpu.memory_space<vmem>>, vector<1x32x8xbf16>
    %1146 = vector.shape_cast %1145 : vector<1x32x8xbf16> to vector<32x8xbf16>
    %cst_543 = arith.constant dense<0.000000e+00> : vector<16x32xf32>
    %1147 = tpu.matmul %1144, %1146, %cst_543 {dimension_numbers = #tpu.dot_dimension_numbers<[1], [1], [0], [0], [0, 0, 1, 0], [], []>} : vector<16x8xbf16>, vector<32x8xbf16>, vector<16x32xf32> -> vector<16x32xf32>
    %c81_544 = arith.constant 81 : index
    %c0_545 = arith.constant 0 : index
    %c0_546 = arith.constant 0 : index
    %1148 = vector.load %arg3[%c81_544, %c0_545, %c0_546] : memref<96x32x8xbf16, #tpu.memory_space<vmem>>, vector<1x32x8xbf16>
    %1149 = vector.shape_cast %1148 : vector<1x32x8xbf16> to vector<32x8xbf16>
    %cst_547 = arith.constant dense<0.000000e+00> : vector<16x8xf32>
    %1150 = tpu.matmul %1106, %1149, %cst_547 {dimension_numbers = #tpu.dot_dimension_numbers<[1], [0], [0], [1], [0, 0, 1, 1], [], []>} : vector<16x32xbf16>, vector<32x8xbf16>, vector<16x8xf32> -> vector<16x8xf32>
    %c130 = arith.constant 130 : index
    %c0_548 = arith.constant 0 : index
    %1151 = vector.load %arg5[%c130, %c0_548] : memref<170x64xf32, #tpu.memory_space<vmem>>, vector<1x8xf32>
    %1152 = vector.broadcast %1151 : vector<1x8xf32> to vector<16x8xf32>
    %1153 = arith.addf %1150, %1152 : vector<16x8xf32>
    %c85_549 = arith.constant 85 : index
    %c0_550 = arith.constant 0 : index
    %c0_551 = arith.constant 0 : index
    %1154 = vector.load %arg3[%c85_549, %c0_550, %c0_551] : memref<96x32x8xbf16, #tpu.memory_space<vmem>>, vector<1x32x8xbf16>
    %1155 = vector.shape_cast %1154 : vector<1x32x8xbf16> to vector<32x8xbf16>
    %cst_552 = arith.constant dense<0.000000e+00> : vector<16x8xf32>
    %1156 = tpu.matmul %1107, %1155, %cst_552 {dimension_numbers = #tpu.dot_dimension_numbers<[1], [0], [0], [1], [0, 0, 1, 1], [], []>} : vector<16x32xbf16>, vector<32x8xbf16>, vector<16x8xf32> -> vector<16x8xf32>
    %c134 = arith.constant 134 : index
    %c0_553 = arith.constant 0 : index
    %1157 = vector.load %arg5[%c134, %c0_553] : memref<170x64xf32, #tpu.memory_space<vmem>>, vector<1x8xf32>
    %1158 = vector.broadcast %1157 : vector<1x8xf32> to vector<16x8xf32>
    %1159 = arith.addf %1156, %1158 : vector<16x8xf32>
    %c89_554 = arith.constant 89 : index
    %c0_555 = arith.constant 0 : index
    %c0_556 = arith.constant 0 : index
    %1160 = vector.load %arg3[%c89_554, %c0_555, %c0_556] : memref<96x32x8xbf16, #tpu.memory_space<vmem>>, vector<1x32x8xbf16>
    %1161 = vector.shape_cast %1160 : vector<1x32x8xbf16> to vector<32x8xbf16>
    %cst_557 = arith.constant dense<0.000000e+00> : vector<16x8xf32>
    %1162 = tpu.matmul %1107, %1161, %cst_557 {dimension_numbers = #tpu.dot_dimension_numbers<[1], [0], [0], [1], [0, 0, 1, 1], [], []>} : vector<16x32xbf16>, vector<32x8xbf16>, vector<16x8xf32> -> vector<16x8xf32>
    %c138 = arith.constant 138 : index
    %c0_558 = arith.constant 0 : index
    %1163 = vector.load %arg5[%c138, %c0_558] : memref<170x64xf32, #tpu.memory_space<vmem>>, vector<1x8xf32>
    %1164 = vector.broadcast %1163 : vector<1x8xf32> to vector<16x8xf32>
    %1165 = arith.addf %1162, %1164 : vector<16x8xf32>
    %1166 = arith.truncf %1153 : vector<16x8xf32> to vector<16x8xbf16>
    %1167 = arith.truncf %1159 : vector<16x8xf32> to vector<16x8xbf16>
    %cst_559 = arith.constant dense<0.000000e+00> : vector<16x16xf32>
    %1168 = tpu.matmul %1166, %1167, %cst_559 {dimension_numbers = #tpu.dot_dimension_numbers<[1], [1], [0], [0], [0, 0, 1, 0], [], []>} : vector<16x8xbf16>, vector<16x8xbf16>, vector<16x16xf32> -> vector<16x16xf32>
    %cst_560 = arith.constant 0.353553385 : f32
    %1169 = vector.broadcast %cst_560 : f32 to vector<16x16xf32>
    %1170 = arith.mulf %1168, %1169 : vector<16x16xf32>
    %1171 = arith.addf %1170, %15 : vector<16x16xf32>
    %cst_561 = arith.constant dense<0xFF800000> : vector<16xf32>
    %1172 = vector.multi_reduction <maximumf>, %1171, %cst_561 [1] : vector<16x16xf32> to vector<16xf32>
    %1173 = vector.shape_cast %1172 : vector<16xf32> to vector<16x1xf32>
    %1174 = vector.broadcast %1173 : vector<16x1xf32> to vector<16x16xf32>
    %1175 = arith.subf %1171, %1174 : vector<16x16xf32>
    %1176 = math.exp %1175 : vector<16x16xf32>
    %cst_562 = arith.constant dense<0.000000e+00> : vector<16xf32>
    %1177 = vector.multi_reduction <add>, %1176, %cst_562 [1] : vector<16x16xf32> to vector<16xf32>
    %1178 = vector.shape_cast %1177 : vector<16xf32> to vector<16x1xf32>
    %1179 = vector.broadcast %1178 : vector<16x1xf32> to vector<16x16xf32>
    %1180 = arith.divf %1176, %1179 : vector<16x16xf32>
    %1181 = arith.truncf %1180 : vector<16x16xf32> to vector<16x16xbf16>
    %1182 = arith.truncf %1165 : vector<16x8xf32> to vector<16x8xbf16>
    %cst_563 = arith.constant dense<0.000000e+00> : vector<16x8xf32>
    %1183 = tpu.matmul %1181, %1182, %cst_563 {dimension_numbers = #tpu.dot_dimension_numbers<[1], [0], [0], [1], [0, 0, 1, 1], [], []>} : vector<16x16xbf16>, vector<16x8xbf16>, vector<16x8xf32> -> vector<16x8xf32>
    %1184 = arith.truncf %1183 : vector<16x8xf32> to vector<16x8xbf16>
    %c93_564 = arith.constant 93 : index
    %c0_565 = arith.constant 0 : index
    %c0_566 = arith.constant 0 : index
    %1185 = vector.load %arg3[%c93_564, %c0_565, %c0_566] : memref<96x32x8xbf16, #tpu.memory_space<vmem>>, vector<1x32x8xbf16>
    %1186 = vector.shape_cast %1185 : vector<1x32x8xbf16> to vector<32x8xbf16>
    %cst_567 = arith.constant dense<0.000000e+00> : vector<16x32xf32>
    %1187 = tpu.matmul %1184, %1186, %cst_567 {dimension_numbers = #tpu.dot_dimension_numbers<[1], [1], [0], [0], [0, 0, 1, 0], [], []>} : vector<16x8xbf16>, vector<32x8xbf16>, vector<16x32xf32> -> vector<16x32xf32>
    %1188 = arith.addf %1147, %1187 : vector<16x32xf32>
    %c82_568 = arith.constant 82 : index
    %c0_569 = arith.constant 0 : index
    %c0_570 = arith.constant 0 : index
    %1189 = vector.load %arg3[%c82_568, %c0_569, %c0_570] : memref<96x32x8xbf16, #tpu.memory_space<vmem>>, vector<1x32x8xbf16>
    %1190 = vector.shape_cast %1189 : vector<1x32x8xbf16> to vector<32x8xbf16>
    %cst_571 = arith.constant dense<0.000000e+00> : vector<16x8xf32>
    %1191 = tpu.matmul %1106, %1190, %cst_571 {dimension_numbers = #tpu.dot_dimension_numbers<[1], [0], [0], [1], [0, 0, 1, 1], [], []>} : vector<16x32xbf16>, vector<32x8xbf16>, vector<16x8xf32> -> vector<16x8xf32>
    %c131 = arith.constant 131 : index
    %c0_572 = arith.constant 0 : index
    %1192 = vector.load %arg5[%c131, %c0_572] : memref<170x64xf32, #tpu.memory_space<vmem>>, vector<1x8xf32>
    %1193 = vector.broadcast %1192 : vector<1x8xf32> to vector<16x8xf32>
    %1194 = arith.addf %1191, %1193 : vector<16x8xf32>
    %c86_573 = arith.constant 86 : index
    %c0_574 = arith.constant 0 : index
    %c0_575 = arith.constant 0 : index
    %1195 = vector.load %arg3[%c86_573, %c0_574, %c0_575] : memref<96x32x8xbf16, #tpu.memory_space<vmem>>, vector<1x32x8xbf16>
    %1196 = vector.shape_cast %1195 : vector<1x32x8xbf16> to vector<32x8xbf16>
    %cst_576 = arith.constant dense<0.000000e+00> : vector<16x8xf32>
    %1197 = tpu.matmul %1107, %1196, %cst_576 {dimension_numbers = #tpu.dot_dimension_numbers<[1], [0], [0], [1], [0, 0, 1, 1], [], []>} : vector<16x32xbf16>, vector<32x8xbf16>, vector<16x8xf32> -> vector<16x8xf32>
    %c135 = arith.constant 135 : index
    %c0_577 = arith.constant 0 : index
    %1198 = vector.load %arg5[%c135, %c0_577] : memref<170x64xf32, #tpu.memory_space<vmem>>, vector<1x8xf32>
    %1199 = vector.broadcast %1198 : vector<1x8xf32> to vector<16x8xf32>
    %1200 = arith.addf %1197, %1199 : vector<16x8xf32>
    %c90_578 = arith.constant 90 : index
    %c0_579 = arith.constant 0 : index
    %c0_580 = arith.constant 0 : index
    %1201 = vector.load %arg3[%c90_578, %c0_579, %c0_580] : memref<96x32x8xbf16, #tpu.memory_space<vmem>>, vector<1x32x8xbf16>
    %1202 = vector.shape_cast %1201 : vector<1x32x8xbf16> to vector<32x8xbf16>
    %cst_581 = arith.constant dense<0.000000e+00> : vector<16x8xf32>
    %1203 = tpu.matmul %1107, %1202, %cst_581 {dimension_numbers = #tpu.dot_dimension_numbers<[1], [0], [0], [1], [0, 0, 1, 1], [], []>} : vector<16x32xbf16>, vector<32x8xbf16>, vector<16x8xf32> -> vector<16x8xf32>
    %c139 = arith.constant 139 : index
    %c0_582 = arith.constant 0 : index
    %1204 = vector.load %arg5[%c139, %c0_582] : memref<170x64xf32, #tpu.memory_space<vmem>>, vector<1x8xf32>
    %1205 = vector.broadcast %1204 : vector<1x8xf32> to vector<16x8xf32>
    %1206 = arith.addf %1203, %1205 : vector<16x8xf32>
    %1207 = arith.truncf %1194 : vector<16x8xf32> to vector<16x8xbf16>
    %1208 = arith.truncf %1200 : vector<16x8xf32> to vector<16x8xbf16>
    %cst_583 = arith.constant dense<0.000000e+00> : vector<16x16xf32>
    %1209 = tpu.matmul %1207, %1208, %cst_583 {dimension_numbers = #tpu.dot_dimension_numbers<[1], [1], [0], [0], [0, 0, 1, 0], [], []>} : vector<16x8xbf16>, vector<16x8xbf16>, vector<16x16xf32> -> vector<16x16xf32>
    %cst_584 = arith.constant 0.353553385 : f32
    %1210 = vector.broadcast %cst_584 : f32 to vector<16x16xf32>
    %1211 = arith.mulf %1209, %1210 : vector<16x16xf32>
    %1212 = arith.addf %1211, %15 : vector<16x16xf32>
    %cst_585 = arith.constant dense<0xFF800000> : vector<16xf32>
    %1213 = vector.multi_reduction <maximumf>, %1212, %cst_585 [1] : vector<16x16xf32> to vector<16xf32>
    %1214 = vector.shape_cast %1213 : vector<16xf32> to vector<16x1xf32>
    %1215 = vector.broadcast %1214 : vector<16x1xf32> to vector<16x16xf32>
    %1216 = arith.subf %1212, %1215 : vector<16x16xf32>
    %1217 = math.exp %1216 : vector<16x16xf32>
    %cst_586 = arith.constant dense<0.000000e+00> : vector<16xf32>
    %1218 = vector.multi_reduction <add>, %1217, %cst_586 [1] : vector<16x16xf32> to vector<16xf32>
    %1219 = vector.shape_cast %1218 : vector<16xf32> to vector<16x1xf32>
    %1220 = vector.broadcast %1219 : vector<16x1xf32> to vector<16x16xf32>
    %1221 = arith.divf %1217, %1220 : vector<16x16xf32>
    %1222 = arith.truncf %1221 : vector<16x16xf32> to vector<16x16xbf16>
    %1223 = arith.truncf %1206 : vector<16x8xf32> to vector<16x8xbf16>
    %cst_587 = arith.constant dense<0.000000e+00> : vector<16x8xf32>
    %1224 = tpu.matmul %1222, %1223, %cst_587 {dimension_numbers = #tpu.dot_dimension_numbers<[1], [0], [0], [1], [0, 0, 1, 1], [], []>} : vector<16x16xbf16>, vector<16x8xbf16>, vector<16x8xf32> -> vector<16x8xf32>
    %1225 = arith.truncf %1224 : vector<16x8xf32> to vector<16x8xbf16>
    %c94_588 = arith.constant 94 : index
    %c0_589 = arith.constant 0 : index
    %c0_590 = arith.constant 0 : index
    %1226 = vector.load %arg3[%c94_588, %c0_589, %c0_590] : memref<96x32x8xbf16, #tpu.memory_space<vmem>>, vector<1x32x8xbf16>
    %1227 = vector.shape_cast %1226 : vector<1x32x8xbf16> to vector<32x8xbf16>
    %cst_591 = arith.constant dense<0.000000e+00> : vector<16x32xf32>
    %1228 = tpu.matmul %1225, %1227, %cst_591 {dimension_numbers = #tpu.dot_dimension_numbers<[1], [1], [0], [0], [0, 0, 1, 0], [], []>} : vector<16x8xbf16>, vector<32x8xbf16>, vector<16x32xf32> -> vector<16x32xf32>
    %1229 = arith.addf %1188, %1228 : vector<16x32xf32>
    %c83_592 = arith.constant 83 : index
    %c0_593 = arith.constant 0 : index
    %c0_594 = arith.constant 0 : index
    %1230 = vector.load %arg3[%c83_592, %c0_593, %c0_594] : memref<96x32x8xbf16, #tpu.memory_space<vmem>>, vector<1x32x8xbf16>
    %1231 = vector.shape_cast %1230 : vector<1x32x8xbf16> to vector<32x8xbf16>
    %cst_595 = arith.constant dense<0.000000e+00> : vector<16x8xf32>
    %1232 = tpu.matmul %1106, %1231, %cst_595 {dimension_numbers = #tpu.dot_dimension_numbers<[1], [0], [0], [1], [0, 0, 1, 1], [], []>} : vector<16x32xbf16>, vector<32x8xbf16>, vector<16x8xf32> -> vector<16x8xf32>
    %c132 = arith.constant 132 : index
    %c0_596 = arith.constant 0 : index
    %1233 = vector.load %arg5[%c132, %c0_596] : memref<170x64xf32, #tpu.memory_space<vmem>>, vector<1x8xf32>
    %1234 = vector.broadcast %1233 : vector<1x8xf32> to vector<16x8xf32>
    %1235 = arith.addf %1232, %1234 : vector<16x8xf32>
    %c87_597 = arith.constant 87 : index
    %c0_598 = arith.constant 0 : index
    %c0_599 = arith.constant 0 : index
    %1236 = vector.load %arg3[%c87_597, %c0_598, %c0_599] : memref<96x32x8xbf16, #tpu.memory_space<vmem>>, vector<1x32x8xbf16>
    %1237 = vector.shape_cast %1236 : vector<1x32x8xbf16> to vector<32x8xbf16>
    %cst_600 = arith.constant dense<0.000000e+00> : vector<16x8xf32>
    %1238 = tpu.matmul %1107, %1237, %cst_600 {dimension_numbers = #tpu.dot_dimension_numbers<[1], [0], [0], [1], [0, 0, 1, 1], [], []>} : vector<16x32xbf16>, vector<32x8xbf16>, vector<16x8xf32> -> vector<16x8xf32>
    %c136 = arith.constant 136 : index
    %c0_601 = arith.constant 0 : index
    %1239 = vector.load %arg5[%c136, %c0_601] : memref<170x64xf32, #tpu.memory_space<vmem>>, vector<1x8xf32>
    %1240 = vector.broadcast %1239 : vector<1x8xf32> to vector<16x8xf32>
    %1241 = arith.addf %1238, %1240 : vector<16x8xf32>
    %c91_602 = arith.constant 91 : index
    %c0_603 = arith.constant 0 : index
    %c0_604 = arith.constant 0 : index
    %1242 = vector.load %arg3[%c91_602, %c0_603, %c0_604] : memref<96x32x8xbf16, #tpu.memory_space<vmem>>, vector<1x32x8xbf16>
    %1243 = vector.shape_cast %1242 : vector<1x32x8xbf16> to vector<32x8xbf16>
    %cst_605 = arith.constant dense<0.000000e+00> : vector<16x8xf32>
    %1244 = tpu.matmul %1107, %1243, %cst_605 {dimension_numbers = #tpu.dot_dimension_numbers<[1], [0], [0], [1], [0, 0, 1, 1], [], []>} : vector<16x32xbf16>, vector<32x8xbf16>, vector<16x8xf32> -> vector<16x8xf32>
    %c140 = arith.constant 140 : index
    %c0_606 = arith.constant 0 : index
    %1245 = vector.load %arg5[%c140, %c0_606] : memref<170x64xf32, #tpu.memory_space<vmem>>, vector<1x8xf32>
    %1246 = vector.broadcast %1245 : vector<1x8xf32> to vector<16x8xf32>
    %1247 = arith.addf %1244, %1246 : vector<16x8xf32>
    %1248 = arith.truncf %1235 : vector<16x8xf32> to vector<16x8xbf16>
    %1249 = arith.truncf %1241 : vector<16x8xf32> to vector<16x8xbf16>
    %cst_607 = arith.constant dense<0.000000e+00> : vector<16x16xf32>
    %1250 = tpu.matmul %1248, %1249, %cst_607 {dimension_numbers = #tpu.dot_dimension_numbers<[1], [1], [0], [0], [0, 0, 1, 0], [], []>} : vector<16x8xbf16>, vector<16x8xbf16>, vector<16x16xf32> -> vector<16x16xf32>
    %cst_608 = arith.constant 0.353553385 : f32
    %1251 = vector.broadcast %cst_608 : f32 to vector<16x16xf32>
    %1252 = arith.mulf %1250, %1251 : vector<16x16xf32>
    %1253 = arith.addf %1252, %15 : vector<16x16xf32>
    %cst_609 = arith.constant dense<0xFF800000> : vector<16xf32>
    %1254 = vector.multi_reduction <maximumf>, %1253, %cst_609 [1] : vector<16x16xf32> to vector<16xf32>
    %1255 = vector.shape_cast %1254 : vector<16xf32> to vector<16x1xf32>
    %1256 = vector.broadcast %1255 : vector<16x1xf32> to vector<16x16xf32>
    %1257 = arith.subf %1253, %1256 : vector<16x16xf32>
    %1258 = math.exp %1257 : vector<16x16xf32>
    %cst_610 = arith.constant dense<0.000000e+00> : vector<16xf32>
    %1259 = vector.multi_reduction <add>, %1258, %cst_610 [1] : vector<16x16xf32> to vector<16xf32>
    %1260 = vector.shape_cast %1259 : vector<16xf32> to vector<16x1xf32>
    %1261 = vector.broadcast %1260 : vector<16x1xf32> to vector<16x16xf32>
    %1262 = arith.divf %1258, %1261 : vector<16x16xf32>
    %1263 = arith.truncf %1262 : vector<16x16xf32> to vector<16x16xbf16>
    %1264 = arith.truncf %1247 : vector<16x8xf32> to vector<16x8xbf16>
    %cst_611 = arith.constant dense<0.000000e+00> : vector<16x8xf32>
    %1265 = tpu.matmul %1263, %1264, %cst_611 {dimension_numbers = #tpu.dot_dimension_numbers<[1], [0], [0], [1], [0, 0, 1, 1], [], []>} : vector<16x16xbf16>, vector<16x8xbf16>, vector<16x8xf32> -> vector<16x8xf32>
    %1266 = arith.truncf %1265 : vector<16x8xf32> to vector<16x8xbf16>
    %c95_612 = arith.constant 95 : index
    %c0_613 = arith.constant 0 : index
    %c0_614 = arith.constant 0 : index
    %1267 = vector.load %arg3[%c95_612, %c0_613, %c0_614] : memref<96x32x8xbf16, #tpu.memory_space<vmem>>, vector<1x32x8xbf16>
    %1268 = vector.shape_cast %1267 : vector<1x32x8xbf16> to vector<32x8xbf16>
    %cst_615 = arith.constant dense<0.000000e+00> : vector<16x32xf32>
    %1269 = tpu.matmul %1266, %1268, %cst_615 {dimension_numbers = #tpu.dot_dimension_numbers<[1], [1], [0], [0], [0, 0, 1, 0], [], []>} : vector<16x8xbf16>, vector<32x8xbf16>, vector<16x32xf32> -> vector<16x32xf32>
    %1270 = arith.addf %1229, %1269 : vector<16x32xf32>
    %c141 = arith.constant 141 : index
    %c0_616 = arith.constant 0 : index
    %1271 = vector.load %arg5[%c141, %c0_616] : memref<170x64xf32, #tpu.memory_space<vmem>>, vector<1x32xf32>
    %1272 = vector.broadcast %1271 : vector<1x32xf32> to vector<16x32xf32>
    %1273 = arith.addf %1270, %1272 : vector<16x32xf32>
    %1274 = arith.addf %1105, %1273 : vector<16x32xf32>
    %c158 = arith.constant 158 : index
    %c0_617 = arith.constant 0 : index
    %1275 = vector.load %arg5[%c158, %c0_617] : memref<170x64xf32, #tpu.memory_space<vmem>>, vector<1x32xf32>
    %c159 = arith.constant 159 : index
    %c0_618 = arith.constant 0 : index
    %1276 = vector.load %arg5[%c159, %c0_618] : memref<170x64xf32, #tpu.memory_space<vmem>>, vector<1x32xf32>
    %cst_619 = arith.constant dense<0.000000e+00> : vector<16xf32>
    %1277 = vector.multi_reduction <add>, %1274, %cst_619 [1] : vector<16x32xf32> to vector<16xf32>
    %1278 = vector.shape_cast %1277 : vector<16xf32> to vector<16x1xf32>
    %cst_620 = arith.constant 3.200000e+01 : f32
    %1279 = vector.broadcast %cst_620 : f32 to vector<16x1xf32>
    %1280 = arith.divf %1278, %1279 : vector<16x1xf32>
    %1281 = vector.broadcast %1280 : vector<16x1xf32> to vector<16x32xf32>
    %1282 = arith.subf %1274, %1281 : vector<16x32xf32>
    %1283 = arith.mulf %1282, %1282 : vector<16x32xf32>
    %cst_621 = arith.constant dense<0.000000e+00> : vector<16xf32>
    %1284 = vector.multi_reduction <add>, %1283, %cst_621 [1] : vector<16x32xf32> to vector<16xf32>
    %1285 = vector.shape_cast %1284 : vector<16xf32> to vector<16x1xf32>
    %cst_622 = arith.constant 3.200000e+01 : f32
    %1286 = vector.broadcast %cst_622 : f32 to vector<16x1xf32>
    %1287 = arith.divf %1285, %1286 : vector<16x1xf32>
    %1288 = vector.broadcast %1280 : vector<16x1xf32> to vector<16x32xf32>
    %1289 = arith.subf %1274, %1288 : vector<16x32xf32>
    %cst_623 = arith.constant 9.99999974E-6 : f32
    %1290 = vector.broadcast %cst_623 : f32 to vector<16x1xf32>
    %1291 = arith.addf %1287, %1290 : vector<16x1xf32>
    %1292 = math.rsqrt %1291 : vector<16x1xf32>
    %1293 = vector.broadcast %1292 : vector<16x1xf32> to vector<16x32xf32>
    %1294 = arith.mulf %1289, %1293 : vector<16x32xf32>
    %1295 = vector.broadcast %1275 : vector<1x32xf32> to vector<16x32xf32>
    %1296 = arith.mulf %1294, %1295 : vector<16x32xf32>
    %1297 = vector.broadcast %1276 : vector<1x32xf32> to vector<16x32xf32>
    %1298 = arith.addf %1296, %1297 : vector<16x32xf32>
    %1299 = arith.truncf %1298 : vector<16x32xf32> to vector<16x32xbf16>
    %c6_624 = arith.constant 6 : index
    %c0_625 = arith.constant 0 : index
    %c0_626 = arith.constant 0 : index
    %1300 = vector.load %arg4[%c6_624, %c0_625, %c0_626] : memref<8x32x64xbf16, #tpu.memory_space<vmem>>, vector<1x32x64xbf16>
    %1301 = vector.shape_cast %1300 : vector<1x32x64xbf16> to vector<32x64xbf16>
    %c7_627 = arith.constant 7 : index
    %c0_628 = arith.constant 0 : index
    %c0_629 = arith.constant 0 : index
    %1302 = vector.load %arg4[%c7_627, %c0_628, %c0_629] : memref<8x32x64xbf16, #tpu.memory_space<vmem>>, vector<1x32x64xbf16>
    %1303 = vector.shape_cast %1302 : vector<1x32x64xbf16> to vector<32x64xbf16>
    %cst_630 = arith.constant dense<0.000000e+00> : vector<16x64xf32>
    %1304 = tpu.matmul %1299, %1301, %cst_630 {dimension_numbers = #tpu.dot_dimension_numbers<[1], [0], [0], [1], [0, 0, 1, 1], [], []>} : vector<16x32xbf16>, vector<32x64xbf16>, vector<16x64xf32> -> vector<16x64xf32>
    %c168 = arith.constant 168 : index
    %c0_631 = arith.constant 0 : index
    %1305 = vector.load %arg5[%c168, %c0_631] : memref<170x64xf32, #tpu.memory_space<vmem>>, vector<1x64xf32>
    %1306 = vector.broadcast %1305 : vector<1x64xf32> to vector<16x64xf32>
    %1307 = arith.addf %1304, %1306 : vector<16x64xf32>
    %cst_632 = arith.constant 0.000000e+00 : f32
    %1308 = vector.broadcast %cst_632 : f32 to vector<16x64xf32>
    %1309 = arith.maximumf %1307, %1308 : vector<16x64xf32>
    %1310 = arith.truncf %1309 : vector<16x64xf32> to vector<16x64xbf16>
    %cst_633 = arith.constant dense<0.000000e+00> : vector<16x32xf32>
    %1311 = tpu.matmul %1310, %1303, %cst_633 {dimension_numbers = #tpu.dot_dimension_numbers<[1], [1], [0], [0], [0, 0, 1, 0], [], []>} : vector<16x64xbf16>, vector<32x64xbf16>, vector<16x32xf32> -> vector<16x32xf32>
    %c169 = arith.constant 169 : index
    %c0_634 = arith.constant 0 : index
    %1312 = vector.load %arg5[%c169, %c0_634] : memref<170x64xf32, #tpu.memory_space<vmem>>, vector<1x32xf32>
    %1313 = vector.broadcast %1312 : vector<1x32xf32> to vector<16x32xf32>
    %1314 = arith.addf %1311, %1313 : vector<16x32xf32>
    %1315 = arith.addf %1298, %1314 : vector<16x32xf32>
    %c160 = arith.constant 160 : index
    %c0_635 = arith.constant 0 : index
    %1316 = vector.load %arg5[%c160, %c0_635] : memref<170x64xf32, #tpu.memory_space<vmem>>, vector<1x32xf32>
    %c161 = arith.constant 161 : index
    %c0_636 = arith.constant 0 : index
    %1317 = vector.load %arg5[%c161, %c0_636] : memref<170x64xf32, #tpu.memory_space<vmem>>, vector<1x32xf32>
    %cst_637 = arith.constant dense<0.000000e+00> : vector<16xf32>
    %1318 = vector.multi_reduction <add>, %1315, %cst_637 [1] : vector<16x32xf32> to vector<16xf32>
    %1319 = vector.shape_cast %1318 : vector<16xf32> to vector<16x1xf32>
    %cst_638 = arith.constant 3.200000e+01 : f32
    %1320 = vector.broadcast %cst_638 : f32 to vector<16x1xf32>
    %1321 = arith.divf %1319, %1320 : vector<16x1xf32>
    %1322 = vector.broadcast %1321 : vector<16x1xf32> to vector<16x32xf32>
    %1323 = arith.subf %1315, %1322 : vector<16x32xf32>
    %1324 = arith.mulf %1323, %1323 : vector<16x32xf32>
    %cst_639 = arith.constant dense<0.000000e+00> : vector<16xf32>
    %1325 = vector.multi_reduction <add>, %1324, %cst_639 [1] : vector<16x32xf32> to vector<16xf32>
    %1326 = vector.shape_cast %1325 : vector<16xf32> to vector<16x1xf32>
    %cst_640 = arith.constant 3.200000e+01 : f32
    %1327 = vector.broadcast %cst_640 : f32 to vector<16x1xf32>
    %1328 = arith.divf %1326, %1327 : vector<16x1xf32>
    %1329 = vector.broadcast %1321 : vector<16x1xf32> to vector<16x32xf32>
    %1330 = arith.subf %1315, %1329 : vector<16x32xf32>
    %cst_641 = arith.constant 9.99999974E-6 : f32
    %1331 = vector.broadcast %cst_641 : f32 to vector<16x1xf32>
    %1332 = arith.addf %1328, %1331 : vector<16x1xf32>
    %1333 = math.rsqrt %1332 : vector<16x1xf32>
    %1334 = vector.broadcast %1333 : vector<16x1xf32> to vector<16x32xf32>
    %1335 = arith.mulf %1330, %1334 : vector<16x32xf32>
    %1336 = vector.broadcast %1316 : vector<1x32xf32> to vector<16x32xf32>
    %1337 = arith.mulf %1335, %1336 : vector<16x32xf32>
    %1338 = vector.broadcast %1317 : vector<1x32xf32> to vector<16x32xf32>
    %1339 = arith.addf %1337, %1338 : vector<16x32xf32>
    %c0_642 = arith.constant 0 : index
    %c0_643 = arith.constant 0 : index
    %1340 = vector.load %arg6[%c0_642, %c0_643] : memref<16x32xf32, #tpu.memory_space<vmem>>, vector<16x32xf32>
    tpu.vector_store %arg6[%c0_642, %c0_643], %1339 {strides = array<i32>} : memref<16x32xf32, #tpu.memory_space<vmem>>, vector<16x32xf32>,
    return
  }
  func.func @transform_0(%arg0: i32) -> (i32, i32) {
    %c0_i32 = arith.constant 0 : i32
    %c0_i32_0 = arith.constant 0 : i32
    return %arg0, %c0_i32 : i32, i32
  }
  func.func @transform_1(%arg0: i32) -> (i32, i32) {
    %c0_i32 = arith.constant 0 : i32
    %c0_i32_0 = arith.constant 0 : i32
    return %arg0, %c0_i32 : i32, i32
  }
  func.func @transform_2(%arg0: i32) -> (i32, i32, i32) {
    %c0_i32 = arith.constant 0 : i32
    %c0_i32_0 = arith.constant 0 : i32
    %c0_i32_1 = arith.constant 0 : i32
    %c0_i32_2 = arith.constant 0 : i32
    return %c0_i32, %c0_i32_0, %c0_i32_1 : i32, i32, i32
  }
  func.func @transform_3(%arg0: i32) -> (i32, i32, i32) {
    %c0_i32 = arith.constant 0 : i32
    %c0_i32_0 = arith.constant 0 : i32
    %c0_i32_1 = arith.constant 0 : i32
    %c0_i32_2 = arith.constant 0 : i32
    return %c0_i32, %c0_i32_0, %c0_i32_1 : i32, i32, i32
  }
  func.func @transform_4(%arg0: i32) -> (i32, i32) {
    %c0_i32 = arith.constant 0 : i32
    %c0_i32_0 = arith.constant 0 : i32
    %c0_i32_1 = arith.constant 0 : i32
    return %c0_i32, %c0_i32_0 : i32, i32
  }
  func.func @transform_5(%arg0: i32) -> (i32, i32) {
    %c0_i32 = arith.constant 0 : i32
    %c0_i32_0 = arith.constant 0 : i32
    return %arg0, %c0_i32 : i32, i32
  }
}

</mosaic_0001>

<llo_original>
// kernel: transformer_forward.1
$region0: #{transformer_forward.1}
  #allocation0 [shape = 'u32[]', space=smem, size = 0x4, offset = 0x4, fixed_abs, tag = 'smem constant byte address 0x4 - core index']
  #allocation1 [shape = 'u32[72,128]{1,0:T(1,128)}', space=vmem, size = 0x9000, scoped, tag = 'internal scratch']
  %s0 = inlined_call_operand.vmem [shape: f32[16,32], index: 0, kind: input, shape index: {}]
  %s1 = inlined_call_operand.vmem [shape: f32[16,32], index: 1, kind: input, shape index: {}]
  %s2 = inlined_call_operand.vmem [shape: bf16[96,32,8], index: 2, kind: input, shape index: {}]
  %s3 = inlined_call_operand.vmem [shape: bf16[8,32,64], index: 3, kind: input, shape index: {}]
  %s4 = inlined_call_operand.vmem [shape: f32[170,64], index: 4, kind: input, shape index: {}]
  %s5 = inlined_call_operand.vmem [shape: f32[16,32], index: 5, kind: output, shape index: {}]
  %s6 = sld [smem:[#allocation0]]
  $region30: #{transformer_forward.1} parent=0
    _
  %s8 = ssub.s32 1, %s6
  %s9 = scalar_select 0, %s8, %s6
  // Predicated region
  $region2: #{transformer_forward.1} parent=0 // pred_check
    _
  $region3: #{transformer_forward.1} parent=0 // pred_check_branch
    %11 = sbr.rel (0) target = $region5
  $region4: #{transformer_forward.1} parent=0 // pred_region
    _
  $region5: #{transformer_forward.1} parent=0 // pred_fallthru
    _
  // Predicated region
  $region6: #{transformer_forward.1} parent=0 // pred_check
    _
  $region7: #{transformer_forward.1} parent=0 // pred_check_branch
    %13 = sbr.rel (0) target = $region9
  $region8: #{transformer_forward.1} parent=0 // pred_region
    _
  $region9: #{transformer_forward.1} parent=0 // pred_fallthru
    _
  // Predicated region
  $region10: #{transformer_forward.1} parent=0 // pred_check
    _
  $region11: #{transformer_forward.1} parent=0 // pred_check_branch
    %15 = sbr.rel (0) target = $region13
  $region12: #{transformer_forward.1} parent=0 // pred_region
    _
  $region13: #{transformer_forward.1} parent=0 // pred_fallthru
    _
  // Predicated region
  $region14: #{transformer_forward.1} parent=0 // pred_check
    _
  $region15: #{transformer_forward.1} parent=0 // pred_check_branch
    %17 = sbr.rel (0) target = $region17
  $region16: #{transformer_forward.1} parent=0 // pred_region
    _
  $region17: #{transformer_forward.1} parent=0 // pred_fallthru
    _
  // Predicated region
  $region18: #{transformer_forward.1} parent=0 // pred_check
    _
  $region19: #{transformer_forward.1} parent=0 // pred_check_branch
    %19 = sbr.rel (0) target = $region21
  $region20: #{transformer_forward.1} parent=0 // pred_region
    _
  $region21: #{transformer_forward.1} parent=0 // pred_fallthru
    _
  %v21 = vld [vmem:[%s4] sm:$0xff]
  %v22 = vld [vmem:[%s0] sm:$0xff]
  %v23 = vld [vmem:[%s0 + $0x8] sm:$0xff]
  %v24 = vadd.f32 %v22, %v21
  %v25 = vadd.f32 %v23, %v21
  %v26 = vlaneseq
  %v27 = vshrl.u32 %v26, 7
  %v28 = vadd.s32 %v27, 8
  %v29 = vlaneseq
  %v30 = vand.u32 %v29, 127
  %v31 = vshra.s32 %v27, 3
  %v32 = vshra.s32 %v28, 3
  %v33 = vshra.s32 %v30, 3
  %vm34 = vcmp.eq.s32.totalorder %v31, %v33
  %vm35 = vcmp.eq.s32.totalorder %v32, %v33
  %v36 = vsel %vm34, 0.0, -1e+30
  %v37 = vsel %vm35, 0.0, -1e+30
  %v38 = vpack.c.bf16 %v25, %v24
  %v39 = vld [vmem:[%s2] sm:$0xf]
  %v40 = vld [vmem:[%s2 + $0x4] sm:$0xf]
  %v41 = vld [vmem:[%s2 + $0x8] sm:$0xf]
  %v42 = vld [vmem:[%s2 + $0xc] sm:$0xf]
  %v43 = vld [vmem:[%s4 + $0x40] sm:$0x1]
  %v44 = vperm.slane %v43, 0
  %v49 = vunpack.c.l.b16 %v39
  %v50 = vunpack.c.l.b16 %v40
  %v51 = vunpack.c.l.b16 %v41
  %v52 = vunpack.c.l.b16 %v42
  %v53 = vpack.c.b16 %v50, %v49
  %v54 = vpack.c.b16 %v52, %v51
  %vm57 = vcmask 261120
  %v59 = vsel %vm57, %v38, 0
  %61 = vmatpush.bf16.msra.mxu0 0
  %62 = vmatpush.bf16.msra.mxu0 0
  %63 = vmatpush.bf16.msra.mxu0 0
  %64 = vmatpush.bf16.msra.mxu0 0
  %65 = vmatpush.bf16.msra.mxu0 0
  %66 = vmatpush.bf16.msra.mxu0 0
  %67 = vmatpush.bf16.msra.mxu0 %v54
  %68 = vmatpush.bf16.msra.mxu0 %v53
  %69 = vmatmul.bf16.gmra.mxu0 %v59
  %v70 = vpop.f32.mrf.mxu0
  %v71 = vadd.f32 %v44, %v70
  %v72 = vpop.f32.mrf.mxu0
  %v73 = vadd.f32 %v44, %v72
  %74 = vdwg.mxu0
  %s75 = scalar_lea.vmem %s2, 64
  %v76 = vld [vmem:[%s75] sm:$0xf]
  %v77 = vld [vmem:[%s75 + $0x4] sm:$0xf]
  %v78 = vld [vmem:[%s75 + $0x8] sm:$0xf]
  %v79 = vld [vmem:[%s75 + $0xc] sm:$0xf]
  %v80 = vld [vmem:[%s4 + $0x44] sm:$0x1]
  %v81 = vperm.slane %v80, 0
  %v86 = vunpack.c.l.b16 %v76
  %v87 = vunpack.c.l.b16 %v77
  %v88 = vunpack.c.l.b16 %v78
  %v89 = vunpack.c.l.b16 %v79
  %v90 = vpack.c.b16 %v87, %v86
  %v91 = vpack.c.b16 %v89, %v88
  %94 = vmatpush.bf16.msra.mxu0 0
  %95 = vmatpush.bf16.msra.mxu0 0
  %96 = vmatpush.bf16.msra.mxu0 0
  %97 = vmatpush.bf16.msra.mxu0 0
  %98 = vmatpush.bf16.msra.mxu0 0
  %99 = vmatpush.bf16.msra.mxu0 0
  %100 = vmatpush.bf16.msra.mxu0 %v91
  %101 = vmatpush.bf16.msra.mxu0 %v90
  %102 = vmatmul.bf16.gmra.mxu0 %v59
  %v103 = vpop.f32.mrf.mxu0
  %v104 = vadd.f32 %v81, %v103
  %v105 = vpop.f32.mrf.mxu0
  %v106 = vadd.f32 %v81, %v105
  %107 = vdwg.mxu0
  %s108 = scalar_lea.vmem %s2, 128
  %v109 = vld [vmem:[%s108] sm:$0xf]
  %v110 = vld [vmem:[%s108 + $0x4] sm:$0xf]
  %v111 = vld [vmem:[%s108 + $0x8] sm:$0xf]
  %v112 = vld [vmem:[%s108 + $0xc] sm:$0xf]
  %v113 = vld [vmem:[%s4 + $0x48] sm:$0x1]
  %v114 = vperm.slane %v113, 0
  %v119 = vunpack.c.l.b16 %v109
  %v120 = vunpack.c.l.b16 %v110
  %v121 = vunpack.c.l.b16 %v111
  %v122 = vunpack.c.l.b16 %v112
  %v123 = vpack.c.b16 %v120, %v119
  %v124 = vpack.c.b16 %v122, %v121
  %127 = vmatpush.bf16.msra.mxu0 0
  %128 = vmatpush.bf16.msra.mxu0 0
  %129 = vmatpush.bf16.msra.mxu0 0
  %130 = vmatpush.bf16.msra.mxu0 0
  %131 = vmatpush.bf16.msra.mxu0 0
  %132 = vmatpush.bf16.msra.mxu0 0
  %133 = vmatpush.bf16.msra.mxu0 %v124
  %134 = vmatpush.bf16.msra.mxu0 %v123
  %135 = vmatmul.bf16.gmra.mxu0 %v59
  %v136 = vpop.f32.mrf.mxu0
  %v137 = vadd.f32 %v114, %v136
  %v138 = vpop.f32.mrf.mxu0
  %v139 = vadd.f32 %v114, %v138
  %140 = vdwg.mxu0
  %v141 = vpack.c.bf16 %v73, %v71
  %v142 = vpack.c.bf16 %v106, %v104
  %vm143 = vcmask 64512
  %v145 = vsel %vm143, %v141, 0
  %v148 = vsel %vm143, %v142, 0
  %150 = vmatpush.bf16.xpose.msra.mxu0 0
  %151 = vmatpush.bf16.xpose.msra.mxu0 0
  %152 = vmatpush.bf16.xpose.msra.mxu0 0
  %153 = vmatpush.bf16.xpose.msra.mxu0 0
  %154 = vmatpush.bf16.xpose.msra.mxu0 0
  %155 = vmatpush.bf16.xpose.msra.mxu0 0
  %156 = vmatpush.bf16.xpose.msra.mxu0 0
  %157 = vmatpush.bf16.xpose.msra.mxu0 %v148
  %158 = vmatmul.bf16.gmra.mxu0 %v145
  %v159 = vpop.f32.mrf.mxu0
  %v160 = vadd.f32 0.0, %v159
  %v161 = vpop.f32.mrf.mxu0
  %v162 = vadd.f32 0.0, %v161
  %163 = vdwg.mxu0
  %v164 = vmul.f32 %v160, 0.35355338
  %v165 = vmul.f32 %v162, 0.35355338
  %v166 = vadd.f32 %v164, %v36
  %v167 = vadd.f32 %v165, %v37
  %vm168 = vcmask 130048
  %v169 = vsel %vm168, %v166, -inf
  %170 = vmax.xlane.f32.xlu0 %v169
  %v171 = vpop.xlane.xlu0 %170
  %v172 = vsel %vm168, %v167, -inf
  %173 = vmax.xlane.f32.xlu0 %v172
  %v174 = vpop.xlane.xlu0 %173
  %v175 = vsub.f32 %v166, %v171
  %v176 = vsub.f32 %v167, %v174
  %v177 = vmul.f32 %v175, 1.442695
  %v178 = vpow.pop %v177
  %v179 = vmul.f32 %v176, 1.442695
  %v180 = vpow.pop %v179
  %v181 = vsel %vm168, %v178, 0.0
  %182 = vadd.xlane.f32.xlu0 %v181
  %v183 = vpop.xlane.xlu0 %182
  %v184 = vsel %vm168, %v180, 0.0
  %185 = vadd.xlane.f32.xlu0 %v184
  %v186 = vpop.xlane.xlu0 %185
  %v187 = vrcp.pop %v183
  %v188 = vmul.f32 %v183, %v187
  %v189 = vsub.f32 1.0, %v188
  %v190 = vmul.f32 %v187, %v189
  %v191 = vadd.f32 %v187, %v190
  %vm192 = vweird.f32 %v183
  %vm193 = vweird.f32 %v187
  %vm194 = vmor %vm192, %vm193
  %v195 = vsel %vm194, %v187, %v191
  %v196 = vand.u32 2147483647, %v183
  %vm197 = vcmp.eq.f32.partialorder %v196, 8.507059e+37
  %v198 = vand.u32 %v183, 2147483648
  %v199 = vor.u32 1.1754944e-38, %v198
  %v200 = vsel %vm197, %v199, %v195
  %v201 = vmul.f32 %v178, %v200
  %v202 = vrcp.pop %v186
  %v203 = vmul.f32 %v186, %v202
  %v204 = vsub.f32 1.0, %v203
  %v205 = vmul.f32 %v202, %v204
  %v206 = vadd.f32 %v202, %v205
  %vm207 = vweird.f32 %v186
  %vm208 = vweird.f32 %v202
  %vm209 = vmor %vm207, %vm208
  %v210 = vsel %vm209, %v202, %v206
  %v211 = vand.u32 2147483647, %v186
  %vm212 = vcmp.eq.f32.partialorder %v211, 8.507059e+37
  %v213 = vand.u32 %v186, 2147483648
  %v214 = vor.u32 1.1754944e-38, %v213
  %v215 = vsel %vm212, %v214, %v210
  %v216 = vmul.f32 %v180, %v215
  %v217 = vpack.c.bf16 %v216, %v201
  %v218 = vpack.c.bf16 %v139, %v137
  %v220 = vsel %vm168, %v217, 0
  %222 = vmatpush.bf16.msra.mxu0 0
  %223 = vmatpush.bf16.msra.mxu0 0
  %224 = vmatpush.bf16.msra.mxu0 0
  %225 = vmatpush.bf16.msra.mxu0 0
  %226 = vmatpush.bf16.msra.mxu0 0
  %227 = vmatpush.bf16.msra.mxu0 0
  %228 = vmatpush.bf16.msra.mxu0 0
  %229 = vmatpush.bf16.msra.mxu0 %v218
  %230 = vmatmul.bf16.gmra.mxu0 %v220
  %v231 = vpop.f32.mrf.mxu0
  %v232 = vadd.f32 0.0, %v231
  %v233 = vpop.f32.mrf.mxu0
  %v234 = vadd.f32 0.0, %v233
  %235 = vdwg.mxu0
  %v236 = vpack.c.bf16 %v234, %v232
  %s237 = scalar_lea.vmem %s2, 192
  %v238 = vld [vmem:[%s237] sm:$0xf]
  %v239 = vld [vmem:[%s237 + $0x4] sm:$0xf]
  %v240 = vld [vmem:[%s237 + $0x8] sm:$0xf]
  %v241 = vld [vmem:[%s237 + $0xc] sm:$0xf]
  %s242 = scalar_lea.vmem %s2, 16
  %v243 = vld [vmem:[%s242] sm:$0xf]
  %v244 = vld [vmem:[%s242 + $0x4] sm:$0xf]
  %v245 = vld [vmem:[%s242 + $0x8] sm:$0xf]
  %v246 = vld [vmem:[%s242 + $0xc] sm:$0xf]
  %v247 = vld [vmem:[%s4 + $0x41] sm:$0x1]
  %v248 = vperm.slane %v247, 0
  %v253 = vunpack.c.l.b16 %v243
  %v254 = vunpack.c.l.b16 %v244
  %v255 = vunpack.c.l.b16 %v245
  %v256 = vunpack.c.l.b16 %v246
  %v257 = vpack.c.b16 %v254, %v253
  %v258 = vpack.c.b16 %v256, %v255
  %261 = vmatpush.bf16.msra.mxu0 0
  %262 = vmatpush.bf16.msra.mxu0 0
  %263 = vmatpush.bf16.msra.mxu0 0
  %264 = vmatpush.bf16.msra.mxu0 0
  %265 = vmatpush.bf16.msra.mxu0 0
  %266 = vmatpush.bf16.msra.mxu0 0
  %267 = vmatpush.bf16.msra.mxu0 %v258
  %268 = vmatpush.bf16.msra.mxu0 %v257
  %269 = vmatmul.bf16.gmra.mxu0 %v59
  %v270 = vpop.f32.mrf.mxu0
  %v271 = vadd.f32 %v248, %v270
  %v272 = vpop.f32.mrf.mxu0
  %v273 = vadd.f32 %v248, %v272
  %274 = vdwg.mxu0
  %s275 = scalar_lea.vmem %s2, 80
  %v276 = vld [vmem:[%s275] sm:$0xf]
  %v277 = vld [vmem:[%s275 + $0x4] sm:$0xf]
  %v278 = vld [vmem:[%s275 + $0x8] sm:$0xf]
  %v279 = vld [vmem:[%s275 + $0xc] sm:$0xf]
  %v280 = vld [vmem:[%s4 + $0x45] sm:$0x1]
  %v281 = vperm.slane %v280, 0
  %v286 = vunpack.c.l.b16 %v276
  %v287 = vunpack.c.l.b16 %v277
  %v288 = vunpack.c.l.b16 %v278
  %v289 = vunpack.c.l.b16 %v279
  %v290 = vpack.c.b16 %v287, %v286
  %v291 = vpack.c.b16 %v289, %v288
  %294 = vmatpush.bf16.msra.mxu0 0
  %295 = vmatpush.bf16.msra.mxu0 0
  %296 = vmatpush.bf16.msra.mxu0 0
  %297 = vmatpush.bf16.msra.mxu0 0
  %298 = vmatpush.bf16.msra.mxu0 0
  %299 = vmatpush.bf16.msra.mxu0 0
  %300 = vmatpush.bf16.msra.mxu0 %v291
  %301 = vmatpush.bf16.msra.mxu0 %v290
  %302 = vmatmul.bf16.gmra.mxu0 %v59
  %v303 = vpop.f32.mrf.mxu0
  %v304 = vadd.f32 %v281, %v303
  %v305 = vpop.f32.mrf.mxu0
  %v306 = vadd.f32 %v281, %v305
  %307 = vdwg.mxu0
  %s308 = scalar_lea.vmem %s2, 144
  %v309 = vld [vmem:[%s308] sm:$0xf]
  %v310 = vld [vmem:[%s308 + $0x4] sm:$0xf]
  %v311 = vld [vmem:[%s308 + $0x8] sm:$0xf]
  %v312 = vld [vmem:[%s308 + $0xc] sm:$0xf]
  %v313 = vld [vmem:[%s4 + $0x49] sm:$0x1]
  %v314 = vperm.slane %v313, 0
  %v319 = vunpack.c.l.b16 %v309
  %v320 = vunpack.c.l.b16 %v310
  %v321 = vunpack.c.l.b16 %v311
  %v322 = vunpack.c.l.b16 %v312
  %v323 = vpack.c.b16 %v320, %v319
  %v324 = vpack.c.b16 %v322, %v321
  %327 = vmatpush.bf16.msra.mxu0 0
  %328 = vmatpush.bf16.msra.mxu0 0
  %329 = vmatpush.bf16.msra.mxu0 0
  %330 = vmatpush.bf16.msra.mxu0 0
  %331 = vmatpush.bf16.msra.mxu0 0
  %332 = vmatpush.bf16.msra.mxu0 0
  %333 = vmatpush.bf16.msra.mxu0 %v324
  %334 = vmatpush.bf16.msra.mxu0 %v323
  %335 = vmatmul.bf16.gmra.mxu0 %v59
  %v336 = vpop.f32.mrf.mxu0
  %v337 = vadd.f32 %v314, %v336
  %v338 = vpop.f32.mrf.mxu0
  %v339 = vadd.f32 %v314, %v338
  %340 = vdwg.mxu0
  %v341 = vpack.c.bf16 %v273, %v271
  %v342 = vpack.c.bf16 %v306, %v304
  %v344 = vsel %vm143, %v341, 0
  %v347 = vsel %vm143, %v342, 0
  %349 = vmatpush.bf16.xpose.msra.mxu0 0
  %350 = vmatpush.bf16.xpose.msra.mxu0 0
  %351 = vmatpush.bf16.xpose.msra.mxu0 0
  %352 = vmatpush.bf16.xpose.msra.mxu0 0
  %353 = vmatpush.bf16.xpose.msra.mxu0 0
  %354 = vmatpush.bf16.xpose.msra.mxu0 0
  %355 = vmatpush.bf16.xpose.msra.mxu0 0
  %356 = vmatpush.bf16.xpose.msra.mxu0 %v347
  %357 = vmatmul.bf16.gmra.mxu0 %v344
  %v358 = vpop.f32.mrf.mxu0
  %v359 = vadd.f32 0.0, %v358
  %v360 = vpop.f32.mrf.mxu0
  %v361 = vadd.f32 0.0, %v360
  %362 = vdwg.mxu0
  %v363 = vmul.f32 %v359, 0.35355338
  %v364 = vmul.f32 %v361, 0.35355338
  %v365 = vadd.f32 %v363, %v36
  %v366 = vadd.f32 %v364, %v37
  %v367 = vsel %vm168, %v365, -inf
  %368 = vmax.xlane.f32.xlu0 %v367
  %v369 = vpop.xlane.xlu0 %368
  %v370 = vsel %vm168, %v366, -inf
  %371 = vmax.xlane.f32.xlu0 %v370
  %v372 = vpop.xlane.xlu0 %371
  %v373 = vsub.f32 %v365, %v369
  %v374 = vsub.f32 %v366, %v372
  %v375 = vmul.f32 %v373, 1.442695
  %v376 = vpow.pop %v375
  %v377 = vmul.f32 %v374, 1.442695
  %v378 = vpow.pop %v377
  %v379 = vsel %vm168, %v376, 0.0
  %380 = vadd.xlane.f32.xlu0 %v379
  %v381 = vpop.xlane.xlu0 %380
  %v382 = vsel %vm168, %v378, 0.0
  %383 = vadd.xlane.f32.xlu0 %v382
  %v384 = vpop.xlane.xlu0 %383
  %v385 = vrcp.pop %v381
  %v386 = vmul.f32 %v381, %v385
  %v387 = vsub.f32 1.0, %v386
  %v388 = vmul.f32 %v385, %v387
  %v389 = vadd.f32 %v385, %v388
  %vm390 = vweird.f32 %v381
  %vm391 = vweird.f32 %v385
  %vm392 = vmor %vm390, %vm391
  %v393 = vsel %vm392, %v385, %v389
  %v394 = vand.u32 2147483647, %v381
  %vm395 = vcmp.eq.f32.partialorder %v394, 8.507059e+37
  %v396 = vand.u32 %v381, 2147483648
  %v397 = vor.u32 1.1754944e-38, %v396
  %v398 = vsel %vm395, %v397, %v393
  %v399 = vmul.f32 %v376, %v398
  %v400 = vrcp.pop %v384
  %v401 = vmul.f32 %v384, %v400
  %v402 = vsub.f32 1.0, %v401
  %v403 = vmul.f32 %v400, %v402
  %v404 = vadd.f32 %v400, %v403
  %vm405 = vweird.f32 %v384
  %vm406 = vweird.f32 %v400
  %vm407 = vmor %vm405, %vm406
  %v408 = vsel %vm407, %v400, %v404
  %v409 = vand.u32 2147483647, %v384
  %vm410 = vcmp.eq.f32.partialorder %v409, 8.507059e+37
  %v411 = vand.u32 %v384, 2147483648
  %v412 = vor.u32 1.1754944e-38, %v411
  %v413 = vsel %vm410, %v412, %v408
  %v414 = vmul.f32 %v378, %v413
  %v415 = vpack.c.bf16 %v414, %v399
  %v416 = vpack.c.bf16 %v339, %v337
  %v418 = vsel %vm168, %v415, 0
  %420 = vmatpush.bf16.msra.mxu0 0
  %421 = vmatpush.bf16.msra.mxu0 0
  %422 = vmatpush.bf16.msra.mxu0 0
  %423 = vmatpush.bf16.msra.mxu0 0
  %424 = vmatpush.bf16.msra.mxu0 0
  %425 = vmatpush.bf16.msra.mxu0 0
  %426 = vmatpush.bf16.msra.mxu0 0
  %427 = vmatpush.bf16.msra.mxu0 %v416
  %428 = vmatmul.bf16.gmra.mxu0 %v418
  %v429 = vpop.f32.mrf.mxu0
  %v430 = vadd.f32 0.0, %v429
  %v431 = vpop.f32.mrf.mxu0
  %v432 = vadd.f32 0.0, %v431
  %433 = vdwg.mxu0
  %v434 = vpack.c.bf16 %v432, %v430
  %s435 = scalar_lea.vmem %s2, 208
  %v436 = vld [vmem:[%s435] sm:$0xf]
  %v437 = vld [vmem:[%s435 + $0x4] sm:$0xf]
  %v438 = vld [vmem:[%s435 + $0x8] sm:$0xf]
  %v439 = vld [vmem:[%s435 + $0xc] sm:$0xf]
  %v444 = vunpack.c.l.b16 %v436
  %v445 = vunpack.c.l.b16 %v437
  %v446 = vunpack.c.l.b16 %v438
  %v447 = vunpack.c.l.b16 %v439
  %v448 = vpack.c.b16 %v445, %v444
  %v449 = vpack.c.b16 %v447, %v446
  %v451 = vsel %vm143, %v434, 0
  %v454 = vsel %vm143, %v448, 0
  %v457 = vsel %vm143, %v449, 0
  %459 = vmatpush.bf16.xpose.msra.mxu0 0
  %460 = vmatpush.bf16.xpose.msra.mxu0 0
  %461 = vmatpush.bf16.xpose.msra.mxu0 0
  %462 = vmatpush.bf16.xpose.msra.mxu0 0
  %463 = vmatpush.bf16.xpose.msra.mxu0 0
  %464 = vmatpush.bf16.xpose.msra.mxu0 0
  %465 = vmatpush.bf16.xpose.msra.mxu0 %v457
  %466 = vmatpush.bf16.xpose.msra.mxu0 %v454
  %467 = vmatmul.bf16.gmra.mxu0 %v451
  %v468 = vpop.f32.mrf.mxu0
  %v469 = vadd.f32 0.0, %v468
  %v470 = vpop.f32.mrf.mxu0
  %v471 = vadd.f32 0.0, %v470
  %472 = vdwg.mxu0
  %v477 = vunpack.c.l.b16 %v238
  %v478 = vunpack.c.l.b16 %v239
  %v479 = vunpack.c.l.b16 %v240
  %v480 = vunpack.c.l.b16 %v241
  %v481 = vpack.c.b16 %v478, %v477
  %v482 = vpack.c.b16 %v480, %v479
  %v484 = vsel %vm143, %v236, 0
  %v487 = vsel %vm143, %v481, 0
  %v490 = vsel %vm143, %v482, 0
  %492 = vmatpush.bf16.xpose.msra.mxu0 0
  %493 = vmatpush.bf16.xpose.msra.mxu0 0
  %494 = vmatpush.bf16.xpose.msra.mxu0 0
  %495 = vmatpush.bf16.xpose.msra.mxu0 0
  %496 = vmatpush.bf16.xpose.msra.mxu0 0
  %497 = vmatpush.bf16.xpose.msra.mxu0 0
  %498 = vmatpush.bf16.xpose.msra.mxu0 %v490
  %499 = vmatpush.bf16.xpose.msra.mxu0 %v487
  %500 = vmatmul.bf16.gmra.mxu0 %v484
  %v501 = vpop.f32.mrf.mxu0
  %v502 = vadd.f32 %v469, %v501
  %v503 = vpop.f32.mrf.mxu0
  %v504 = vadd.f32 %v471, %v503
  %505 = vdwg.mxu0
  %s506 = scalar_lea.vmem %s2, 32
  %v507 = vld [vmem:[%s506] sm:$0xf]
  %v508 = vld [vmem:[%s506 + $0x4] sm:$0xf]
  %v509 = vld [vmem:[%s506 + $0x8] sm:$0xf]
  %v510 = vld [vmem:[%s506 + $0xc] sm:$0xf]
  %v511 = vld [vmem:[%s4 + $0x42] sm:$0x1]
  %v512 = vperm.slane %v511, 0
  %v517 = vunpack.c.l.b16 %v507
  %v518 = vunpack.c.l.b16 %v508
  %v519 = vunpack.c.l.b16 %v509
  %v520 = vunpack.c.l.b16 %v510
  %v521 = vpack.c.b16 %v518, %v517
  %v522 = vpack.c.b16 %v520, %v519
  %525 = vmatpush.bf16.msra.mxu0 0
  %526 = vmatpush.bf16.msra.mxu0 0
  %527 = vmatpush.bf16.msra.mxu0 0
  %528 = vmatpush.bf16.msra.mxu0 0
  %529 = vmatpush.bf16.msra.mxu0 0
  %530 = vmatpush.bf16.msra.mxu0 0
  %531 = vmatpush.bf16.msra.mxu0 %v522
  %532 = vmatpush.bf16.msra.mxu0 %v521
  %533 = vmatmul.bf16.gmra.mxu0 %v59
  %v534 = vpop.f32.mrf.mxu0
  %v535 = vadd.f32 %v512, %v534
  %v536 = vpop.f32.mrf.mxu0
  %v537 = vadd.f32 %v512, %v536
  %538 = vdwg.mxu0
  %s539 = scalar_lea.vmem %s2, 96
  %v540 = vld [vmem:[%s539] sm:$0xf]
  %v541 = vld [vmem:[%s539 + $0x4] sm:$0xf]
  %v542 = vld [vmem:[%s539 + $0x8] sm:$0xf]
  %v543 = vld [vmem:[%s539 + $0xc] sm:$0xf]
  %v544 = vld [vmem:[%s4 + $0x46] sm:$0x1]
  %v545 = vperm.slane %v544, 0
  %v550 = vunpack.c.l.b16 %v540
  %v551 = vunpack.c.l.b16 %v541
  %v552 = vunpack.c.l.b16 %v542
  %v553 = vunpack.c.l.b16 %v543
  %v554 = vpack.c.b16 %v551, %v550
  %v555 = vpack.c.b16 %v553, %v552
  %558 = vmatpush.bf16.msra.mxu0 0
  %559 = vmatpush.bf16.msra.mxu0 0
  %560 = vmatpush.bf16.msra.mxu0 0
  %561 = vmatpush.bf16.msra.mxu0 0
  %562 = vmatpush.bf16.msra.mxu0 0
  %563 = vmatpush.bf16.msra.mxu0 0
  %564 = vmatpush.bf16.msra.mxu0 %v555
  %565 = vmatpush.bf16.msra.mxu0 %v554
  %566 = vmatmul.bf16.gmra.mxu0 %v59
  %v567 = vpop.f32.mrf.mxu0
  %v568 = vadd.f32 %v545, %v567
  %v569 = vpop.f32.mrf.mxu0
  %v570 = vadd.f32 %v545, %v569
  %571 = vdwg.mxu0
  %s572 = scalar_lea.vmem %s2, 160
  %v573 = vld [vmem:[%s572] sm:$0xf]
  %v574 = vld [vmem:[%s572 + $0x4] sm:$0xf]
  %v575 = vld [vmem:[%s572 + $0x8] sm:$0xf]
  %v576 = vld [vmem:[%s572 + $0xc] sm:$0xf]
  %v577 = vld [vmem:[%s4 + $0x4a] sm:$0x1]
  %v578 = vperm.slane %v577, 0
  %v583 = vunpack.c.l.b16 %v573
  %v584 = vunpack.c.l.b16 %v574
  %v585 = vunpack.c.l.b16 %v575
  %v586 = vunpack.c.l.b16 %v576
  %v587 = vpack.c.b16 %v584, %v583
  %v588 = vpack.c.b16 %v586, %v585
  %591 = vmatpush.bf16.msra.mxu0 0
  %592 = vmatpush.bf16.msra.mxu0 0
  %593 = vmatpush.bf16.msra.mxu0 0
  %594 = vmatpush.bf16.msra.mxu0 0
  %595 = vmatpush.bf16.msra.mxu0 0
  %596 = vmatpush.bf16.msra.mxu0 0
  %597 = vmatpush.bf16.msra.mxu0 %v588
  %598 = vmatpush.bf16.msra.mxu0 %v587
  %599 = vmatmul.bf16.gmra.mxu0 %v59
  %v600 = vpop.f32.mrf.mxu0
  %v601 = vadd.f32 %v578, %v600
  %v602 = vpop.f32.mrf.mxu0
  %v603 = vadd.f32 %v578, %v602
  %604 = vdwg.mxu0
  %v605 = vpack.c.bf16 %v537, %v535
  %v606 = vpack.c.bf16 %v570, %v568
  %v608 = vsel %vm143, %v605, 0
  %v611 = vsel %vm143, %v606, 0
  %613 = vmatpush.bf16.xpose.msra.mxu0 0
  %614 = vmatpush.bf16.xpose.msra.mxu0 0
  %615 = vmatpush.bf16.xpose.msra.mxu0 0
  %616 = vmatpush.bf16.xpose.msra.mxu0 0
  %617 = vmatpush.bf16.xpose.msra.mxu0 0
  %618 = vmatpush.bf16.xpose.msra.mxu0 0
  %619 = vmatpush.bf16.xpose.msra.mxu0 0
  %620 = vmatpush.bf16.xpose.msra.mxu0 %v611
  %621 = vmatmul.bf16.gmra.mxu0 %v608
  %v622 = vpop.f32.mrf.mxu0
  %v623 = vadd.f32 0.0, %v622
  %v624 = vpop.f32.mrf.mxu0
  %v625 = vadd.f32 0.0, %v624
  %626 = vdwg.mxu0
  %v627 = vmul.f32 %v623, 0.35355338
  %v628 = vmul.f32 %v625, 0.35355338
  %v629 = vadd.f32 %v627, %v36
  %v630 = vadd.f32 %v628, %v37
  %v631 = vsel %vm168, %v629, -inf
  %632 = vmax.xlane.f32.xlu0 %v631
  %v633 = vpop.xlane.xlu0 %632
  %v634 = vsel %vm168, %v630, -inf
  %635 = vmax.xlane.f32.xlu0 %v634
  %v636 = vpop.xlane.xlu0 %635
  %v637 = vsub.f32 %v629, %v633
  %v638 = vsub.f32 %v630, %v636
  %v639 = vmul.f32 %v637, 1.442695
  %v640 = vpow.pop %v639
  %v641 = vmul.f32 %v638, 1.442695
  %v642 = vpow.pop %v641
  %v643 = vsel %vm168, %v640, 0.0
  %644 = vadd.xlane.f32.xlu0 %v643
  %v645 = vpop.xlane.xlu0 %644
  %v646 = vsel %vm168, %v642, 0.0
  %647 = vadd.xlane.f32.xlu0 %v646
  %v648 = vpop.xlane.xlu0 %647
  %v649 = vrcp.pop %v645
  %v650 = vmul.f32 %v645, %v649
  %v651 = vsub.f32 1.0, %v650
  %v652 = vmul.f32 %v649, %v651
  %v653 = vadd.f32 %v649, %v652
  %vm654 = vweird.f32 %v645
  %vm655 = vweird.f32 %v649
  %vm656 = vmor %vm654, %vm655
  %v657 = vsel %vm656, %v649, %v653
  %v658 = vand.u32 2147483647, %v645
  %vm659 = vcmp.eq.f32.partialorder %v658, 8.507059e+37
  %v660 = vand.u32 %v645, 2147483648
  %v661 = vor.u32 1.1754944e-38, %v660
  %v662 = vsel %vm659, %v661, %v657
  %v663 = vmul.f32 %v640, %v662
  %v664 = vrcp.pop %v648
  %v665 = vmul.f32 %v648, %v664
  %v666 = vsub.f32 1.0, %v665
  %v667 = vmul.f32 %v664, %v666
  %v668 = vadd.f32 %v664, %v667
  %vm669 = vweird.f32 %v648
  %vm670 = vweird.f32 %v664
  %vm671 = vmor %vm669, %vm670
  %v672 = vsel %vm671, %v664, %v668
  %v673 = vand.u32 2147483647, %v648
  %vm674 = vcmp.eq.f32.partialorder %v673, 8.507059e+37
  %v675 = vand.u32 %v648, 2147483648
  %v676 = vor.u32 1.1754944e-38, %v675
  %v677 = vsel %vm674, %v676, %v672
  %v678 = vmul.f32 %v642, %v677
  %v679 = vpack.c.bf16 %v678, %v663
  %v680 = vpack.c.bf16 %v603, %v601
  %v682 = vsel %vm168, %v679, 0
  %684 = vmatpush.bf16.msra.mxu0 0
  %685 = vmatpush.bf16.msra.mxu0 0
  %686 = vmatpush.bf16.msra.mxu0 0
  %687 = vmatpush.bf16.msra.mxu0 0
  %688 = vmatpush.bf16.msra.mxu0 0
  %689 = vmatpush.bf16.msra.mxu0 0
  %690 = vmatpush.bf16.msra.mxu0 0
  %691 = vmatpush.bf16.msra.mxu0 %v680
  %692 = vmatmul.bf16.gmra.mxu0 %v682
  %v693 = vpop.f32.mrf.mxu0
  %v694 = vadd.f32 0.0, %v693
  %v695 = vpop.f32.mrf.mxu0
  %v696 = vadd.f32 0.0, %v695
  %697 = vdwg.mxu0
  %v698 = vpack.c.bf16 %v696, %v694
  %s699 = scalar_lea.vmem %s2, 224
  %v700 = vld [vmem:[%s699] sm:$0xf]
  %v701 = vld [vmem:[%s699 + $0x4] sm:$0xf]
  %v702 = vld [vmem:[%s699 + $0x8] sm:$0xf]
  %v703 = vld [vmem:[%s699 + $0xc] sm:$0xf]
  %v708 = vunpack.c.l.b16 %v700
  %v709 = vunpack.c.l.b16 %v701
  %v710 = vunpack.c.l.b16 %v702
  %v711 = vunpack.c.l.b16 %v703
  %v712 = vpack.c.b16 %v709, %v708
  %v713 = vpack.c.b16 %v711, %v710
  %v715 = vsel %vm143, %v698, 0
  %v718 = vsel %vm143, %v712, 0
  %v721 = vsel %vm143, %v713, 0
  %723 = vmatpush.bf16.xpose.msra.mxu0 0
  %724 = vmatpush.bf16.xpose.msra.mxu0 0
  %725 = vmatpush.bf16.xpose.msra.mxu0 0
  %726 = vmatpush.bf16.xpose.msra.mxu0 0
  %727 = vmatpush.bf16.xpose.msra.mxu0 0
  %728 = vmatpush.bf16.xpose.msra.mxu0 0
  %729 = vmatpush.bf16.xpose.msra.mxu0 %v721
  %730 = vmatpush.bf16.xpose.msra.mxu0 %v718
  %731 = vmatmul.bf16.gmra.mxu0 %v715
  %v732 = vpop.f32.mrf.mxu0
  %v733 = vadd.f32 0.0, %v732
  %v734 = vpop.f32.mrf.mxu0
  %v735 = vadd.f32 0.0, %v734
  %736 = vdwg.mxu0
  %v737 = vadd.f32 %v502, %v733
  %v738 = vadd.f32 %v504, %v735
  %s739 = scalar_lea.vmem %s2, 48
  %v740 = vld [vmem:[%s739] sm:$0xf]
  %v741 = vld [vmem:[%s739 + $0x4] sm:$0xf]
  %v742 = vld [vmem:[%s739 + $0x8] sm:$0xf]
  %v743 = vld [vmem:[%s739 + $0xc] sm:$0xf]
  %v744 = vld [vmem:[%s4 + $0x43] sm:$0x1]
  %v745 = vperm.slane %v744, 0
  %v750 = vunpack.c.l.b16 %v740
  %v751 = vunpack.c.l.b16 %v741
  %v752 = vunpack.c.l.b16 %v742
  %v753 = vunpack.c.l.b16 %v743
  %v754 = vpack.c.b16 %v751, %v750
  %v755 = vpack.c.b16 %v753, %v752
  %758 = vmatpush.bf16.msra.mxu0 0
  %759 = vmatpush.bf16.msra.mxu0 0
  %760 = vmatpush.bf16.msra.mxu0 0
  %761 = vmatpush.bf16.msra.mxu0 0
  %762 = vmatpush.bf16.msra.mxu0 0
  %763 = vmatpush.bf16.msra.mxu0 0
  %764 = vmatpush.bf16.msra.mxu0 %v755
  %765 = vmatpush.bf16.msra.mxu0 %v754
  %766 = vmatmul.bf16.gmra.mxu0 %v59
  %v767 = vpop.f32.mrf.mxu0
  %v768 = vadd.f32 %v745, %v767
  %v769 = vpop.f32.mrf.mxu0
  %v770 = vadd.f32 %v745, %v769
  %771 = vdwg.mxu0
  %s772 = scalar_lea.vmem %s2, 112
  %v773 = vld [vmem:[%s772] sm:$0xf]
  %v774 = vld [vmem:[%s772 + $0x4] sm:$0xf]
  %v775 = vld [vmem:[%s772 + $0x8] sm:$0xf]
  %v776 = vld [vmem:[%s772 + $0xc] sm:$0xf]
  %v777 = vld [vmem:[%s4 + $0x47] sm:$0x1]
  %v778 = vperm.slane %v777, 0
  %v783 = vunpack.c.l.b16 %v773
  %v784 = vunpack.c.l.b16 %v774
  %v785 = vunpack.c.l.b16 %v775
  %v786 = vunpack.c.l.b16 %v776
  %v787 = vpack.c.b16 %v784, %v783
  %v788 = vpack.c.b16 %v786, %v785
  %791 = vmatpush.bf16.msra.mxu0 0
  %792 = vmatpush.bf16.msra.mxu0 0
  %793 = vmatpush.bf16.msra.mxu0 0
  %794 = vmatpush.bf16.msra.mxu0 0
  %795 = vmatpush.bf16.msra.mxu0 0
  %796 = vmatpush.bf16.msra.mxu0 0
  %797 = vmatpush.bf16.msra.mxu0 %v788
  %798 = vmatpush.bf16.msra.mxu0 %v787
  %799 = vmatmul.bf16.gmra.mxu0 %v59
  %v800 = vpop.f32.mrf.mxu0
  %v801 = vadd.f32 %v778, %v800
  %v802 = vpop.f32.mrf.mxu0
  %v803 = vadd.f32 %v778, %v802
  %804 = vdwg.mxu0
  %s805 = scalar_lea.vmem %s2, 176
  %v806 = vld [vmem:[%s805] sm:$0xf]
  %v807 = vld [vmem:[%s805 + $0x4] sm:$0xf]
  %v808 = vld [vmem:[%s805 + $0x8] sm:$0xf]
  %v809 = vld [vmem:[%s805 + $0xc] sm:$0xf]
  %v810 = vld [vmem:[%s4 + $0x4b] sm:$0x1]
  %v811 = vperm.slane %v810, 0
  %v816 = vunpack.c.l.b16 %v806
  %v817 = vunpack.c.l.b16 %v807
  %v818 = vunpack.c.l.b16 %v808
  %v819 = vunpack.c.l.b16 %v809
  %v820 = vpack.c.b16 %v817, %v816
  %v821 = vpack.c.b16 %v819, %v818
  %824 = vmatpush.bf16.msra.mxu0 0
  %825 = vmatpush.bf16.msra.mxu0 0
  %826 = vmatpush.bf16.msra.mxu0 0
  %827 = vmatpush.bf16.msra.mxu0 0
  %828 = vmatpush.bf16.msra.mxu0 0
  %829 = vmatpush.bf16.msra.mxu0 0
  %830 = vmatpush.bf16.msra.mxu0 %v821
  %831 = vmatpush.bf16.msra.mxu0 %v820
  %832 = vmatmul.bf16.gmra.mxu0 %v59
  %v833 = vpop.f32.mrf.mxu0
  %v834 = vadd.f32 %v811, %v833
  %v835 = vpop.f32.mrf.mxu0
  %v836 = vadd.f32 %v811, %v835
  %837 = vdwg.mxu0
  %v838 = vpack.c.bf16 %v770, %v768
  %v839 = vpack.c.bf16 %v803, %v801
  %v841 = vsel %vm143, %v838, 0
  %v844 = vsel %vm143, %v839, 0
  %846 = vmatpush.bf16.xpose.msra.mxu0 0
  %847 = vmatpush.bf16.xpose.msra.mxu0 0
  %848 = vmatpush.bf16.xpose.msra.mxu0 0
  %849 = vmatpush.bf16.xpose.msra.mxu0 0
  %850 = vmatpush.bf16.xpose.msra.mxu0 0
  %851 = vmatpush.bf16.xpose.msra.mxu0 0
  %852 = vmatpush.bf16.xpose.msra.mxu0 0
  %853 = vmatpush.bf16.xpose.msra.mxu0 %v844
  %854 = vmatmul.bf16.gmra.mxu0 %v841
  %v855 = vpop.f32.mrf.mxu0
  %v856 = vadd.f32 0.0, %v855
  %v857 = vpop.f32.mrf.mxu0
  %v858 = vadd.f32 0.0, %v857
  %859 = vdwg.mxu0
  %v860 = vmul.f32 %v856, 0.35355338
  %v861 = vmul.f32 %v858, 0.35355338
  %v862 = vadd.f32 %v860, %v36
  %v863 = vadd.f32 %v861, %v37
  %v864 = vsel %vm168, %v862, -inf
  %865 = vmax.xlane.f32.xlu0 %v864
  %v866 = vpop.xlane.xlu0 %865
  %v867 = vsel %vm168, %v863, -inf
  %868 = vmax.xlane.f32.xlu0 %v867
  %v869 = vpop.xlane.xlu0 %868
  %v870 = vsub.f32 %v862, %v866
  %v871 = vsub.f32 %v863, %v869
  %v872 = vmul.f32 %v870, 1.442695
  %v873 = vpow.pop %v872
  %v874 = vmul.f32 %v871, 1.442695
  %v875 = vpow.pop %v874
  %v876 = vsel %vm168, %v873, 0.0
  %877 = vadd.xlane.f32.xlu0 %v876
  %v878 = vpop.xlane.xlu0 %877
  %v879 = vsel %vm168, %v875, 0.0
  %880 = vadd.xlane.f32.xlu0 %v879
  %v881 = vpop.xlane.xlu0 %880
  %v882 = vrcp.pop %v878
  %v883 = vmul.f32 %v878, %v882
  %v884 = vsub.f32 1.0, %v883
  %v885 = vmul.f32 %v882, %v884
  %v886 = vadd.f32 %v882, %v885
  %vm887 = vweird.f32 %v878
  %vm888 = vweird.f32 %v882
  %vm889 = vmor %vm887, %vm888
  %v890 = vsel %vm889, %v882, %v886
  %v891 = vand.u32 2147483647, %v878
  %vm892 = vcmp.eq.f32.partialorder %v891, 8.507059e+37
  %v893 = vand.u32 %v878, 2147483648
  %v894 = vor.u32 1.1754944e-38, %v893
  %v895 = vsel %vm892, %v894, %v890
  %v896 = vmul.f32 %v873, %v895
  %v897 = vrcp.pop %v881
  %v898 = vmul.f32 %v881, %v897
  %v899 = vsub.f32 1.0, %v898
  %v900 = vmul.f32 %v897, %v899
  %v901 = vadd.f32 %v897, %v900
  %vm902 = vweird.f32 %v881
  %vm903 = vweird.f32 %v897
  %vm904 = vmor %vm902, %vm903
  %v905 = vsel %vm904, %v897, %v901
  %v906 = vand.u32 2147483647, %v881
  %vm907 = vcmp.eq.f32.partialorder %v906, 8.507059e+37
  %v908 = vand.u32 %v881, 2147483648
  %v909 = vor.u32 1.1754944e-38, %v908
  %v910 = vsel %vm907, %v909, %v905
  %v911 = vmul.f32 %v875, %v910
  %v912 = vpack.c.bf16 %v911, %v896
  %v913 = vpack.c.bf16 %v836, %v834
  %v915 = vsel %vm168, %v912, 0
  %917 = vmatpush.bf16.msra.mxu0 0
  %918 = vmatpush.bf16.msra.mxu0 0
  %919 = vmatpush.bf16.msra.mxu0 0
  %920 = vmatpush.bf16.msra.mxu0 0
  %921 = vmatpush.bf16.msra.mxu0 0
  %922 = vmatpush.bf16.msra.mxu0 0
  %923 = vmatpush.bf16.msra.mxu0 0
  %924 = vmatpush.bf16.msra.mxu0 %v913
  %925 = vmatmul.bf16.gmra.mxu0 %v915
  %v926 = vpop.f32.mrf.mxu0
  %v927 = vadd.f32 0.0, %v926
  %v928 = vpop.f32.mrf.mxu0
  %v929 = vadd.f32 0.0, %v928
  %930 = vdwg.mxu0
  %v931 = vpack.c.bf16 %v929, %v927
  %s932 = scalar_lea.vmem %s2, 240
  %v933 = vld [vmem:[%s932] sm:$0xf]
  %v934 = vld [vmem:[%s932 + $0x4] sm:$0xf]
  %v935 = vld [vmem:[%s932 + $0x8] sm:$0xf]
  %v936 = vld [vmem:[%s932 + $0xc] sm:$0xf]
  %v941 = vunpack.c.l.b16 %v933
  %v942 = vunpack.c.l.b16 %v934
  %v943 = vunpack.c.l.b16 %v935
  %v944 = vunpack.c.l.b16 %v936
  %v945 = vpack.c.b16 %v942, %v941
  %v946 = vpack.c.b16 %v944, %v943
  %v948 = vsel %vm143, %v931, 0
  %v951 = vsel %vm143, %v945, 0
  %v954 = vsel %vm143, %v946, 0
  %956 = vmatpush.bf16.xpose.msra.mxu0 0
  %957 = vmatpush.bf16.xpose.msra.mxu0 0
  %958 = vmatpush.bf16.xpose.msra.mxu0 0
  %959 = vmatpush.bf16.xpose.msra.mxu0 0
  %960 = vmatpush.bf16.xpose.msra.mxu0 0
  %961 = vmatpush.bf16.xpose.msra.mxu0 0
  %962 = vmatpush.bf16.xpose.msra.mxu0 %v954
  %963 = vmatpush.bf16.xpose.msra.mxu0 %v951
  %964 = vmatmul.bf16.gmra.mxu0 %v948
  %v965 = vpop.f32.mrf.mxu0
  %v966 = vadd.f32 0.0, %v965
  %v967 = vpop.f32.mrf.mxu0
  %v968 = vadd.f32 0.0, %v967
  %969 = vdwg.mxu0
  %v970 = vadd.f32 %v737, %v966
  %v971 = vadd.f32 %v738, %v968
  %v972 = vld [vmem:[%s4 + $0x4c] sm:$0x1]
  %v973 = vperm.slane %v972, 0
  %v974 = vadd.f32 %v970, %v973
  %v975 = vadd.f32 %v971, %v973
  %v976 = vadd.f32 %v24, %v974
  %v977 = vadd.f32 %v25, %v975
  %v978 = vld [vmem:[%s4 + $0x8e] sm:$0x1]
  %v979 = vld [vmem:[%s4 + $0x8f] sm:$0x1]
  %v980 = vsel %vm57, %v976, 0.0
  %981 = vadd.xlane.f32.xlu0 %v980
  %v982 = vpop.xlane.xlu0 %981
  %v983 = vsel %vm57, %v977, 0.0
  %984 = vadd.xlane.f32.xlu0 %v983
  %v985 = vpop.xlane.xlu0 %984
  %v986 = vrcp.pop 32.0
  %v987 = vmul.f32 32.0, %v986
  %v988 = vsub.f32 1.0, %v987
  %v989 = vmul.f32 %v986, %v988
  %v990 = vadd.f32 %v986, %v989
  %vm991 = vweird.f32 %v986
  %v992 = vsel %vm991, %v986, %v990
  %v993 = vmul.f32 %v982, %v992
  %v994 = vmul.f32 %v985, %v992
  %v995 = vsub.f32 %v976, %v993
  %v996 = vsub.f32 %v977, %v994
  %v997 = vmul.f32 %v995, %v995
  %v998 = vmul.f32 %v996, %v996
  %v999 = vsel %vm57, %v997, 0.0
  %1000 = vadd.xlane.f32.xlu0 %v999
  %v1001 = vpop.xlane.xlu0 %1000
  %v1002 = vsel %vm57, %v998, 0.0
  %1003 = vadd.xlane.f32.xlu0 %v1002
  %v1004 = vpop.xlane.xlu0 %1003
  %v1005 = vmul.f32 %v1001, %v992
  %v1006 = vmul.f32 %v1004, %v992
  %v1007 = vadd.f32 %v1005, 1e-05
  %v1008 = vadd.f32 %v1006, 1e-05
  %v1009 = vrsqrt.pop %v1007
  %v1010 = vmul.f32 %v1009, %v1007
  %v1011 = vmul.f32 %v1010, %v1009
  %v1012 = vmul.f32 0.5, %v1011
  %v1013 = vsub.f32 1.5, %v1012
  %v1014 = vmul.f32 %v1009, %v1013
  %vm1015 = vweird.f32 %v1007
  %vm1016 = vweird.f32 %v1009
  %vm1017 = vmor %vm1015, %vm1016
  %v1018 = vsel %vm1017, %v1009, %v1014
  %v1019 = vrsqrt.pop %v1008
  %v1020 = vmul.f32 %v1019, %v1008
  %v1021 = vmul.f32 %v1020, %v1019
  %v1022 = vmul.f32 0.5, %v1021
  %v1023 = vsub.f32 1.5, %v1022
  %v1024 = vmul.f32 %v1019, %v1023
  %vm1025 = vweird.f32 %v1008
  %vm1026 = vweird.f32 %v1019
  %vm1027 = vmor %vm1025, %vm1026
  %v1028 = vsel %vm1027, %v1019, %v1024
  %v1029 = vmul.f32 %v995, %v1018
  %v1030 = vmul.f32 %v996, %v1028
  %v1031 = vperm.slane %v978, 0
  %v1032 = vmul.f32 %v1029, %v1031
  %v1033 = vmul.f32 %v1030, %v1031
  %v1034 = vperm.slane %v979, 0
  %v1035 = vadd.f32 %v1032, %v1034
  %v1036 = vadd.f32 %v1033, %v1034
  %v1037 = vpack.c.bf16 %v1036, %v1035
  %v1038 = vld [vmem:[%s3] sm:$0xf]
  %v1039 = vld [vmem:[%s3 + $0x4] sm:$0xf]
  %v1040 = vld [vmem:[%s3 + $0x8] sm:$0xf]
  %v1041 = vld [vmem:[%s3 + $0xc] sm:$0xf]
  %s1042 = scalar_lea.vmem %s3, 16
  %v1043 = vld [vmem:[%s1042] sm:$0xf]
  %v1044 = vld [vmem:[%s1042 + $0x4] sm:$0xf]
  %v1045 = vld [vmem:[%s1042 + $0x8] sm:$0xf]
  %v1046 = vld [vmem:[%s1042 + $0xc] sm:$0xf]
  %v1047 = vld [vmem:[%s4 + $0xa2] sm:$0x1]
  %v1048 = vperm.slane %v1047, 0
  %v1053 = vunpack.c.l.b16 %v1038
  %v1054 = vunpack.c.l.b16 %v1039
  %v1055 = vunpack.c.l.b16 %v1040
  %v1056 = vunpack.c.l.b16 %v1041
  %v1057 = vpack.c.b16 %v1054, %v1053
  %v1058 = vpack.c.b16 %v1056, %v1055
  %v1062 = vsel %vm57, %v1037, 0
  %1064 = vmatpush.bf16.msra.mxu0 0
  %1065 = vmatpush.bf16.msra.mxu0 0
  %1066 = vmatpush.bf16.msra.mxu0 0
  %1067 = vmatpush.bf16.msra.mxu0 0
  %1068 = vmatpush.bf16.msra.mxu0 0
  %1069 = vmatpush.bf16.msra.mxu0 0
  %1070 = vmatpush.bf16.msra.mxu0 %v1058
  %1071 = vmatpush.bf16.msra.mxu0 %v1057
  %1072 = vmatmul.bf16.gmra.mxu0 %v1062
  %v1073 = vpop.f32.mrf.mxu0
  %v1074 = vadd.f32 %v1048, %v1073
  %v1075 = vpop.f32.mrf.mxu0
  %v1076 = vadd.f32 %v1048, %v1075
  %1077 = vdwg.mxu0
  %v1078 = vmax.f32 %v1074, 0.0
  %v1079 = vmax.f32 %v1076, 0.0
  %v1080 = vpack.c.bf16 %v1079, %v1078
  %v1081 = vld [vmem:[%s4 + $0xa3] sm:$0x1]
  %v1082 = vperm.slane %v1081, 0
  %v1087 = vunpack.c.l.b16 %v1043
  %v1088 = vunpack.c.l.b16 %v1044
  %v1089 = vunpack.c.l.b16 %v1045
  %v1090 = vunpack.c.l.b16 %v1046
  %v1091 = vpack.c.b16 %v1088, %v1087
  %v1092 = vpack.c.b16 %v1090, %v1089
  %vm1093 = vcmask 523264
  %v1095 = vsel %vm1093, %v1080, 0
  %v1098 = vsel %vm1093, %v1091, 0
  %v1101 = vsel %vm1093, %v1092, 0
  %1103 = vmatpush.bf16.xpose.msra.mxu0 0
  %1104 = vmatpush.bf16.xpose.msra.mxu0 0
  %1105 = vmatpush.bf16.xpose.msra.mxu0 0
  %1106 = vmatpush.bf16.xpose.msra.mxu0 0
  %1107 = vmatpush.bf16.xpose.msra.mxu0 0
  %1108 = vmatpush.bf16.xpose.msra.mxu0 0
  %1109 = vmatpush.bf16.xpose.msra.mxu0 %v1101
  %1110 = vmatpush.bf16.xpose.msra.mxu0 %v1098
  %1111 = vmatmul.bf16.gmra.mxu0 %v1095
  %v1112 = vpop.f32.mrf.mxu0
  %v1113 = vadd.f32 %v1082, %v1112
  %v1114 = vpop.f32.mrf.mxu0
  %v1115 = vadd.f32 %v1082, %v1114
  %1116 = vdwg.mxu0
  %v1117 = vadd.f32 %v1035, %v1113
  %v1118 = vadd.f32 %v1036, %v1115
  %v1119 = vld [vmem:[%s4 + $0x90] sm:$0x1]
  %v1120 = vld [vmem:[%s4 + $0x91] sm:$0x1]
  %v1121 = vsel %vm57, %v1117, 0.0
  %1122 = vadd.xlane.f32.xlu0 %v1121
  %v1123 = vpop.xlane.xlu0 %1122
  %v1124 = vsel %vm57, %v1118, 0.0
  %1125 = vadd.xlane.f32.xlu0 %v1124
  %v1126 = vpop.xlane.xlu0 %1125
  %v1127 = vmul.f32 %v1123, %v992
  %v1128 = vmul.f32 %v1126, %v992
  %v1129 = vsub.f32 %v1117, %v1127
  %v1130 = vsub.f32 %v1118, %v1128
  %v1131 = vmul.f32 %v1129, %v1129
  %v1132 = vmul.f32 %v1130, %v1130
  %v1133 = vsel %vm57, %v1131, 0.0
  %1134 = vadd.xlane.f32.xlu0 %v1133
  %v1135 = vpop.xlane.xlu0 %1134
  %v1136 = vsel %vm57, %v1132, 0.0
  %1137 = vadd.xlane.f32.xlu0 %v1136
  %v1138 = vpop.xlane.xlu0 %1137
  %v1139 = vmul.f32 %v1135, %v992
  %v1140 = vmul.f32 %v1138, %v992
  %v1141 = vadd.f32 %v1139, 1e-05
  %v1142 = vadd.f32 %v1140, 1e-05
  %v1143 = vrsqrt.pop %v1141
  %v1144 = vmul.f32 %v1143, %v1141
  %v1145 = vmul.f32 %v1144, %v1143
  %v1146 = vmul.f32 0.5, %v1145
  %v1147 = vsub.f32 1.5, %v1146
  %v1148 = vmul.f32 %v1143, %v1147
  %vm1149 = vweird.f32 %v1141
  %vm1150 = vweird.f32 %v1143
  %vm1151 = vmor %vm1149, %vm1150
  %v1152 = vsel %vm1151, %v1143, %v1148
  %v1153 = vrsqrt.pop %v1142
  %v1154 = vmul.f32 %v1153, %v1142
  %v1155 = vmul.f32 %v1154, %v1153
  %v1156 = vmul.f32 0.5, %v1155
  %v1157 = vsub.f32 1.5, %v1156
  %v1158 = vmul.f32 %v1153, %v1157
  %vm1159 = vweird.f32 %v1142
  %vm1160 = vweird.f32 %v1153
  %vm1161 = vmor %vm1159, %vm1160
  %v1162 = vsel %vm1161, %v1153, %v1158
  %v1163 = vmul.f32 %v1129, %v1152
  %v1164 = vmul.f32 %v1130, %v1162
  %v1165 = vperm.slane %v1119, 0
  %v1166 = vmul.f32 %v1163, %v1165
  %v1167 = vmul.f32 %v1164, %v1165
  %v1168 = vperm.slane %v1120, 0
  %v1169 = vadd.f32 %v1166, %v1168
  %v1170 = vadd.f32 %v1167, %v1168
  %v1171 = vpack.c.bf16 %v1170, %v1169
  %s1172 = scalar_lea.vmem %s2, 256
  %v1173 = vld [vmem:[%s1172] sm:$0xf]
  %v1174 = vld [vmem:[%s1172 + $0x4] sm:$0xf]
  %v1175 = vld [vmem:[%s1172 + $0x8] sm:$0xf]
  %v1176 = vld [vmem:[%s1172 + $0xc] sm:$0xf]
  %v1177 = vld [vmem:[%s4 + $0x4d] sm:$0x1]
  %v1178 = vperm.slane %v1177, 0
  %v1183 = vunpack.c.l.b16 %v1173
  %v1184 = vunpack.c.l.b16 %v1174
  %v1185 = vunpack.c.l.b16 %v1175
  %v1186 = vunpack.c.l.b16 %v1176
  %v1187 = vpack.c.b16 %v1184, %v1183
  %v1188 = vpack.c.b16 %v1186, %v1185
  %v1192 = vsel %vm57, %v1171, 0
  %1194 = vmatpush.bf16.msra.mxu0 0
  %1195 = vmatpush.bf16.msra.mxu0 0
  %1196 = vmatpush.bf16.msra.mxu0 0
  %1197 = vmatpush.bf16.msra.mxu0 0
  %1198 = vmatpush.bf16.msra.mxu0 0
  %1199 = vmatpush.bf16.msra.mxu0 0
  %1200 = vmatpush.bf16.msra.mxu0 %v1188
  %1201 = vmatpush.bf16.msra.mxu0 %v1187
  %1202 = vmatmul.bf16.gmra.mxu0 %v1192
  %v1203 = vpop.f32.mrf.mxu0
  %v1204 = vadd.f32 %v1178, %v1203
  %v1205 = vpop.f32.mrf.mxu0
  %v1206 = vadd.f32 %v1178, %v1205
  %1207 = vdwg.mxu0
  %s1208 = scalar_lea.vmem %s2, 320
  %v1209 = vld [vmem:[%s1208] sm:$0xf]
  %v1210 = vld [vmem:[%s1208 + $0x4] sm:$0xf]
  %v1211 = vld [vmem:[%s1208 + $0x8] sm:$0xf]
  %v1212 = vld [vmem:[%s1208 + $0xc] sm:$0xf]
  %v1213 = vld [vmem:[%s4 + $0x51] sm:$0x1]
  %v1214 = vperm.slane %v1213, 0
  %v1219 = vunpack.c.l.b16 %v1209
  %v1220 = vunpack.c.l.b16 %v1210
  %v1221 = vunpack.c.l.b16 %v1211
  %v1222 = vunpack.c.l.b16 %v1212
  %v1223 = vpack.c.b16 %v1220, %v1219
  %v1224 = vpack.c.b16 %v1222, %v1221
  %1227 = vmatpush.bf16.msra.mxu0 0
  %1228 = vmatpush.bf16.msra.mxu0 0
  %1229 = vmatpush.bf16.msra.mxu0 0
  %1230 = vmatpush.bf16.msra.mxu0 0
  %1231 = vmatpush.bf16.msra.mxu0 0
  %1232 = vmatpush.bf16.msra.mxu0 0
  %1233 = vmatpush.bf16.msra.mxu0 %v1224
  %1234 = vmatpush.bf16.msra.mxu0 %v1223
  %1235 = vmatmul.bf16.gmra.mxu0 %v1192
  %v1236 = vpop.f32.mrf.mxu0
  %v1237 = vadd.f32 %v1214, %v1236
  %v1238 = vpop.f32.mrf.mxu0
  %v1239 = vadd.f32 %v1214, %v1238
  %1240 = vdwg.mxu0
  %s1241 = scalar_lea.vmem %s2, 384
  %v1242 = vld [vmem:[%s1241] sm:$0xf]
  %v1243 = vld [vmem:[%s1241 + $0x4] sm:$0xf]
  %v1244 = vld [vmem:[%s1241 + $0x8] sm:$0xf]
  %v1245 = vld [vmem:[%s1241 + $0xc] sm:$0xf]
  %v1246 = vld [vmem:[%s4 + $0x55] sm:$0x1]
  %v1247 = vperm.slane %v1246, 0
  %v1252 = vunpack.c.l.b16 %v1242
  %v1253 = vunpack.c.l.b16 %v1243
  %v1254 = vunpack.c.l.b16 %v1244
  %v1255 = vunpack.c.l.b16 %v1245
  %v1256 = vpack.c.b16 %v1253, %v1252
  %v1257 = vpack.c.b16 %v1255, %v1254
  %1260 = vmatpush.bf16.msra.mxu0 0
  %1261 = vmatpush.bf16.msra.mxu0 0
  %1262 = vmatpush.bf16.msra.mxu0 0
  %1263 = vmatpush.bf16.msra.mxu0 0
  %1264 = vmatpush.bf16.msra.mxu0 0
  %1265 = vmatpush.bf16.msra.mxu0 0
  %1266 = vmatpush.bf16.msra.mxu0 %v1257
  %1267 = vmatpush.bf16.msra.mxu0 %v1256
  %1268 = vmatmul.bf16.gmra.mxu0 %v1192
  %v1269 = vpop.f32.mrf.mxu0
  %v1270 = vadd.f32 %v1247, %v1269
  %v1271 = vpop.f32.mrf.mxu0
  %v1272 = vadd.f32 %v1247, %v1271
  %1273 = vdwg.mxu0
  %v1274 = vpack.c.bf16 %v1206, %v1204
  %v1275 = vpack.c.bf16 %v1239, %v1237
  %v1277 = vsel %vm143, %v1274, 0
  %v1280 = vsel %vm143, %v1275, 0
  %1282 = vmatpush.bf16.xpose.msra.mxu0 0
  %1283 = vmatpush.bf16.xpose.msra.mxu0 0
  %1284 = vmatpush.bf16.xpose.msra.mxu0 0
  %1285 = vmatpush.bf16.xpose.msra.mxu0 0
  %1286 = vmatpush.bf16.xpose.msra.mxu0 0
  %1287 = vmatpush.bf16.xpose.msra.mxu0 0
  %1288 = vmatpush.bf16.xpose.msra.mxu0 0
  %1289 = vmatpush.bf16.xpose.msra.mxu0 %v1280
  %1290 = vmatmul.bf16.gmra.mxu0 %v1277
  %v1291 = vpop.f32.mrf.mxu0
  %v1292 = vadd.f32 0.0, %v1291
  %v1293 = vpop.f32.mrf.mxu0
  %v1294 = vadd.f32 0.0, %v1293
  %1295 = vdwg.mxu0
  %v1296 = vmul.f32 %v1292, 0.35355338
  %v1297 = vmul.f32 %v1294, 0.35355338
  %v1298 = vadd.f32 %v1296, %v36
  %v1299 = vadd.f32 %v1297, %v37
  %v1300 = vsel %vm168, %v1298, -inf
  %1301 = vmax.xlane.f32.xlu0 %v1300
  %v1302 = vpop.xlane.xlu0 %1301
  %v1303 = vsel %vm168, %v1299, -inf
  %1304 = vmax.xlane.f32.xlu0 %v1303
  %v1305 = vpop.xlane.xlu0 %1304
  %v1306 = vsub.f32 %v1298, %v1302
  %v1307 = vsub.f32 %v1299, %v1305
  %v1308 = vmul.f32 %v1306, 1.442695
  %v1309 = vpow.pop %v1308
  %v1310 = vmul.f32 %v1307, 1.442695
  %v1311 = vpow.pop %v1310
  %v1312 = vsel %vm168, %v1309, 0.0
  %1313 = vadd.xlane.f32.xlu0 %v1312
  %v1314 = vpop.xlane.xlu0 %1313
  %v1315 = vsel %vm168, %v1311, 0.0
  %1316 = vadd.xlane.f32.xlu0 %v1315
  %v1317 = vpop.xlane.xlu0 %1316
  %v1318 = vrcp.pop %v1314
  %v1319 = vmul.f32 %v1314, %v1318
  %v1320 = vsub.f32 1.0, %v1319
  %v1321 = vmul.f32 %v1318, %v1320
  %v1322 = vadd.f32 %v1318, %v1321
  %vm1323 = vweird.f32 %v1314
  %vm1324 = vweird.f32 %v1318
  %vm1325 = vmor %vm1323, %vm1324
  %v1326 = vsel %vm1325, %v1318, %v1322
  %v1327 = vand.u32 2147483647, %v1314
  %vm1328 = vcmp.eq.f32.partialorder %v1327, 8.507059e+37
  %v1329 = vand.u32 %v1314, 2147483648
  %v1330 = vor.u32 1.1754944e-38, %v1329
  %v1331 = vsel %vm1328, %v1330, %v1326
  %v1332 = vmul.f32 %v1309, %v1331
  %v1333 = vrcp.pop %v1317
  %v1334 = vmul.f32 %v1317, %v1333
  %v1335 = vsub.f32 1.0, %v1334
  %v1336 = vmul.f32 %v1333, %v1335
  %v1337 = vadd.f32 %v1333, %v1336
  %vm1338 = vweird.f32 %v1317
  %vm1339 = vweird.f32 %v1333
  %vm1340 = vmor %vm1338, %vm1339
  %v1341 = vsel %vm1340, %v1333, %v1337
  %v1342 = vand.u32 2147483647, %v1317
  %vm1343 = vcmp.eq.f32.partialorder %v1342, 8.507059e+37
  %v1344 = vand.u32 %v1317, 2147483648
  %v1345 = vor.u32 1.1754944e-38, %v1344
  %v1346 = vsel %vm1343, %v1345, %v1341
  %v1347 = vmul.f32 %v1311, %v1346
  %v1348 = vpack.c.bf16 %v1347, %v1332
  %v1349 = vpack.c.bf16 %v1272, %v1270
  %v1351 = vsel %vm168, %v1348, 0
  %1353 = vmatpush.bf16.msra.mxu0 0
  %1354 = vmatpush.bf16.msra.mxu0 0
  %1355 = vmatpush.bf16.msra.mxu0 0
  %1356 = vmatpush.bf16.msra.mxu0 0
  %1357 = vmatpush.bf16.msra.mxu0 0
  %1358 = vmatpush.bf16.msra.mxu0 0
  %1359 = vmatpush.bf16.msra.mxu0 0
  %1360 = vmatpush.bf16.msra.mxu0 %v1349
  %1361 = vmatmul.bf16.gmra.mxu0 %v1351
  %v1362 = vpop.f32.mrf.mxu0
  %v1363 = vadd.f32 0.0, %v1362
  %v1364 = vpop.f32.mrf.mxu0
  %v1365 = vadd.f32 0.0, %v1364
  %1366 = vdwg.mxu0
  %v1367 = vpack.c.bf16 %v1365, %v1363
  %s1368 = scalar_lea.vmem %s2, 448
  %v1369 = vld [vmem:[%s1368] sm:$0xf]
  %v1370 = vld [vmem:[%s1368 + $0x4] sm:$0xf]
  %v1371 = vld [vmem:[%s1368 + $0x8] sm:$0xf]
  %v1372 = vld [vmem:[%s1368 + $0xc] sm:$0xf]
  %s1373 = scalar_lea.vmem %s2, 272
  %v1374 = vld [vmem:[%s1373] sm:$0xf]
  %v1375 = vld [vmem:[%s1373 + $0x4] sm:$0xf]
  %v1376 = vld [vmem:[%s1373 + $0x8] sm:$0xf]
  %v1377 = vld [vmem:[%s1373 + $0xc] sm:$0xf]
  %v1378 = vld [vmem:[%s4 + $0x4e] sm:$0x1]
  %v1379 = vperm.slane %v1378, 0
  %v1384 = vunpack.c.l.b16 %v1374
  %v1385 = vunpack.c.l.b16 %v1375
  %v1386 = vunpack.c.l.b16 %v1376
  %v1387 = vunpack.c.l.b16 %v1377
  %v1388 = vpack.c.b16 %v1385, %v1384
  %v1389 = vpack.c.b16 %v1387, %v1386
  %1392 = vmatpush.bf16.msra.mxu0 0
  %1393 = vmatpush.bf16.msra.mxu0 0
  %1394 = vmatpush.bf16.msra.mxu0 0
  %1395 = vmatpush.bf16.msra.mxu0 0
  %1396 = vmatpush.bf16.msra.mxu0 0
  %1397 = vmatpush.bf16.msra.mxu0 0
  %1398 = vmatpush.bf16.msra.mxu0 %v1389
  %1399 = vmatpush.bf16.msra.mxu0 %v1388
  %1400 = vmatmul.bf16.gmra.mxu0 %v1192
  %v1401 = vpop.f32.mrf.mxu0
  %v1402 = vadd.f32 %v1379, %v1401
  %v1403 = vpop.f32.mrf.mxu0
  %v1404 = vadd.f32 %v1379, %v1403
  %1405 = vdwg.mxu0
  %s1406 = scalar_lea.vmem %s2, 336
  %v1407 = vld [vmem:[%s1406] sm:$0xf]
  %v1408 = vld [vmem:[%s1406 + $0x4] sm:$0xf]
  %v1409 = vld [vmem:[%s1406 + $0x8] sm:$0xf]
  %v1410 = vld [vmem:[%s1406 + $0xc] sm:$0xf]
  %v1411 = vld [vmem:[%s4 + $0x52] sm:$0x1]
  %v1412 = vperm.slane %v1411, 0
  %v1417 = vunpack.c.l.b16 %v1407
  %v1418 = vunpack.c.l.b16 %v1408
  %v1419 = vunpack.c.l.b16 %v1409
  %v1420 = vunpack.c.l.b16 %v1410
  %v1421 = vpack.c.b16 %v1418, %v1417
  %v1422 = vpack.c.b16 %v1420, %v1419
  %1425 = vmatpush.bf16.msra.mxu0 0
  %1426 = vmatpush.bf16.msra.mxu0 0
  %1427 = vmatpush.bf16.msra.mxu0 0
  %1428 = vmatpush.bf16.msra.mxu0 0
  %1429 = vmatpush.bf16.msra.mxu0 0
  %1430 = vmatpush.bf16.msra.mxu0 0
  %1431 = vmatpush.bf16.msra.mxu0 %v1422
  %1432 = vmatpush.bf16.msra.mxu0 %v1421
  %1433 = vmatmul.bf16.gmra.mxu0 %v1192
  %v1434 = vpop.f32.mrf.mxu0
  %v1435 = vadd.f32 %v1412, %v1434
  %v1436 = vpop.f32.mrf.mxu0
  %v1437 = vadd.f32 %v1412, %v1436
  %1438 = vdwg.mxu0
  %s1439 = scalar_lea.vmem %s2, 400
  %v1440 = vld [vmem:[%s1439] sm:$0xf]
  %v1441 = vld [vmem:[%s1439 + $0x4] sm:$0xf]
  %v1442 = vld [vmem:[%s1439 + $0x8] sm:$0xf]
  %v1443 = vld [vmem:[%s1439 + $0xc] sm:$0xf]
  %v1444 = vld [vmem:[%s4 + $0x56] sm:$0x1]
  %v1445 = vperm.slane %v1444, 0
  %v1450 = vunpack.c.l.b16 %v1440
  %v1451 = vunpack.c.l.b16 %v1441
  %v1452 = vunpack.c.l.b16 %v1442
  %v1453 = vunpack.c.l.b16 %v1443
  %v1454 = vpack.c.b16 %v1451, %v1450
  %v1455 = vpack.c.b16 %v1453, %v1452
  %1458 = vmatpush.bf16.msra.mxu0 0
  %1459 = vmatpush.bf16.msra.mxu0 0
  %1460 = vmatpush.bf16.msra.mxu0 0
  %1461 = vmatpush.bf16.msra.mxu0 0
  %1462 = vmatpush.bf16.msra.mxu0 0
  %1463 = vmatpush.bf16.msra.mxu0 0
  %1464 = vmatpush.bf16.msra.mxu0 %v1455
  %1465 = vmatpush.bf16.msra.mxu0 %v1454
  %1466 = vmatmul.bf16.gmra.mxu0 %v1192
  %v1467 = vpop.f32.mrf.mxu0
  %v1468 = vadd.f32 %v1445, %v1467
  %v1469 = vpop.f32.mrf.mxu0
  %v1470 = vadd.f32 %v1445, %v1469
  %1471 = vdwg.mxu0
  %v1472 = vpack.c.bf16 %v1404, %v1402
  %v1473 = vpack.c.bf16 %v1437, %v1435
  %v1475 = vsel %vm143, %v1472, 0
  %v1478 = vsel %vm143, %v1473, 0
  %1480 = vmatpush.bf16.xpose.msra.mxu0 0
  %1481 = vmatpush.bf16.xpose.msra.mxu0 0
  %1482 = vmatpush.bf16.xpose.msra.mxu0 0
  %1483 = vmatpush.bf16.xpose.msra.mxu0 0
  %1484 = vmatpush.bf16.xpose.msra.mxu0 0
  %1485 = vmatpush.bf16.xpose.msra.mxu0 0
  %1486 = vmatpush.bf16.xpose.msra.mxu0 0
  %1487 = vmatpush.bf16.xpose.msra.mxu0 %v1478
  %1488 = vmatmul.bf16.gmra.mxu0 %v1475
  %v1489 = vpop.f32.mrf.mxu0
  %v1490 = vadd.f32 0.0, %v1489
  %v1491 = vpop.f32.mrf.mxu0
  %v1492 = vadd.f32 0.0, %v1491
  %1493 = vdwg.mxu0
  %v1494 = vmul.f32 %v1490, 0.35355338
  %v1495 = vmul.f32 %v1492, 0.35355338
  %v1496 = vadd.f32 %v1494, %v36
  %v1497 = vadd.f32 %v1495, %v37
  %v1498 = vsel %vm168, %v1496, -inf
  %1499 = vmax.xlane.f32.xlu0 %v1498
  %v1500 = vpop.xlane.xlu0 %1499
  %v1501 = vsel %vm168, %v1497, -inf
  %1502 = vmax.xlane.f32.xlu0 %v1501
  %v1503 = vpop.xlane.xlu0 %1502
  %v1504 = vsub.f32 %v1496, %v1500
  %v1505 = vsub.f32 %v1497, %v1503
  %v1506 = vmul.f32 %v1504, 1.442695
  %v1507 = vpow.pop %v1506
  %v1508 = vmul.f32 %v1505, 1.442695
  %v1509 = vpow.pop %v1508
  %v1510 = vsel %vm168, %v1507, 0.0
  %1511 = vadd.xlane.f32.xlu0 %v1510
  %v1512 = vpop.xlane.xlu0 %1511
  %v1513 = vsel %vm168, %v1509, 0.0
  %1514 = vadd.xlane.f32.xlu0 %v1513
  %v1515 = vpop.xlane.xlu0 %1514
  %v1516 = vrcp.pop %v1512
  %v1517 = vmul.f32 %v1512, %v1516
  %v1518 = vsub.f32 1.0, %v1517
  %v1519 = vmul.f32 %v1516, %v1518
  %v1520 = vadd.f32 %v1516, %v1519
  %vm1521 = vweird.f32 %v1512
  %vm1522 = vweird.f32 %v1516
  %vm1523 = vmor %vm1521, %vm1522
  %v1524 = vsel %vm1523, %v1516, %v1520
  %v1525 = vand.u32 2147483647, %v1512
  %vm1526 = vcmp.eq.f32.partialorder %v1525, 8.507059e+37
  %v1527 = vand.u32 %v1512, 2147483648
  %v1528 = vor.u32 1.1754944e-38, %v1527
  %v1529 = vsel %vm1526, %v1528, %v1524
  %v1530 = vmul.f32 %v1507, %v1529
  %v1531 = vrcp.pop %v1515
  %v1532 = vmul.f32 %v1515, %v1531
  %v1533 = vsub.f32 1.0, %v1532
  %v1534 = vmul.f32 %v1531, %v1533
  %v1535 = vadd.f32 %v1531, %v1534
  %vm1536 = vweird.f32 %v1515
  %vm1537 = vweird.f32 %v1531
  %vm1538 = vmor %vm1536, %vm1537
  %v1539 = vsel %vm1538, %v1531, %v1535
  %v1540 = vand.u32 2147483647, %v1515
  %vm1541 = vcmp.eq.f32.partialorder %v1540, 8.507059e+37
  %v1542 = vand.u32 %v1515, 2147483648
  %v1543 = vor.u32 1.1754944e-38, %v1542
  %v1544 = vsel %vm1541, %v1543, %v1539
  %v1545 = vmul.f32 %v1509, %v1544
  %v1546 = vpack.c.bf16 %v1545, %v1530
  %v1547 = vpack.c.bf16 %v1470, %v1468
  %v1549 = vsel %vm168, %v1546, 0
  %1551 = vmatpush.bf16.msra.mxu0 0
  %1552 = vmatpush.bf16.msra.mxu0 0
  %1553 = vmatpush.bf16.msra.mxu0 0
  %1554 = vmatpush.bf16.msra.mxu0 0
  %1555 = vmatpush.bf16.msra.mxu0 0
  %1556 = vmatpush.bf16.msra.mxu0 0
  %1557 = vmatpush.bf16.msra.mxu0 0
  %1558 = vmatpush.bf16.msra.mxu0 %v1547
  %1559 = vmatmul.bf16.gmra.mxu0 %v1549
  %v1560 = vpop.f32.mrf.mxu0
  %v1561 = vadd.f32 0.0, %v1560
  %v1562 = vpop.f32.mrf.mxu0
  %v1563 = vadd.f32 0.0, %v1562
  %1564 = vdwg.mxu0
  %v1565 = vpack.c.bf16 %v1563, %v1561
  %s1566 = scalar_lea.vmem %s2, 464
  %v1567 = vld [vmem:[%s1566] sm:$0xf]
  %v1568 = vld [vmem:[%s1566 + $0x4] sm:$0xf]
  %v1569 = vld [vmem:[%s1566 + $0x8] sm:$0xf]
  %v1570 = vld [vmem:[%s1566 + $0xc] sm:$0xf]
  %v1575 = vunpack.c.l.b16 %v1567
  %v1576 = vunpack.c.l.b16 %v1568
  %v1577 = vunpack.c.l.b16 %v1569
  %v1578 = vunpack.c.l.b16 %v1570
  %v1579 = vpack.c.b16 %v1576, %v1575
  %v1580 = vpack.c.b16 %v1578, %v1577
  %v1582 = vsel %vm143, %v1565, 0
  %v1585 = vsel %vm143, %v1579, 0
  %v1588 = vsel %vm143, %v1580, 0
  %1590 = vmatpush.bf16.xpose.msra.mxu0 0
  %1591 = vmatpush.bf16.xpose.msra.mxu0 0
  %1592 = vmatpush.bf16.xpose.msra.mxu0 0
  %1593 = vmatpush.bf16.xpose.msra.mxu0 0
  %1594 = vmatpush.bf16.xpose.msra.mxu0 0
  %1595 = vmatpush.bf16.xpose.msra.mxu0 0
  %1596 = vmatpush.bf16.xpose.msra.mxu0 %v1588
  %1597 = vmatpush.bf16.xpose.msra.mxu0 %v1585
  %1598 = vmatmul.bf16.gmra.mxu0 %v1582
  %v1599 = vpop.f32.mrf.mxu0
  %v1600 = vadd.f32 0.0, %v1599
  %v1601 = vpop.f32.mrf.mxu0
  %v1602 = vadd.f32 0.0, %v1601
  %1603 = vdwg.mxu0
  %v1608 = vunpack.c.l.b16 %v1369
  %v1609 = vunpack.c.l.b16 %v1370
  %v1610 = vunpack.c.l.b16 %v1371
  %v1611 = vunpack.c.l.b16 %v1372
  %v1612 = vpack.c.b16 %v1609, %v1608
  %v1613 = vpack.c.b16 %v1611, %v1610
  %v1615 = vsel %vm143, %v1367, 0
  %v1618 = vsel %vm143, %v1612, 0
  %v1621 = vsel %vm143, %v1613, 0
  %1623 = vmatpush.bf16.xpose.msra.mxu0 0
  %1624 = vmatpush.bf16.xpose.msra.mxu0 0
  %1625 = vmatpush.bf16.xpose.msra.mxu0 0
  %1626 = vmatpush.bf16.xpose.msra.mxu0 0
  %1627 = vmatpush.bf16.xpose.msra.mxu0 0
  %1628 = vmatpush.bf16.xpose.msra.mxu0 0
  %1629 = vmatpush.bf16.xpose.msra.mxu0 %v1621
  %1630 = vmatpush.bf16.xpose.msra.mxu0 %v1618
  %1631 = vmatmul.bf16.gmra.mxu0 %v1615
  %v1632 = vpop.f32.mrf.mxu0
  %v1633 = vadd.f32 %v1600, %v1632
  %v1634 = vpop.f32.mrf.mxu0
  %v1635 = vadd.f32 %v1602, %v1634
  %1636 = vdwg.mxu0
  %s1637 = scalar_lea.vmem %s2, 288
  %v1638 = vld [vmem:[%s1637] sm:$0xf]
  %v1639 = vld [vmem:[%s1637 + $0x4] sm:$0xf]
  %v1640 = vld [vmem:[%s1637 + $0x8] sm:$0xf]
  %v1641 = vld [vmem:[%s1637 + $0xc] sm:$0xf]
  %v1642 = vld [vmem:[%s4 + $0x4f] sm:$0x1]
  %v1643 = vperm.slane %v1642, 0
  %v1648 = vunpack.c.l.b16 %v1638
  %v1649 = vunpack.c.l.b16 %v1639
  %v1650 = vunpack.c.l.b16 %v1640
  %v1651 = vunpack.c.l.b16 %v1641
  %v1652 = vpack.c.b16 %v1649, %v1648
  %v1653 = vpack.c.b16 %v1651, %v1650
  %1656 = vmatpush.bf16.msra.mxu0 0
  %1657 = vmatpush.bf16.msra.mxu0 0
  %1658 = vmatpush.bf16.msra.mxu0 0
  %1659 = vmatpush.bf16.msra.mxu0 0
  %1660 = vmatpush.bf16.msra.mxu0 0
  %1661 = vmatpush.bf16.msra.mxu0 0
  %1662 = vmatpush.bf16.msra.mxu0 %v1653
  %1663 = vmatpush.bf16.msra.mxu0 %v1652
  %1664 = vmatmul.bf16.gmra.mxu0 %v1192
  %v1665 = vpop.f32.mrf.mxu0
  %v1666 = vadd.f32 %v1643, %v1665
  %v1667 = vpop.f32.mrf.mxu0
  %v1668 = vadd.f32 %v1643, %v1667
  %1669 = vdwg.mxu0
  %s1670 = scalar_lea.vmem %s2, 352
  %v1671 = vld [vmem:[%s1670] sm:$0xf]
  %v1672 = vld [vmem:[%s1670 + $0x4] sm:$0xf]
  %v1673 = vld [vmem:[%s1670 + $0x8] sm:$0xf]
  %v1674 = vld [vmem:[%s1670 + $0xc] sm:$0xf]
  %v1675 = vld [vmem:[%s4 + $0x53] sm:$0x1]
  %v1676 = vperm.slane %v1675, 0
  %v1681 = vunpack.c.l.b16 %v1671
  %v1682 = vunpack.c.l.b16 %v1672
  %v1683 = vunpack.c.l.b16 %v1673
  %v1684 = vunpack.c.l.b16 %v1674
  %v1685 = vpack.c.b16 %v1682, %v1681
  %v1686 = vpack.c.b16 %v1684, %v1683
  %1689 = vmatpush.bf16.msra.mxu0 0
  %1690 = vmatpush.bf16.msra.mxu0 0
  %1691 = vmatpush.bf16.msra.mxu0 0
  %1692 = vmatpush.bf16.msra.mxu0 0
  %1693 = vmatpush.bf16.msra.mxu0 0
  %1694 = vmatpush.bf16.msra.mxu0 0
  %1695 = vmatpush.bf16.msra.mxu0 %v1686
  %1696 = vmatpush.bf16.msra.mxu0 %v1685
  %1697 = vmatmul.bf16.gmra.mxu0 %v1192
  %v1698 = vpop.f32.mrf.mxu0
  %v1699 = vadd.f32 %v1676, %v1698
  %v1700 = vpop.f32.mrf.mxu0
  %v1701 = vadd.f32 %v1676, %v1700
  %1702 = vdwg.mxu0
  %s1703 = scalar_lea.vmem %s2, 416
  %v1704 = vld [vmem:[%s1703] sm:$0xf]
  %v1705 = vld [vmem:[%s1703 + $0x4] sm:$0xf]
  %v1706 = vld [vmem:[%s1703 + $0x8] sm:$0xf]
  %v1707 = vld [vmem:[%s1703 + $0xc] sm:$0xf]
  %v1708 = vld [vmem:[%s4 + $0x57] sm:$0x1]
  %v1709 = vperm.slane %v1708, 0
  %v1714 = vunpack.c.l.b16 %v1704
  %v1715 = vunpack.c.l.b16 %v1705
  %v1716 = vunpack.c.l.b16 %v1706
  %v1717 = vunpack.c.l.b16 %v1707
  %v1718 = vpack.c.b16 %v1715, %v1714
  %v1719 = vpack.c.b16 %v1717, %v1716
  %1722 = vmatpush.bf16.msra.mxu0 0
  %1723 = vmatpush.bf16.msra.mxu0 0
  %1724 = vmatpush.bf16.msra.mxu0 0
  %1725 = vmatpush.bf16.msra.mxu0 0
  %1726 = vmatpush.bf16.msra.mxu0 0
  %1727 = vmatpush.bf16.msra.mxu0 0
  %1728 = vmatpush.bf16.msra.mxu0 %v1719
  %1729 = vmatpush.bf16.msra.mxu0 %v1718
  %1730 = vmatmul.bf16.gmra.mxu0 %v1192
  %v1731 = vpop.f32.mrf.mxu0
  %v1732 = vadd.f32 %v1709, %v1731
  %v1733 = vpop.f32.mrf.mxu0
  %v1734 = vadd.f32 %v1709, %v1733
  %1735 = vdwg.mxu0
  %v1736 = vpack.c.bf16 %v1668, %v1666
  %v1737 = vpack.c.bf16 %v1701, %v1699
  %v1739 = vsel %vm143, %v1736, 0
  %v1742 = vsel %vm143, %v1737, 0
  %1744 = vmatpush.bf16.xpose.msra.mxu0 0
  %1745 = vmatpush.bf16.xpose.msra.mxu0 0
  %1746 = vmatpush.bf16.xpose.msra.mxu0 0
  %1747 = vmatpush.bf16.xpose.msra.mxu0 0
  %1748 = vmatpush.bf16.xpose.msra.mxu0 0
  %1749 = vmatpush.bf16.xpose.msra.mxu0 0
  %1750 = vmatpush.bf16.xpose.msra.mxu0 0
  %1751 = vmatpush.bf16.xpose.msra.mxu0 %v1742
  %1752 = vmatmul.bf16.gmra.mxu0 %v1739
  %v1753 = vpop.f32.mrf.mxu0
  %v1754 = vadd.f32 0.0, %v1753
  %v1755 = vpop.f32.mrf.mxu0
  %v1756 = vadd.f32 0.0, %v1755
  %1757 = vdwg.mxu0
  %v1758 = vmul.f32 %v1754, 0.35355338
  %v1759 = vmul.f32 %v1756, 0.35355338
  %v1760 = vadd.f32 %v1758, %v36
  %v1761 = vadd.f32 %v1759, %v37
  %v1762 = vsel %vm168, %v1760, -inf
  %1763 = vmax.xlane.f32.xlu0 %v1762
  %v1764 = vpop.xlane.xlu0 %1763
  %v1765 = vsel %vm168, %v1761, -inf
  %1766 = vmax.xlane.f32.xlu0 %v1765
  %v1767 = vpop.xlane.xlu0 %1766
  %v1768 = vsub.f32 %v1760, %v1764
  %v1769 = vsub.f32 %v1761, %v1767
  %v1770 = vmul.f32 %v1768, 1.442695
  %v1771 = vpow.pop %v1770
  %v1772 = vmul.f32 %v1769, 1.442695
  %v1773 = vpow.pop %v1772
  %v1774 = vsel %vm168, %v1771, 0.0
  %1775 = vadd.xlane.f32.xlu0 %v1774
  %v1776 = vpop.xlane.xlu0 %1775
  %v1777 = vsel %vm168, %v1773, 0.0
  %1778 = vadd.xlane.f32.xlu0 %v1777
  %v1779 = vpop.xlane.xlu0 %1778
  %v1780 = vrcp.pop %v1776
  %v1781 = vmul.f32 %v1776, %v1780
  %v1782 = vsub.f32 1.0, %v1781
  %v1783 = vmul.f32 %v1780, %v1782
  %v1784 = vadd.f32 %v1780, %v1783
  %vm1785 = vweird.f32 %v1776
  %vm1786 = vweird.f32 %v1780
  %vm1787 = vmor %vm1785, %vm1786
  %v1788 = vsel %vm1787, %v1780, %v1784
  %v1789 = vand.u32 2147483647, %v1776
  %vm1790 = vcmp.eq.f32.partialorder %v1789, 8.507059e+37
  %v1791 = vand.u32 %v1776, 2147483648
  %v1792 = vor.u32 1.1754944e-38, %v1791
  %v1793 = vsel %vm1790, %v1792, %v1788
  %v1794 = vmul.f32 %v1771, %v1793
  %v1795 = vrcp.pop %v1779
  %v1796 = vmul.f32 %v1779, %v1795
  %v1797 = vsub.f32 1.0, %v1796
  %v1798 = vmul.f32 %v1795, %v1797
  %v1799 = vadd.f32 %v1795, %v1798
  %vm1800 = vweird.f32 %v1779
  %vm1801 = vweird.f32 %v1795
  %vm1802 = vmor %vm1800, %vm1801
  %v1803 = vsel %vm1802, %v1795, %v1799
  %v1804 = vand.u32 2147483647, %v1779
  %vm1805 = vcmp.eq.f32.partialorder %v1804, 8.507059e+37
  %v1806 = vand.u32 %v1779, 2147483648
  %v1807 = vor.u32 1.1754944e-38, %v1806
  %v1808 = vsel %vm1805, %v1807, %v1803
  %v1809 = vmul.f32 %v1773, %v1808
  %v1810 = vpack.c.bf16 %v1809, %v1794
  %v1811 = vpack.c.bf16 %v1734, %v1732
  %v1813 = vsel %vm168, %v1810, 0
  %1815 = vmatpush.bf16.msra.mxu0 0
  %1816 = vmatpush.bf16.msra.mxu0 0
  %1817 = vmatpush.bf16.msra.mxu0 0
  %1818 = vmatpush.bf16.msra.mxu0 0
  %1819 = vmatpush.bf16.msra.mxu0 0
  %1820 = vmatpush.bf16.msra.mxu0 0
  %1821 = vmatpush.bf16.msra.mxu0 0
  %1822 = vmatpush.bf16.msra.mxu0 %v1811
  %1823 = vmatmul.bf16.gmra.mxu0 %v1813
  %v1824 = vpop.f32.mrf.mxu0
  %v1825 = vadd.f32 0.0, %v1824
  %v1826 = vpop.f32.mrf.mxu0
  %v1827 = vadd.f32 0.0, %v1826
  %1828 = vdwg.mxu0
  %v1829 = vpack.c.bf16 %v1827, %v1825
  %s1830 = scalar_lea.vmem %s2, 480
  %v1831 = vld [vmem:[%s1830] sm:$0xf]
  %v1832 = vld [vmem:[%s1830 + $0x4] sm:$0xf]
  %v1833 = vld [vmem:[%s1830 + $0x8] sm:$0xf]
  %v1834 = vld [vmem:[%s1830 + $0xc] sm:$0xf]
  %v1839 = vunpack.c.l.b16 %v1831
  %v1840 = vunpack.c.l.b16 %v1832
  %v1841 = vunpack.c.l.b16 %v1833
  %v1842 = vunpack.c.l.b16 %v1834
  %v1843 = vpack.c.b16 %v1840, %v1839
  %v1844 = vpack.c.b16 %v1842, %v1841
  %v1846 = vsel %vm143, %v1829, 0
  %v1849 = vsel %vm143, %v1843, 0
  %v1852 = vsel %vm143, %v1844, 0
  %1854 = vmatpush.bf16.xpose.msra.mxu0 0
  %1855 = vmatpush.bf16.xpose.msra.mxu0 0
  %1856 = vmatpush.bf16.xpose.msra.mxu0 0
  %1857 = vmatpush.bf16.xpose.msra.mxu0 0
  %1858 = vmatpush.bf16.xpose.msra.mxu0 0
  %1859 = vmatpush.bf16.xpose.msra.mxu0 0
  %1860 = vmatpush.bf16.xpose.msra.mxu0 %v1852
  %1861 = vmatpush.bf16.xpose.msra.mxu0 %v1849
  %1862 = vmatmul.bf16.gmra.mxu0 %v1846
  %v1863 = vpop.f32.mrf.mxu0
  %v1864 = vadd.f32 0.0, %v1863
  %v1865 = vpop.f32.mrf.mxu0
  %v1866 = vadd.f32 0.0, %v1865
  %1867 = vdwg.mxu0
  %v1868 = vadd.f32 %v1633, %v1864
  %v1869 = vadd.f32 %v1635, %v1866
  %s1870 = scalar_lea.vmem %s2, 304
  %v1871 = vld [vmem:[%s1870] sm:$0xf]
  %v1872 = vld [vmem:[%s1870 + $0x4] sm:$0xf]
  %v1873 = vld [vmem:[%s1870 + $0x8] sm:$0xf]
  %v1874 = vld [vmem:[%s1870 + $0xc] sm:$0xf]
  %v1875 = vld [vmem:[%s4 + $0x50] sm:$0x1]
  %v1876 = vperm.slane %v1875, 0
  %v1881 = vunpack.c.l.b16 %v1871
  %v1882 = vunpack.c.l.b16 %v1872
  %v1883 = vunpack.c.l.b16 %v1873
  %v1884 = vunpack.c.l.b16 %v1874
  %v1885 = vpack.c.b16 %v1882, %v1881
  %v1886 = vpack.c.b16 %v1884, %v1883
  %1889 = vmatpush.bf16.msra.mxu0 0
  %1890 = vmatpush.bf16.msra.mxu0 0
  %1891 = vmatpush.bf16.msra.mxu0 0
  %1892 = vmatpush.bf16.msra.mxu0 0
  %1893 = vmatpush.bf16.msra.mxu0 0
  %1894 = vmatpush.bf16.msra.mxu0 0
  %1895 = vmatpush.bf16.msra.mxu0 %v1886
  %1896 = vmatpush.bf16.msra.mxu0 %v1885
  %1897 = vmatmul.bf16.gmra.mxu0 %v1192
  %v1898 = vpop.f32.mrf.mxu0
  %v1899 = vadd.f32 %v1876, %v1898
  %v1900 = vpop.f32.mrf.mxu0
  %v1901 = vadd.f32 %v1876, %v1900
  %1902 = vdwg.mxu0
  %s1903 = scalar_lea.vmem %s2, 368
  %v1904 = vld [vmem:[%s1903] sm:$0xf]
  %v1905 = vld [vmem:[%s1903 + $0x4] sm:$0xf]
  %v1906 = vld [vmem:[%s1903 + $0x8] sm:$0xf]
  %v1907 = vld [vmem:[%s1903 + $0xc] sm:$0xf]
  %v1908 = vld [vmem:[%s4 + $0x54] sm:$0x1]
  %v1909 = vperm.slane %v1908, 0
  %v1914 = vunpack.c.l.b16 %v1904
  %v1915 = vunpack.c.l.b16 %v1905
  %v1916 = vunpack.c.l.b16 %v1906
  %v1917 = vunpack.c.l.b16 %v1907
  %v1918 = vpack.c.b16 %v1915, %v1914
  %v1919 = vpack.c.b16 %v1917, %v1916
  %1922 = vmatpush.bf16.msra.mxu0 0
  %1923 = vmatpush.bf16.msra.mxu0 0
  %1924 = vmatpush.bf16.msra.mxu0 0
  %1925 = vmatpush.bf16.msra.mxu0 0
  %1926 = vmatpush.bf16.msra.mxu0 0
  %1927 = vmatpush.bf16.msra.mxu0 0
  %1928 = vmatpush.bf16.msra.mxu0 %v1919
  %1929 = vmatpush.bf16.msra.mxu0 %v1918
  %1930 = vmatmul.bf16.gmra.mxu0 %v1192
  %v1931 = vpop.f32.mrf.mxu0
  %v1932 = vadd.f32 %v1909, %v1931
  %v1933 = vpop.f32.mrf.mxu0
  %v1934 = vadd.f32 %v1909, %v1933
  %1935 = vdwg.mxu0
  %s1936 = scalar_lea.vmem %s2, 432
  %v1937 = vld [vmem:[%s1936] sm:$0xf]
  %v1938 = vld [vmem:[%s1936 + $0x4] sm:$0xf]
  %v1939 = vld [vmem:[%s1936 + $0x8] sm:$0xf]
  %v1940 = vld [vmem:[%s1936 + $0xc] sm:$0xf]
  %v1941 = vld [vmem:[%s4 + $0x58] sm:$0x1]
  %v1942 = vperm.slane %v1941, 0
  %v1947 = vunpack.c.l.b16 %v1937
  %v1948 = vunpack.c.l.b16 %v1938
  %v1949 = vunpack.c.l.b16 %v1939
  %v1950 = vunpack.c.l.b16 %v1940
  %v1951 = vpack.c.b16 %v1948, %v1947
  %v1952 = vpack.c.b16 %v1950, %v1949
  %1955 = vmatpush.bf16.msra.mxu0 0
  %1956 = vmatpush.bf16.msra.mxu0 0
  %1957 = vmatpush.bf16.msra.mxu0 0
  %1958 = vmatpush.bf16.msra.mxu0 0
  %1959 = vmatpush.bf16.msra.mxu0 0
  %1960 = vmatpush.bf16.msra.mxu0 0
  %1961 = vmatpush.bf16.msra.mxu0 %v1952
  %1962 = vmatpush.bf16.msra.mxu0 %v1951
  %1963 = vmatmul.bf16.gmra.mxu0 %v1192
  %v1964 = vpop.f32.mrf.mxu0
  %v1965 = vadd.f32 %v1942, %v1964
  %v1966 = vpop.f32.mrf.mxu0
  %v1967 = vadd.f32 %v1942, %v1966
  %1968 = vdwg.mxu0
  %v1969 = vpack.c.bf16 %v1901, %v1899
  %v1970 = vpack.c.bf16 %v1934, %v1932
  %v1972 = vsel %vm143, %v1969, 0
  %v1975 = vsel %vm143, %v1970, 0
  %1977 = vmatpush.bf16.xpose.msra.mxu0 0
  %1978 = vmatpush.bf16.xpose.msra.mxu0 0
  %1979 = vmatpush.bf16.xpose.msra.mxu0 0
  %1980 = vmatpush.bf16.xpose.msra.mxu0 0
  %1981 = vmatpush.bf16.xpose.msra.mxu0 0
  %1982 = vmatpush.bf16.xpose.msra.mxu0 0
  %1983 = vmatpush.bf16.xpose.msra.mxu0 0
  %1984 = vmatpush.bf16.xpose.msra.mxu0 %v1975
  %1985 = vmatmul.bf16.gmra.mxu0 %v1972
  %v1986 = vpop.f32.mrf.mxu0
  %v1987 = vadd.f32 0.0, %v1986
  %v1988 = vpop.f32.mrf.mxu0
  %v1989 = vadd.f32 0.0, %v1988
  %1990 = vdwg.mxu0
  %v1991 = vmul.f32 %v1987, 0.35355338
  %v1992 = vmul.f32 %v1989, 0.35355338
  %v1993 = vadd.f32 %v1991, %v36
  %v1994 = vadd.f32 %v1992, %v37
  %v1995 = vsel %vm168, %v1993, -inf
  %1996 = vmax.xlane.f32.xlu0 %v1995
  %v1997 = vpop.xlane.xlu0 %1996
  %v1998 = vsel %vm168, %v1994, -inf
  %1999 = vmax.xlane.f32.xlu0 %v1998
  %v2000 = vpop.xlane.xlu0 %1999
  %v2001 = vsub.f32 %v1993, %v1997
  %v2002 = vsub.f32 %v1994, %v2000
  %v2003 = vmul.f32 %v2001, 1.442695
  %v2004 = vpow.pop %v2003
  %v2005 = vmul.f32 %v2002, 1.442695
  %v2006 = vpow.pop %v2005
  %v2007 = vsel %vm168, %v2004, 0.0
  %2008 = vadd.xlane.f32.xlu0 %v2007
  %v2009 = vpop.xlane.xlu0 %2008
  %v2010 = vsel %vm168, %v2006, 0.0
  %2011 = vadd.xlane.f32.xlu0 %v2010
  %v2012 = vpop.xlane.xlu0 %2011
  %v2013 = vrcp.pop %v2009
  %v2014 = vmul.f32 %v2009, %v2013
  %v2015 = vsub.f32 1.0, %v2014
  %v2016 = vmul.f32 %v2013, %v2015
  %v2017 = vadd.f32 %v2013, %v2016
  %vm2018 = vweird.f32 %v2009
  %vm2019 = vweird.f32 %v2013
  %vm2020 = vmor %vm2018, %vm2019
  %v2021 = vsel %vm2020, %v2013, %v2017
  %v2022 = vand.u32 2147483647, %v2009
  %vm2023 = vcmp.eq.f32.partialorder %v2022, 8.507059e+37
  %v2024 = vand.u32 %v2009, 2147483648
  %v2025 = vor.u32 1.1754944e-38, %v2024
  %v2026 = vsel %vm2023, %v2025, %v2021
  %v2027 = vmul.f32 %v2004, %v2026
  %v2028 = vrcp.pop %v2012
  %v2029 = vmul.f32 %v2012, %v2028
  %v2030 = vsub.f32 1.0, %v2029
  %v2031 = vmul.f32 %v2028, %v2030
  %v2032 = vadd.f32 %v2028, %v2031
  %vm2033 = vweird.f32 %v2012
  %vm2034 = vweird.f32 %v2028
  %vm2035 = vmor %vm2033, %vm2034
  %v2036 = vsel %vm2035, %v2028, %v2032
  %v2037 = vand.u32 2147483647, %v2012
  %vm2038 = vcmp.eq.f32.partialorder %v2037, 8.507059e+37
  %v2039 = vand.u32 %v2012, 2147483648
  %v2040 = vor.u32 1.1754944e-38, %v2039
  %v2041 = vsel %vm2038, %v2040, %v2036
  %v2042 = vmul.f32 %v2006, %v2041
  %v2043 = vpack.c.bf16 %v2042, %v2027
  %v2044 = vpack.c.bf16 %v1967, %v1965
  %v2046 = vsel %vm168, %v2043, 0
  %2048 = vmatpush.bf16.msra.mxu0 0
  %2049 = vmatpush.bf16.msra.mxu0 0
  %2050 = vmatpush.bf16.msra.mxu0 0
  %2051 = vmatpush.bf16.msra.mxu0 0
  %2052 = vmatpush.bf16.msra.mxu0 0
  %2053 = vmatpush.bf16.msra.mxu0 0
  %2054 = vmatpush.bf16.msra.mxu0 0
  %2055 = vmatpush.bf16.msra.mxu0 %v2044
  %2056 = vmatmul.bf16.gmra.mxu0 %v2046
  %v2057 = vpop.f32.mrf.mxu0
  %v2058 = vadd.f32 0.0, %v2057
  %v2059 = vpop.f32.mrf.mxu0
  %v2060 = vadd.f32 0.0, %v2059
  %2061 = vdwg.mxu0
  %v2062 = vpack.c.bf16 %v2060, %v2058
  %s2063 = scalar_lea.vmem %s2, 496
  %v2064 = vld [vmem:[%s2063] sm:$0xf]
  %v2065 = vld [vmem:[%s2063 + $0x4] sm:$0xf]
  %v2066 = vld [vmem:[%s2063 + $0x8] sm:$0xf]
  %v2067 = vld [vmem:[%s2063 + $0xc] sm:$0xf]
  %v2072 = vunpack.c.l.b16 %v2064
  %v2073 = vunpack.c.l.b16 %v2065
  %v2074 = vunpack.c.l.b16 %v2066
  %v2075 = vunpack.c.l.b16 %v2067
  %v2076 = vpack.c.b16 %v2073, %v2072
  %v2077 = vpack.c.b16 %v2075, %v2074
  %v2079 = vsel %vm143, %v2062, 0
  %v2082 = vsel %vm143, %v2076, 0
  %v2085 = vsel %vm143, %v2077, 0
  %2087 = vmatpush.bf16.xpose.msra.mxu0 0
  %2088 = vmatpush.bf16.xpose.msra.mxu0 0
  %2089 = vmatpush.bf16.xpose.msra.mxu0 0
  %2090 = vmatpush.bf16.xpose.msra.mxu0 0
  %2091 = vmatpush.bf16.xpose.msra.mxu0 0
  %2092 = vmatpush.bf16.xpose.msra.mxu0 0
  %2093 = vmatpush.bf16.xpose.msra.mxu0 %v2085
  %2094 = vmatpush.bf16.xpose.msra.mxu0 %v2082
  %2095 = vmatmul.bf16.gmra.mxu0 %v2079
  %v2096 = vpop.f32.mrf.mxu0
  %v2097 = vadd.f32 0.0, %v2096
  %v2098 = vpop.f32.mrf.mxu0
  %v2099 = vadd.f32 0.0, %v2098
  %2100 = vdwg.mxu0
  %v2101 = vadd.f32 %v1868, %v2097
  %v2102 = vadd.f32 %v1869, %v2099
  %v2103 = vld [vmem:[%s4 + $0x59] sm:$0x1]
  %v2104 = vperm.slane %v2103, 0
  %v2105 = vadd.f32 %v2101, %v2104
  %v2106 = vadd.f32 %v2102, %v2104
  %v2107 = vadd.f32 %v1169, %v2105
  %v2108 = vadd.f32 %v1170, %v2106
  %v2109 = vld [vmem:[%s4 + $0x92] sm:$0x1]
  %v2110 = vld [vmem:[%s4 + $0x93] sm:$0x1]
  %v2111 = vsel %vm57, %v2107, 0.0
  %2112 = vadd.xlane.f32.xlu0 %v2111
  %v2113 = vpop.xlane.xlu0 %2112
  %v2114 = vsel %vm57, %v2108, 0.0
  %2115 = vadd.xlane.f32.xlu0 %v2114
  %v2116 = vpop.xlane.xlu0 %2115
  %v2117 = vmul.f32 %v2113, %v992
  %v2118 = vmul.f32 %v2116, %v992
  %v2119 = vsub.f32 %v2107, %v2117
  %v2120 = vsub.f32 %v2108, %v2118
  %v2121 = vmul.f32 %v2119, %v2119
  %v2122 = vmul.f32 %v2120, %v2120
  %v2123 = vsel %vm57, %v2121, 0.0
  %2124 = vadd.xlane.f32.xlu0 %v2123
  %v2125 = vpop.xlane.xlu0 %2124
  %v2126 = vsel %vm57, %v2122, 0.0
  %2127 = vadd.xlane.f32.xlu0 %v2126
  %v2128 = vpop.xlane.xlu0 %2127
  %v2129 = vmul.f32 %v2125, %v992
  %v2130 = vmul.f32 %v2128, %v992
  %v2131 = vadd.f32 %v2129, 1e-05
  %v2132 = vadd.f32 %v2130, 1e-05
  %v2133 = vrsqrt.pop %v2131
  %v2134 = vmul.f32 %v2133, %v2131
  %v2135 = vmul.f32 %v2134, %v2133
  %v2136 = vmul.f32 0.5, %v2135
  %v2137 = vsub.f32 1.5, %v2136
  %v2138 = vmul.f32 %v2133, %v2137
  %vm2139 = vweird.f32 %v2131
  %vm2140 = vweird.f32 %v2133
  %vm2141 = vmor %vm2139, %vm2140
  %v2142 = vsel %vm2141, %v2133, %v2138
  %v2143 = vrsqrt.pop %v2132
  %v2144 = vmul.f32 %v2143, %v2132
  %v2145 = vmul.f32 %v2144, %v2143
  %v2146 = vmul.f32 0.5, %v2145
  %v2147 = vsub.f32 1.5, %v2146
  %v2148 = vmul.f32 %v2143, %v2147
  %vm2149 = vweird.f32 %v2132
  %vm2150 = vweird.f32 %v2143
  %vm2151 = vmor %vm2149, %vm2150
  %v2152 = vsel %vm2151, %v2143, %v2148
  %v2153 = vmul.f32 %v2119, %v2142
  %v2154 = vmul.f32 %v2120, %v2152
  %v2155 = vperm.slane %v2109, 0
  %v2156 = vmul.f32 %v2153, %v2155
  %v2157 = vmul.f32 %v2154, %v2155
  %v2158 = vperm.slane %v2110, 0
  %v2159 = vadd.f32 %v2156, %v2158
  %v2160 = vadd.f32 %v2157, %v2158
  %v2161 = vpack.c.bf16 %v2160, %v2159
  %s2162 = scalar_lea.vmem %s3, 32
  %v2163 = vld [vmem:[%s2162] sm:$0xf]
  %v2164 = vld [vmem:[%s2162 + $0x4] sm:$0xf]
  %v2165 = vld [vmem:[%s2162 + $0x8] sm:$0xf]
  %v2166 = vld [vmem:[%s2162 + $0xc] sm:$0xf]
  %s2167 = scalar_lea.vmem %s3, 48
  %v2168 = vld [vmem:[%s2167] sm:$0xf]
  %v2169 = vld [vmem:[%s2167 + $0x4] sm:$0xf]
  %v2170 = vld [vmem:[%s2167 + $0x8] sm:$0xf]
  %v2171 = vld [vmem:[%s2167 + $0xc] sm:$0xf]
  %v2172 = vld [vmem:[%s4 + $0xa4] sm:$0x1]
  %v2173 = vperm.slane %v2172, 0
  %v2178 = vunpack.c.l.b16 %v2163
  %v2179 = vunpack.c.l.b16 %v2164
  %v2180 = vunpack.c.l.b16 %v2165
  %v2181 = vunpack.c.l.b16 %v2166
  %v2182 = vpack.c.b16 %v2179, %v2178
  %v2183 = vpack.c.b16 %v2181, %v2180
  %v2187 = vsel %vm57, %v2161, 0
  %2189 = vmatpush.bf16.msra.mxu0 0
  %2190 = vmatpush.bf16.msra.mxu0 0
  %2191 = vmatpush.bf16.msra.mxu0 0
  %2192 = vmatpush.bf16.msra.mxu0 0
  %2193 = vmatpush.bf16.msra.mxu0 0
  %2194 = vmatpush.bf16.msra.mxu0 0
  %2195 = vmatpush.bf16.msra.mxu0 %v2183
  %2196 = vmatpush.bf16.msra.mxu0 %v2182
  %2197 = vmatmul.bf16.gmra.mxu0 %v2187
  %v2198 = vpop.f32.mrf.mxu0
  %v2199 = vadd.f32 %v2173, %v2198
  %v2200 = vpop.f32.mrf.mxu0
  %v2201 = vadd.f32 %v2173, %v2200
  %2202 = vdwg.mxu0
  %v2203 = vmax.f32 %v2199, 0.0
  %v2204 = vmax.f32 %v2201, 0.0
  %v2205 = vpack.c.bf16 %v2204, %v2203
  %v2206 = vld [vmem:[%s4 + $0xa5] sm:$0x1]
  %v2207 = vperm.slane %v2206, 0
  %v2212 = vunpack.c.l.b16 %v2168
  %v2213 = vunpack.c.l.b16 %v2169
  %v2214 = vunpack.c.l.b16 %v2170
  %v2215 = vunpack.c.l.b16 %v2171
  %v2216 = vpack.c.b16 %v2213, %v2212
  %v2217 = vpack.c.b16 %v2215, %v2214
  %v2219 = vsel %vm1093, %v2205, 0
  %v2222 = vsel %vm1093, %v2216, 0
  %v2225 = vsel %vm1093, %v2217, 0
  %2227 = vmatpush.bf16.xpose.msra.mxu0 0
  %2228 = vmatpush.bf16.xpose.msra.mxu0 0
  %2229 = vmatpush.bf16.xpose.msra.mxu0 0
  %2230 = vmatpush.bf16.xpose.msra.mxu0 0
  %2231 = vmatpush.bf16.xpose.msra.mxu0 0
  %2232 = vmatpush.bf16.xpose.msra.mxu0 0
  %2233 = vmatpush.bf16.xpose.msra.mxu0 %v2225
  %2234 = vmatpush.bf16.xpose.msra.mxu0 %v2222
  %2235 = vmatmul.bf16.gmra.mxu0 %v2219
  %v2236 = vpop.f32.mrf.mxu0
  %v2237 = vadd.f32 %v2207, %v2236
  %v2238 = vpop.f32.mrf.mxu0
  %v2239 = vadd.f32 %v2207, %v2238
  %2240 = vdwg.mxu0
  %v2241 = vadd.f32 %v2159, %v2237
  %v2242 = vadd.f32 %v2160, %v2239
  %v2243 = vld [vmem:[%s4 + $0x94] sm:$0x1]
  %v2244 = vld [vmem:[%s4 + $0x95] sm:$0x1]
  %v2245 = vsel %vm57, %v2241, 0.0
  %2246 = vadd.xlane.f32.xlu0 %v2245
  %v2247 = vpop.xlane.xlu0 %2246
  %v2248 = vsel %vm57, %v2242, 0.0
  %2249 = vadd.xlane.f32.xlu0 %v2248
  %v2250 = vpop.xlane.xlu0 %2249
  %v2251 = vmul.f32 %v2247, %v992
  %v2252 = vmul.f32 %v2250, %v992
  %v2253 = vsub.f32 %v2241, %v2251
  %v2254 = vsub.f32 %v2242, %v2252
  %v2255 = vmul.f32 %v2253, %v2253
  %v2256 = vmul.f32 %v2254, %v2254
  %v2257 = vsel %vm57, %v2255, 0.0
  %2258 = vadd.xlane.f32.xlu0 %v2257
  %v2259 = vpop.xlane.xlu0 %2258
  %v2260 = vsel %vm57, %v2256, 0.0
  %2261 = vadd.xlane.f32.xlu0 %v2260
  %v2262 = vpop.xlane.xlu0 %2261
  %v2263 = vmul.f32 %v2259, %v992
  %v2264 = vmul.f32 %v2262, %v992
  %v2265 = vadd.f32 %v2263, 1e-05
  %v2266 = vadd.f32 %v2264, 1e-05
  %v2267 = vrsqrt.pop %v2265
  %v2268 = vmul.f32 %v2267, %v2265
  %v2269 = vmul.f32 %v2268, %v2267
  %v2270 = vmul.f32 0.5, %v2269
  %v2271 = vsub.f32 1.5, %v2270
  %v2272 = vmul.f32 %v2267, %v2271
  %vm2273 = vweird.f32 %v2265
  %vm2274 = vweird.f32 %v2267
  %vm2275 = vmor %vm2273, %vm2274
  %v2276 = vsel %vm2275, %v2267, %v2272
  %v2277 = vrsqrt.pop %v2266
  %v2278 = vmul.f32 %v2277, %v2266
  %v2279 = vmul.f32 %v2278, %v2277
  %v2280 = vmul.f32 0.5, %v2279
  %v2281 = vsub.f32 1.5, %v2280
  %v2282 = vmul.f32 %v2277, %v2281
  %vm2283 = vweird.f32 %v2266
  %vm2284 = vweird.f32 %v2277
  %vm2285 = vmor %vm2283, %vm2284
  %v2286 = vsel %vm2285, %v2277, %v2282
  %v2287 = vmul.f32 %v2253, %v2276
  %v2288 = vmul.f32 %v2254, %v2286
  %v2289 = vperm.slane %v2243, 0
  %v2290 = vmul.f32 %v2287, %v2289
  %v2291 = vmul.f32 %v2288, %v2289
  %v2292 = vperm.slane %v2244, 0
  %v2293 = vadd.f32 %v2290, %v2292
  %v2294 = vadd.f32 %v2291, %v2292
  %v2295 = vld [vmem:[%s1] sm:$0xff]
  %v2296 = vld [vmem:[%s1 + $0x8] sm:$0xff]
  %v2297 = vadd.f32 %v2295, %v21
  %v2298 = vadd.f32 %v2296, %v21
  %v2299 = vpack.c.bf16 %v2298, %v2297
  %s2300 = scalar_lea.vmem %s2, 512
  %v2301 = vld [vmem:[%s2300] sm:$0xf]
  %v2302 = vld [vmem:[%s2300 + $0x4] sm:$0xf]
  %v2303 = vld [vmem:[%s2300 + $0x8] sm:$0xf]
  %v2304 = vld [vmem:[%s2300 + $0xc] sm:$0xf]
  %v2305 = vld [vmem:[%s4 + $0x5a] sm:$0x1]
  %v2306 = vperm.slane %v2305, 0
  %v2311 = vunpack.c.l.b16 %v2301
  %v2312 = vunpack.c.l.b16 %v2302
  %v2313 = vunpack.c.l.b16 %v2303
  %v2314 = vunpack.c.l.b16 %v2304
  %v2315 = vpack.c.b16 %v2312, %v2311
  %v2316 = vpack.c.b16 %v2314, %v2313
  %v2320 = vsel %vm57, %v2299, 0
  %2322 = vmatpush.bf16.msra.mxu0 0
  %2323 = vmatpush.bf16.msra.mxu0 0
  %2324 = vmatpush.bf16.msra.mxu0 0
  %2325 = vmatpush.bf16.msra.mxu0 0
  %2326 = vmatpush.bf16.msra.mxu0 0
  %2327 = vmatpush.bf16.msra.mxu0 0
  %2328 = vmatpush.bf16.msra.mxu0 %v2316
  %2329 = vmatpush.bf16.msra.mxu0 %v2315
  %2330 = vmatmul.bf16.gmra.mxu0 %v2320
  %v2331 = vpop.f32.mrf.mxu0
  %v2332 = vadd.f32 %v2306, %v2331
  %v2333 = vpop.f32.mrf.mxu0
  %v2334 = vadd.f32 %v2306, %v2333
  %2335 = vdwg.mxu0
  %s2336 = scalar_lea.vmem %s2, 576
  %v2337 = vld [vmem:[%s2336] sm:$0xf]
  %v2338 = vld [vmem:[%s2336 + $0x4] sm:$0xf]
  %v2339 = vld [vmem:[%s2336 + $0x8] sm:$0xf]
  %v2340 = vld [vmem:[%s2336 + $0xc] sm:$0xf]
  %v2341 = vld [vmem:[%s4 + $0x5e] sm:$0x1]
  %v2342 = vperm.slane %v2341, 0
  %v2347 = vunpack.c.l.b16 %v2337
  %v2348 = vunpack.c.l.b16 %v2338
  %v2349 = vunpack.c.l.b16 %v2339
  %v2350 = vunpack.c.l.b16 %v2340
  %v2351 = vpack.c.b16 %v2348, %v2347
  %v2352 = vpack.c.b16 %v2350, %v2349
  %2355 = vmatpush.bf16.msra.mxu0 0
  %2356 = vmatpush.bf16.msra.mxu0 0
  %2357 = vmatpush.bf16.msra.mxu0 0
  %2358 = vmatpush.bf16.msra.mxu0 0
  %2359 = vmatpush.bf16.msra.mxu0 0
  %2360 = vmatpush.bf16.msra.mxu0 0
  %2361 = vmatpush.bf16.msra.mxu0 %v2352
  %2362 = vmatpush.bf16.msra.mxu0 %v2351
  %2363 = vmatmul.bf16.gmra.mxu0 %v2320
  %v2364 = vpop.f32.mrf.mxu0
  %v2365 = vadd.f32 %v2342, %v2364
  %v2366 = vpop.f32.mrf.mxu0
  %v2367 = vadd.f32 %v2342, %v2366
  %2368 = vdwg.mxu0
  %s2369 = scalar_lea.vmem %s2, 640
  %v2370 = vld [vmem:[%s2369] sm:$0xf]
  %v2371 = vld [vmem:[%s2369 + $0x4] sm:$0xf]
  %v2372 = vld [vmem:[%s2369 + $0x8] sm:$0xf]
  %v2373 = vld [vmem:[%s2369 + $0xc] sm:$0xf]
  %v2374 = vld [vmem:[%s4 + $0x62] sm:$0x1]
  %v2375 = vperm.slane %v2374, 0
  %v2380 = vunpack.c.l.b16 %v2370
  %v2381 = vunpack.c.l.b16 %v2371
  %v2382 = vunpack.c.l.b16 %v2372
  %v2383 = vunpack.c.l.b16 %v2373
  %v2384 = vpack.c.b16 %v2381, %v2380
  %v2385 = vpack.c.b16 %v2383, %v2382
  %2388 = vmatpush.bf16.msra.mxu0 0
  %2389 = vmatpush.bf16.msra.mxu0 0
  %2390 = vmatpush.bf16.msra.mxu0 0
  %2391 = vmatpush.bf16.msra.mxu0 0
  %2392 = vmatpush.bf16.msra.mxu0 0
  %2393 = vmatpush.bf16.msra.mxu0 0
  %2394 = vmatpush.bf16.msra.mxu0 %v2385
  %2395 = vmatpush.bf16.msra.mxu0 %v2384
  %2396 = vmatmul.bf16.gmra.mxu0 %v2320
  %v2397 = vpop.f32.mrf.mxu0
  %v2398 = vadd.f32 %v2375, %v2397
  %v2399 = vpop.f32.mrf.mxu0
  %v2400 = vadd.f32 %v2375, %v2399
  %2401 = vdwg.mxu0
  %v2402 = vpack.c.bf16 %v2334, %v2332
  %v2403 = vpack.c.bf16 %v2367, %v2365
  %v2405 = vsel %vm143, %v2402, 0
  %v2408 = vsel %vm143, %v2403, 0
  %2410 = vmatpush.bf16.xpose.msra.mxu0 0
  %2411 = vmatpush.bf16.xpose.msra.mxu0 0
  %2412 = vmatpush.bf16.xpose.msra.mxu0 0
  %2413 = vmatpush.bf16.xpose.msra.mxu0 0
  %2414 = vmatpush.bf16.xpose.msra.mxu0 0
  %2415 = vmatpush.bf16.xpose.msra.mxu0 0
  %2416 = vmatpush.bf16.xpose.msra.mxu0 0
  %2417 = vmatpush.bf16.xpose.msra.mxu0 %v2408
  %2418 = vmatmul.bf16.gmra.mxu0 %v2405
  %v2419 = vpop.f32.mrf.mxu0
  %v2420 = vadd.f32 0.0, %v2419
  %v2421 = vpop.f32.mrf.mxu0
  %v2422 = vadd.f32 0.0, %v2421
  %2423 = vdwg.mxu0
  %v2424 = vmul.f32 %v2420, 0.35355338
  %v2425 = vmul.f32 %v2422, 0.35355338
  %v2426 = vadd.f32 %v2424, %v36
  %v2427 = vadd.f32 %v2425, %v37
  %v2428 = vsel %vm168, %v2426, -inf
  %2429 = vmax.xlane.f32.xlu0 %v2428
  %v2430 = vpop.xlane.xlu0 %2429
  %v2431 = vsel %vm168, %v2427, -inf
  %2432 = vmax.xlane.f32.xlu0 %v2431
  %v2433 = vpop.xlane.xlu0 %2432
  %v2434 = vsub.f32 %v2426, %v2430
  %v2435 = vsub.f32 %v2427, %v2433
  %v2436 = vmul.f32 %v2434, 1.442695
  %v2437 = vpow.pop %v2436
  %v2438 = vmul.f32 %v2435, 1.442695
  %v2439 = vpow.pop %v2438
  %v2440 = vsel %vm168, %v2437, 0.0
  %2441 = vadd.xlane.f32.xlu0 %v2440
  %v2442 = vpop.xlane.xlu0 %2441
  %v2443 = vsel %vm168, %v2439, 0.0
  %2444 = vadd.xlane.f32.xlu0 %v2443
  %v2445 = vpop.xlane.xlu0 %2444
  %v2446 = vrcp.pop %v2442
  %v2447 = vmul.f32 %v2442, %v2446
  %v2448 = vsub.f32 1.0, %v2447
  %v2449 = vmul.f32 %v2446, %v2448
  %v2450 = vadd.f32 %v2446, %v2449
  %vm2451 = vweird.f32 %v2442
  %vm2452 = vweird.f32 %v2446
  %vm2453 = vmor %vm2451, %vm2452
  %v2454 = vsel %vm2453, %v2446, %v2450
  %v2455 = vand.u32 2147483647, %v2442
  %vm2456 = vcmp.eq.f32.partialorder %v2455, 8.507059e+37
  %v2457 = vand.u32 %v2442, 2147483648
  %v2458 = vor.u32 1.1754944e-38, %v2457
  %v2459 = vsel %vm2456, %v2458, %v2454
  %v2460 = vmul.f32 %v2437, %v2459
  %v2461 = vrcp.pop %v2445
  %v2462 = vmul.f32 %v2445, %v2461
  %v2463 = vsub.f32 1.0, %v2462
  %v2464 = vmul.f32 %v2461, %v2463
  %v2465 = vadd.f32 %v2461, %v2464
  %vm2466 = vweird.f32 %v2445
  %vm2467 = vweird.f32 %v2461
  %vm2468 = vmor %vm2466, %vm2467
  %v2469 = vsel %vm2468, %v2461, %v2465
  %v2470 = vand.u32 2147483647, %v2445
  %vm2471 = vcmp.eq.f32.partialorder %v2470, 8.507059e+37
  %v2472 = vand.u32 %v2445, 2147483648
  %v2473 = vor.u32 1.1754944e-38, %v2472
  %v2474 = vsel %vm2471, %v2473, %v2469
  %v2475 = vmul.f32 %v2439, %v2474
  %v2476 = vpack.c.bf16 %v2475, %v2460
  %v2477 = vpack.c.bf16 %v2400, %v2398
  %v2479 = vsel %vm168, %v2476, 0
  %2481 = vmatpush.bf16.msra.mxu0 0
  %2482 = vmatpush.bf16.msra.mxu0 0
  %2483 = vmatpush.bf16.msra.mxu0 0
  %2484 = vmatpush.bf16.msra.mxu0 0
  %2485 = vmatpush.bf16.msra.mxu0 0
  %2486 = vmatpush.bf16.msra.mxu0 0
  %2487 = vmatpush.bf16.msra.mxu0 0
  %2488 = vmatpush.bf16.msra.mxu0 %v2477
  %2489 = vmatmul.bf16.gmra.mxu0 %v2479
  %v2490 = vpop.f32.mrf.mxu0
  %v2491 = vadd.f32 0.0, %v2490
  %v2492 = vpop.f32.mrf.mxu0
  %v2493 = vadd.f32 0.0, %v2492
  %2494 = vdwg.mxu0
  %v2495 = vpack.c.bf16 %v2493, %v2491
  %s2496 = scalar_lea.vmem %s2, 704
  %v2497 = vld [vmem:[%s2496] sm:$0xf]
  %v2498 = vld [vmem:[%s2496 + $0x4] sm:$0xf]
  %v2499 = vld [vmem:[%s2496 + $0x8] sm:$0xf]
  %v2500 = vld [vmem:[%s2496 + $0xc] sm:$0xf]
  %s2501 = scalar_lea.vmem %s2, 528
  %v2502 = vld [vmem:[%s2501] sm:$0xf]
  %v2503 = vld [vmem:[%s2501 + $0x4] sm:$0xf]
  %v2504 = vld [vmem:[%s2501 + $0x8] sm:$0xf]
  %v2505 = vld [vmem:[%s2501 + $0xc] sm:$0xf]
  %v2506 = vld [vmem:[%s4 + $0x5b] sm:$0x1]
  %v2507 = vperm.slane %v2506, 0
  %v2512 = vunpack.c.l.b16 %v2502
  %v2513 = vunpack.c.l.b16 %v2503
  %v2514 = vunpack.c.l.b16 %v2504
  %v2515 = vunpack.c.l.b16 %v2505
  %v2516 = vpack.c.b16 %v2513, %v2512
  %v2517 = vpack.c.b16 %v2515, %v2514
  %2520 = vmatpush.bf16.msra.mxu0 0
  %2521 = vmatpush.bf16.msra.mxu0 0
  %2522 = vmatpush.bf16.msra.mxu0 0
  %2523 = vmatpush.bf16.msra.mxu0 0
  %2524 = vmatpush.bf16.msra.mxu0 0
  %2525 = vmatpush.bf16.msra.mxu0 0
  %2526 = vmatpush.bf16.msra.mxu0 %v2517
  %2527 = vmatpush.bf16.msra.mxu0 %v2516
  %2528 = vmatmul.bf16.gmra.mxu0 %v2320
  %v2529 = vpop.f32.mrf.mxu0
  %v2530 = vadd.f32 %v2507, %v2529
  %v2531 = vpop.f32.mrf.mxu0
  %v2532 = vadd.f32 %v2507, %v2531
  %2533 = vdwg.mxu0
  %s2534 = scalar_lea.vmem %s2, 592
  %v2535 = vld [vmem:[%s2534] sm:$0xf]
  %v2536 = vld [vmem:[%s2534 + $0x4] sm:$0xf]
  %v2537 = vld [vmem:[%s2534 + $0x8] sm:$0xf]
  %v2538 = vld [vmem:[%s2534 + $0xc] sm:$0xf]
  %v2539 = vld [vmem:[%s4 + $0x5f] sm:$0x1]
  %v2540 = vperm.slane %v2539, 0
  %v2545 = vunpack.c.l.b16 %v2535
  %v2546 = vunpack.c.l.b16 %v2536
  %v2547 = vunpack.c.l.b16 %v2537
  %v2548 = vunpack.c.l.b16 %v2538
  %v2549 = vpack.c.b16 %v2546, %v2545
  %v2550 = vpack.c.b16 %v2548, %v2547
  %2553 = vmatpush.bf16.msra.mxu0 0
  %2554 = vmatpush.bf16.msra.mxu0 0
  %2555 = vmatpush.bf16.msra.mxu0 0
  %2556 = vmatpush.bf16.msra.mxu0 0
  %2557 = vmatpush.bf16.msra.mxu0 0
  %2558 = vmatpush.bf16.msra.mxu0 0
  %2559 = vmatpush.bf16.msra.mxu0 %v2550
  %2560 = vmatpush.bf16.msra.mxu0 %v2549
  %2561 = vmatmul.bf16.gmra.mxu0 %v2320
  %v2562 = vpop.f32.mrf.mxu0
  %v2563 = vadd.f32 %v2540, %v2562
  %v2564 = vpop.f32.mrf.mxu0
  %v2565 = vadd.f32 %v2540, %v2564
  %2566 = vdwg.mxu0
  %s2567 = scalar_lea.vmem %s2, 656
  %v2568 = vld [vmem:[%s2567] sm:$0xf]
  %v2569 = vld [vmem:[%s2567 + $0x4] sm:$0xf]
  %v2570 = vld [vmem:[%s2567 + $0x8] sm:$0xf]
  %v2571 = vld [vmem:[%s2567 + $0xc] sm:$0xf]
  %v2572 = vld [vmem:[%s4 + $0x63] sm:$0x1]
  %v2573 = vperm.slane %v2572, 0
  %v2578 = vunpack.c.l.b16 %v2568
  %v2579 = vunpack.c.l.b16 %v2569
  %v2580 = vunpack.c.l.b16 %v2570
  %v2581 = vunpack.c.l.b16 %v2571
  %v2582 = vpack.c.b16 %v2579, %v2578
  %v2583 = vpack.c.b16 %v2581, %v2580
  %2586 = vmatpush.bf16.msra.mxu0 0
  %2587 = vmatpush.bf16.msra.mxu0 0
  %2588 = vmatpush.bf16.msra.mxu0 0
  %2589 = vmatpush.bf16.msra.mxu0 0
  %2590 = vmatpush.bf16.msra.mxu0 0
  %2591 = vmatpush.bf16.msra.mxu0 0
  %2592 = vmatpush.bf16.msra.mxu0 %v2583
  %2593 = vmatpush.bf16.msra.mxu0 %v2582
  %2594 = vmatmul.bf16.gmra.mxu0 %v2320
  %v2595 = vpop.f32.mrf.mxu0
  %v2596 = vadd.f32 %v2573, %v2595
  %v2597 = vpop.f32.mrf.mxu0
  %v2598 = vadd.f32 %v2573, %v2597
  %2599 = vdwg.mxu0
  %v2600 = vpack.c.bf16 %v2532, %v2530
  %v2601 = vpack.c.bf16 %v2565, %v2563
  %v2603 = vsel %vm143, %v2600, 0
  %v2606 = vsel %vm143, %v2601, 0
  %2608 = vmatpush.bf16.xpose.msra.mxu0 0
  %2609 = vmatpush.bf16.xpose.msra.mxu0 0
  %2610 = vmatpush.bf16.xpose.msra.mxu0 0
  %2611 = vmatpush.bf16.xpose.msra.mxu0 0
  %2612 = vmatpush.bf16.xpose.msra.mxu0 0
  %2613 = vmatpush.bf16.xpose.msra.mxu0 0
  %2614 = vmatpush.bf16.xpose.msra.mxu0 0
  %2615 = vmatpush.bf16.xpose.msra.mxu0 %v2606
  %2616 = vmatmul.bf16.gmra.mxu0 %v2603
  %v2617 = vpop.f32.mrf.mxu0
  %v2618 = vadd.f32 0.0, %v2617
  %v2619 = vpop.f32.mrf.mxu0
  %v2620 = vadd.f32 0.0, %v2619
  %2621 = vdwg.mxu0
  %v2622 = vmul.f32 %v2618, 0.35355338
  %v2623 = vmul.f32 %v2620, 0.35355338
  %v2624 = vadd.f32 %v2622, %v36
  %v2625 = vadd.f32 %v2623, %v37
  %v2626 = vsel %vm168, %v2624, -inf
  %2627 = vmax.xlane.f32.xlu0 %v2626
  %v2628 = vpop.xlane.xlu0 %2627
  %v2629 = vsel %vm168, %v2625, -inf
  %2630 = vmax.xlane.f32.xlu0 %v2629
  %v2631 = vpop.xlane.xlu0 %2630
  %v2632 = vsub.f32 %v2624, %v2628
  %v2633 = vsub.f32 %v2625, %v2631
  %v2634 = vmul.f32 %v2632, 1.442695
  %v2635 = vpow.pop %v2634
  %v2636 = vmul.f32 %v2633, 1.442695
  %v2637 = vpow.pop %v2636
  %v2638 = vsel %vm168, %v2635, 0.0
  %2639 = vadd.xlane.f32.xlu0 %v2638
  %v2640 = vpop.xlane.xlu0 %2639
  %v2641 = vsel %vm168, %v2637, 0.0
  %2642 = vadd.xlane.f32.xlu0 %v2641
  %v2643 = vpop.xlane.xlu0 %2642
  %v2644 = vrcp.pop %v2640
  %v2645 = vmul.f32 %v2640, %v2644
  %v2646 = vsub.f32 1.0, %v2645
  %v2647 = vmul.f32 %v2644, %v2646
  %v2648 = vadd.f32 %v2644, %v2647
  %vm2649 = vweird.f32 %v2640
  %vm2650 = vweird.f32 %v2644
  %vm2651 = vmor %vm2649, %vm2650
  %v2652 = vsel %vm2651, %v2644, %v2648
  %v2653 = vand.u32 2147483647, %v2640
  %vm2654 = vcmp.eq.f32.partialorder %v2653, 8.507059e+37
  %v2655 = vand.u32 %v2640, 2147483648
  %v2656 = vor.u32 1.1754944e-38, %v2655
  %v2657 = vsel %vm2654, %v2656, %v2652
  %v2658 = vmul.f32 %v2635, %v2657
  %v2659 = vrcp.pop %v2643
  %v2660 = vmul.f32 %v2643, %v2659
  %v2661 = vsub.f32 1.0, %v2660
  %v2662 = vmul.f32 %v2659, %v2661
  %v2663 = vadd.f32 %v2659, %v2662
  %vm2664 = vweird.f32 %v2643
  %vm2665 = vweird.f32 %v2659
  %vm2666 = vmor %vm2664, %vm2665
  %v2667 = vsel %vm2666, %v2659, %v2663
  %v2668 = vand.u32 2147483647, %v2643
  %vm2669 = vcmp.eq.f32.partialorder %v2668, 8.507059e+37
  %v2670 = vand.u32 %v2643, 2147483648
  %v2671 = vor.u32 1.1754944e-38, %v2670
  %v2672 = vsel %vm2669, %v2671, %v2667
  %v2673 = vmul.f32 %v2637, %v2672
  %v2674 = vpack.c.bf16 %v2673, %v2658
  %v2675 = vpack.c.bf16 %v2598, %v2596
  %v2677 = vsel %vm168, %v2674, 0
  %2679 = vmatpush.bf16.msra.mxu0 0
  %2680 = vmatpush.bf16.msra.mxu0 0
  %2681 = vmatpush.bf16.msra.mxu0 0
  %2682 = vmatpush.bf16.msra.mxu0 0
  %2683 = vmatpush.bf16.msra.mxu0 0
  %2684 = vmatpush.bf16.msra.mxu0 0
  %2685 = vmatpush.bf16.msra.mxu0 0
  %2686 = vmatpush.bf16.msra.mxu0 %v2675
  %2687 = vmatmul.bf16.gmra.mxu0 %v2677
  %v2688 = vpop.f32.mrf.mxu0
  %v2689 = vadd.f32 0.0, %v2688
  %v2690 = vpop.f32.mrf.mxu0
  %v2691 = vadd.f32 0.0, %v2690
  %2692 = vdwg.mxu0
  %v2693 = vpack.c.bf16 %v2691, %v2689
  %s2694 = scalar_lea.vmem %s2, 720
  %v2695 = vld [vmem:[%s2694] sm:$0xf]
  %v2696 = vld [vmem:[%s2694 + $0x4] sm:$0xf]
  %v2697 = vld [vmem:[%s2694 + $0x8] sm:$0xf]
  %v2698 = vld [vmem:[%s2694 + $0xc] sm:$0xf]
  %v2703 = vunpack.c.l.b16 %v2695
  %v2704 = vunpack.c.l.b16 %v2696
  %v2705 = vunpack.c.l.b16 %v2697
  %v2706 = vunpack.c.l.b16 %v2698
  %v2707 = vpack.c.b16 %v2704, %v2703
  %v2708 = vpack.c.b16 %v2706, %v2705
  %v2710 = vsel %vm143, %v2693, 0
  %v2713 = vsel %vm143, %v2707, 0
  %v2716 = vsel %vm143, %v2708, 0
  %2718 = vmatpush.bf16.xpose.msra.mxu0 0
  %2719 = vmatpush.bf16.xpose.msra.mxu0 0
  %2720 = vmatpush.bf16.xpose.msra.mxu0 0
  %2721 = vmatpush.bf16.xpose.msra.mxu0 0
  %2722 = vmatpush.bf16.xpose.msra.mxu0 0
  %2723 = vmatpush.bf16.xpose.msra.mxu0 0
  %2724 = vmatpush.bf16.xpose.msra.mxu0 %v2716
  %2725 = vmatpush.bf16.xpose.msra.mxu0 %v2713
  %2726 = vmatmul.bf16.gmra.mxu0 %v2710
  %v2727 = vpop.f32.mrf.mxu0
  %v2728 = vadd.f32 0.0, %v2727
  %v2729 = vpop.f32.mrf.mxu0
  %v2730 = vadd.f32 0.0, %v2729
  %2731 = vdwg.mxu0
  %v2736 = vunpack.c.l.b16 %v2497
  %v2737 = vunpack.c.l.b16 %v2498
  %v2738 = vunpack.c.l.b16 %v2499
  %v2739 = vunpack.c.l.b16 %v2500
  %v2740 = vpack.c.b16 %v2737, %v2736
  %v2741 = vpack.c.b16 %v2739, %v2738
  %v2743 = vsel %vm143, %v2495, 0
  %v2746 = vsel %vm143, %v2740, 0
  %v2749 = vsel %vm143, %v2741, 0
  %2751 = vmatpush.bf16.xpose.msra.mxu0 0
  %2752 = vmatpush.bf16.xpose.msra.mxu0 0
  %2753 = vmatpush.bf16.xpose.msra.mxu0 0
  %2754 = vmatpush.bf16.xpose.msra.mxu0 0
  %2755 = vmatpush.bf16.xpose.msra.mxu0 0
  %2756 = vmatpush.bf16.xpose.msra.mxu0 0
  %2757 = vmatpush.bf16.xpose.msra.mxu0 %v2749
  %2758 = vmatpush.bf16.xpose.msra.mxu0 %v2746
  %2759 = vmatmul.bf16.gmra.mxu0 %v2743
  %v2760 = vpop.f32.mrf.mxu0
  %v2761 = vadd.f32 %v2728, %v2760
  %v2762 = vpop.f32.mrf.mxu0
  %v2763 = vadd.f32 %v2730, %v2762
  %2764 = vdwg.mxu0
  %s2765 = scalar_lea.vmem %s2, 544
  %v2766 = vld [vmem:[%s2765] sm:$0xf]
  %v2767 = vld [vmem:[%s2765 + $0x4] sm:$0xf]
  %v2768 = vld [vmem:[%s2765 + $0x8] sm:$0xf]
  %v2769 = vld [vmem:[%s2765 + $0xc] sm:$0xf]
  %v2770 = vld [vmem:[%s4 + $0x5c] sm:$0x1]
  %v2771 = vperm.slane %v2770, 0
  %v2776 = vunpack.c.l.b16 %v2766
  %v2777 = vunpack.c.l.b16 %v2767
  %v2778 = vunpack.c.l.b16 %v2768
  %v2779 = vunpack.c.l.b16 %v2769
  %v2780 = vpack.c.b16 %v2777, %v2776
  %v2781 = vpack.c.b16 %v2779, %v2778
  %2784 = vmatpush.bf16.msra.mxu0 0
  %2785 = vmatpush.bf16.msra.mxu0 0
  %2786 = vmatpush.bf16.msra.mxu0 0
  %2787 = vmatpush.bf16.msra.mxu0 0
  %2788 = vmatpush.bf16.msra.mxu0 0
  %2789 = vmatpush.bf16.msra.mxu0 0
  %2790 = vmatpush.bf16.msra.mxu0 %v2781
  %2791 = vmatpush.bf16.msra.mxu0 %v2780
  %2792 = vmatmul.bf16.gmra.mxu0 %v2320
  %v2793 = vpop.f32.mrf.mxu0
  %v2794 = vadd.f32 %v2771, %v2793
  %v2795 = vpop.f32.mrf.mxu0
  %v2796 = vadd.f32 %v2771, %v2795
  %2797 = vdwg.mxu0
  %s2798 = scalar_lea.vmem %s2, 608
  %v2799 = vld [vmem:[%s2798] sm:$0xf]
  %v2800 = vld [vmem:[%s2798 + $0x4] sm:$0xf]
  %v2801 = vld [vmem:[%s2798 + $0x8] sm:$0xf]
  %v2802 = vld [vmem:[%s2798 + $0xc] sm:$0xf]
  %v2803 = vld [vmem:[%s4 + $0x60] sm:$0x1]
  %v2804 = vperm.slane %v2803, 0
  %v2809 = vunpack.c.l.b16 %v2799
  %v2810 = vunpack.c.l.b16 %v2800
  %v2811 = vunpack.c.l.b16 %v2801
  %v2812 = vunpack.c.l.b16 %v2802
  %v2813 = vpack.c.b16 %v2810, %v2809
  %v2814 = vpack.c.b16 %v2812, %v2811
  %2817 = vmatpush.bf16.msra.mxu0 0
  %2818 = vmatpush.bf16.msra.mxu0 0
  %2819 = vmatpush.bf16.msra.mxu0 0
  %2820 = vmatpush.bf16.msra.mxu0 0
  %2821 = vmatpush.bf16.msra.mxu0 0
  %2822 = vmatpush.bf16.msra.mxu0 0
  %2823 = vmatpush.bf16.msra.mxu0 %v2814
  %2824 = vmatpush.bf16.msra.mxu0 %v2813
  %2825 = vmatmul.bf16.gmra.mxu0 %v2320
  %v2826 = vpop.f32.mrf.mxu0
  %v2827 = vadd.f32 %v2804, %v2826
  %v2828 = vpop.f32.mrf.mxu0
  %v2829 = vadd.f32 %v2804, %v2828
  %2830 = vdwg.mxu0
  %s2831 = scalar_lea.vmem %s2, 672
  %v2832 = vld [vmem:[%s2831] sm:$0xf]
  %v2833 = vld [vmem:[%s2831 + $0x4] sm:$0xf]
  %v2834 = vld [vmem:[%s2831 + $0x8] sm:$0xf]
  %v2835 = vld [vmem:[%s2831 + $0xc] sm:$0xf]
  %v2836 = vld [vmem:[%s4 + $0x64] sm:$0x1]
  %v2837 = vperm.slane %v2836, 0
  %v2842 = vunpack.c.l.b16 %v2832
  %v2843 = vunpack.c.l.b16 %v2833
  %v2844 = vunpack.c.l.b16 %v2834
  %v2845 = vunpack.c.l.b16 %v2835
  %v2846 = vpack.c.b16 %v2843, %v2842
  %v2847 = vpack.c.b16 %v2845, %v2844
  %2850 = vmatpush.bf16.msra.mxu0 0
  %2851 = vmatpush.bf16.msra.mxu0 0
  %2852 = vmatpush.bf16.msra.mxu0 0
  %2853 = vmatpush.bf16.msra.mxu0 0
  %2854 = vmatpush.bf16.msra.mxu0 0
  %2855 = vmatpush.bf16.msra.mxu0 0
  %2856 = vmatpush.bf16.msra.mxu0 %v2847
  %2857 = vmatpush.bf16.msra.mxu0 %v2846
  %2858 = vmatmul.bf16.gmra.mxu0 %v2320
  %v2859 = vpop.f32.mrf.mxu0
  %v2860 = vadd.f32 %v2837, %v2859
  %v2861 = vpop.f32.mrf.mxu0
  %v2862 = vadd.f32 %v2837, %v2861
  %2863 = vdwg.mxu0
  %v2864 = vpack.c.bf16 %v2796, %v2794
  %v2865 = vpack.c.bf16 %v2829, %v2827
  %v2867 = vsel %vm143, %v2864, 0
  %v2870 = vsel %vm143, %v2865, 0
  %2872 = vmatpush.bf16.xpose.msra.mxu0 0
  %2873 = vmatpush.bf16.xpose.msra.mxu0 0
  %2874 = vmatpush.bf16.xpose.msra.mxu0 0
  %2875 = vmatpush.bf16.xpose.msra.mxu0 0
  %2876 = vmatpush.bf16.xpose.msra.mxu0 0
  %2877 = vmatpush.bf16.xpose.msra.mxu0 0
  %2878 = vmatpush.bf16.xpose.msra.mxu0 0
  %2879 = vmatpush.bf16.xpose.msra.mxu0 %v2870
  %2880 = vmatmul.bf16.gmra.mxu0 %v2867
  %v2881 = vpop.f32.mrf.mxu0
  %v2882 = vadd.f32 0.0, %v2881
  %v2883 = vpop.f32.mrf.mxu0
  %v2884 = vadd.f32 0.0, %v2883
  %2885 = vdwg.mxu0
  %v2886 = vmul.f32 %v2882, 0.35355338
  %v2887 = vmul.f32 %v2884, 0.35355338
  %v2888 = vadd.f32 %v2886, %v36
  %v2889 = vadd.f32 %v2887, %v37
  %v2890 = vsel %vm168, %v2888, -inf
  %2891 = vmax.xlane.f32.xlu0 %v2890
  %v2892 = vpop.xlane.xlu0 %2891
  %v2893 = vsel %vm168, %v2889, -inf
  %2894 = vmax.xlane.f32.xlu0 %v2893
  %v2895 = vpop.xlane.xlu0 %2894
  %v2896 = vsub.f32 %v2888, %v2892
  %v2897 = vsub.f32 %v2889, %v2895
  %v2898 = vmul.f32 %v2896, 1.442695
  %v2899 = vpow.pop %v2898
  %v2900 = vmul.f32 %v2897, 1.442695
  %v2901 = vpow.pop %v2900
  %v2902 = vsel %vm168, %v2899, 0.0
  %2903 = vadd.xlane.f32.xlu0 %v2902
  %v2904 = vpop.xlane.xlu0 %2903
  %v2905 = vsel %vm168, %v2901, 0.0
  %2906 = vadd.xlane.f32.xlu0 %v2905
  %v2907 = vpop.xlane.xlu0 %2906
  %v2908 = vrcp.pop %v2904
  %v2909 = vmul.f32 %v2904, %v2908
  %v2910 = vsub.f32 1.0, %v2909
  %v2911 = vmul.f32 %v2908, %v2910
  %v2912 = vadd.f32 %v2908, %v2911
  %vm2913 = vweird.f32 %v2904
  %vm2914 = vweird.f32 %v2908
  %vm2915 = vmor %vm2913, %vm2914
  %v2916 = vsel %vm2915, %v2908, %v2912
  %v2917 = vand.u32 2147483647, %v2904
  %vm2918 = vcmp.eq.f32.partialorder %v2917, 8.507059e+37
  %v2919 = vand.u32 %v2904, 2147483648
  %v2920 = vor.u32 1.1754944e-38, %v2919
  %v2921 = vsel %vm2918, %v2920, %v2916
  %v2922 = vmul.f32 %v2899, %v2921
  %v2923 = vrcp.pop %v2907
  %v2924 = vmul.f32 %v2907, %v2923
  %v2925 = vsub.f32 1.0, %v2924
  %v2926 = vmul.f32 %v2923, %v2925
  %v2927 = vadd.f32 %v2923, %v2926
  %vm2928 = vweird.f32 %v2907
  %vm2929 = vweird.f32 %v2923
  %vm2930 = vmor %vm2928, %vm2929
  %v2931 = vsel %vm2930, %v2923, %v2927
  %v2932 = vand.u32 2147483647, %v2907
  %vm2933 = vcmp.eq.f32.partialorder %v2932, 8.507059e+37
  %v2934 = vand.u32 %v2907, 2147483648
  %v2935 = vor.u32 1.1754944e-38, %v2934
  %v2936 = vsel %vm2933, %v2935, %v2931
  %v2937 = vmul.f32 %v2901, %v2936
  %v2938 = vpack.c.bf16 %v2937, %v2922
  %v2939 = vpack.c.bf16 %v2862, %v2860
  %v2941 = vsel %vm168, %v2938, 0
  %2943 = vmatpush.bf16.msra.mxu0 0
  %2944 = vmatpush.bf16.msra.mxu0 0
  %2945 = vmatpush.bf16.msra.mxu0 0
  %2946 = vmatpush.bf16.msra.mxu0 0
  %2947 = vmatpush.bf16.msra.mxu0 0
  %2948 = vmatpush.bf16.msra.mxu0 0
  %2949 = vmatpush.bf16.msra.mxu0 0
  %2950 = vmatpush.bf16.msra.mxu0 %v2939
  %2951 = vmatmul.bf16.gmra.mxu0 %v2941
  %v2952 = vpop.f32.mrf.mxu0
  %v2953 = vadd.f32 0.0, %v2952
  %v2954 = vpop.f32.mrf.mxu0
  %v2955 = vadd.f32 0.0, %v2954
  %2956 = vdwg.mxu0
  %v2957 = vpack.c.bf16 %v2955, %v2953
  %s2958 = scalar_lea.vmem %s2, 736
  %v2959 = vld [vmem:[%s2958] sm:$0xf]
  %v2960 = vld [vmem:[%s2958 + $0x4] sm:$0xf]
  %v2961 = vld [vmem:[%s2958 + $0x8] sm:$0xf]
  %v2962 = vld [vmem:[%s2958 + $0xc] sm:$0xf]
  %v2967 = vunpack.c.l.b16 %v2959
  %v2968 = vunpack.c.l.b16 %v2960
  %v2969 = vunpack.c.l.b16 %v2961
  %v2970 = vunpack.c.l.b16 %v2962
  %v2971 = vpack.c.b16 %v2968, %v2967
  %v2972 = vpack.c.b16 %v2970, %v2969
  %v2974 = vsel %vm143, %v2957, 0
  %v2977 = vsel %vm143, %v2971, 0
  %v2980 = vsel %vm143, %v2972, 0
  %2982 = vmatpush.bf16.xpose.msra.mxu0 0
  %2983 = vmatpush.bf16.xpose.msra.mxu0 0
  %2984 = vmatpush.bf16.xpose.msra.mxu0 0
  %2985 = vmatpush.bf16.xpose.msra.mxu0 0
  %2986 = vmatpush.bf16.xpose.msra.mxu0 0
  %2987 = vmatpush.bf16.xpose.msra.mxu0 0
  %2988 = vmatpush.bf16.xpose.msra.mxu0 %v2980
  %2989 = vmatpush.bf16.xpose.msra.mxu0 %v2977
  %2990 = vmatmul.bf16.gmra.mxu0 %v2974
  %v2991 = vpop.f32.mrf.mxu0
  %v2992 = vadd.f32 0.0, %v2991
  %v2993 = vpop.f32.mrf.mxu0
  %v2994 = vadd.f32 0.0, %v2993
  %2995 = vdwg.mxu0
  %v2996 = vadd.f32 %v2761, %v2992
  %v2997 = vadd.f32 %v2763, %v2994
  %s2998 = scalar_lea.vmem %s2, 560
  %v2999 = vld [vmem:[%s2998] sm:$0xf]
  %v3000 = vld [vmem:[%s2998 + $0x4] sm:$0xf]
  %v3001 = vld [vmem:[%s2998 + $0x8] sm:$0xf]
  %v3002 = vld [vmem:[%s2998 + $0xc] sm:$0xf]
  %v3003 = vld [vmem:[%s4 + $0x5d] sm:$0x1]
  %v3004 = vperm.slane %v3003, 0
  %v3009 = vunpack.c.l.b16 %v2999
  %v3010 = vunpack.c.l.b16 %v3000
  %v3011 = vunpack.c.l.b16 %v3001
  %v3012 = vunpack.c.l.b16 %v3002
  %v3013 = vpack.c.b16 %v3010, %v3009
  %v3014 = vpack.c.b16 %v3012, %v3011
  %3017 = vmatpush.bf16.msra.mxu0 0
  %3018 = vmatpush.bf16.msra.mxu0 0
  %3019 = vmatpush.bf16.msra.mxu0 0
  %3020 = vmatpush.bf16.msra.mxu0 0
  %3021 = vmatpush.bf16.msra.mxu0 0
  %3022 = vmatpush.bf16.msra.mxu0 0
  %3023 = vmatpush.bf16.msra.mxu0 %v3014
  %3024 = vmatpush.bf16.msra.mxu0 %v3013
  %3025 = vmatmul.bf16.gmra.mxu0 %v2320
  %v3026 = vpop.f32.mrf.mxu0
  %v3027 = vadd.f32 %v3004, %v3026
  %v3028 = vpop.f32.mrf.mxu0
  %v3029 = vadd.f32 %v3004, %v3028
  %3030 = vdwg.mxu0
  %s3031 = scalar_lea.vmem %s2, 624
  %v3032 = vld [vmem:[%s3031] sm:$0xf]
  %v3033 = vld [vmem:[%s3031 + $0x4] sm:$0xf]
  %v3034 = vld [vmem:[%s3031 + $0x8] sm:$0xf]
  %v3035 = vld [vmem:[%s3031 + $0xc] sm:$0xf]
  %v3036 = vld [vmem:[%s4 + $0x61] sm:$0x1]
  %v3037 = vperm.slane %v3036, 0
  %v3042 = vunpack.c.l.b16 %v3032
  %v3043 = vunpack.c.l.b16 %v3033
  %v3044 = vunpack.c.l.b16 %v3034
  %v3045 = vunpack.c.l.b16 %v3035
  %v3046 = vpack.c.b16 %v3043, %v3042
  %v3047 = vpack.c.b16 %v3045, %v3044
  %3050 = vmatpush.bf16.msra.mxu0 0
  %3051 = vmatpush.bf16.msra.mxu0 0
  %3052 = vmatpush.bf16.msra.mxu0 0
  %3053 = vmatpush.bf16.msra.mxu0 0
  %3054 = vmatpush.bf16.msra.mxu0 0
  %3055 = vmatpush.bf16.msra.mxu0 0
  %3056 = vmatpush.bf16.msra.mxu0 %v3047
  %3057 = vmatpush.bf16.msra.mxu0 %v3046
  %3058 = vmatmul.bf16.gmra.mxu0 %v2320
  %v3059 = vpop.f32.mrf.mxu0
  %v3060 = vadd.f32 %v3037, %v3059
  %v3061 = vpop.f32.mrf.mxu0
  %v3062 = vadd.f32 %v3037, %v3061
  %3063 = vdwg.mxu0
  %s3064 = scalar_lea.vmem %s2, 688
  %v3065 = vld [vmem:[%s3064] sm:$0xf]
  %v3066 = vld [vmem:[%s3064 + $0x4] sm:$0xf]
  %v3067 = vld [vmem:[%s3064 + $0x8] sm:$0xf]
  %v3068 = vld [vmem:[%s3064 + $0xc] sm:$0xf]
  %v3069 = vld [vmem:[%s4 + $0x65] sm:$0x1]
  %v3070 = vperm.slane %v3069, 0
  %v3075 = vunpack.c.l.b16 %v3065
  %v3076 = vunpack.c.l.b16 %v3066
  %v3077 = vunpack.c.l.b16 %v3067
  %v3078 = vunpack.c.l.b16 %v3068
  %v3079 = vpack.c.b16 %v3076, %v3075
  %v3080 = vpack.c.b16 %v3078, %v3077
  %3083 = vmatpush.bf16.msra.mxu0 0
  %3084 = vmatpush.bf16.msra.mxu0 0
  %3085 = vmatpush.bf16.msra.mxu0 0
  %3086 = vmatpush.bf16.msra.mxu0 0
  %3087 = vmatpush.bf16.msra.mxu0 0
  %3088 = vmatpush.bf16.msra.mxu0 0
  %3089 = vmatpush.bf16.msra.mxu0 %v3080
  %3090 = vmatpush.bf16.msra.mxu0 %v3079
  %3091 = vmatmul.bf16.gmra.mxu0 %v2320
  %v3092 = vpop.f32.mrf.mxu0
  %v3093 = vadd.f32 %v3070, %v3092
  %v3094 = vpop.f32.mrf.mxu0
  %v3095 = vadd.f32 %v3070, %v3094
  %3096 = vdwg.mxu0
  %v3097 = vpack.c.bf16 %v3029, %v3027
  %v3098 = vpack.c.bf16 %v3062, %v3060
  %v3100 = vsel %vm143, %v3097, 0
  %v3103 = vsel %vm143, %v3098, 0
  %3105 = vmatpush.bf16.xpose.msra.mxu0 0
  %3106 = vmatpush.bf16.xpose.msra.mxu0 0
  %3107 = vmatpush.bf16.xpose.msra.mxu0 0
  %3108 = vmatpush.bf16.xpose.msra.mxu0 0
  %3109 = vmatpush.bf16.xpose.msra.mxu0 0
  %3110 = vmatpush.bf16.xpose.msra.mxu0 0
  %3111 = vmatpush.bf16.xpose.msra.mxu0 0
  %3112 = vmatpush.bf16.xpose.msra.mxu0 %v3103
  %3113 = vmatmul.bf16.gmra.mxu0 %v3100
  %v3114 = vpop.f32.mrf.mxu0
  %v3115 = vadd.f32 0.0, %v3114
  %v3116 = vpop.f32.mrf.mxu0
  %v3117 = vadd.f32 0.0, %v3116
  %3118 = vdwg.mxu0
  %v3119 = vmul.f32 %v3115, 0.35355338
  %v3120 = vmul.f32 %v3117, 0.35355338
  %v3121 = vadd.f32 %v3119, %v36
  %v3122 = vadd.f32 %v3120, %v37
  %v3123 = vsel %vm168, %v3121, -inf
  %3124 = vmax.xlane.f32.xlu0 %v3123
  %v3125 = vpop.xlane.xlu0 %3124
  %v3126 = vsel %vm168, %v3122, -inf
  %3127 = vmax.xlane.f32.xlu0 %v3126
  %v3128 = vpop.xlane.xlu0 %3127
  %v3129 = vsub.f32 %v3121, %v3125
  %v3130 = vsub.f32 %v3122, %v3128
  %v3131 = vmul.f32 %v3129, 1.442695
  %v3132 = vpow.pop %v3131
  %v3133 = vmul.f32 %v3130, 1.442695
  %v3134 = vpow.pop %v3133
  %v3135 = vsel %vm168, %v3132, 0.0
  %3136 = vadd.xlane.f32.xlu0 %v3135
  %v3137 = vpop.xlane.xlu0 %3136
  %v3138 = vsel %vm168, %v3134, 0.0
  %3139 = vadd.xlane.f32.xlu0 %v3138
  %v3140 = vpop.xlane.xlu0 %3139
  %v3141 = vrcp.pop %v3137
  %v3142 = vmul.f32 %v3137, %v3141
  %v3143 = vsub.f32 1.0, %v3142
  %v3144 = vmul.f32 %v3141, %v3143
  %v3145 = vadd.f32 %v3141, %v3144
  %vm3146 = vweird.f32 %v3137
  %vm3147 = vweird.f32 %v3141
  %vm3148 = vmor %vm3146, %vm3147
  %v3149 = vsel %vm3148, %v3141, %v3145
  %v3150 = vand.u32 2147483647, %v3137
  %vm3151 = vcmp.eq.f32.partialorder %v3150, 8.507059e+37
  %v3152 = vand.u32 %v3137, 2147483648
  %v3153 = vor.u32 1.1754944e-38, %v3152
  %v3154 = vsel %vm3151, %v3153, %v3149
  %v3155 = vmul.f32 %v3132, %v3154
  %v3156 = vrcp.pop %v3140
  %v3157 = vmul.f32 %v3140, %v3156
  %v3158 = vsub.f32 1.0, %v3157
  %v3159 = vmul.f32 %v3156, %v3158
  %v3160 = vadd.f32 %v3156, %v3159
  %vm3161 = vweird.f32 %v3140
  %vm3162 = vweird.f32 %v3156
  %vm3163 = vmor %vm3161, %vm3162
  %v3164 = vsel %vm3163, %v3156, %v3160
  %v3165 = vand.u32 2147483647, %v3140
  %vm3166 = vcmp.eq.f32.partialorder %v3165, 8.507059e+37
  %v3167 = vand.u32 %v3140, 2147483648
  %v3168 = vor.u32 1.1754944e-38, %v3167
  %v3169 = vsel %vm3166, %v3168, %v3164
  %v3170 = vmul.f32 %v3134, %v3169
  %v3171 = vpack.c.bf16 %v3170, %v3155
  %v3172 = vpack.c.bf16 %v3095, %v3093
  %v3174 = vsel %vm168, %v3171, 0
  %3176 = vmatpush.bf16.msra.mxu0 0
  %3177 = vmatpush.bf16.msra.mxu0 0
  %3178 = vmatpush.bf16.msra.mxu0 0
  %3179 = vmatpush.bf16.msra.mxu0 0
  %3180 = vmatpush.bf16.msra.mxu0 0
  %3181 = vmatpush.bf16.msra.mxu0 0
  %3182 = vmatpush.bf16.msra.mxu0 0
  %3183 = vmatpush.bf16.msra.mxu0 %v3172
  %3184 = vmatmul.bf16.gmra.mxu0 %v3174
  %v3185 = vpop.f32.mrf.mxu0
  %v3186 = vadd.f32 0.0, %v3185
  %v3187 = vpop.f32.mrf.mxu0
  %v3188 = vadd.f32 0.0, %v3187
  %3189 = vdwg.mxu0
  %v3190 = vpack.c.bf16 %v3188, %v3186
  %s3191 = scalar_lea.vmem %s2, 752
  %v3192 = vld [vmem:[%s3191] sm:$0xf]
  %v3193 = vld [vmem:[%s3191 + $0x4] sm:$0xf]
  %v3194 = vld [vmem:[%s3191 + $0x8] sm:$0xf]
  %v3195 = vld [vmem:[%s3191 + $0xc] sm:$0xf]
  %v3200 = vunpack.c.l.b16 %v3192
  %v3201 = vunpack.c.l.b16 %v3193
  %v3202 = vunpack.c.l.b16 %v3194
  %v3203 = vunpack.c.l.b16 %v3195
  %v3204 = vpack.c.b16 %v3201, %v3200
  %v3205 = vpack.c.b16 %v3203, %v3202
  %v3207 = vsel %vm143, %v3190, 0
  %v3210 = vsel %vm143, %v3204, 0
  %v3213 = vsel %vm143, %v3205, 0
  %3215 = vmatpush.bf16.xpose.msra.mxu0 0
  %3216 = vmatpush.bf16.xpose.msra.mxu0 0
  %3217 = vmatpush.bf16.xpose.msra.mxu0 0
  %3218 = vmatpush.bf16.xpose.msra.mxu0 0
  %3219 = vmatpush.bf16.xpose.msra.mxu0 0
  %3220 = vmatpush.bf16.xpose.msra.mxu0 0
  %3221 = vmatpush.bf16.xpose.msra.mxu0 %v3213
  %3222 = vmatpush.bf16.xpose.msra.mxu0 %v3210
  %3223 = vmatmul.bf16.gmra.mxu0 %v3207
  %v3224 = vpop.f32.mrf.mxu0
  %v3225 = vadd.f32 0.0, %v3224
  %v3226 = vpop.f32.mrf.mxu0
  %v3227 = vadd.f32 0.0, %v3226
  %3228 = vdwg.mxu0
  %v3229 = vadd.f32 %v2996, %v3225
  %v3230 = vadd.f32 %v2997, %v3227
  %v3231 = vld [vmem:[%s4 + $0x66] sm:$0x1]
  %v3232 = vperm.slane %v3231, 0
  %v3233 = vadd.f32 %v3229, %v3232
  %v3234 = vadd.f32 %v3230, %v3232
  %v3235 = vadd.f32 %v2297, %v3233
  %v3236 = vadd.f32 %v2298, %v3234
  %v3237 = vld [vmem:[%s4 + $0x96] sm:$0x1]
  %v3238 = vld [vmem:[%s4 + $0x97] sm:$0x1]
  %v3239 = vsel %vm57, %v3235, 0.0
  %3240 = vadd.xlane.f32.xlu0 %v3239
  %v3241 = vpop.xlane.xlu0 %3240
  %v3242 = vsel %vm57, %v3236, 0.0
  %3243 = vadd.xlane.f32.xlu0 %v3242
  %v3244 = vpop.xlane.xlu0 %3243
  %v3245 = vmul.f32 %v3241, %v992
  %v3246 = vmul.f32 %v3244, %v992
  %v3247 = vsub.f32 %v3235, %v3245
  %v3248 = vsub.f32 %v3236, %v3246
  %v3249 = vmul.f32 %v3247, %v3247
  %v3250 = vmul.f32 %v3248, %v3248
  %v3251 = vsel %vm57, %v3249, 0.0
  %3252 = vadd.xlane.f32.xlu0 %v3251
  %v3253 = vpop.xlane.xlu0 %3252
  %v3254 = vsel %vm57, %v3250, 0.0
  %3255 = vadd.xlane.f32.xlu0 %v3254
  %v3256 = vpop.xlane.xlu0 %3255
  %v3257 = vmul.f32 %v3253, %v992
  %v3258 = vmul.f32 %v3256, %v992
  %v3259 = vadd.f32 %v3257, 1e-05
  %v3260 = vadd.f32 %v3258, 1e-05
  %v3261 = vrsqrt.pop %v3259
  %v3262 = vmul.f32 %v3261, %v3259
  %v3263 = vmul.f32 %v3262, %v3261
  %v3264 = vmul.f32 0.5, %v3263
  %v3265 = vsub.f32 1.5, %v3264
  %v3266 = vmul.f32 %v3261, %v3265
  %vm3267 = vweird.f32 %v3259
  %vm3268 = vweird.f32 %v3261
  %vm3269 = vmor %vm3267, %vm3268
  %v3270 = vsel %vm3269, %v3261, %v3266
  %v3271 = vrsqrt.pop %v3260
  %v3272 = vmul.f32 %v3271, %v3260
  %v3273 = vmul.f32 %v3272, %v3271
  %v3274 = vmul.f32 0.5, %v3273
  %v3275 = vsub.f32 1.5, %v3274
  %v3276 = vmul.f32 %v3271, %v3275
  %vm3277 = vweird.f32 %v3260
  %vm3278 = vweird.f32 %v3271
  %vm3279 = vmor %vm3277, %vm3278
  %v3280 = vsel %vm3279, %v3271, %v3276
  %v3281 = vmul.f32 %v3247, %v3270
  %v3282 = vmul.f32 %v3248, %v3280
  %v3283 = vperm.slane %v3237, 0
  %v3284 = vmul.f32 %v3281, %v3283
  %v3285 = vmul.f32 %v3282, %v3283
  %v3286 = vperm.slane %v3238, 0
  %v3287 = vadd.f32 %v3284, %v3286
  %v3288 = vadd.f32 %v3285, %v3286
  %v3289 = vpack.c.bf16 %v3288, %v3287
  %v3290 = vpack.c.bf16 %v2294, %v2293
  %s3291 = scalar_lea.vmem %s2, 768
  %v3292 = vld [vmem:[%s3291] sm:$0xf]
  %v3293 = vld [vmem:[%s3291 + $0x4] sm:$0xf]
  %v3294 = vld [vmem:[%s3291 + $0x8] sm:$0xf]
  %v3295 = vld [vmem:[%s3291 + $0xc] sm:$0xf]
  %v3296 = vld [vmem:[%s4 + $0x67] sm:$0x1]
  %v3297 = vperm.slane %v3296, 0
  %v3302 = vunpack.c.l.b16 %v3292
  %v3303 = vunpack.c.l.b16 %v3293
  %v3304 = vunpack.c.l.b16 %v3294
  %v3305 = vunpack.c.l.b16 %v3295
  %v3306 = vpack.c.b16 %v3303, %v3302
  %v3307 = vpack.c.b16 %v3305, %v3304
  %v3311 = vsel %vm57, %v3289, 0
  %3313 = vmatpush.bf16.msra.mxu0 0
  %3314 = vmatpush.bf16.msra.mxu0 0
  %3315 = vmatpush.bf16.msra.mxu0 0
  %3316 = vmatpush.bf16.msra.mxu0 0
  %3317 = vmatpush.bf16.msra.mxu0 0
  %3318 = vmatpush.bf16.msra.mxu0 0
  %3319 = vmatpush.bf16.msra.mxu0 %v3307
  %3320 = vmatpush.bf16.msra.mxu0 %v3306
  %3321 = vmatmul.bf16.gmra.mxu0 %v3311
  %v3322 = vpop.f32.mrf.mxu0
  %v3323 = vadd.f32 %v3297, %v3322
  %v3324 = vpop.f32.mrf.mxu0
  %v3325 = vadd.f32 %v3297, %v3324
  %3326 = vdwg.mxu0
  %s3327 = scalar_lea.vmem %s2, 832
  %v3328 = vld [vmem:[%s3327] sm:$0xf]
  %v3329 = vld [vmem:[%s3327 + $0x4] sm:$0xf]
  %v3330 = vld [vmem:[%s3327 + $0x8] sm:$0xf]
  %v3331 = vld [vmem:[%s3327 + $0xc] sm:$0xf]
  %v3332 = vld [vmem:[%s4 + $0x6b] sm:$0x1]
  %v3333 = vperm.slane %v3332, 0
  %v3338 = vunpack.c.l.b16 %v3328
  %v3339 = vunpack.c.l.b16 %v3329
  %v3340 = vunpack.c.l.b16 %v3330
  %v3341 = vunpack.c.l.b16 %v3331
  %v3342 = vpack.c.b16 %v3339, %v3338
  %v3343 = vpack.c.b16 %v3341, %v3340
  %v3347 = vsel %vm57, %v3290, 0
  %3349 = vmatpush.bf16.msra.mxu0 0
  %3350 = vmatpush.bf16.msra.mxu0 0
  %3351 = vmatpush.bf16.msra.mxu0 0
  %3352 = vmatpush.bf16.msra.mxu0 0
  %3353 = vmatpush.bf16.msra.mxu0 0
  %3354 = vmatpush.bf16.msra.mxu0 0
  %3355 = vmatpush.bf16.msra.mxu0 %v3343
  %3356 = vmatpush.bf16.msra.mxu0 %v3342
  %3357 = vmatmul.bf16.gmra.mxu0 %v3347
  %v3358 = vpop.f32.mrf.mxu0
  %v3359 = vadd.f32 %v3333, %v3358
  %v3360 = vpop.f32.mrf.mxu0
  %v3361 = vadd.f32 %v3333, %v3360
  %3362 = vdwg.mxu0
  %s3363 = scalar_lea.vmem %s2, 896
  %v3364 = vld [vmem:[%s3363] sm:$0xf]
  %v3365 = vld [vmem:[%s3363 + $0x4] sm:$0xf]
  %v3366 = vld [vmem:[%s3363 + $0x8] sm:$0xf]
  %v3367 = vld [vmem:[%s3363 + $0xc] sm:$0xf]
  %v3368 = vld [vmem:[%s4 + $0x6f] sm:$0x1]
  %v3369 = vperm.slane %v3368, 0
  %v3374 = vunpack.c.l.b16 %v3364
  %v3375 = vunpack.c.l.b16 %v3365
  %v3376 = vunpack.c.l.b16 %v3366
  %v3377 = vunpack.c.l.b16 %v3367
  %v3378 = vpack.c.b16 %v3375, %v3374
  %v3379 = vpack.c.b16 %v3377, %v3376
  %3382 = vmatpush.bf16.msra.mxu0 0
  %3383 = vmatpush.bf16.msra.mxu0 0
  %3384 = vmatpush.bf16.msra.mxu0 0
  %3385 = vmatpush.bf16.msra.mxu0 0
  %3386 = vmatpush.bf16.msra.mxu0 0
  %3387 = vmatpush.bf16.msra.mxu0 0
  %3388 = vmatpush.bf16.msra.mxu0 %v3379
  %3389 = vmatpush.bf16.msra.mxu0 %v3378
  %3390 = vmatmul.bf16.gmra.mxu0 %v3347
  %v3391 = vpop.f32.mrf.mxu0
  %v3392 = vadd.f32 %v3369, %v3391
  %v3393 = vpop.f32.mrf.mxu0
  %v3394 = vadd.f32 %v3369, %v3393
  %3395 = vdwg.mxu0
  %v3396 = vpack.c.bf16 %v3325, %v3323
  %v3397 = vpack.c.bf16 %v3361, %v3359
  %v3399 = vsel %vm143, %v3396, 0
  %v3402 = vsel %vm143, %v3397, 0
  %3404 = vmatpush.bf16.xpose.msra.mxu0 0
  %3405 = vmatpush.bf16.xpose.msra.mxu0 0
  %3406 = vmatpush.bf16.xpose.msra.mxu0 0
  %3407 = vmatpush.bf16.xpose.msra.mxu0 0
  %3408 = vmatpush.bf16.xpose.msra.mxu0 0
  %3409 = vmatpush.bf16.xpose.msra.mxu0 0
  %3410 = vmatpush.bf16.xpose.msra.mxu0 0
  %3411 = vmatpush.bf16.xpose.msra.mxu0 %v3402
  %3412 = vmatmul.bf16.gmra.mxu0 %v3399
  %v3413 = vpop.f32.mrf.mxu0
  %v3414 = vadd.f32 0.0, %v3413
  %v3415 = vpop.f32.mrf.mxu0
  %v3416 = vadd.f32 0.0, %v3415
  %3417 = vdwg.mxu0
  %v3418 = vmul.f32 %v3414, 0.35355338
  %v3419 = vmul.f32 %v3416, 0.35355338
  %v3420 = vadd.f32 %v3418, %v36
  %v3421 = vadd.f32 %v3419, %v37
  %v3422 = vsel %vm168, %v3420, -inf
  %3423 = vmax.xlane.f32.xlu0 %v3422
  %v3424 = vpop.xlane.xlu0 %3423
  %v3425 = vsel %vm168, %v3421, -inf
  %3426 = vmax.xlane.f32.xlu0 %v3425
  %v3427 = vpop.xlane.xlu0 %3426
  %v3428 = vsub.f32 %v3420, %v3424
  %v3429 = vsub.f32 %v3421, %v3427
  %v3430 = vmul.f32 %v3428, 1.442695
  %v3431 = vpow.pop %v3430
  %v3432 = vmul.f32 %v3429, 1.442695
  %v3433 = vpow.pop %v3432
  %v3434 = vsel %vm168, %v3431, 0.0
  %3435 = vadd.xlane.f32.xlu0 %v3434
  %v3436 = vpop.xlane.xlu0 %3435
  %v3437 = vsel %vm168, %v3433, 0.0
  %3438 = vadd.xlane.f32.xlu0 %v3437
  %v3439 = vpop.xlane.xlu0 %3438
  %v3440 = vrcp.pop %v3436
  %v3441 = vmul.f32 %v3436, %v3440
  %v3442 = vsub.f32 1.0, %v3441
  %v3443 = vmul.f32 %v3440, %v3442
  %v3444 = vadd.f32 %v3440, %v3443
  %vm3445 = vweird.f32 %v3436
  %vm3446 = vweird.f32 %v3440
  %vm3447 = vmor %vm3445, %vm3446
  %v3448 = vsel %vm3447, %v3440, %v3444
  %v3449 = vand.u32 2147483647, %v3436
  %vm3450 = vcmp.eq.f32.partialorder %v3449, 8.507059e+37
  %v3451 = vand.u32 %v3436, 2147483648
  %v3452 = vor.u32 1.1754944e-38, %v3451
  %v3453 = vsel %vm3450, %v3452, %v3448
  %v3454 = vmul.f32 %v3431, %v3453
  %v3455 = vrcp.pop %v3439
  %v3456 = vmul.f32 %v3439, %v3455
  %v3457 = vsub.f32 1.0, %v3456
  %v3458 = vmul.f32 %v3455, %v3457
  %v3459 = vadd.f32 %v3455, %v3458
  %vm3460 = vweird.f32 %v3439
  %vm3461 = vweird.f32 %v3455
  %vm3462 = vmor %vm3460, %vm3461
  %v3463 = vsel %vm3462, %v3455, %v3459
  %v3464 = vand.u32 2147483647, %v3439
  %vm3465 = vcmp.eq.f32.partialorder %v3464, 8.507059e+37
  %v3466 = vand.u32 %v3439, 2147483648
  %v3467 = vor.u32 1.1754944e-38, %v3466
  %v3468 = vsel %vm3465, %v3467, %v3463
  %v3469 = vmul.f32 %v3433, %v3468
  %v3470 = vpack.c.bf16 %v3469, %v3454
  %v3471 = vpack.c.bf16 %v3394, %v3392
  %v3473 = vsel %vm168, %v3470, 0
  %3475 = vmatpush.bf16.msra.mxu0 0
  %3476 = vmatpush.bf16.msra.mxu0 0
  %3477 = vmatpush.bf16.msra.mxu0 0
  %3478 = vmatpush.bf16.msra.mxu0 0
  %3479 = vmatpush.bf16.msra.mxu0 0
  %3480 = vmatpush.bf16.msra.mxu0 0
  %3481 = vmatpush.bf16.msra.mxu0 0
  %3482 = vmatpush.bf16.msra.mxu0 %v3471
  %3483 = vmatmul.bf16.gmra.mxu0 %v3473
  %v3484 = vpop.f32.mrf.mxu0
  %v3485 = vadd.f32 0.0, %v3484
  %v3486 = vpop.f32.mrf.mxu0
  %v3487 = vadd.f32 0.0, %v3486
  %3488 = vdwg.mxu0
  %v3489 = vpack.c.bf16 %v3487, %v3485
  %s3490 = scalar_lea.vmem %s2, 960
  %v3491 = vld [vmem:[%s3490] sm:$0xf]
  %v3492 = vld [vmem:[%s3490 + $0x4] sm:$0xf]
  %v3493 = vld [vmem:[%s3490 + $0x8] sm:$0xf]
  %v3494 = vld [vmem:[%s3490 + $0xc] sm:$0xf]
  %s3495 = scalar_lea.vmem %s2, 784
  %v3496 = vld [vmem:[%s3495] sm:$0xf]
  %v3497 = vld [vmem:[%s3495 + $0x4] sm:$0xf]
  %v3498 = vld [vmem:[%s3495 + $0x8] sm:$0xf]
  %v3499 = vld [vmem:[%s3495 + $0xc] sm:$0xf]
  %v3500 = vld [vmem:[%s4 + $0x68] sm:$0x1]
  %v3501 = vperm.slane %v3500, 0
  %v3506 = vunpack.c.l.b16 %v3496
  %v3507 = vunpack.c.l.b16 %v3497
  %v3508 = vunpack.c.l.b16 %v3498
  %v3509 = vunpack.c.l.b16 %v3499
  %v3510 = vpack.c.b16 %v3507, %v3506
  %v3511 = vpack.c.b16 %v3509, %v3508
  %3514 = vmatpush.bf16.msra.mxu0 0
  %3515 = vmatpush.bf16.msra.mxu0 0
  %3516 = vmatpush.bf16.msra.mxu0 0
  %3517 = vmatpush.bf16.msra.mxu0 0
  %3518 = vmatpush.bf16.msra.mxu0 0
  %3519 = vmatpush.bf16.msra.mxu0 0
  %3520 = vmatpush.bf16.msra.mxu0 %v3511
  %3521 = vmatpush.bf16.msra.mxu0 %v3510
  %3522 = vmatmul.bf16.gmra.mxu0 %v3311
  %v3523 = vpop.f32.mrf.mxu0
  %v3524 = vadd.f32 %v3501, %v3523
  %v3525 = vpop.f32.mrf.mxu0
  %v3526 = vadd.f32 %v3501, %v3525
  %3527 = vdwg.mxu0
  %s3528 = scalar_lea.vmem %s2, 848
  %v3529 = vld [vmem:[%s3528] sm:$0xf]
  %v3530 = vld [vmem:[%s3528 + $0x4] sm:$0xf]
  %v3531 = vld [vmem:[%s3528 + $0x8] sm:$0xf]
  %v3532 = vld [vmem:[%s3528 + $0xc] sm:$0xf]
  %v3533 = vld [vmem:[%s4 + $0x6c] sm:$0x1]
  %v3534 = vperm.slane %v3533, 0
  %v3539 = vunpack.c.l.b16 %v3529
  %v3540 = vunpack.c.l.b16 %v3530
  %v3541 = vunpack.c.l.b16 %v3531
  %v3542 = vunpack.c.l.b16 %v3532
  %v3543 = vpack.c.b16 %v3540, %v3539
  %v3544 = vpack.c.b16 %v3542, %v3541
  %3547 = vmatpush.bf16.msra.mxu0 0
  %3548 = vmatpush.bf16.msra.mxu0 0
  %3549 = vmatpush.bf16.msra.mxu0 0
  %3550 = vmatpush.bf16.msra.mxu0 0
  %3551 = vmatpush.bf16.msra.mxu0 0
  %3552 = vmatpush.bf16.msra.mxu0 0
  %3553 = vmatpush.bf16.msra.mxu0 %v3544
  %3554 = vmatpush.bf16.msra.mxu0 %v3543
  %3555 = vmatmul.bf16.gmra.mxu0 %v3347
  %v3556 = vpop.f32.mrf.mxu0
  %v3557 = vadd.f32 %v3534, %v3556
  %v3558 = vpop.f32.mrf.mxu0
  %v3559 = vadd.f32 %v3534, %v3558
  %3560 = vdwg.mxu0
  %s3561 = scalar_lea.vmem %s2, 912
  %v3562 = vld [vmem:[%s3561] sm:$0xf]
  %v3563 = vld [vmem:[%s3561 + $0x4] sm:$0xf]
  %v3564 = vld [vmem:[%s3561 + $0x8] sm:$0xf]
  %v3565 = vld [vmem:[%s3561 + $0xc] sm:$0xf]
  %v3566 = vld [vmem:[%s4 + $0x70] sm:$0x1]
  %v3567 = vperm.slane %v3566, 0
  %v3572 = vunpack.c.l.b16 %v3562
  %v3573 = vunpack.c.l.b16 %v3563
  %v3574 = vunpack.c.l.b16 %v3564
  %v3575 = vunpack.c.l.b16 %v3565
  %v3576 = vpack.c.b16 %v3573, %v3572
  %v3577 = vpack.c.b16 %v3575, %v3574
  %3580 = vmatpush.bf16.msra.mxu0 0
  %3581 = vmatpush.bf16.msra.mxu0 0
  %3582 = vmatpush.bf16.msra.mxu0 0
  %3583 = vmatpush.bf16.msra.mxu0 0
  %3584 = vmatpush.bf16.msra.mxu0 0
  %3585 = vmatpush.bf16.msra.mxu0 0
  %3586 = vmatpush.bf16.msra.mxu0 %v3577
  %3587 = vmatpush.bf16.msra.mxu0 %v3576
  %3588 = vmatmul.bf16.gmra.mxu0 %v3347
  %v3589 = vpop.f32.mrf.mxu0
  %v3590 = vadd.f32 %v3567, %v3589
  %v3591 = vpop.f32.mrf.mxu0
  %v3592 = vadd.f32 %v3567, %v3591
  %3593 = vdwg.mxu0
  %v3594 = vpack.c.bf16 %v3526, %v3524
  %v3595 = vpack.c.bf16 %v3559, %v3557
  %v3597 = vsel %vm143, %v3594, 0
  %v3600 = vsel %vm143, %v3595, 0
  %3602 = vmatpush.bf16.xpose.msra.mxu0 0
  %3603 = vmatpush.bf16.xpose.msra.mxu0 0
  %3604 = vmatpush.bf16.xpose.msra.mxu0 0
  %3605 = vmatpush.bf16.xpose.msra.mxu0 0
  %3606 = vmatpush.bf16.xpose.msra.mxu0 0
  %3607 = vmatpush.bf16.xpose.msra.mxu0 0
  %3608 = vmatpush.bf16.xpose.msra.mxu0 0
  %3609 = vmatpush.bf16.xpose.msra.mxu0 %v3600
  %3610 = vmatmul.bf16.gmra.mxu0 %v3597
  %v3611 = vpop.f32.mrf.mxu0
  %v3612 = vadd.f32 0.0, %v3611
  %v3613 = vpop.f32.mrf.mxu0
  %v3614 = vadd.f32 0.0, %v3613
  %3615 = vdwg.mxu0
  %v3616 = vmul.f32 %v3612, 0.35355338
  %v3617 = vmul.f32 %v3614, 0.35355338
  %v3618 = vadd.f32 %v3616, %v36
  %v3619 = vadd.f32 %v3617, %v37
  %v3620 = vsel %vm168, %v3618, -inf
  %3621 = vmax.xlane.f32.xlu0 %v3620
  %v3622 = vpop.xlane.xlu0 %3621
  %v3623 = vsel %vm168, %v3619, -inf
  %3624 = vmax.xlane.f32.xlu0 %v3623
  %v3625 = vpop.xlane.xlu0 %3624
  %v3626 = vsub.f32 %v3618, %v3622
  %v3627 = vsub.f32 %v3619, %v3625
  %v3628 = vmul.f32 %v3626, 1.442695
  %v3629 = vpow.pop %v3628
  %v3630 = vmul.f32 %v3627, 1.442695
  %v3631 = vpow.pop %v3630
  %v3632 = vsel %vm168, %v3629, 0.0
  %3633 = vadd.xlane.f32.xlu0 %v3632
  %v3634 = vpop.xlane.xlu0 %3633
  %v3635 = vsel %vm168, %v3631, 0.0
  %3636 = vadd.xlane.f32.xlu0 %v3635
  %v3637 = vpop.xlane.xlu0 %3636
  %v3638 = vrcp.pop %v3634
  %v3639 = vmul.f32 %v3634, %v3638
  %v3640 = vsub.f32 1.0, %v3639
  %v3641 = vmul.f32 %v3638, %v3640
  %v3642 = vadd.f32 %v3638, %v3641
  %vm3643 = vweird.f32 %v3634
  %vm3644 = vweird.f32 %v3638
  %vm3645 = vmor %vm3643, %vm3644
  %v3646 = vsel %vm3645, %v3638, %v3642
  %v3647 = vand.u32 2147483647, %v3634
  %vm3648 = vcmp.eq.f32.partialorder %v3647, 8.507059e+37
  %v3649 = vand.u32 %v3634, 2147483648
  %v3650 = vor.u32 1.1754944e-38, %v3649
  %v3651 = vsel %vm3648, %v3650, %v3646
  %v3652 = vmul.f32 %v3629, %v3651
  %v3653 = vrcp.pop %v3637
  %v3654 = vmul.f32 %v3637, %v3653
  %v3655 = vsub.f32 1.0, %v3654
  %v3656 = vmul.f32 %v3653, %v3655
  %v3657 = vadd.f32 %v3653, %v3656
  %vm3658 = vweird.f32 %v3637
  %vm3659 = vweird.f32 %v3653
  %vm3660 = vmor %vm3658, %vm3659
  %v3661 = vsel %vm3660, %v3653, %v3657
  %v3662 = vand.u32 2147483647, %v3637
  %vm3663 = vcmp.eq.f32.partialorder %v3662, 8.507059e+37
  %v3664 = vand.u32 %v3637, 2147483648
  %v3665 = vor.u32 1.1754944e-38, %v3664
  %v3666 = vsel %vm3663, %v3665, %v3661
  %v3667 = vmul.f32 %v3631, %v3666
  %v3668 = vpack.c.bf16 %v3667, %v3652
  %v3669 = vpack.c.bf16 %v3592, %v3590
  %v3671 = vsel %vm168, %v3668, 0
  %3673 = vmatpush.bf16.msra.mxu0 0
  %3674 = vmatpush.bf16.msra.mxu0 0
  %3675 = vmatpush.bf16.msra.mxu0 0
  %3676 = vmatpush.bf16.msra.mxu0 0
  %3677 = vmatpush.bf16.msra.mxu0 0
  %3678 = vmatpush.bf16.msra.mxu0 0
  %3679 = vmatpush.bf16.msra.mxu0 0
  %3680 = vmatpush.bf16.msra.mxu0 %v3669
  %3681 = vmatmul.bf16.gmra.mxu0 %v3671
  %v3682 = vpop.f32.mrf.mxu0
  %v3683 = vadd.f32 0.0, %v3682
  %v3684 = vpop.f32.mrf.mxu0
  %v3685 = vadd.f32 0.0, %v3684
  %3686 = vdwg.mxu0
  %v3687 = vpack.c.bf16 %v3685, %v3683
  %s3688 = scalar_lea.vmem %s2, 976
  %v3689 = vld [vmem:[%s3688] sm:$0xf]
  %v3690 = vld [vmem:[%s3688 + $0x4] sm:$0xf]
  %v3691 = vld [vmem:[%s3688 + $0x8] sm:$0xf]
  %v3692 = vld [vmem:[%s3688 + $0xc] sm:$0xf]
  %v3697 = vunpack.c.l.b16 %v3689
  %v3698 = vunpack.c.l.b16 %v3690
  %v3699 = vunpack.c.l.b16 %v3691
  %v3700 = vunpack.c.l.b16 %v3692
  %v3701 = vpack.c.b16 %v3698, %v3697
  %v3702 = vpack.c.b16 %v3700, %v3699
  %v3704 = vsel %vm143, %v3687, 0
  %v3707 = vsel %vm143, %v3701, 0
  %v3710 = vsel %vm143, %v3702, 0
  %3712 = vmatpush.bf16.xpose.msra.mxu0 0
  %3713 = vmatpush.bf16.xpose.msra.mxu0 0
  %3714 = vmatpush.bf16.xpose.msra.mxu0 0
  %3715 = vmatpush.bf16.xpose.msra.mxu0 0
  %3716 = vmatpush.bf16.xpose.msra.mxu0 0
  %3717 = vmatpush.bf16.xpose.msra.mxu0 0
  %3718 = vmatpush.bf16.xpose.msra.mxu0 %v3710
  %3719 = vmatpush.bf16.xpose.msra.mxu0 %v3707
  %3720 = vmatmul.bf16.gmra.mxu0 %v3704
  %v3721 = vpop.f32.mrf.mxu0
  %v3722 = vadd.f32 0.0, %v3721
  %v3723 = vpop.f32.mrf.mxu0
  %v3724 = vadd.f32 0.0, %v3723
  %3725 = vdwg.mxu0
  %v3730 = vunpack.c.l.b16 %v3491
  %v3731 = vunpack.c.l.b16 %v3492
  %v3732 = vunpack.c.l.b16 %v3493
  %v3733 = vunpack.c.l.b16 %v3494
  %v3734 = vpack.c.b16 %v3731, %v3730
  %v3735 = vpack.c.b16 %v3733, %v3732
  %v3737 = vsel %vm143, %v3489, 0
  %v3740 = vsel %vm143, %v3734, 0
  %v3743 = vsel %vm143, %v3735, 0
  %3745 = vmatpush.bf16.xpose.msra.mxu0 0
  %3746 = vmatpush.bf16.xpose.msra.mxu0 0
  %3747 = vmatpush.bf16.xpose.msra.mxu0 0
  %3748 = vmatpush.bf16.xpose.msra.mxu0 0
  %3749 = vmatpush.bf16.xpose.msra.mxu0 0
  %3750 = vmatpush.bf16.xpose.msra.mxu0 0
  %3751 = vmatpush.bf16.xpose.msra.mxu0 %v3743
  %3752 = vmatpush.bf16.xpose.msra.mxu0 %v3740
  %3753 = vmatmul.bf16.gmra.mxu0 %v3737
  %v3754 = vpop.f32.mrf.mxu0
  %v3755 = vadd.f32 %v3722, %v3754
  %v3756 = vpop.f32.mrf.mxu0
  %v3757 = vadd.f32 %v3724, %v3756
  %3758 = vdwg.mxu0
  %s3759 = scalar_lea.vmem %s2, 800
  %v3760 = vld [vmem:[%s3759] sm:$0xf]
  %v3761 = vld [vmem:[%s3759 + $0x4] sm:$0xf]
  %v3762 = vld [vmem:[%s3759 + $0x8] sm:$0xf]
  %v3763 = vld [vmem:[%s3759 + $0xc] sm:$0xf]
  %v3764 = vld [vmem:[%s4 + $0x69] sm:$0x1]
  %v3765 = vperm.slane %v3764, 0
  %v3770 = vunpack.c.l.b16 %v3760
  %v3771 = vunpack.c.l.b16 %v3761
  %v3772 = vunpack.c.l.b16 %v3762
  %v3773 = vunpack.c.l.b16 %v3763
  %v3774 = vpack.c.b16 %v3771, %v3770
  %v3775 = vpack.c.b16 %v3773, %v3772
  %3778 = vmatpush.bf16.msra.mxu0 0
  %3779 = vmatpush.bf16.msra.mxu0 0
  %3780 = vmatpush.bf16.msra.mxu0 0
  %3781 = vmatpush.bf16.msra.mxu0 0
  %3782 = vmatpush.bf16.msra.mxu0 0
  %3783 = vmatpush.bf16.msra.mxu0 0
  %3784 = vmatpush.bf16.msra.mxu0 %v3775
  %3785 = vmatpush.bf16.msra.mxu0 %v3774
  %3786 = vmatmul.bf16.gmra.mxu0 %v3311
  %v3787 = vpop.f32.mrf.mxu0
  %v3788 = vadd.f32 %v3765, %v3787
  %v3789 = vpop.f32.mrf.mxu0
  %v3790 = vadd.f32 %v3765, %v3789
  %3791 = vdwg.mxu0
  %s3792 = scalar_lea.vmem %s2, 864
  %v3793 = vld [vmem:[%s3792] sm:$0xf]
  %v3794 = vld [vmem:[%s3792 + $0x4] sm:$0xf]
  %v3795 = vld [vmem:[%s3792 + $0x8] sm:$0xf]
  %v3796 = vld [vmem:[%s3792 + $0xc] sm:$0xf]
  %v3797 = vld [vmem:[%s4 + $0x6d] sm:$0x1]
  %v3798 = vperm.slane %v3797, 0
  %v3803 = vunpack.c.l.b16 %v3793
  %v3804 = vunpack.c.l.b16 %v3794
  %v3805 = vunpack.c.l.b16 %v3795
  %v3806 = vunpack.c.l.b16 %v3796
  %v3807 = vpack.c.b16 %v3804, %v3803
  %v3808 = vpack.c.b16 %v3806, %v3805
  %3811 = vmatpush.bf16.msra.mxu0 0
  %3812 = vmatpush.bf16.msra.mxu0 0
  %3813 = vmatpush.bf16.msra.mxu0 0
  %3814 = vmatpush.bf16.msra.mxu0 0
  %3815 = vmatpush.bf16.msra.mxu0 0
  %3816 = vmatpush.bf16.msra.mxu0 0
  %3817 = vmatpush.bf16.msra.mxu0 %v3808
  %3818 = vmatpush.bf16.msra.mxu0 %v3807
  %3819 = vmatmul.bf16.gmra.mxu0 %v3347
  %v3820 = vpop.f32.mrf.mxu0
  %v3821 = vadd.f32 %v3798, %v3820
  %v3822 = vpop.f32.mrf.mxu0
  %v3823 = vadd.f32 %v3798, %v3822
  %3824 = vdwg.mxu0
  %s3825 = scalar_lea.vmem %s2, 928
  %v3826 = vld [vmem:[%s3825] sm:$0xf]
  %v3827 = vld [vmem:[%s3825 + $0x4] sm:$0xf]
  %v3828 = vld [vmem:[%s3825 + $0x8] sm:$0xf]
  %v3829 = vld [vmem:[%s3825 + $0xc] sm:$0xf]
  %v3830 = vld [vmem:[%s4 + $0x71] sm:$0x1]
  %v3831 = vperm.slane %v3830, 0
  %v3836 = vunpack.c.l.b16 %v3826
  %v3837 = vunpack.c.l.b16 %v3827
  %v3838 = vunpack.c.l.b16 %v3828
  %v3839 = vunpack.c.l.b16 %v3829
  %v3840 = vpack.c.b16 %v3837, %v3836
  %v3841 = vpack.c.b16 %v3839, %v3838
  %3844 = vmatpush.bf16.msra.mxu0 0
  %3845 = vmatpush.bf16.msra.mxu0 0
  %3846 = vmatpush.bf16.msra.mxu0 0
  %3847 = vmatpush.bf16.msra.mxu0 0
  %3848 = vmatpush.bf16.msra.mxu0 0
  %3849 = vmatpush.bf16.msra.mxu0 0
  %3850 = vmatpush.bf16.msra.mxu0 %v3841
  %3851 = vmatpush.bf16.msra.mxu0 %v3840
  %3852 = vmatmul.bf16.gmra.mxu0 %v3347
  %v3853 = vpop.f32.mrf.mxu0
  %v3854 = vadd.f32 %v3831, %v3853
  %v3855 = vpop.f32.mrf.mxu0
  %v3856 = vadd.f32 %v3831, %v3855
  %3857 = vdwg.mxu0
  %v3858 = vpack.c.bf16 %v3790, %v3788
  %v3859 = vpack.c.bf16 %v3823, %v3821
  %v3861 = vsel %vm143, %v3858, 0
  %v3864 = vsel %vm143, %v3859, 0
  %3866 = vmatpush.bf16.xpose.msra.mxu0 0
  %3867 = vmatpush.bf16.xpose.msra.mxu0 0
  %3868 = vmatpush.bf16.xpose.msra.mxu0 0
  %3869 = vmatpush.bf16.xpose.msra.mxu0 0
  %3870 = vmatpush.bf16.xpose.msra.mxu0 0
  %3871 = vmatpush.bf16.xpose.msra.mxu0 0
  %3872 = vmatpush.bf16.xpose.msra.mxu0 0
  %3873 = vmatpush.bf16.xpose.msra.mxu0 %v3864
  %3874 = vmatmul.bf16.gmra.mxu0 %v3861
  %v3875 = vpop.f32.mrf.mxu0
  %v3876 = vadd.f32 0.0, %v3875
  %v3877 = vpop.f32.mrf.mxu0
  %v3878 = vadd.f32 0.0, %v3877
  %3879 = vdwg.mxu0
  %v3880 = vmul.f32 %v3876, 0.35355338
  %v3881 = vmul.f32 %v3878, 0.35355338
  %v3882 = vadd.f32 %v3880, %v36
  %v3883 = vadd.f32 %v3881, %v37
  %v3884 = vsel %vm168, %v3882, -inf
  %3885 = vmax.xlane.f32.xlu0 %v3884
  %v3886 = vpop.xlane.xlu0 %3885
  %v3887 = vsel %vm168, %v3883, -inf
  %3888 = vmax.xlane.f32.xlu0 %v3887
  %v3889 = vpop.xlane.xlu0 %3888
  %v3890 = vsub.f32 %v3882, %v3886
  %v3891 = vsub.f32 %v3883, %v3889
  %v3892 = vmul.f32 %v3890, 1.442695
  %v3893 = vpow.pop %v3892
  %v3894 = vmul.f32 %v3891, 1.442695
  %v3895 = vpow.pop %v3894
  %v3896 = vsel %vm168, %v3893, 0.0
  %3897 = vadd.xlane.f32.xlu0 %v3896
  %v3898 = vpop.xlane.xlu0 %3897
  %v3899 = vsel %vm168, %v3895, 0.0
  %3900 = vadd.xlane.f32.xlu0 %v3899
  %v3901 = vpop.xlane.xlu0 %3900
  %v3902 = vrcp.pop %v3898
  %v3903 = vmul.f32 %v3898, %v3902
  %v3904 = vsub.f32 1.0, %v3903
  %v3905 = vmul.f32 %v3902, %v3904
  %v3906 = vadd.f32 %v3902, %v3905
  %vm3907 = vweird.f32 %v3898
  %vm3908 = vweird.f32 %v3902
  %vm3909 = vmor %vm3907, %vm3908
  %v3910 = vsel %vm3909, %v3902, %v3906
  %v3911 = vand.u32 2147483647, %v3898
  %vm3912 = vcmp.eq.f32.partialorder %v3911, 8.507059e+37
  %v3913 = vand.u32 %v3898, 2147483648
  %v3914 = vor.u32 1.1754944e-38, %v3913
  %v3915 = vsel %vm3912, %v3914, %v3910
  %v3916 = vmul.f32 %v3893, %v3915
  %v3917 = vrcp.pop %v3901
  %v3918 = vmul.f32 %v3901, %v3917
  %v3919 = vsub.f32 1.0, %v3918
  %v3920 = vmul.f32 %v3917, %v3919
  %v3921 = vadd.f32 %v3917, %v3920
  %vm3922 = vweird.f32 %v3901
  %vm3923 = vweird.f32 %v3917
  %vm3924 = vmor %vm3922, %vm3923
  %v3925 = vsel %vm3924, %v3917, %v3921
  %v3926 = vand.u32 2147483647, %v3901
  %vm3927 = vcmp.eq.f32.partialorder %v3926, 8.507059e+37
  %v3928 = vand.u32 %v3901, 2147483648
  %v3929 = vor.u32 1.1754944e-38, %v3928
  %v3930 = vsel %vm3927, %v3929, %v3925
  %v3931 = vmul.f32 %v3895, %v3930
  %v3932 = vpack.c.bf16 %v3931, %v3916
  %v3933 = vpack.c.bf16 %v3856, %v3854
  %v3935 = vsel %vm168, %v3932, 0
  %3937 = vmatpush.bf16.msra.mxu0 0
  %3938 = vmatpush.bf16.msra.mxu0 0
  %3939 = vmatpush.bf16.msra.mxu0 0
  %3940 = vmatpush.bf16.msra.mxu0 0
  %3941 = vmatpush.bf16.msra.mxu0 0
  %3942 = vmatpush.bf16.msra.mxu0 0
  %3943 = vmatpush.bf16.msra.mxu0 0
  %3944 = vmatpush.bf16.msra.mxu0 %v3933
  %3945 = vmatmul.bf16.gmra.mxu0 %v3935
  %v3946 = vpop.f32.mrf.mxu0
  %v3947 = vadd.f32 0.0, %v3946
  %v3948 = vpop.f32.mrf.mxu0
  %v3949 = vadd.f32 0.0, %v3948
  %3950 = vdwg.mxu0
  %v3951 = vpack.c.bf16 %v3949, %v3947
  %s3952 = scalar_lea.vmem %s2, 992
  %v3953 = vld [vmem:[%s3952] sm:$0xf]
  %v3954 = vld [vmem:[%s3952 + $0x4] sm:$0xf]
  %v3955 = vld [vmem:[%s3952 + $0x8] sm:$0xf]
  %v3956 = vld [vmem:[%s3952 + $0xc] sm:$0xf]
  %v3961 = vunpack.c.l.b16 %v3953
  %v3962 = vunpack.c.l.b16 %v3954
  %v3963 = vunpack.c.l.b16 %v3955
  %v3964 = vunpack.c.l.b16 %v3956
  %v3965 = vpack.c.b16 %v3962, %v3961
  %v3966 = vpack.c.b16 %v3964, %v3963
  %v3968 = vsel %vm143, %v3951, 0
  %v3971 = vsel %vm143, %v3965, 0
  %v3974 = vsel %vm143, %v3966, 0
  %3976 = vmatpush.bf16.xpose.msra.mxu0 0
  %3977 = vmatpush.bf16.xpose.msra.mxu0 0
  %3978 = vmatpush.bf16.xpose.msra.mxu0 0
  %3979 = vmatpush.bf16.xpose.msra.mxu0 0
  %3980 = vmatpush.bf16.xpose.msra.mxu0 0
  %3981 = vmatpush.bf16.xpose.msra.mxu0 0
  %3982 = vmatpush.bf16.xpose.msra.mxu0 %v3974
  %3983 = vmatpush.bf16.xpose.msra.mxu0 %v3971
  %3984 = vmatmul.bf16.gmra.mxu0 %v3968
  %v3985 = vpop.f32.mrf.mxu0
  %v3986 = vadd.f32 0.0, %v3985
  %v3987 = vpop.f32.mrf.mxu0
  %v3988 = vadd.f32 0.0, %v3987
  %3989 = vdwg.mxu0
  %v3990 = vadd.f32 %v3755, %v3986
  %v3991 = vadd.f32 %v3757, %v3988
  %s3992 = scalar_lea.vmem %s2, 816
  %v3993 = vld [vmem:[%s3992] sm:$0xf]
  %v3994 = vld [vmem:[%s3992 + $0x4] sm:$0xf]
  %v3995 = vld [vmem:[%s3992 + $0x8] sm:$0xf]
  %v3996 = vld [vmem:[%s3992 + $0xc] sm:$0xf]
  %v3997 = vld [vmem:[%s4 + $0x6a] sm:$0x1]
  %v3998 = vperm.slane %v3997, 0
  %v4003 = vunpack.c.l.b16 %v3993
  %v4004 = vunpack.c.l.b16 %v3994
  %v4005 = vunpack.c.l.b16 %v3995
  %v4006 = vunpack.c.l.b16 %v3996
  %v4007 = vpack.c.b16 %v4004, %v4003
  %v4008 = vpack.c.b16 %v4006, %v4005
  %4011 = vmatpush.bf16.msra.mxu0 0
  %4012 = vmatpush.bf16.msra.mxu0 0
  %4013 = vmatpush.bf16.msra.mxu0 0
  %4014 = vmatpush.bf16.msra.mxu0 0
  %4015 = vmatpush.bf16.msra.mxu0 0
  %4016 = vmatpush.bf16.msra.mxu0 0
  %4017 = vmatpush.bf16.msra.mxu0 %v4008
  %4018 = vmatpush.bf16.msra.mxu0 %v4007
  %4019 = vmatmul.bf16.gmra.mxu0 %v3311
  %v4020 = vpop.f32.mrf.mxu0
  %v4021 = vadd.f32 %v3998, %v4020
  %v4022 = vpop.f32.mrf.mxu0
  %v4023 = vadd.f32 %v3998, %v4022
  %4024 = vdwg.mxu0
  %s4025 = scalar_lea.vmem %s2, 880
  %v4026 = vld [vmem:[%s4025] sm:$0xf]
  %v4027 = vld [vmem:[%s4025 + $0x4] sm:$0xf]
  %v4028 = vld [vmem:[%s4025 + $0x8] sm:$0xf]
  %v4029 = vld [vmem:[%s4025 + $0xc] sm:$0xf]
  %v4030 = vld [vmem:[%s4 + $0x6e] sm:$0x1]
  %v4031 = vperm.slane %v4030, 0
  %v4036 = vunpack.c.l.b16 %v4026
  %v4037 = vunpack.c.l.b16 %v4027
  %v4038 = vunpack.c.l.b16 %v4028
  %v4039 = vunpack.c.l.b16 %v4029
  %v4040 = vpack.c.b16 %v4037, %v4036
  %v4041 = vpack.c.b16 %v4039, %v4038
  %4044 = vmatpush.bf16.msra.mxu0 0
  %4045 = vmatpush.bf16.msra.mxu0 0
  %4046 = vmatpush.bf16.msra.mxu0 0
  %4047 = vmatpush.bf16.msra.mxu0 0
  %4048 = vmatpush.bf16.msra.mxu0 0
  %4049 = vmatpush.bf16.msra.mxu0 0
  %4050 = vmatpush.bf16.msra.mxu0 %v4041
  %4051 = vmatpush.bf16.msra.mxu0 %v4040
  %4052 = vmatmul.bf16.gmra.mxu0 %v3347
  %v4053 = vpop.f32.mrf.mxu0
  %v4054 = vadd.f32 %v4031, %v4053
  %v4055 = vpop.f32.mrf.mxu0
  %v4056 = vadd.f32 %v4031, %v4055
  %4057 = vdwg.mxu0
  %s4058 = scalar_lea.vmem %s2, 944
  %v4059 = vld [vmem:[%s4058] sm:$0xf]
  %v4060 = vld [vmem:[%s4058 + $0x4] sm:$0xf]
  %v4061 = vld [vmem:[%s4058 + $0x8] sm:$0xf]
  %v4062 = vld [vmem:[%s4058 + $0xc] sm:$0xf]
  %v4063 = vld [vmem:[%s4 + $0x72] sm:$0x1]
  %v4064 = vperm.slane %v4063, 0
  %v4069 = vunpack.c.l.b16 %v4059
  %v4070 = vunpack.c.l.b16 %v4060
  %v4071 = vunpack.c.l.b16 %v4061
  %v4072 = vunpack.c.l.b16 %v4062
  %v4073 = vpack.c.b16 %v4070, %v4069
  %v4074 = vpack.c.b16 %v4072, %v4071
  %4077 = vmatpush.bf16.msra.mxu0 0
  %4078 = vmatpush.bf16.msra.mxu0 0
  %4079 = vmatpush.bf16.msra.mxu0 0
  %4080 = vmatpush.bf16.msra.mxu0 0
  %4081 = vmatpush.bf16.msra.mxu0 0
  %4082 = vmatpush.bf16.msra.mxu0 0
  %4083 = vmatpush.bf16.msra.mxu0 %v4074
  %4084 = vmatpush.bf16.msra.mxu0 %v4073
  %4085 = vmatmul.bf16.gmra.mxu0 %v3347
  %v4086 = vpop.f32.mrf.mxu0
  %v4087 = vadd.f32 %v4064, %v4086
  %v4088 = vpop.f32.mrf.mxu0
  %v4089 = vadd.f32 %v4064, %v4088
  %4090 = vdwg.mxu0
  %v4091 = vpack.c.bf16 %v4023, %v4021
  %v4092 = vpack.c.bf16 %v4056, %v4054
  %v4094 = vsel %vm143, %v4091, 0
  %v4097 = vsel %vm143, %v4092, 0
  %4099 = vmatpush.bf16.xpose.msra.mxu0 0
  %4100 = vmatpush.bf16.xpose.msra.mxu0 0
  %4101 = vmatpush.bf16.xpose.msra.mxu0 0
  %4102 = vmatpush.bf16.xpose.msra.mxu0 0
  %4103 = vmatpush.bf16.xpose.msra.mxu0 0
  %4104 = vmatpush.bf16.xpose.msra.mxu0 0
  %4105 = vmatpush.bf16.xpose.msra.mxu0 0
  %4106 = vmatpush.bf16.xpose.msra.mxu0 %v4097
  %4107 = vmatmul.bf16.gmra.mxu0 %v4094
  %v4108 = vpop.f32.mrf.mxu0
  %v4109 = vadd.f32 0.0, %v4108
  %v4110 = vpop.f32.mrf.mxu0
  %v4111 = vadd.f32 0.0, %v4110
  %4112 = vdwg.mxu0
  %v4113 = vmul.f32 %v4109, 0.35355338
  %v4114 = vmul.f32 %v4111, 0.35355338
  %v4115 = vadd.f32 %v4113, %v36
  %v4116 = vadd.f32 %v4114, %v37
  %v4117 = vsel %vm168, %v4115, -inf
  %4118 = vmax.xlane.f32.xlu0 %v4117
  %v4119 = vpop.xlane.xlu0 %4118
  %v4120 = vsel %vm168, %v4116, -inf
  %4121 = vmax.xlane.f32.xlu0 %v4120
  %v4122 = vpop.xlane.xlu0 %4121
  %v4123 = vsub.f32 %v4115, %v4119
  %v4124 = vsub.f32 %v4116, %v4122
  %v4125 = vmul.f32 %v4123, 1.442695
  %v4126 = vpow.pop %v4125
  %v4127 = vmul.f32 %v4124, 1.442695
  %v4128 = vpow.pop %v4127
  %v4129 = vsel %vm168, %v4126, 0.0
  %4130 = vadd.xlane.f32.xlu0 %v4129
  %v4131 = vpop.xlane.xlu0 %4130
  %v4132 = vsel %vm168, %v4128, 0.0
  %4133 = vadd.xlane.f32.xlu0 %v4132
  %v4134 = vpop.xlane.xlu0 %4133
  %v4135 = vrcp.pop %v4131
  %v4136 = vmul.f32 %v4131, %v4135
  %v4137 = vsub.f32 1.0, %v4136
  %v4138 = vmul.f32 %v4135, %v4137
  %v4139 = vadd.f32 %v4135, %v4138
  %vm4140 = vweird.f32 %v4131
  %vm4141 = vweird.f32 %v4135
  %vm4142 = vmor %vm4140, %vm4141
  %v4143 = vsel %vm4142, %v4135, %v4139
  %v4144 = vand.u32 2147483647, %v4131
  %vm4145 = vcmp.eq.f32.partialorder %v4144, 8.507059e+37
  %v4146 = vand.u32 %v4131, 2147483648
  %v4147 = vor.u32 1.1754944e-38, %v4146
  %v4148 = vsel %vm4145, %v4147, %v4143
  %v4149 = vmul.f32 %v4126, %v4148
  %v4150 = vrcp.pop %v4134
  %v4151 = vmul.f32 %v4134, %v4150
  %v4152 = vsub.f32 1.0, %v4151
  %v4153 = vmul.f32 %v4150, %v4152
  %v4154 = vadd.f32 %v4150, %v4153
  %vm4155 = vweird.f32 %v4134
  %vm4156 = vweird.f32 %v4150
  %vm4157 = vmor %vm4155, %vm4156
  %v4158 = vsel %vm4157, %v4150, %v4154
  %v4159 = vand.u32 2147483647, %v4134
  %vm4160 = vcmp.eq.f32.partialorder %v4159, 8.507059e+37
  %v4161 = vand.u32 %v4134, 2147483648
  %v4162 = vor.u32 1.1754944e-38, %v4161
  %v4163 = vsel %vm4160, %v4162, %v4158
  %v4164 = vmul.f32 %v4128, %v4163
  %v4165 = vpack.c.bf16 %v4164, %v4149
  %v4166 = vpack.c.bf16 %v4089, %v4087
  %v4168 = vsel %vm168, %v4165, 0
  %4170 = vmatpush.bf16.msra.mxu0 0
  %4171 = vmatpush.bf16.msra.mxu0 0
  %4172 = vmatpush.bf16.msra.mxu0 0
  %4173 = vmatpush.bf16.msra.mxu0 0
  %4174 = vmatpush.bf16.msra.mxu0 0
  %4175 = vmatpush.bf16.msra.mxu0 0
  %4176 = vmatpush.bf16.msra.mxu0 0
  %4177 = vmatpush.bf16.msra.mxu0 %v4166
  %4178 = vmatmul.bf16.gmra.mxu0 %v4168
  %v4179 = vpop.f32.mrf.mxu0
  %v4180 = vadd.f32 0.0, %v4179
  %v4181 = vpop.f32.mrf.mxu0
  %v4182 = vadd.f32 0.0, %v4181
  %4183 = vdwg.mxu0
  %v4184 = vpack.c.bf16 %v4182, %v4180
  %s4185 = scalar_lea.vmem %s2, 1008
  %v4186 = vld [vmem:[%s4185] sm:$0xf]
  %v4187 = vld [vmem:[%s4185 + $0x4] sm:$0xf]
  %v4188 = vld [vmem:[%s4185 + $0x8] sm:$0xf]
  %v4189 = vld [vmem:[%s4185 + $0xc] sm:$0xf]
  %v4194 = vunpack.c.l.b16 %v4186
  %v4195 = vunpack.c.l.b16 %v4187
  %v4196 = vunpack.c.l.b16 %v4188
  %v4197 = vunpack.c.l.b16 %v4189
  %v4198 = vpack.c.b16 %v4195, %v4194
  %v4199 = vpack.c.b16 %v4197, %v4196
  %v4201 = vsel %vm143, %v4184, 0
  %v4204 = vsel %vm143, %v4198, 0
  %v4207 = vsel %vm143, %v4199, 0
  %4209 = vmatpush.bf16.xpose.msra.mxu0 0
  %4210 = vmatpush.bf16.xpose.msra.mxu0 0
  %4211 = vmatpush.bf16.xpose.msra.mxu0 0
  %4212 = vmatpush.bf16.xpose.msra.mxu0 0
  %4213 = vmatpush.bf16.xpose.msra.mxu0 0
  %4214 = vmatpush.bf16.xpose.msra.mxu0 0
  %4215 = vmatpush.bf16.xpose.msra.mxu0 %v4207
  %4216 = vmatpush.bf16.xpose.msra.mxu0 %v4204
  %4217 = vmatmul.bf16.gmra.mxu0 %v4201
  %v4218 = vpop.f32.mrf.mxu0
  %v4219 = vadd.f32 0.0, %v4218
  %v4220 = vpop.f32.mrf.mxu0
  %v4221 = vadd.f32 0.0, %v4220
  %4222 = vdwg.mxu0
  %v4223 = vadd.f32 %v3990, %v4219
  %v4224 = vadd.f32 %v3991, %v4221
  %v4225 = vld [vmem:[%s4 + $0x73] sm:$0x1]
  %v4226 = vperm.slane %v4225, 0
  %v4227 = vadd.f32 %v4223, %v4226
  %v4228 = vadd.f32 %v4224, %v4226
  %v4229 = vadd.f32 %v3287, %v4227
  %v4230 = vadd.f32 %v3288, %v4228
  %v4231 = vld [vmem:[%s4 + $0x98] sm:$0x1]
  %v4232 = vld [vmem:[%s4 + $0x99] sm:$0x1]
  %v4233 = vsel %vm57, %v4229, 0.0
  %4234 = vadd.xlane.f32.xlu0 %v4233
  %v4235 = vpop.xlane.xlu0 %4234
  %v4236 = vsel %vm57, %v4230, 0.0
  %4237 = vadd.xlane.f32.xlu0 %v4236
  %v4238 = vpop.xlane.xlu0 %4237
  %v4239 = vmul.f32 %v4235, %v992
  %v4240 = vmul.f32 %v4238, %v992
  %v4241 = vsub.f32 %v4229, %v4239
  %v4242 = vsub.f32 %v4230, %v4240
  %v4243 = vmul.f32 %v4241, %v4241
  %v4244 = vmul.f32 %v4242, %v4242
  %v4245 = vsel %vm57, %v4243, 0.0
  %4246 = vadd.xlane.f32.xlu0 %v4245
  %v4247 = vpop.xlane.xlu0 %4246
  %v4248 = vsel %vm57, %v4244, 0.0
  %4249 = vadd.xlane.f32.xlu0 %v4248
  %v4250 = vpop.xlane.xlu0 %4249
  %v4251 = vmul.f32 %v4247, %v992
  %v4252 = vmul.f32 %v4250, %v992
  %v4253 = vadd.f32 %v4251, 1e-05
  %v4254 = vadd.f32 %v4252, 1e-05
  %v4255 = vrsqrt.pop %v4253
  %v4256 = vmul.f32 %v4255, %v4253
  %v4257 = vmul.f32 %v4256, %v4255
  %v4258 = vmul.f32 0.5, %v4257
  %v4259 = vsub.f32 1.5, %v4258
  %v4260 = vmul.f32 %v4255, %v4259
  %vm4261 = vweird.f32 %v4253
  %vm4262 = vweird.f32 %v4255
  %vm4263 = vmor %vm4261, %vm4262
  %v4264 = vsel %vm4263, %v4255, %v4260
  %v4265 = vrsqrt.pop %v4254
  %v4266 = vmul.f32 %v4265, %v4254
  %v4267 = vmul.f32 %v4266, %v4265
  %v4268 = vmul.f32 0.5, %v4267
  %v4269 = vsub.f32 1.5, %v4268
  %v4270 = vmul.f32 %v4265, %v4269
  %vm4271 = vweird.f32 %v4254
  %vm4272 = vweird.f32 %v4265
  %vm4273 = vmor %vm4271, %vm4272
  %v4274 = vsel %vm4273, %v4265, %v4270
  %v4275 = vmul.f32 %v4241, %v4264
  %v4276 = vmul.f32 %v4242, %v4274
  %v4277 = vperm.slane %v4231, 0
  %v4278 = vmul.f32 %v4275, %v4277
  %v4279 = vmul.f32 %v4276, %v4277
  %v4280 = vperm.slane %v4232, 0
  %v4281 = vadd.f32 %v4278, %v4280
  %v4282 = vadd.f32 %v4279, %v4280
  %v4283 = vpack.c.bf16 %v4282, %v4281
  %s4284 = scalar_lea.vmem %s3, 64
  %v4285 = vld [vmem:[%s4284] sm:$0xf]
  %v4286 = vld [vmem:[%s4284 + $0x4] sm:$0xf]
  %v4287 = vld [vmem:[%s4284 + $0x8] sm:$0xf]
  %v4288 = vld [vmem:[%s4284 + $0xc] sm:$0xf]
  %s4289 = scalar_lea.vmem %s3, 80
  %v4290 = vld [vmem:[%s4289] sm:$0xf]
  %v4291 = vld [vmem:[%s4289 + $0x4] sm:$0xf]
  %v4292 = vld [vmem:[%s4289 + $0x8] sm:$0xf]
  %v4293 = vld [vmem:[%s4289 + $0xc] sm:$0xf]
  %v4294 = vld [vmem:[%s4 + $0xa6] sm:$0x1]
  %v4295 = vperm.slane %v4294, 0
  %v4300 = vunpack.c.l.b16 %v4285
  %v4301 = vunpack.c.l.b16 %v4286
  %v4302 = vunpack.c.l.b16 %v4287
  %v4303 = vunpack.c.l.b16 %v4288
  %v4304 = vpack.c.b16 %v4301, %v4300
  %v4305 = vpack.c.b16 %v4303, %v4302
  %v4309 = vsel %vm57, %v4283, 0
  %4311 = vmatpush.bf16.msra.mxu0 0
  %4312 = vmatpush.bf16.msra.mxu0 0
  %4313 = vmatpush.bf16.msra.mxu0 0
  %4314 = vmatpush.bf16.msra.mxu0 0
  %4315 = vmatpush.bf16.msra.mxu0 0
  %4316 = vmatpush.bf16.msra.mxu0 0
  %4317 = vmatpush.bf16.msra.mxu0 %v4305
  %4318 = vmatpush.bf16.msra.mxu0 %v4304
  %4319 = vmatmul.bf16.gmra.mxu0 %v4309
  %v4320 = vpop.f32.mrf.mxu0
  %v4321 = vadd.f32 %v4295, %v4320
  %v4322 = vpop.f32.mrf.mxu0
  %v4323 = vadd.f32 %v4295, %v4322
  %4324 = vdwg.mxu0
  %v4325 = vmax.f32 %v4321, 0.0
  %v4326 = vmax.f32 %v4323, 0.0
  %v4327 = vpack.c.bf16 %v4326, %v4325
  %v4328 = vld [vmem:[%s4 + $0xa7] sm:$0x1]
  %v4329 = vperm.slane %v4328, 0
  %v4334 = vunpack.c.l.b16 %v4290
  %v4335 = vunpack.c.l.b16 %v4291
  %v4336 = vunpack.c.l.b16 %v4292
  %v4337 = vunpack.c.l.b16 %v4293
  %v4338 = vpack.c.b16 %v4335, %v4334
  %v4339 = vpack.c.b16 %v4337, %v4336
  %v4341 = vsel %vm1093, %v4327, 0
  %v4344 = vsel %vm1093, %v4338, 0
  %v4347 = vsel %vm1093, %v4339, 0
  %4349 = vmatpush.bf16.xpose.msra.mxu0 0
  %4350 = vmatpush.bf16.xpose.msra.mxu0 0
  %4351 = vmatpush.bf16.xpose.msra.mxu0 0
  %4352 = vmatpush.bf16.xpose.msra.mxu0 0
  %4353 = vmatpush.bf16.xpose.msra.mxu0 0
  %4354 = vmatpush.bf16.xpose.msra.mxu0 0
  %4355 = vmatpush.bf16.xpose.msra.mxu0 %v4347
  %4356 = vmatpush.bf16.xpose.msra.mxu0 %v4344
  %4357 = vmatmul.bf16.gmra.mxu0 %v4341
  %v4358 = vpop.f32.mrf.mxu0
  %v4359 = vadd.f32 %v4329, %v4358
  %v4360 = vpop.f32.mrf.mxu0
  %v4361 = vadd.f32 %v4329, %v4360
  %4362 = vdwg.mxu0
  %v4363 = vadd.f32 %v4281, %v4359
  %v4364 = vadd.f32 %v4282, %v4361
  %v4365 = vld [vmem:[%s4 + $0x9a] sm:$0x1]
  %v4366 = vld [vmem:[%s4 + $0x9b] sm:$0x1]
  %v4367 = vsel %vm57, %v4363, 0.0
  %4368 = vadd.xlane.f32.xlu0 %v4367
  %v4369 = vpop.xlane.xlu0 %4368
  %v4370 = vsel %vm57, %v4364, 0.0
  %4371 = vadd.xlane.f32.xlu0 %v4370
  %v4372 = vpop.xlane.xlu0 %4371
  %v4373 = vmul.f32 %v4369, %v992
  %v4374 = vmul.f32 %v4372, %v992
  %v4375 = vsub.f32 %v4363, %v4373
  %v4376 = vsub.f32 %v4364, %v4374
  %v4377 = vmul.f32 %v4375, %v4375
  %v4378 = vmul.f32 %v4376, %v4376
  %v4379 = vsel %vm57, %v4377, 0.0
  %4380 = vadd.xlane.f32.xlu0 %v4379
  %v4381 = vpop.xlane.xlu0 %4380
  %v4382 = vsel %vm57, %v4378, 0.0
  %4383 = vadd.xlane.f32.xlu0 %v4382
  %v4384 = vpop.xlane.xlu0 %4383
  %v4385 = vmul.f32 %v4381, %v992
  %v4386 = vmul.f32 %v4384, %v992
  %v4387 = vadd.f32 %v4385, 1e-05
  %v4388 = vadd.f32 %v4386, 1e-05
  %v4389 = vrsqrt.pop %v4387
  %v4390 = vmul.f32 %v4389, %v4387
  %v4391 = vmul.f32 %v4390, %v4389
  %v4392 = vmul.f32 0.5, %v4391
  %v4393 = vsub.f32 1.5, %v4392
  %v4394 = vmul.f32 %v4389, %v4393
  %vm4395 = vweird.f32 %v4387
  %vm4396 = vweird.f32 %v4389
  %vm4397 = vmor %vm4395, %vm4396
  %v4398 = vsel %vm4397, %v4389, %v4394
  %v4399 = vrsqrt.pop %v4388
  %v4400 = vmul.f32 %v4399, %v4388
  %v4401 = vmul.f32 %v4400, %v4399
  %v4402 = vmul.f32 0.5, %v4401
  %v4403 = vsub.f32 1.5, %v4402
  %v4404 = vmul.f32 %v4399, %v4403
  %vm4405 = vweird.f32 %v4388
  %vm4406 = vweird.f32 %v4399
  %vm4407 = vmor %vm4405, %vm4406
  %v4408 = vsel %vm4407, %v4399, %v4404
  %v4409 = vmul.f32 %v4375, %v4398
  %v4410 = vmul.f32 %v4376, %v4408
  %v4411 = vperm.slane %v4365, 0
  %v4412 = vmul.f32 %v4409, %v4411
  %v4413 = vmul.f32 %v4410, %v4411
  %v4414 = vperm.slane %v4366, 0
  %v4415 = vadd.f32 %v4412, %v4414
  %v4416 = vadd.f32 %v4413, %v4414
  %v4417 = vpack.c.bf16 %v4416, %v4415
  %s4418 = scalar_lea.vmem %s2, 1024
  %v4419 = vld [vmem:[%s4418] sm:$0xf]
  %v4420 = vld [vmem:[%s4418 + $0x4] sm:$0xf]
  %v4421 = vld [vmem:[%s4418 + $0x8] sm:$0xf]
  %v4422 = vld [vmem:[%s4418 + $0xc] sm:$0xf]
  %v4423 = vld [vmem:[%s4 + $0x74] sm:$0x1]
  %v4424 = vperm.slane %v4423, 0
  %v4429 = vunpack.c.l.b16 %v4419
  %v4430 = vunpack.c.l.b16 %v4420
  %v4431 = vunpack.c.l.b16 %v4421
  %v4432 = vunpack.c.l.b16 %v4422
  %v4433 = vpack.c.b16 %v4430, %v4429
  %v4434 = vpack.c.b16 %v4432, %v4431
  %v4438 = vsel %vm57, %v4417, 0
  %4440 = vmatpush.bf16.msra.mxu0 0
  %4441 = vmatpush.bf16.msra.mxu0 0
  %4442 = vmatpush.bf16.msra.mxu0 0
  %4443 = vmatpush.bf16.msra.mxu0 0
  %4444 = vmatpush.bf16.msra.mxu0 0
  %4445 = vmatpush.bf16.msra.mxu0 0
  %4446 = vmatpush.bf16.msra.mxu0 %v4434
  %4447 = vmatpush.bf16.msra.mxu0 %v4433
  %4448 = vmatmul.bf16.gmra.mxu0 %v4438
  %v4449 = vpop.f32.mrf.mxu0
  %v4450 = vadd.f32 %v4424, %v4449
  %v4451 = vpop.f32.mrf.mxu0
  %v4452 = vadd.f32 %v4424, %v4451
  %4453 = vdwg.mxu0
  %s4454 = scalar_lea.vmem %s2, 1088
  %v4455 = vld [vmem:[%s4454] sm:$0xf]
  %v4456 = vld [vmem:[%s4454 + $0x4] sm:$0xf]
  %v4457 = vld [vmem:[%s4454 + $0x8] sm:$0xf]
  %v4458 = vld [vmem:[%s4454 + $0xc] sm:$0xf]
  %v4459 = vld [vmem:[%s4 + $0x78] sm:$0x1]
  %v4460 = vperm.slane %v4459, 0
  %v4465 = vunpack.c.l.b16 %v4455
  %v4466 = vunpack.c.l.b16 %v4456
  %v4467 = vunpack.c.l.b16 %v4457
  %v4468 = vunpack.c.l.b16 %v4458
  %v4469 = vpack.c.b16 %v4466, %v4465
  %v4470 = vpack.c.b16 %v4468, %v4467
  %4473 = vmatpush.bf16.msra.mxu0 0
  %4474 = vmatpush.bf16.msra.mxu0 0
  %4475 = vmatpush.bf16.msra.mxu0 0
  %4476 = vmatpush.bf16.msra.mxu0 0
  %4477 = vmatpush.bf16.msra.mxu0 0
  %4478 = vmatpush.bf16.msra.mxu0 0
  %4479 = vmatpush.bf16.msra.mxu0 %v4470
  %4480 = vmatpush.bf16.msra.mxu0 %v4469
  %4481 = vmatmul.bf16.gmra.mxu0 %v4438
  %v4482 = vpop.f32.mrf.mxu0
  %v4483 = vadd.f32 %v4460, %v4482
  %v4484 = vpop.f32.mrf.mxu0
  %v4485 = vadd.f32 %v4460, %v4484
  %4486 = vdwg.mxu0
  %s4487 = scalar_lea.vmem %s2, 1152
  %v4488 = vld [vmem:[%s4487] sm:$0xf]
  %v4489 = vld [vmem:[%s4487 + $0x4] sm:$0xf]
  %v4490 = vld [vmem:[%s4487 + $0x8] sm:$0xf]
  %v4491 = vld [vmem:[%s4487 + $0xc] sm:$0xf]
  %v4492 = vld [vmem:[%s4 + $0x7c] sm:$0x1]
  %v4493 = vperm.slane %v4492, 0
  %v4498 = vunpack.c.l.b16 %v4488
  %v4499 = vunpack.c.l.b16 %v4489
  %v4500 = vunpack.c.l.b16 %v4490
  %v4501 = vunpack.c.l.b16 %v4491
  %v4502 = vpack.c.b16 %v4499, %v4498
  %v4503 = vpack.c.b16 %v4501, %v4500
  %4506 = vmatpush.bf16.msra.mxu0 0
  %4507 = vmatpush.bf16.msra.mxu0 0
  %4508 = vmatpush.bf16.msra.mxu0 0
  %4509 = vmatpush.bf16.msra.mxu0 0
  %4510 = vmatpush.bf16.msra.mxu0 0
  %4511 = vmatpush.bf16.msra.mxu0 0
  %4512 = vmatpush.bf16.msra.mxu0 %v4503
  %4513 = vmatpush.bf16.msra.mxu0 %v4502
  %4514 = vmatmul.bf16.gmra.mxu0 %v4438
  %v4515 = vpop.f32.mrf.mxu0
  %v4516 = vadd.f32 %v4493, %v4515
  %v4517 = vpop.f32.mrf.mxu0
  %v4518 = vadd.f32 %v4493, %v4517
  %4519 = vdwg.mxu0
  %v4520 = vpack.c.bf16 %v4452, %v4450
  %v4521 = vpack.c.bf16 %v4485, %v4483
  %v4523 = vsel %vm143, %v4520, 0
  %v4526 = vsel %vm143, %v4521, 0
  %4528 = vmatpush.bf16.xpose.msra.mxu0 0
  %4529 = vmatpush.bf16.xpose.msra.mxu0 0
  %4530 = vmatpush.bf16.xpose.msra.mxu0 0
  %4531 = vmatpush.bf16.xpose.msra.mxu0 0
  %4532 = vmatpush.bf16.xpose.msra.mxu0 0
  %4533 = vmatpush.bf16.xpose.msra.mxu0 0
  %4534 = vmatpush.bf16.xpose.msra.mxu0 0
  %4535 = vmatpush.bf16.xpose.msra.mxu0 %v4526
  %4536 = vmatmul.bf16.gmra.mxu0 %v4523
  %v4537 = vpop.f32.mrf.mxu0
  %v4538 = vadd.f32 0.0, %v4537
  %v4539 = vpop.f32.mrf.mxu0
  %v4540 = vadd.f32 0.0, %v4539
  %4541 = vdwg.mxu0
  %v4542 = vmul.f32 %v4538, 0.35355338
  %v4543 = vmul.f32 %v4540, 0.35355338
  %v4544 = vadd.f32 %v4542, %v36
  %v4545 = vadd.f32 %v4543, %v37
  %v4546 = vsel %vm168, %v4544, -inf
  %4547 = vmax.xlane.f32.xlu0 %v4546
  %v4548 = vpop.xlane.xlu0 %4547
  %v4549 = vsel %vm168, %v4545, -inf
  %4550 = vmax.xlane.f32.xlu0 %v4549
  %v4551 = vpop.xlane.xlu0 %4550
  %v4552 = vsub.f32 %v4544, %v4548
  %v4553 = vsub.f32 %v4545, %v4551
  %v4554 = vmul.f32 %v4552, 1.442695
  %v4555 = vpow.pop %v4554
  %v4556 = vmul.f32 %v4553, 1.442695
  %v4557 = vpow.pop %v4556
  %v4558 = vsel %vm168, %v4555, 0.0
  %4559 = vadd.xlane.f32.xlu0 %v4558
  %v4560 = vpop.xlane.xlu0 %4559
  %v4561 = vsel %vm168, %v4557, 0.0
  %4562 = vadd.xlane.f32.xlu0 %v4561
  %v4563 = vpop.xlane.xlu0 %4562
  %v4564 = vrcp.pop %v4560
  %v4565 = vmul.f32 %v4560, %v4564
  %v4566 = vsub.f32 1.0, %v4565
  %v4567 = vmul.f32 %v4564, %v4566
  %v4568 = vadd.f32 %v4564, %v4567
  %vm4569 = vweird.f32 %v4560
  %vm4570 = vweird.f32 %v4564
  %vm4571 = vmor %vm4569, %vm4570
  %v4572 = vsel %vm4571, %v4564, %v4568
  %v4573 = vand.u32 2147483647, %v4560
  %vm4574 = vcmp.eq.f32.partialorder %v4573, 8.507059e+37
  %v4575 = vand.u32 %v4560, 2147483648
  %v4576 = vor.u32 1.1754944e-38, %v4575
  %v4577 = vsel %vm4574, %v4576, %v4572
  %v4578 = vmul.f32 %v4555, %v4577
  %v4579 = vrcp.pop %v4563
  %v4580 = vmul.f32 %v4563, %v4579
  %v4581 = vsub.f32 1.0, %v4580
  %v4582 = vmul.f32 %v4579, %v4581
  %v4583 = vadd.f32 %v4579, %v4582
  %vm4584 = vweird.f32 %v4563
  %vm4585 = vweird.f32 %v4579
  %vm4586 = vmor %vm4584, %vm4585
  %v4587 = vsel %vm4586, %v4579, %v4583
  %v4588 = vand.u32 2147483647, %v4563
  %vm4589 = vcmp.eq.f32.partialorder %v4588, 8.507059e+37
  %v4590 = vand.u32 %v4563, 2147483648
  %v4591 = vor.u32 1.1754944e-38, %v4590
  %v4592 = vsel %vm4589, %v4591, %v4587
  %v4593 = vmul.f32 %v4557, %v4592
  %v4594 = vpack.c.bf16 %v4593, %v4578
  %v4595 = vpack.c.bf16 %v4518, %v4516
  %v4597 = vsel %vm168, %v4594, 0
  %4599 = vmatpush.bf16.msra.mxu0 0
  %4600 = vmatpush.bf16.msra.mxu0 0
  %4601 = vmatpush.bf16.msra.mxu0 0
  %4602 = vmatpush.bf16.msra.mxu0 0
  %4603 = vmatpush.bf16.msra.mxu0 0
  %4604 = vmatpush.bf16.msra.mxu0 0
  %4605 = vmatpush.bf16.msra.mxu0 0
  %4606 = vmatpush.bf16.msra.mxu0 %v4595
  %4607 = vmatmul.bf16.gmra.mxu0 %v4597
  %v4608 = vpop.f32.mrf.mxu0
  %v4609 = vadd.f32 0.0, %v4608
  %v4610 = vpop.f32.mrf.mxu0
  %v4611 = vadd.f32 0.0, %v4610
  %4612 = vdwg.mxu0
  %v4613 = vpack.c.bf16 %v4611, %v4609
  %s4614 = scalar_lea.vmem %s2, 1216
  %v4615 = vld [vmem:[%s4614] sm:$0xf]
  %v4616 = vld [vmem:[%s4614 + $0x4] sm:$0xf]
  %v4617 = vld [vmem:[%s4614 + $0x8] sm:$0xf]
  %v4618 = vld [vmem:[%s4614 + $0xc] sm:$0xf]
  %s4619 = scalar_lea.vmem %s2, 1040
  %v4620 = vld [vmem:[%s4619] sm:$0xf]
  %v4621 = vld [vmem:[%s4619 + $0x4] sm:$0xf]
  %v4622 = vld [vmem:[%s4619 + $0x8] sm:$0xf]
  %v4623 = vld [vmem:[%s4619 + $0xc] sm:$0xf]
  %v4624 = vld [vmem:[%s4 + $0x75] sm:$0x1]
  %v4625 = vperm.slane %v4624, 0
  %v4630 = vunpack.c.l.b16 %v4620
  %v4631 = vunpack.c.l.b16 %v4621
  %v4632 = vunpack.c.l.b16 %v4622
  %v4633 = vunpack.c.l.b16 %v4623
  %v4634 = vpack.c.b16 %v4631, %v4630
  %v4635 = vpack.c.b16 %v4633, %v4632
  %4638 = vmatpush.bf16.msra.mxu0 0
  %4639 = vmatpush.bf16.msra.mxu0 0
  %4640 = vmatpush.bf16.msra.mxu0 0
  %4641 = vmatpush.bf16.msra.mxu0 0
  %4642 = vmatpush.bf16.msra.mxu0 0
  %4643 = vmatpush.bf16.msra.mxu0 0
  %4644 = vmatpush.bf16.msra.mxu0 %v4635
  %4645 = vmatpush.bf16.msra.mxu0 %v4634
  %4646 = vmatmul.bf16.gmra.mxu0 %v4438
  %v4647 = vpop.f32.mrf.mxu0
  %v4648 = vadd.f32 %v4625, %v4647
  %v4649 = vpop.f32.mrf.mxu0
  %v4650 = vadd.f32 %v4625, %v4649
  %4651 = vdwg.mxu0
  %s4652 = scalar_lea.vmem %s2, 1104
  %v4653 = vld [vmem:[%s4652] sm:$0xf]
  %v4654 = vld [vmem:[%s4652 + $0x4] sm:$0xf]
  %v4655 = vld [vmem:[%s4652 + $0x8] sm:$0xf]
  %v4656 = vld [vmem:[%s4652 + $0xc] sm:$0xf]
  %v4657 = vld [vmem:[%s4 + $0x79] sm:$0x1]
  %v4658 = vperm.slane %v4657, 0
  %v4663 = vunpack.c.l.b16 %v4653
  %v4664 = vunpack.c.l.b16 %v4654
  %v4665 = vunpack.c.l.b16 %v4655
  %v4666 = vunpack.c.l.b16 %v4656
  %v4667 = vpack.c.b16 %v4664, %v4663
  %v4668 = vpack.c.b16 %v4666, %v4665
  %4671 = vmatpush.bf16.msra.mxu0 0
  %4672 = vmatpush.bf16.msra.mxu0 0
  %4673 = vmatpush.bf16.msra.mxu0 0
  %4674 = vmatpush.bf16.msra.mxu0 0
  %4675 = vmatpush.bf16.msra.mxu0 0
  %4676 = vmatpush.bf16.msra.mxu0 0
  %4677 = vmatpush.bf16.msra.mxu0 %v4668
  %4678 = vmatpush.bf16.msra.mxu0 %v4667
  %4679 = vmatmul.bf16.gmra.mxu0 %v4438
  %v4680 = vpop.f32.mrf.mxu0
  %v4681 = vadd.f32 %v4658, %v4680
  %v4682 = vpop.f32.mrf.mxu0
  %v4683 = vadd.f32 %v4658, %v4682
  %4684 = vdwg.mxu0
  %s4685 = scalar_lea.vmem %s2, 1168
  %v4686 = vld [vmem:[%s4685] sm:$0xf]
  %v4687 = vld [vmem:[%s4685 + $0x4] sm:$0xf]
  %v4688 = vld [vmem:[%s4685 + $0x8] sm:$0xf]
  %v4689 = vld [vmem:[%s4685 + $0xc] sm:$0xf]
  %v4690 = vld [vmem:[%s4 + $0x7d] sm:$0x1]
  %v4691 = vperm.slane %v4690, 0
  %v4696 = vunpack.c.l.b16 %v4686
  %v4697 = vunpack.c.l.b16 %v4687
  %v4698 = vunpack.c.l.b16 %v4688
  %v4699 = vunpack.c.l.b16 %v4689
  %v4700 = vpack.c.b16 %v4697, %v4696
  %v4701 = vpack.c.b16 %v4699, %v4698
  %4704 = vmatpush.bf16.msra.mxu0 0
  %4705 = vmatpush.bf16.msra.mxu0 0
  %4706 = vmatpush.bf16.msra.mxu0 0
  %4707 = vmatpush.bf16.msra.mxu0 0
  %4708 = vmatpush.bf16.msra.mxu0 0
  %4709 = vmatpush.bf16.msra.mxu0 0
  %4710 = vmatpush.bf16.msra.mxu0 %v4701
  %4711 = vmatpush.bf16.msra.mxu0 %v4700
  %4712 = vmatmul.bf16.gmra.mxu0 %v4438
  %v4713 = vpop.f32.mrf.mxu0
  %v4714 = vadd.f32 %v4691, %v4713
  %v4715 = vpop.f32.mrf.mxu0
  %v4716 = vadd.f32 %v4691, %v4715
  %4717 = vdwg.mxu0
  %v4718 = vpack.c.bf16 %v4650, %v4648
  %v4719 = vpack.c.bf16 %v4683, %v4681
  %v4721 = vsel %vm143, %v4718, 0
  %v4724 = vsel %vm143, %v4719, 0
  %4726 = vmatpush.bf16.xpose.msra.mxu0 0
  %4727 = vmatpush.bf16.xpose.msra.mxu0 0
  %4728 = vmatpush.bf16.xpose.msra.mxu0 0
  %4729 = vmatpush.bf16.xpose.msra.mxu0 0
  %4730 = vmatpush.bf16.xpose.msra.mxu0 0
  %4731 = vmatpush.bf16.xpose.msra.mxu0 0
  %4732 = vmatpush.bf16.xpose.msra.mxu0 0
  %4733 = vmatpush.bf16.xpose.msra.mxu0 %v4724
  %4734 = vmatmul.bf16.gmra.mxu0 %v4721
  %v4735 = vpop.f32.mrf.mxu0
  %v4736 = vadd.f32 0.0, %v4735
  %v4737 = vpop.f32.mrf.mxu0
  %v4738 = vadd.f32 0.0, %v4737
  %4739 = vdwg.mxu0
  %v4740 = vmul.f32 %v4736, 0.35355338
  %v4741 = vmul.f32 %v4738, 0.35355338
  %v4742 = vadd.f32 %v4740, %v36
  %v4743 = vadd.f32 %v4741, %v37
  %v4744 = vsel %vm168, %v4742, -inf
  %4745 = vmax.xlane.f32.xlu0 %v4744
  %v4746 = vpop.xlane.xlu0 %4745
  %v4747 = vsel %vm168, %v4743, -inf
  %4748 = vmax.xlane.f32.xlu0 %v4747
  %v4749 = vpop.xlane.xlu0 %4748
  %v4750 = vsub.f32 %v4742, %v4746
  %v4751 = vsub.f32 %v4743, %v4749
  %v4752 = vmul.f32 %v4750, 1.442695
  %v4753 = vpow.pop %v4752
  %v4754 = vmul.f32 %v4751, 1.442695
  %v4755 = vpow.pop %v4754
  %v4756 = vsel %vm168, %v4753, 0.0
  %4757 = vadd.xlane.f32.xlu0 %v4756
  %v4758 = vpop.xlane.xlu0 %4757
  %v4759 = vsel %vm168, %v4755, 0.0
  %4760 = vadd.xlane.f32.xlu0 %v4759
  %v4761 = vpop.xlane.xlu0 %4760
  %v4762 = vrcp.pop %v4758
  %v4763 = vmul.f32 %v4758, %v4762
  %v4764 = vsub.f32 1.0, %v4763
  %v4765 = vmul.f32 %v4762, %v4764
  %v4766 = vadd.f32 %v4762, %v4765
  %vm4767 = vweird.f32 %v4758
  %vm4768 = vweird.f32 %v4762
  %vm4769 = vmor %vm4767, %vm4768
  %v4770 = vsel %vm4769, %v4762, %v4766
  %v4771 = vand.u32 2147483647, %v4758
  %vm4772 = vcmp.eq.f32.partialorder %v4771, 8.507059e+37
  %v4773 = vand.u32 %v4758, 2147483648
  %v4774 = vor.u32 1.1754944e-38, %v4773
  %v4775 = vsel %vm4772, %v4774, %v4770
  %v4776 = vmul.f32 %v4753, %v4775
  %v4777 = vrcp.pop %v4761
  %v4778 = vmul.f32 %v4761, %v4777
  %v4779 = vsub.f32 1.0, %v4778
  %v4780 = vmul.f32 %v4777, %v4779
  %v4781 = vadd.f32 %v4777, %v4780
  %vm4782 = vweird.f32 %v4761
  %vm4783 = vweird.f32 %v4777
  %vm4784 = vmor %vm4782, %vm4783
  %v4785 = vsel %vm4784, %v4777, %v4781
  %v4786 = vand.u32 2147483647, %v4761
  %vm4787 = vcmp.eq.f32.partialorder %v4786, 8.507059e+37
  %v4788 = vand.u32 %v4761, 2147483648
  %v4789 = vor.u32 1.1754944e-38, %v4788
  %v4790 = vsel %vm4787, %v4789, %v4785
  %v4791 = vmul.f32 %v4755, %v4790
  %v4792 = vpack.c.bf16 %v4791, %v4776
  %v4793 = vpack.c.bf16 %v4716, %v4714
  %v4795 = vsel %vm168, %v4792, 0
  %4797 = vmatpush.bf16.msra.mxu0 0
  %4798 = vmatpush.bf16.msra.mxu0 0
  %4799 = vmatpush.bf16.msra.mxu0 0
  %4800 = vmatpush.bf16.msra.mxu0 0
  %4801 = vmatpush.bf16.msra.mxu0 0
  %4802 = vmatpush.bf16.msra.mxu0 0
  %4803 = vmatpush.bf16.msra.mxu0 0
  %4804 = vmatpush.bf16.msra.mxu0 %v4793
  %4805 = vmatmul.bf16.gmra.mxu0 %v4795
  %v4806 = vpop.f32.mrf.mxu0
  %v4807 = vadd.f32 0.0, %v4806
  %v4808 = vpop.f32.mrf.mxu0
  %v4809 = vadd.f32 0.0, %v4808
  %4810 = vdwg.mxu0
  %v4811 = vpack.c.bf16 %v4809, %v4807
  %s4812 = scalar_lea.vmem %s2, 1232
  %v4813 = vld [vmem:[%s4812] sm:$0xf]
  %v4814 = vld [vmem:[%s4812 + $0x4] sm:$0xf]
  %v4815 = vld [vmem:[%s4812 + $0x8] sm:$0xf]
  %v4816 = vld [vmem:[%s4812 + $0xc] sm:$0xf]
  %v4821 = vunpack.c.l.b16 %v4813
  %v4822 = vunpack.c.l.b16 %v4814
  %v4823 = vunpack.c.l.b16 %v4815
  %v4824 = vunpack.c.l.b16 %v4816
  %v4825 = vpack.c.b16 %v4822, %v4821
  %v4826 = vpack.c.b16 %v4824, %v4823
  %v4828 = vsel %vm143, %v4811, 0
  %v4831 = vsel %vm143, %v4825, 0
  %v4834 = vsel %vm143, %v4826, 0
  %4836 = vmatpush.bf16.xpose.msra.mxu0 0
  %4837 = vmatpush.bf16.xpose.msra.mxu0 0
  %4838 = vmatpush.bf16.xpose.msra.mxu0 0
  %4839 = vmatpush.bf16.xpose.msra.mxu0 0
  %4840 = vmatpush.bf16.xpose.msra.mxu0 0
  %4841 = vmatpush.bf16.xpose.msra.mxu0 0
  %4842 = vmatpush.bf16.xpose.msra.mxu0 %v4834
  %4843 = vmatpush.bf16.xpose.msra.mxu0 %v4831
  %4844 = vmatmul.bf16.gmra.mxu0 %v4828
  %v4845 = vpop.f32.mrf.mxu0
  %v4846 = vadd.f32 0.0, %v4845
  %v4847 = vpop.f32.mrf.mxu0
  %v4848 = vadd.f32 0.0, %v4847
  %4849 = vdwg.mxu0
  %v4854 = vunpack.c.l.b16 %v4615
  %v4855 = vunpack.c.l.b16 %v4616
  %v4856 = vunpack.c.l.b16 %v4617
  %v4857 = vunpack.c.l.b16 %v4618
  %v4858 = vpack.c.b16 %v4855, %v4854
  %v4859 = vpack.c.b16 %v4857, %v4856
  %v4861 = vsel %vm143, %v4613, 0
  %v4864 = vsel %vm143, %v4858, 0
  %v4867 = vsel %vm143, %v4859, 0
  %4869 = vmatpush.bf16.xpose.msra.mxu0 0
  %4870 = vmatpush.bf16.xpose.msra.mxu0 0
  %4871 = vmatpush.bf16.xpose.msra.mxu0 0
  %4872 = vmatpush.bf16.xpose.msra.mxu0 0
  %4873 = vmatpush.bf16.xpose.msra.mxu0 0
  %4874 = vmatpush.bf16.xpose.msra.mxu0 0
  %4875 = vmatpush.bf16.xpose.msra.mxu0 %v4867
  %4876 = vmatpush.bf16.xpose.msra.mxu0 %v4864
  %4877 = vmatmul.bf16.gmra.mxu0 %v4861
  %v4878 = vpop.f32.mrf.mxu0
  %v4879 = vadd.f32 %v4846, %v4878
  %v4880 = vpop.f32.mrf.mxu0
  %v4881 = vadd.f32 %v4848, %v4880
  %4882 = vdwg.mxu0
  %s4883 = scalar_lea.vmem %s2, 1056
  %v4884 = vld [vmem:[%s4883] sm:$0xf]
  %v4885 = vld [vmem:[%s4883 + $0x4] sm:$0xf]
  %v4886 = vld [vmem:[%s4883 + $0x8] sm:$0xf]
  %v4887 = vld [vmem:[%s4883 + $0xc] sm:$0xf]
  %v4888 = vld [vmem:[%s4 + $0x76] sm:$0x1]
  %v4889 = vperm.slane %v4888, 0
  %v4894 = vunpack.c.l.b16 %v4884
  %v4895 = vunpack.c.l.b16 %v4885
  %v4896 = vunpack.c.l.b16 %v4886
  %v4897 = vunpack.c.l.b16 %v4887
  %v4898 = vpack.c.b16 %v4895, %v4894
  %v4899 = vpack.c.b16 %v4897, %v4896
  %4902 = vmatpush.bf16.msra.mxu0 0
  %4903 = vmatpush.bf16.msra.mxu0 0
  %4904 = vmatpush.bf16.msra.mxu0 0
  %4905 = vmatpush.bf16.msra.mxu0 0
  %4906 = vmatpush.bf16.msra.mxu0 0
  %4907 = vmatpush.bf16.msra.mxu0 0
  %4908 = vmatpush.bf16.msra.mxu0 %v4899
  %4909 = vmatpush.bf16.msra.mxu0 %v4898
  %4910 = vmatmul.bf16.gmra.mxu0 %v4438
  %v4911 = vpop.f32.mrf.mxu0
  %v4912 = vadd.f32 %v4889, %v4911
  %v4913 = vpop.f32.mrf.mxu0
  %v4914 = vadd.f32 %v4889, %v4913
  %4915 = vdwg.mxu0
  %s4916 = scalar_lea.vmem %s2, 1120
  %v4917 = vld [vmem:[%s4916] sm:$0xf]
  %v4918 = vld [vmem:[%s4916 + $0x4] sm:$0xf]
  %v4919 = vld [vmem:[%s4916 + $0x8] sm:$0xf]
  %v4920 = vld [vmem:[%s4916 + $0xc] sm:$0xf]
  %v4921 = vld [vmem:[%s4 + $0x7a] sm:$0x1]
  %v4922 = vperm.slane %v4921, 0
  %v4927 = vunpack.c.l.b16 %v4917
  %v4928 = vunpack.c.l.b16 %v4918
  %v4929 = vunpack.c.l.b16 %v4919
  %v4930 = vunpack.c.l.b16 %v4920
  %v4931 = vpack.c.b16 %v4928, %v4927
  %v4932 = vpack.c.b16 %v4930, %v4929
  %4935 = vmatpush.bf16.msra.mxu0 0
  %4936 = vmatpush.bf16.msra.mxu0 0
  %4937 = vmatpush.bf16.msra.mxu0 0
  %4938 = vmatpush.bf16.msra.mxu0 0
  %4939 = vmatpush.bf16.msra.mxu0 0
  %4940 = vmatpush.bf16.msra.mxu0 0
  %4941 = vmatpush.bf16.msra.mxu0 %v4932
  %4942 = vmatpush.bf16.msra.mxu0 %v4931
  %4943 = vmatmul.bf16.gmra.mxu0 %v4438
  %v4944 = vpop.f32.mrf.mxu0
  %v4945 = vadd.f32 %v4922, %v4944
  %v4946 = vpop.f32.mrf.mxu0
  %v4947 = vadd.f32 %v4922, %v4946
  %4948 = vdwg.mxu0
  %s4949 = scalar_lea.vmem %s2, 1184
  %v4950 = vld [vmem:[%s4949] sm:$0xf]
  %v4951 = vld [vmem:[%s4949 + $0x4] sm:$0xf]
  %v4952 = vld [vmem:[%s4949 + $0x8] sm:$0xf]
  %v4953 = vld [vmem:[%s4949 + $0xc] sm:$0xf]
  %v4954 = vld [vmem:[%s4 + $0x7e] sm:$0x1]
  %v4955 = vperm.slane %v4954, 0
  %v4960 = vunpack.c.l.b16 %v4950
  %v4961 = vunpack.c.l.b16 %v4951
  %v4962 = vunpack.c.l.b16 %v4952
  %v4963 = vunpack.c.l.b16 %v4953
  %v4964 = vpack.c.b16 %v4961, %v4960
  %v4965 = vpack.c.b16 %v4963, %v4962
  %4968 = vmatpush.bf16.msra.mxu0 0
  %4969 = vmatpush.bf16.msra.mxu0 0
  %4970 = vmatpush.bf16.msra.mxu0 0
  %4971 = vmatpush.bf16.msra.mxu0 0
  %4972 = vmatpush.bf16.msra.mxu0 0
  %4973 = vmatpush.bf16.msra.mxu0 0
  %4974 = vmatpush.bf16.msra.mxu0 %v4965
  %4975 = vmatpush.bf16.msra.mxu0 %v4964
  %4976 = vmatmul.bf16.gmra.mxu0 %v4438
  %v4977 = vpop.f32.mrf.mxu0
  %v4978 = vadd.f32 %v4955, %v4977
  %v4979 = vpop.f32.mrf.mxu0
  %v4980 = vadd.f32 %v4955, %v4979
  %4981 = vdwg.mxu0
  %v4982 = vpack.c.bf16 %v4914, %v4912
  %v4983 = vpack.c.bf16 %v4947, %v4945
  %v4985 = vsel %vm143, %v4982, 0
  %v4988 = vsel %vm143, %v4983, 0
  %4990 = vmatpush.bf16.xpose.msra.mxu0 0
  %4991 = vmatpush.bf16.xpose.msra.mxu0 0
  %4992 = vmatpush.bf16.xpose.msra.mxu0 0
  %4993 = vmatpush.bf16.xpose.msra.mxu0 0
  %4994 = vmatpush.bf16.xpose.msra.mxu0 0
  %4995 = vmatpush.bf16.xpose.msra.mxu0 0
  %4996 = vmatpush.bf16.xpose.msra.mxu0 0
  %4997 = vmatpush.bf16.xpose.msra.mxu0 %v4988
  %4998 = vmatmul.bf16.gmra.mxu0 %v4985
  %v4999 = vpop.f32.mrf.mxu0
  %v5000 = vadd.f32 0.0, %v4999
  %v5001 = vpop.f32.mrf.mxu0
  %v5002 = vadd.f32 0.0, %v5001
  %5003 = vdwg.mxu0
  %v5004 = vmul.f32 %v5000, 0.35355338
  %v5005 = vmul.f32 %v5002, 0.35355338
  %v5006 = vadd.f32 %v5004, %v36
  %v5007 = vadd.f32 %v5005, %v37
  %v5008 = vsel %vm168, %v5006, -inf
  %5009 = vmax.xlane.f32.xlu0 %v5008
  %v5010 = vpop.xlane.xlu0 %5009
  %v5011 = vsel %vm168, %v5007, -inf
  %5012 = vmax.xlane.f32.xlu0 %v5011
  %v5013 = vpop.xlane.xlu0 %5012
  %v5014 = vsub.f32 %v5006, %v5010
  %v5015 = vsub.f32 %v5007, %v5013
  %v5016 = vmul.f32 %v5014, 1.442695
  %v5017 = vpow.pop %v5016
  %v5018 = vmul.f32 %v5015, 1.442695
  %v5019 = vpow.pop %v5018
  %v5020 = vsel %vm168, %v5017, 0.0
  %5021 = vadd.xlane.f32.xlu0 %v5020
  %v5022 = vpop.xlane.xlu0 %5021
  %v5023 = vsel %vm168, %v5019, 0.0
  %5024 = vadd.xlane.f32.xlu0 %v5023
  %v5025 = vpop.xlane.xlu0 %5024
  %v5026 = vrcp.pop %v5022
  %v5027 = vmul.f32 %v5022, %v5026
  %v5028 = vsub.f32 1.0, %v5027
  %v5029 = vmul.f32 %v5026, %v5028
  %v5030 = vadd.f32 %v5026, %v5029
  %vm5031 = vweird.f32 %v5022
  %vm5032 = vweird.f32 %v5026
  %vm5033 = vmor %vm5031, %vm5032
  %v5034 = vsel %vm5033, %v5026, %v5030
  %v5035 = vand.u32 2147483647, %v5022
  %vm5036 = vcmp.eq.f32.partialorder %v5035, 8.507059e+37
  %v5037 = vand.u32 %v5022, 2147483648
  %v5038 = vor.u32 1.1754944e-38, %v5037
  %v5039 = vsel %vm5036, %v5038, %v5034
  %v5040 = vmul.f32 %v5017, %v5039
  %v5041 = vrcp.pop %v5025
  %v5042 = vmul.f32 %v5025, %v5041
  %v5043 = vsub.f32 1.0, %v5042
  %v5044 = vmul.f32 %v5041, %v5043
  %v5045 = vadd.f32 %v5041, %v5044
  %vm5046 = vweird.f32 %v5025
  %vm5047 = vweird.f32 %v5041
  %vm5048 = vmor %vm5046, %vm5047
  %v5049 = vsel %vm5048, %v5041, %v5045
  %v5050 = vand.u32 2147483647, %v5025
  %vm5051 = vcmp.eq.f32.partialorder %v5050, 8.507059e+37
  %v5052 = vand.u32 %v5025, 2147483648
  %v5053 = vor.u32 1.1754944e-38, %v5052
  %v5054 = vsel %vm5051, %v5053, %v5049
  %v5055 = vmul.f32 %v5019, %v5054
  %v5056 = vpack.c.bf16 %v5055, %v5040
  %v5057 = vpack.c.bf16 %v4980, %v4978
  %v5059 = vsel %vm168, %v5056, 0
  %5061 = vmatpush.bf16.msra.mxu0 0
  %5062 = vmatpush.bf16.msra.mxu0 0
  %5063 = vmatpush.bf16.msra.mxu0 0
  %5064 = vmatpush.bf16.msra.mxu0 0
  %5065 = vmatpush.bf16.msra.mxu0 0
  %5066 = vmatpush.bf16.msra.mxu0 0
  %5067 = vmatpush.bf16.msra.mxu0 0
  %5068 = vmatpush.bf16.msra.mxu0 %v5057
  %5069 = vmatmul.bf16.gmra.mxu0 %v5059
  %v5070 = vpop.f32.mrf.mxu0
  %v5071 = vadd.f32 0.0, %v5070
  %v5072 = vpop.f32.mrf.mxu0
  %v5073 = vadd.f32 0.0, %v5072
  %5074 = vdwg.mxu0
  %v5075 = vpack.c.bf16 %v5073, %v5071
  %s5076 = scalar_lea.vmem %s2, 1248
  %v5077 = vld [vmem:[%s5076] sm:$0xf]
  %v5078 = vld [vmem:[%s5076 + $0x4] sm:$0xf]
  %v5079 = vld [vmem:[%s5076 + $0x8] sm:$0xf]
  %v5080 = vld [vmem:[%s5076 + $0xc] sm:$0xf]
  %v5085 = vunpack.c.l.b16 %v5077
  %v5086 = vunpack.c.l.b16 %v5078
  %v5087 = vunpack.c.l.b16 %v5079
  %v5088 = vunpack.c.l.b16 %v5080
  %v5089 = vpack.c.b16 %v5086, %v5085
  %v5090 = vpack.c.b16 %v5088, %v5087
  %v5092 = vsel %vm143, %v5075, 0
  %v5095 = vsel %vm143, %v5089, 0
  %v5098 = vsel %vm143, %v5090, 0
  %5100 = vmatpush.bf16.xpose.msra.mxu0 0
  %5101 = vmatpush.bf16.xpose.msra.mxu0 0
  %5102 = vmatpush.bf16.xpose.msra.mxu0 0
  %5103 = vmatpush.bf16.xpose.msra.mxu0 0
  %5104 = vmatpush.bf16.xpose.msra.mxu0 0
  %5105 = vmatpush.bf16.xpose.msra.mxu0 0
  %5106 = vmatpush.bf16.xpose.msra.mxu0 %v5098
  %5107 = vmatpush.bf16.xpose.msra.mxu0 %v5095
  %5108 = vmatmul.bf16.gmra.mxu0 %v5092
  %v5109 = vpop.f32.mrf.mxu0
  %v5110 = vadd.f32 0.0, %v5109
  %v5111 = vpop.f32.mrf.mxu0
  %v5112 = vadd.f32 0.0, %v5111
  %5113 = vdwg.mxu0
  %v5114 = vadd.f32 %v4879, %v5110
  %v5115 = vadd.f32 %v4881, %v5112
  %s5116 = scalar_lea.vmem %s2, 1072
  %v5117 = vld [vmem:[%s5116] sm:$0xf]
  %v5118 = vld [vmem:[%s5116 + $0x4] sm:$0xf]
  %v5119 = vld [vmem:[%s5116 + $0x8] sm:$0xf]
  %v5120 = vld [vmem:[%s5116 + $0xc] sm:$0xf]
  %v5121 = vld [vmem:[%s4 + $0x77] sm:$0x1]
  %v5122 = vperm.slane %v5121, 0
  %v5127 = vunpack.c.l.b16 %v5117
  %v5128 = vunpack.c.l.b16 %v5118
  %v5129 = vunpack.c.l.b16 %v5119
  %v5130 = vunpack.c.l.b16 %v5120
  %v5131 = vpack.c.b16 %v5128, %v5127
  %v5132 = vpack.c.b16 %v5130, %v5129
  %5135 = vmatpush.bf16.msra.mxu0 0
  %5136 = vmatpush.bf16.msra.mxu0 0
  %5137 = vmatpush.bf16.msra.mxu0 0
  %5138 = vmatpush.bf16.msra.mxu0 0
  %5139 = vmatpush.bf16.msra.mxu0 0
  %5140 = vmatpush.bf16.msra.mxu0 0
  %5141 = vmatpush.bf16.msra.mxu0 %v5132
  %5142 = vmatpush.bf16.msra.mxu0 %v5131
  %5143 = vmatmul.bf16.gmra.mxu0 %v4438
  %v5144 = vpop.f32.mrf.mxu0
  %v5145 = vadd.f32 %v5122, %v5144
  %v5146 = vpop.f32.mrf.mxu0
  %v5147 = vadd.f32 %v5122, %v5146
  %5148 = vdwg.mxu0
  %s5149 = scalar_lea.vmem %s2, 1136
  %v5150 = vld [vmem:[%s5149] sm:$0xf]
  %v5151 = vld [vmem:[%s5149 + $0x4] sm:$0xf]
  %v5152 = vld [vmem:[%s5149 + $0x8] sm:$0xf]
  %v5153 = vld [vmem:[%s5149 + $0xc] sm:$0xf]
  %v5154 = vld [vmem:[%s4 + $0x7b] sm:$0x1]
  %v5155 = vperm.slane %v5154, 0
  %v5160 = vunpack.c.l.b16 %v5150
  %v5161 = vunpack.c.l.b16 %v5151
  %v5162 = vunpack.c.l.b16 %v5152
  %v5163 = vunpack.c.l.b16 %v5153
  %v5164 = vpack.c.b16 %v5161, %v5160
  %v5165 = vpack.c.b16 %v5163, %v5162
  %5168 = vmatpush.bf16.msra.mxu0 0
  %5169 = vmatpush.bf16.msra.mxu0 0
  %5170 = vmatpush.bf16.msra.mxu0 0
  %5171 = vmatpush.bf16.msra.mxu0 0
  %5172 = vmatpush.bf16.msra.mxu0 0
  %5173 = vmatpush.bf16.msra.mxu0 0
  %5174 = vmatpush.bf16.msra.mxu0 %v5165
  %5175 = vmatpush.bf16.msra.mxu0 %v5164
  %5176 = vmatmul.bf16.gmra.mxu0 %v4438
  %v5177 = vpop.f32.mrf.mxu0
  %v5178 = vadd.f32 %v5155, %v5177
  %v5179 = vpop.f32.mrf.mxu0
  %v5180 = vadd.f32 %v5155, %v5179
  %5181 = vdwg.mxu0
  %s5182 = scalar_lea.vmem %s2, 1200
  %v5183 = vld [vmem:[%s5182] sm:$0xf]
  %v5184 = vld [vmem:[%s5182 + $0x4] sm:$0xf]
  %v5185 = vld [vmem:[%s5182 + $0x8] sm:$0xf]
  %v5186 = vld [vmem:[%s5182 + $0xc] sm:$0xf]
  %v5187 = vld [vmem:[%s4 + $0x7f] sm:$0x1]
  %v5188 = vperm.slane %v5187, 0
  %v5193 = vunpack.c.l.b16 %v5183
  %v5194 = vunpack.c.l.b16 %v5184
  %v5195 = vunpack.c.l.b16 %v5185
  %v5196 = vunpack.c.l.b16 %v5186
  %v5197 = vpack.c.b16 %v5194, %v5193
  %v5198 = vpack.c.b16 %v5196, %v5195
  %5201 = vmatpush.bf16.msra.mxu0 0
  %5202 = vmatpush.bf16.msra.mxu0 0
  %5203 = vmatpush.bf16.msra.mxu0 0
  %5204 = vmatpush.bf16.msra.mxu0 0
  %5205 = vmatpush.bf16.msra.mxu0 0
  %5206 = vmatpush.bf16.msra.mxu0 0
  %5207 = vmatpush.bf16.msra.mxu0 %v5198
  %5208 = vmatpush.bf16.msra.mxu0 %v5197
  %5209 = vmatmul.bf16.gmra.mxu0 %v4438
  %v5210 = vpop.f32.mrf.mxu0
  %v5211 = vadd.f32 %v5188, %v5210
  %v5212 = vpop.f32.mrf.mxu0
  %v5213 = vadd.f32 %v5188, %v5212
  %5214 = vdwg.mxu0
  %v5215 = vpack.c.bf16 %v5147, %v5145
  %v5216 = vpack.c.bf16 %v5180, %v5178
  %v5218 = vsel %vm143, %v5215, 0
  %v5221 = vsel %vm143, %v5216, 0
  %5223 = vmatpush.bf16.xpose.msra.mxu0 0
  %5224 = vmatpush.bf16.xpose.msra.mxu0 0
  %5225 = vmatpush.bf16.xpose.msra.mxu0 0
  %5226 = vmatpush.bf16.xpose.msra.mxu0 0
  %5227 = vmatpush.bf16.xpose.msra.mxu0 0
  %5228 = vmatpush.bf16.xpose.msra.mxu0 0
  %5229 = vmatpush.bf16.xpose.msra.mxu0 0
  %5230 = vmatpush.bf16.xpose.msra.mxu0 %v5221
  %5231 = vmatmul.bf16.gmra.mxu0 %v5218
  %v5232 = vpop.f32.mrf.mxu0
  %v5233 = vadd.f32 0.0, %v5232
  %v5234 = vpop.f32.mrf.mxu0
  %v5235 = vadd.f32 0.0, %v5234
  %5236 = vdwg.mxu0
  %v5237 = vmul.f32 %v5233, 0.35355338
  %v5238 = vmul.f32 %v5235, 0.35355338
  %v5239 = vadd.f32 %v5237, %v36
  %v5240 = vadd.f32 %v5238, %v37
  %v5241 = vsel %vm168, %v5239, -inf
  %5242 = vmax.xlane.f32.xlu0 %v5241
  %v5243 = vpop.xlane.xlu0 %5242
  %v5244 = vsel %vm168, %v5240, -inf
  %5245 = vmax.xlane.f32.xlu0 %v5244
  %v5246 = vpop.xlane.xlu0 %5245
  %v5247 = vsub.f32 %v5239, %v5243
  %v5248 = vsub.f32 %v5240, %v5246
  %v5249 = vmul.f32 %v5247, 1.442695
  %v5250 = vpow.pop %v5249
  %v5251 = vmul.f32 %v5248, 1.442695
  %v5252 = vpow.pop %v5251
  %v5253 = vsel %vm168, %v5250, 0.0
  %5254 = vadd.xlane.f32.xlu0 %v5253
  %v5255 = vpop.xlane.xlu0 %5254
  %v5256 = vsel %vm168, %v5252, 0.0
  %5257 = vadd.xlane.f32.xlu0 %v5256
  %v5258 = vpop.xlane.xlu0 %5257
  %v5259 = vrcp.pop %v5255
  %v5260 = vmul.f32 %v5255, %v5259
  %v5261 = vsub.f32 1.0, %v5260
  %v5262 = vmul.f32 %v5259, %v5261
  %v5263 = vadd.f32 %v5259, %v5262
  %vm5264 = vweird.f32 %v5255
  %vm5265 = vweird.f32 %v5259
  %vm5266 = vmor %vm5264, %vm5265
  %v5267 = vsel %vm5266, %v5259, %v5263
  %v5268 = vand.u32 2147483647, %v5255
  %vm5269 = vcmp.eq.f32.partialorder %v5268, 8.507059e+37
  %v5270 = vand.u32 %v5255, 2147483648
  %v5271 = vor.u32 1.1754944e-38, %v5270
  %v5272 = vsel %vm5269, %v5271, %v5267
  %v5273 = vmul.f32 %v5250, %v5272
  %v5274 = vrcp.pop %v5258
  %v5275 = vmul.f32 %v5258, %v5274
  %v5276 = vsub.f32 1.0, %v5275
  %v5277 = vmul.f32 %v5274, %v5276
  %v5278 = vadd.f32 %v5274, %v5277
  %vm5279 = vweird.f32 %v5258
  %vm5280 = vweird.f32 %v5274
  %vm5281 = vmor %vm5279, %vm5280
  %v5282 = vsel %vm5281, %v5274, %v5278
  %v5283 = vand.u32 2147483647, %v5258
  %vm5284 = vcmp.eq.f32.partialorder %v5283, 8.507059e+37
  %v5285 = vand.u32 %v5258, 2147483648
  %v5286 = vor.u32 1.1754944e-38, %v5285
  %v5287 = vsel %vm5284, %v5286, %v5282
  %v5288 = vmul.f32 %v5252, %v5287
  %v5289 = vpack.c.bf16 %v5288, %v5273
  %v5290 = vpack.c.bf16 %v5213, %v5211
  %v5292 = vsel %vm168, %v5289, 0
  %5294 = vmatpush.bf16.msra.mxu0 0
  %5295 = vmatpush.bf16.msra.mxu0 0
  %5296 = vmatpush.bf16.msra.mxu0 0
  %5297 = vmatpush.bf16.msra.mxu0 0
  %5298 = vmatpush.bf16.msra.mxu0 0
  %5299 = vmatpush.bf16.msra.mxu0 0
  %5300 = vmatpush.bf16.msra.mxu0 0
  %5301 = vmatpush.bf16.msra.mxu0 %v5290
  %5302 = vmatmul.bf16.gmra.mxu0 %v5292
  %v5303 = vpop.f32.mrf.mxu0
  %v5304 = vadd.f32 0.0, %v5303
  %v5305 = vpop.f32.mrf.mxu0
  %v5306 = vadd.f32 0.0, %v5305
  %5307 = vdwg.mxu0
  %v5308 = vpack.c.bf16 %v5306, %v5304
  %s5309 = scalar_lea.vmem %s2, 1264
  %v5310 = vld [vmem:[%s5309] sm:$0xf]
  %v5311 = vld [vmem:[%s5309 + $0x4] sm:$0xf]
  %v5312 = vld [vmem:[%s5309 + $0x8] sm:$0xf]
  %v5313 = vld [vmem:[%s5309 + $0xc] sm:$0xf]
  %v5318 = vunpack.c.l.b16 %v5310
  %v5319 = vunpack.c.l.b16 %v5311
  %v5320 = vunpack.c.l.b16 %v5312
  %v5321 = vunpack.c.l.b16 %v5313
  %v5322 = vpack.c.b16 %v5319, %v5318
  %v5323 = vpack.c.b16 %v5321, %v5320
  %v5325 = vsel %vm143, %v5308, 0
  %v5328 = vsel %vm143, %v5322, 0
  %v5331 = vsel %vm143, %v5323, 0
  %5333 = vmatpush.bf16.xpose.msra.mxu0 0
  %5334 = vmatpush.bf16.xpose.msra.mxu0 0
  %5335 = vmatpush.bf16.xpose.msra.mxu0 0
  %5336 = vmatpush.bf16.xpose.msra.mxu0 0
  %5337 = vmatpush.bf16.xpose.msra.mxu0 0
  %5338 = vmatpush.bf16.xpose.msra.mxu0 0
  %5339 = vmatpush.bf16.xpose.msra.mxu0 %v5331
  %5340 = vmatpush.bf16.xpose.msra.mxu0 %v5328
  %5341 = vmatmul.bf16.gmra.mxu0 %v5325
  %v5342 = vpop.f32.mrf.mxu0
  %v5343 = vadd.f32 0.0, %v5342
  %v5344 = vpop.f32.mrf.mxu0
  %v5345 = vadd.f32 0.0, %v5344
  %5346 = vdwg.mxu0
  %v5347 = vadd.f32 %v5114, %v5343
  %v5348 = vadd.f32 %v5115, %v5345
  %v5349 = vld [vmem:[%s4 + $0x80] sm:$0x1]
  %v5350 = vperm.slane %v5349, 0
  %v5351 = vadd.f32 %v5347, %v5350
  %v5352 = vadd.f32 %v5348, %v5350
  %v5353 = vadd.f32 %v4415, %v5351
  %v5354 = vadd.f32 %v4416, %v5352
  %v5355 = vld [vmem:[%s4 + $0x9c] sm:$0x1]
  %v5356 = vld [vmem:[%s4 + $0x9d] sm:$0x1]
  %v5357 = vsel %vm57, %v5353, 0.0
  %5358 = vadd.xlane.f32.xlu0 %v5357
  %v5359 = vpop.xlane.xlu0 %5358
  %v5360 = vsel %vm57, %v5354, 0.0
  %5361 = vadd.xlane.f32.xlu0 %v5360
  %v5362 = vpop.xlane.xlu0 %5361
  %v5363 = vmul.f32 %v5359, %v992
  %v5364 = vmul.f32 %v5362, %v992
  %v5365 = vsub.f32 %v5353, %v5363
  %v5366 = vsub.f32 %v5354, %v5364
  %v5367 = vmul.f32 %v5365, %v5365
  %v5368 = vmul.f32 %v5366, %v5366
  %v5369 = vsel %vm57, %v5367, 0.0
  %5370 = vadd.xlane.f32.xlu0 %v5369
  %v5371 = vpop.xlane.xlu0 %5370
  %v5372 = vsel %vm57, %v5368, 0.0
  %5373 = vadd.xlane.f32.xlu0 %v5372
  %v5374 = vpop.xlane.xlu0 %5373
  %v5375 = vmul.f32 %v5371, %v992
  %v5376 = vmul.f32 %v5374, %v992
  %v5377 = vadd.f32 %v5375, 1e-05
  %v5378 = vadd.f32 %v5376, 1e-05
  %v5379 = vrsqrt.pop %v5377
  %v5380 = vmul.f32 %v5379, %v5377
  %v5381 = vmul.f32 %v5380, %v5379
  %v5382 = vmul.f32 0.5, %v5381
  %v5383 = vsub.f32 1.5, %v5382
  %v5384 = vmul.f32 %v5379, %v5383
  %vm5385 = vweird.f32 %v5377
  %vm5386 = vweird.f32 %v5379
  %vm5387 = vmor %vm5385, %vm5386
  %v5388 = vsel %vm5387, %v5379, %v5384
  %v5389 = vrsqrt.pop %v5378
  %v5390 = vmul.f32 %v5389, %v5378
  %v5391 = vmul.f32 %v5390, %v5389
  %v5392 = vmul.f32 0.5, %v5391
  %v5393 = vsub.f32 1.5, %v5392
  %v5394 = vmul.f32 %v5389, %v5393
  %vm5395 = vweird.f32 %v5378
  %vm5396 = vweird.f32 %v5389
  %vm5397 = vmor %vm5395, %vm5396
  %v5398 = vsel %vm5397, %v5389, %v5394
  %v5399 = vmul.f32 %v5365, %v5388
  %v5400 = vmul.f32 %v5366, %v5398
  %v5401 = vperm.slane %v5355, 0
  %v5402 = vmul.f32 %v5399, %v5401
  %v5403 = vmul.f32 %v5400, %v5401
  %v5404 = vperm.slane %v5356, 0
  %v5405 = vadd.f32 %v5402, %v5404
  %v5406 = vadd.f32 %v5403, %v5404
  %v5407 = vpack.c.bf16 %v5406, %v5405
  %s5408 = scalar_lea.vmem %s2, 1280
  %v5409 = vld [vmem:[%s5408] sm:$0xf]
  %v5410 = vld [vmem:[%s5408 + $0x4] sm:$0xf]
  %v5411 = vld [vmem:[%s5408 + $0x8] sm:$0xf]
  %v5412 = vld [vmem:[%s5408 + $0xc] sm:$0xf]
  %v5413 = vld [vmem:[%s4 + $0x81] sm:$0x1]
  %v5414 = vperm.slane %v5413, 0
  %v5419 = vunpack.c.l.b16 %v5409
  %v5420 = vunpack.c.l.b16 %v5410
  %v5421 = vunpack.c.l.b16 %v5411
  %v5422 = vunpack.c.l.b16 %v5412
  %v5423 = vpack.c.b16 %v5420, %v5419
  %v5424 = vpack.c.b16 %v5422, %v5421
  %v5428 = vsel %vm57, %v5407, 0
  %5430 = vmatpush.bf16.msra.mxu0 0
  %5431 = vmatpush.bf16.msra.mxu0 0
  %5432 = vmatpush.bf16.msra.mxu0 0
  %5433 = vmatpush.bf16.msra.mxu0 0
  %5434 = vmatpush.bf16.msra.mxu0 0
  %5435 = vmatpush.bf16.msra.mxu0 0
  %5436 = vmatpush.bf16.msra.mxu0 %v5424
  %5437 = vmatpush.bf16.msra.mxu0 %v5423
  %5438 = vmatmul.bf16.gmra.mxu0 %v5428
  %v5439 = vpop.f32.mrf.mxu0
  %v5440 = vadd.f32 %v5414, %v5439
  %v5441 = vpop.f32.mrf.mxu0
  %v5442 = vadd.f32 %v5414, %v5441
  %5443 = vdwg.mxu0
  %s5444 = scalar_lea.vmem %s2, 1344
  %v5445 = vld [vmem:[%s5444] sm:$0xf]
  %v5446 = vld [vmem:[%s5444 + $0x4] sm:$0xf]
  %v5447 = vld [vmem:[%s5444 + $0x8] sm:$0xf]
  %v5448 = vld [vmem:[%s5444 + $0xc] sm:$0xf]
  %v5449 = vld [vmem:[%s4 + $0x85] sm:$0x1]
  %v5450 = vperm.slane %v5449, 0
  %v5455 = vunpack.c.l.b16 %v5445
  %v5456 = vunpack.c.l.b16 %v5446
  %v5457 = vunpack.c.l.b16 %v5447
  %v5458 = vunpack.c.l.b16 %v5448
  %v5459 = vpack.c.b16 %v5456, %v5455
  %v5460 = vpack.c.b16 %v5458, %v5457
  %5463 = vmatpush.bf16.msra.mxu0 0
  %5464 = vmatpush.bf16.msra.mxu0 0
  %5465 = vmatpush.bf16.msra.mxu0 0
  %5466 = vmatpush.bf16.msra.mxu0 0
  %5467 = vmatpush.bf16.msra.mxu0 0
  %5468 = vmatpush.bf16.msra.mxu0 0
  %5469 = vmatpush.bf16.msra.mxu0 %v5460
  %5470 = vmatpush.bf16.msra.mxu0 %v5459
  %5471 = vmatmul.bf16.gmra.mxu0 %v3347
  %v5472 = vpop.f32.mrf.mxu0
  %v5473 = vadd.f32 %v5450, %v5472
  %v5474 = vpop.f32.mrf.mxu0
  %v5475 = vadd.f32 %v5450, %v5474
  %5476 = vdwg.mxu0
  %s5477 = scalar_lea.vmem %s2, 1408
  %v5478 = vld [vmem:[%s5477] sm:$0xf]
  %v5479 = vld [vmem:[%s5477 + $0x4] sm:$0xf]
  %v5480 = vld [vmem:[%s5477 + $0x8] sm:$0xf]
  %v5481 = vld [vmem:[%s5477 + $0xc] sm:$0xf]
  %v5482 = vld [vmem:[%s4 + $0x89] sm:$0x1]
  %v5483 = vperm.slane %v5482, 0
  %v5488 = vunpack.c.l.b16 %v5478
  %v5489 = vunpack.c.l.b16 %v5479
  %v5490 = vunpack.c.l.b16 %v5480
  %v5491 = vunpack.c.l.b16 %v5481
  %v5492 = vpack.c.b16 %v5489, %v5488
  %v5493 = vpack.c.b16 %v5491, %v5490
  %5496 = vmatpush.bf16.msra.mxu0 0
  %5497 = vmatpush.bf16.msra.mxu0 0
  %5498 = vmatpush.bf16.msra.mxu0 0
  %5499 = vmatpush.bf16.msra.mxu0 0
  %5500 = vmatpush.bf16.msra.mxu0 0
  %5501 = vmatpush.bf16.msra.mxu0 0
  %5502 = vmatpush.bf16.msra.mxu0 %v5493
  %5503 = vmatpush.bf16.msra.mxu0 %v5492
  %5504 = vmatmul.bf16.gmra.mxu0 %v3347
  %v5505 = vpop.f32.mrf.mxu0
  %v5506 = vadd.f32 %v5483, %v5505
  %v5507 = vpop.f32.mrf.mxu0
  %v5508 = vadd.f32 %v5483, %v5507
  %5509 = vdwg.mxu0
  %v5510 = vpack.c.bf16 %v5442, %v5440
  %v5511 = vpack.c.bf16 %v5475, %v5473
  %v5513 = vsel %vm143, %v5510, 0
  %v5516 = vsel %vm143, %v5511, 0
  %5518 = vmatpush.bf16.xpose.msra.mxu0 0
  %5519 = vmatpush.bf16.xpose.msra.mxu0 0
  %5520 = vmatpush.bf16.xpose.msra.mxu0 0
  %5521 = vmatpush.bf16.xpose.msra.mxu0 0
  %5522 = vmatpush.bf16.xpose.msra.mxu0 0
  %5523 = vmatpush.bf16.xpose.msra.mxu0 0
  %5524 = vmatpush.bf16.xpose.msra.mxu0 0
  %5525 = vmatpush.bf16.xpose.msra.mxu0 %v5516
  %5526 = vmatmul.bf16.gmra.mxu0 %v5513
  %v5527 = vpop.f32.mrf.mxu0
  %v5528 = vadd.f32 0.0, %v5527
  %v5529 = vpop.f32.mrf.mxu0
  %v5530 = vadd.f32 0.0, %v5529
  %5531 = vdwg.mxu0
  %v5532 = vmul.f32 %v5528, 0.35355338
  %v5533 = vmul.f32 %v5530, 0.35355338
  %v5534 = vadd.f32 %v5532, %v36
  %v5535 = vadd.f32 %v5533, %v37
  %v5536 = vsel %vm168, %v5534, -inf
  %5537 = vmax.xlane.f32.xlu0 %v5536
  %v5538 = vpop.xlane.xlu0 %5537
  %v5539 = vsel %vm168, %v5535, -inf
  %5540 = vmax.xlane.f32.xlu0 %v5539
  %v5541 = vpop.xlane.xlu0 %5540
  %v5542 = vsub.f32 %v5534, %v5538
  %v5543 = vsub.f32 %v5535, %v5541
  %v5544 = vmul.f32 %v5542, 1.442695
  %v5545 = vpow.pop %v5544
  %v5546 = vmul.f32 %v5543, 1.442695
  %v5547 = vpow.pop %v5546
  %v5548 = vsel %vm168, %v5545, 0.0
  %5549 = vadd.xlane.f32.xlu0 %v5548
  %v5550 = vpop.xlane.xlu0 %5549
  %v5551 = vsel %vm168, %v5547, 0.0
  %5552 = vadd.xlane.f32.xlu0 %v5551
  %v5553 = vpop.xlane.xlu0 %5552
  %v5554 = vrcp.pop %v5550
  %v5555 = vmul.f32 %v5550, %v5554
  %v5556 = vsub.f32 1.0, %v5555
  %v5557 = vmul.f32 %v5554, %v5556
  %v5558 = vadd.f32 %v5554, %v5557
  %vm5559 = vweird.f32 %v5550
  %vm5560 = vweird.f32 %v5554
  %vm5561 = vmor %vm5559, %vm5560
  %v5562 = vsel %vm5561, %v5554, %v5558
  %v5563 = vand.u32 2147483647, %v5550
  %vm5564 = vcmp.eq.f32.partialorder %v5563, 8.507059e+37
  %v5565 = vand.u32 %v5550, 2147483648
  %v5566 = vor.u32 1.1754944e-38, %v5565
  %v5567 = vsel %vm5564, %v5566, %v5562
  %v5568 = vmul.f32 %v5545, %v5567
  %v5569 = vrcp.pop %v5553
  %v5570 = vmul.f32 %v5553, %v5569
  %v5571 = vsub.f32 1.0, %v5570
  %v5572 = vmul.f32 %v5569, %v5571
  %v5573 = vadd.f32 %v5569, %v5572
  %vm5574 = vweird.f32 %v5553
  %vm5575 = vweird.f32 %v5569
  %vm5576 = vmor %vm5574, %vm5575
  %v5577 = vsel %vm5576, %v5569, %v5573
  %v5578 = vand.u32 2147483647, %v5553
  %vm5579 = vcmp.eq.f32.partialorder %v5578, 8.507059e+37
  %v5580 = vand.u32 %v5553, 2147483648
  %v5581 = vor.u32 1.1754944e-38, %v5580
  %v5582 = vsel %vm5579, %v5581, %v5577
  %v5583 = vmul.f32 %v5547, %v5582
  %v5584 = vpack.c.bf16 %v5583, %v5568
  %v5585 = vpack.c.bf16 %v5508, %v5506
  %v5587 = vsel %vm168, %v5584, 0
  %5589 = vmatpush.bf16.msra.mxu0 0
  %5590 = vmatpush.bf16.msra.mxu0 0
  %5591 = vmatpush.bf16.msra.mxu0 0
  %5592 = vmatpush.bf16.msra.mxu0 0
  %5593 = vmatpush.bf16.msra.mxu0 0
  %5594 = vmatpush.bf16.msra.mxu0 0
  %5595 = vmatpush.bf16.msra.mxu0 0
  %5596 = vmatpush.bf16.msra.mxu0 %v5585
  %5597 = vmatmul.bf16.gmra.mxu0 %v5587
  %v5598 = vpop.f32.mrf.mxu0
  %v5599 = vadd.f32 0.0, %v5598
  %v5600 = vpop.f32.mrf.mxu0
  %v5601 = vadd.f32 0.0, %v5600
  %5602 = vdwg.mxu0
  %v5603 = vpack.c.bf16 %v5601, %v5599
  %s5604 = scalar_lea.vmem %s2, 1472
  %v5605 = vld [vmem:[%s5604] sm:$0xf]
  %v5606 = vld [vmem:[%s5604 + $0x4] sm:$0xf]
  %v5607 = vld [vmem:[%s5604 + $0x8] sm:$0xf]
  %v5608 = vld [vmem:[%s5604 + $0xc] sm:$0xf]
  %s5609 = scalar_lea.vmem %s2, 1296
  %v5610 = vld [vmem:[%s5609] sm:$0xf]
  %v5611 = vld [vmem:[%s5609 + $0x4] sm:$0xf]
  %v5612 = vld [vmem:[%s5609 + $0x8] sm:$0xf]
  %v5613 = vld [vmem:[%s5609 + $0xc] sm:$0xf]
  %v5614 = vld [vmem:[%s4 + $0x82] sm:$0x1]
  %v5615 = vperm.slane %v5614, 0
  %v5620 = vunpack.c.l.b16 %v5610
  %v5621 = vunpack.c.l.b16 %v5611
  %v5622 = vunpack.c.l.b16 %v5612
  %v5623 = vunpack.c.l.b16 %v5613
  %v5624 = vpack.c.b16 %v5621, %v5620
  %v5625 = vpack.c.b16 %v5623, %v5622
  %5628 = vmatpush.bf16.msra.mxu0 0
  %5629 = vmatpush.bf16.msra.mxu0 0
  %5630 = vmatpush.bf16.msra.mxu0 0
  %5631 = vmatpush.bf16.msra.mxu0 0
  %5632 = vmatpush.bf16.msra.mxu0 0
  %5633 = vmatpush.bf16.msra.mxu0 0
  %5634 = vmatpush.bf16.msra.mxu0 %v5625
  %5635 = vmatpush.bf16.msra.mxu0 %v5624
  %5636 = vmatmul.bf16.gmra.mxu0 %v5428
  %v5637 = vpop.f32.mrf.mxu0
  %v5638 = vadd.f32 %v5615, %v5637
  %v5639 = vpop.f32.mrf.mxu0
  %v5640 = vadd.f32 %v5615, %v5639
  %5641 = vdwg.mxu0
  %s5642 = scalar_lea.vmem %s2, 1360
  %v5643 = vld [vmem:[%s5642] sm:$0xf]
  %v5644 = vld [vmem:[%s5642 + $0x4] sm:$0xf]
  %v5645 = vld [vmem:[%s5642 + $0x8] sm:$0xf]
  %v5646 = vld [vmem:[%s5642 + $0xc] sm:$0xf]
  %v5647 = vld [vmem:[%s4 + $0x86] sm:$0x1]
  %v5648 = vperm.slane %v5647, 0
  %v5653 = vunpack.c.l.b16 %v5643
  %v5654 = vunpack.c.l.b16 %v5644
  %v5655 = vunpack.c.l.b16 %v5645
  %v5656 = vunpack.c.l.b16 %v5646
  %v5657 = vpack.c.b16 %v5654, %v5653
  %v5658 = vpack.c.b16 %v5656, %v5655
  %5661 = vmatpush.bf16.msra.mxu0 0
  %5662 = vmatpush.bf16.msra.mxu0 0
  %5663 = vmatpush.bf16.msra.mxu0 0
  %5664 = vmatpush.bf16.msra.mxu0 0
  %5665 = vmatpush.bf16.msra.mxu0 0
  %5666 = vmatpush.bf16.msra.mxu0 0
  %5667 = vmatpush.bf16.msra.mxu0 %v5658
  %5668 = vmatpush.bf16.msra.mxu0 %v5657
  %5669 = vmatmul.bf16.gmra.mxu0 %v3347
  %v5670 = vpop.f32.mrf.mxu0
  %v5671 = vadd.f32 %v5648, %v5670
  %v5672 = vpop.f32.mrf.mxu0
  %v5673 = vadd.f32 %v5648, %v5672
  %5674 = vdwg.mxu0
  %s5675 = scalar_lea.vmem %s2, 1424
  %v5676 = vld [vmem:[%s5675] sm:$0xf]
  %v5677 = vld [vmem:[%s5675 + $0x4] sm:$0xf]
  %v5678 = vld [vmem:[%s5675 + $0x8] sm:$0xf]
  %v5679 = vld [vmem:[%s5675 + $0xc] sm:$0xf]
  %v5680 = vld [vmem:[%s4 + $0x8a] sm:$0x1]
  %v5681 = vperm.slane %v5680, 0
  %v5686 = vunpack.c.l.b16 %v5676
  %v5687 = vunpack.c.l.b16 %v5677
  %v5688 = vunpack.c.l.b16 %v5678
  %v5689 = vunpack.c.l.b16 %v5679
  %v5690 = vpack.c.b16 %v5687, %v5686
  %v5691 = vpack.c.b16 %v5689, %v5688
  %5694 = vmatpush.bf16.msra.mxu0 0
  %5695 = vmatpush.bf16.msra.mxu0 0
  %5696 = vmatpush.bf16.msra.mxu0 0
  %5697 = vmatpush.bf16.msra.mxu0 0
  %5698 = vmatpush.bf16.msra.mxu0 0
  %5699 = vmatpush.bf16.msra.mxu0 0
  %5700 = vmatpush.bf16.msra.mxu0 %v5691
  %5701 = vmatpush.bf16.msra.mxu0 %v5690
  %5702 = vmatmul.bf16.gmra.mxu0 %v3347
  %v5703 = vpop.f32.mrf.mxu0
  %v5704 = vadd.f32 %v5681, %v5703
  %v5705 = vpop.f32.mrf.mxu0
  %v5706 = vadd.f32 %v5681, %v5705
  %5707 = vdwg.mxu0
  %v5708 = vpack.c.bf16 %v5640, %v5638
  %v5709 = vpack.c.bf16 %v5673, %v5671
  %v5711 = vsel %vm143, %v5708, 0
  %v5714 = vsel %vm143, %v5709, 0
  %5716 = vmatpush.bf16.xpose.msra.mxu0 0
  %5717 = vmatpush.bf16.xpose.msra.mxu0 0
  %5718 = vmatpush.bf16.xpose.msra.mxu0 0
  %5719 = vmatpush.bf16.xpose.msra.mxu0 0
  %5720 = vmatpush.bf16.xpose.msra.mxu0 0
  %5721 = vmatpush.bf16.xpose.msra.mxu0 0
  %5722 = vmatpush.bf16.xpose.msra.mxu0 0
  %5723 = vmatpush.bf16.xpose.msra.mxu0 %v5714
  %5724 = vmatmul.bf16.gmra.mxu0 %v5711
  %v5725 = vpop.f32.mrf.mxu0
  %v5726 = vadd.f32 0.0, %v5725
  %v5727 = vpop.f32.mrf.mxu0
  %v5728 = vadd.f32 0.0, %v5727
  %5729 = vdwg.mxu0
  %v5730 = vmul.f32 %v5726, 0.35355338
  %v5731 = vmul.f32 %v5728, 0.35355338
  %v5732 = vadd.f32 %v5730, %v36
  %v5733 = vadd.f32 %v5731, %v37
  %v5734 = vsel %vm168, %v5732, -inf
  %5735 = vmax.xlane.f32.xlu0 %v5734
  %v5736 = vpop.xlane.xlu0 %5735
  %v5737 = vsel %vm168, %v5733, -inf
  %5738 = vmax.xlane.f32.xlu0 %v5737
  %v5739 = vpop.xlane.xlu0 %5738
  %v5740 = vsub.f32 %v5732, %v5736
  %v5741 = vsub.f32 %v5733, %v5739
  %v5742 = vmul.f32 %v5740, 1.442695
  %v5743 = vpow.pop %v5742
  %v5744 = vmul.f32 %v5741, 1.442695
  %v5745 = vpow.pop %v5744
  %v5746 = vsel %vm168, %v5743, 0.0
  %5747 = vadd.xlane.f32.xlu0 %v5746
  %v5748 = vpop.xlane.xlu0 %5747
  %v5749 = vsel %vm168, %v5745, 0.0
  %5750 = vadd.xlane.f32.xlu0 %v5749
  %v5751 = vpop.xlane.xlu0 %5750
  %v5752 = vrcp.pop %v5748
  %v5753 = vmul.f32 %v5748, %v5752
  %v5754 = vsub.f32 1.0, %v5753
  %v5755 = vmul.f32 %v5752, %v5754
  %v5756 = vadd.f32 %v5752, %v5755
  %vm5757 = vweird.f32 %v5748
  %vm5758 = vweird.f32 %v5752
  %vm5759 = vmor %vm5757, %vm5758
  %v5760 = vsel %vm5759, %v5752, %v5756
  %v5761 = vand.u32 2147483647, %v5748
  %vm5762 = vcmp.eq.f32.partialorder %v5761, 8.507059e+37
  %v5763 = vand.u32 %v5748, 2147483648
  %v5764 = vor.u32 1.1754944e-38, %v5763
  %v5765 = vsel %vm5762, %v5764, %v5760
  %v5766 = vmul.f32 %v5743, %v5765
  %v5767 = vrcp.pop %v5751
  %v5768 = vmul.f32 %v5751, %v5767
  %v5769 = vsub.f32 1.0, %v5768
  %v5770 = vmul.f32 %v5767, %v5769
  %v5771 = vadd.f32 %v5767, %v5770
  %vm5772 = vweird.f32 %v5751
  %vm5773 = vweird.f32 %v5767
  %vm5774 = vmor %vm5772, %vm5773
  %v5775 = vsel %vm5774, %v5767, %v5771
  %v5776 = vand.u32 2147483647, %v5751
  %vm5777 = vcmp.eq.f32.partialorder %v5776, 8.507059e+37
  %v5778 = vand.u32 %v5751, 2147483648
  %v5779 = vor.u32 1.1754944e-38, %v5778
  %v5780 = vsel %vm5777, %v5779, %v5775
  %v5781 = vmul.f32 %v5745, %v5780
  %v5782 = vpack.c.bf16 %v5781, %v5766
  %v5783 = vpack.c.bf16 %v5706, %v5704
  %v5785 = vsel %vm168, %v5782, 0
  %5787 = vmatpush.bf16.msra.mxu0 0
  %5788 = vmatpush.bf16.msra.mxu0 0
  %5789 = vmatpush.bf16.msra.mxu0 0
  %5790 = vmatpush.bf16.msra.mxu0 0
  %5791 = vmatpush.bf16.msra.mxu0 0
  %5792 = vmatpush.bf16.msra.mxu0 0
  %5793 = vmatpush.bf16.msra.mxu0 0
  %5794 = vmatpush.bf16.msra.mxu0 %v5783
  %5795 = vmatmul.bf16.gmra.mxu0 %v5785
  %v5796 = vpop.f32.mrf.mxu0
  %v5797 = vadd.f32 0.0, %v5796
  %v5798 = vpop.f32.mrf.mxu0
  %v5799 = vadd.f32 0.0, %v5798
  %5800 = vdwg.mxu0
  %v5801 = vpack.c.bf16 %v5799, %v5797
  %s5802 = scalar_lea.vmem %s2, 1488
  %v5803 = vld [vmem:[%s5802] sm:$0xf]
  %v5804 = vld [vmem:[%s5802 + $0x4] sm:$0xf]
  %v5805 = vld [vmem:[%s5802 + $0x8] sm:$0xf]
  %v5806 = vld [vmem:[%s5802 + $0xc] sm:$0xf]
  %v5811 = vunpack.c.l.b16 %v5803
  %v5812 = vunpack.c.l.b16 %v5804
  %v5813 = vunpack.c.l.b16 %v5805
  %v5814 = vunpack.c.l.b16 %v5806
  %v5815 = vpack.c.b16 %v5812, %v5811
  %v5816 = vpack.c.b16 %v5814, %v5813
  %v5818 = vsel %vm143, %v5801, 0
  %v5821 = vsel %vm143, %v5815, 0
  %v5824 = vsel %vm143, %v5816, 0
  %5826 = vmatpush.bf16.xpose.msra.mxu0 0
  %5827 = vmatpush.bf16.xpose.msra.mxu0 0
  %5828 = vmatpush.bf16.xpose.msra.mxu0 0
  %5829 = vmatpush.bf16.xpose.msra.mxu0 0
  %5830 = vmatpush.bf16.xpose.msra.mxu0 0
  %5831 = vmatpush.bf16.xpose.msra.mxu0 0
  %5832 = vmatpush.bf16.xpose.msra.mxu0 %v5824
  %5833 = vmatpush.bf16.xpose.msra.mxu0 %v5821
  %5834 = vmatmul.bf16.gmra.mxu0 %v5818
  %v5835 = vpop.f32.mrf.mxu0
  %v5836 = vadd.f32 0.0, %v5835
  %v5837 = vpop.f32.mrf.mxu0
  %v5838 = vadd.f32 0.0, %v5837
  %5839 = vdwg.mxu0
  %v5844 = vunpack.c.l.b16 %v5605
  %v5845 = vunpack.c.l.b16 %v5606
  %v5846 = vunpack.c.l.b16 %v5607
  %v5847 = vunpack.c.l.b16 %v5608
  %v5848 = vpack.c.b16 %v5845, %v5844
  %v5849 = vpack.c.b16 %v5847, %v5846
  %v5851 = vsel %vm143, %v5603, 0
  %v5854 = vsel %vm143, %v5848, 0
  %v5857 = vsel %vm143, %v5849, 0
  %5859 = vmatpush.bf16.xpose.msra.mxu0 0
  %5860 = vmatpush.bf16.xpose.msra.mxu0 0
  %5861 = vmatpush.bf16.xpose.msra.mxu0 0
  %5862 = vmatpush.bf16.xpose.msra.mxu0 0
  %5863 = vmatpush.bf16.xpose.msra.mxu0 0
  %5864 = vmatpush.bf16.xpose.msra.mxu0 0
  %5865 = vmatpush.bf16.xpose.msra.mxu0 %v5857
  %5866 = vmatpush.bf16.xpose.msra.mxu0 %v5854
  %5867 = vmatmul.bf16.gmra.mxu0 %v5851
  %v5868 = vpop.f32.mrf.mxu0
  %v5869 = vadd.f32 %v5836, %v5868
  %v5870 = vpop.f32.mrf.mxu0
  %v5871 = vadd.f32 %v5838, %v5870
  %5872 = vdwg.mxu0
  %s5873 = scalar_lea.vmem %s2, 1312
  %v5874 = vld [vmem:[%s5873] sm:$0xf]
  %v5875 = vld [vmem:[%s5873 + $0x4] sm:$0xf]
  %v5876 = vld [vmem:[%s5873 + $0x8] sm:$0xf]
  %v5877 = vld [vmem:[%s5873 + $0xc] sm:$0xf]
  %v5878 = vld [vmem:[%s4 + $0x83] sm:$0x1]
  %v5879 = vperm.slane %v5878, 0
  %v5884 = vunpack.c.l.b16 %v5874
  %v5885 = vunpack.c.l.b16 %v5875
  %v5886 = vunpack.c.l.b16 %v5876
  %v5887 = vunpack.c.l.b16 %v5877
  %v5888 = vpack.c.b16 %v5885, %v5884
  %v5889 = vpack.c.b16 %v5887, %v5886
  %5892 = vmatpush.bf16.msra.mxu0 0
  %5893 = vmatpush.bf16.msra.mxu0 0
  %5894 = vmatpush.bf16.msra.mxu0 0
  %5895 = vmatpush.bf16.msra.mxu0 0
  %5896 = vmatpush.bf16.msra.mxu0 0
  %5897 = vmatpush.bf16.msra.mxu0 0
  %5898 = vmatpush.bf16.msra.mxu0 %v5889
  %5899 = vmatpush.bf16.msra.mxu0 %v5888
  %5900 = vmatmul.bf16.gmra.mxu0 %v5428
  %v5901 = vpop.f32.mrf.mxu0
  %v5902 = vadd.f32 %v5879, %v5901
  %v5903 = vpop.f32.mrf.mxu0
  %v5904 = vadd.f32 %v5879, %v5903
  %5905 = vdwg.mxu0
  %s5906 = scalar_lea.vmem %s2, 1376
  %v5907 = vld [vmem:[%s5906] sm:$0xf]
  %v5908 = vld [vmem:[%s5906 + $0x4] sm:$0xf]
  %v5909 = vld [vmem:[%s5906 + $0x8] sm:$0xf]
  %v5910 = vld [vmem:[%s5906 + $0xc] sm:$0xf]
  %v5911 = vld [vmem:[%s4 + $0x87] sm:$0x1]
  %v5912 = vperm.slane %v5911, 0
  %v5917 = vunpack.c.l.b16 %v5907
  %v5918 = vunpack.c.l.b16 %v5908
  %v5919 = vunpack.c.l.b16 %v5909
  %v5920 = vunpack.c.l.b16 %v5910
  %v5921 = vpack.c.b16 %v5918, %v5917
  %v5922 = vpack.c.b16 %v5920, %v5919
  %5925 = vmatpush.bf16.msra.mxu0 0
  %5926 = vmatpush.bf16.msra.mxu0 0
  %5927 = vmatpush.bf16.msra.mxu0 0
  %5928 = vmatpush.bf16.msra.mxu0 0
  %5929 = vmatpush.bf16.msra.mxu0 0
  %5930 = vmatpush.bf16.msra.mxu0 0
  %5931 = vmatpush.bf16.msra.mxu0 %v5922
  %5932 = vmatpush.bf16.msra.mxu0 %v5921
  %5933 = vmatmul.bf16.gmra.mxu0 %v3347
  %v5934 = vpop.f32.mrf.mxu0
  %v5935 = vadd.f32 %v5912, %v5934
  %v5936 = vpop.f32.mrf.mxu0
  %v5937 = vadd.f32 %v5912, %v5936
  %5938 = vdwg.mxu0
  %s5939 = scalar_lea.vmem %s2, 1440
  %v5940 = vld [vmem:[%s5939] sm:$0xf]
  %v5941 = vld [vmem:[%s5939 + $0x4] sm:$0xf]
  %v5942 = vld [vmem:[%s5939 + $0x8] sm:$0xf]
  %v5943 = vld [vmem:[%s5939 + $0xc] sm:$0xf]
  %v5944 = vld [vmem:[%s4 + $0x8b] sm:$0x1]
  %v5945 = vperm.slane %v5944, 0
  %v5950 = vunpack.c.l.b16 %v5940
  %v5951 = vunpack.c.l.b16 %v5941
  %v5952 = vunpack.c.l.b16 %v5942
  %v5953 = vunpack.c.l.b16 %v5943
  %v5954 = vpack.c.b16 %v5951, %v5950
  %v5955 = vpack.c.b16 %v5953, %v5952
  %5958 = vmatpush.bf16.msra.mxu0 0
  %5959 = vmatpush.bf16.msra.mxu0 0
  %5960 = vmatpush.bf16.msra.mxu0 0
  %5961 = vmatpush.bf16.msra.mxu0 0
  %5962 = vmatpush.bf16.msra.mxu0 0
  %5963 = vmatpush.bf16.msra.mxu0 0
  %5964 = vmatpush.bf16.msra.mxu0 %v5955
  %5965 = vmatpush.bf16.msra.mxu0 %v5954
  %5966 = vmatmul.bf16.gmra.mxu0 %v3347
  %v5967 = vpop.f32.mrf.mxu0
  %v5968 = vadd.f32 %v5945, %v5967
  %v5969 = vpop.f32.mrf.mxu0
  %v5970 = vadd.f32 %v5945, %v5969
  %5971 = vdwg.mxu0
  %v5972 = vpack.c.bf16 %v5904, %v5902
  %v5973 = vpack.c.bf16 %v5937, %v5935
  %v5975 = vsel %vm143, %v5972, 0
  %v5978 = vsel %vm143, %v5973, 0
  %5980 = vmatpush.bf16.xpose.msra.mxu0 0
  %5981 = vmatpush.bf16.xpose.msra.mxu0 0
  %5982 = vmatpush.bf16.xpose.msra.mxu0 0
  %5983 = vmatpush.bf16.xpose.msra.mxu0 0
  %5984 = vmatpush.bf16.xpose.msra.mxu0 0
  %5985 = vmatpush.bf16.xpose.msra.mxu0 0
  %5986 = vmatpush.bf16.xpose.msra.mxu0 0
  %5987 = vmatpush.bf16.xpose.msra.mxu0 %v5978
  %5988 = vmatmul.bf16.gmra.mxu0 %v5975
  %v5989 = vpop.f32.mrf.mxu0
  %v5990 = vadd.f32 0.0, %v5989
  %v5991 = vpop.f32.mrf.mxu0
  %v5992 = vadd.f32 0.0, %v5991
  %5993 = vdwg.mxu0
  %v5994 = vmul.f32 %v5990, 0.35355338
  %v5995 = vmul.f32 %v5992, 0.35355338
  %v5996 = vadd.f32 %v5994, %v36
  %v5997 = vadd.f32 %v5995, %v37
  %v5998 = vsel %vm168, %v5996, -inf
  %5999 = vmax.xlane.f32.xlu0 %v5998
  %v6000 = vpop.xlane.xlu0 %5999
  %v6001 = vsel %vm168, %v5997, -inf
  %6002 = vmax.xlane.f32.xlu0 %v6001
  %v6003 = vpop.xlane.xlu0 %6002
  %v6004 = vsub.f32 %v5996, %v6000
  %v6005 = vsub.f32 %v5997, %v6003
  %v6006 = vmul.f32 %v6004, 1.442695
  %v6007 = vpow.pop %v6006
  %v6008 = vmul.f32 %v6005, 1.442695
  %v6009 = vpow.pop %v6008
  %v6010 = vsel %vm168, %v6007, 0.0
  %6011 = vadd.xlane.f32.xlu0 %v6010
  %v6012 = vpop.xlane.xlu0 %6011
  %v6013 = vsel %vm168, %v6009, 0.0
  %6014 = vadd.xlane.f32.xlu0 %v6013
  %v6015 = vpop.xlane.xlu0 %6014
  %v6016 = vrcp.pop %v6012
  %v6017 = vmul.f32 %v6012, %v6016
  %v6018 = vsub.f32 1.0, %v6017
  %v6019 = vmul.f32 %v6016, %v6018
  %v6020 = vadd.f32 %v6016, %v6019
  %vm6021 = vweird.f32 %v6012
  %vm6022 = vweird.f32 %v6016
  %vm6023 = vmor %vm6021, %vm6022
  %v6024 = vsel %vm6023, %v6016, %v6020
  %v6025 = vand.u32 2147483647, %v6012
  %vm6026 = vcmp.eq.f32.partialorder %v6025, 8.507059e+37
  %v6027 = vand.u32 %v6012, 2147483648
  %v6028 = vor.u32 1.1754944e-38, %v6027
  %v6029 = vsel %vm6026, %v6028, %v6024
  %v6030 = vmul.f32 %v6007, %v6029
  %v6031 = vrcp.pop %v6015
  %v6032 = vmul.f32 %v6015, %v6031
  %v6033 = vsub.f32 1.0, %v6032
  %v6034 = vmul.f32 %v6031, %v6033
  %v6035 = vadd.f32 %v6031, %v6034
  %vm6036 = vweird.f32 %v6015
  %vm6037 = vweird.f32 %v6031
  %vm6038 = vmor %vm6036, %vm6037
  %v6039 = vsel %vm6038, %v6031, %v6035
  %v6040 = vand.u32 2147483647, %v6015
  %vm6041 = vcmp.eq.f32.partialorder %v6040, 8.507059e+37
  %v6042 = vand.u32 %v6015, 2147483648
  %v6043 = vor.u32 1.1754944e-38, %v6042
  %v6044 = vsel %vm6041, %v6043, %v6039
  %v6045 = vmul.f32 %v6009, %v6044
  %v6046 = vpack.c.bf16 %v6045, %v6030
  %v6047 = vpack.c.bf16 %v5970, %v5968
  %v6049 = vsel %vm168, %v6046, 0
  %6051 = vmatpush.bf16.msra.mxu0 0
  %6052 = vmatpush.bf16.msra.mxu0 0
  %6053 = vmatpush.bf16.msra.mxu0 0
  %6054 = vmatpush.bf16.msra.mxu0 0
  %6055 = vmatpush.bf16.msra.mxu0 0
  %6056 = vmatpush.bf16.msra.mxu0 0
  %6057 = vmatpush.bf16.msra.mxu0 0
  %6058 = vmatpush.bf16.msra.mxu0 %v6047
  %6059 = vmatmul.bf16.gmra.mxu0 %v6049
  %v6060 = vpop.f32.mrf.mxu0
  %v6061 = vadd.f32 0.0, %v6060
  %v6062 = vpop.f32.mrf.mxu0
  %v6063 = vadd.f32 0.0, %v6062
  %6064 = vdwg.mxu0
  %v6065 = vpack.c.bf16 %v6063, %v6061
  %s6066 = scalar_lea.vmem %s2, 1504
  %v6067 = vld [vmem:[%s6066] sm:$0xf]
  %v6068 = vld [vmem:[%s6066 + $0x4] sm:$0xf]
  %v6069 = vld [vmem:[%s6066 + $0x8] sm:$0xf]
  %v6070 = vld [vmem:[%s6066 + $0xc] sm:$0xf]
  %v6075 = vunpack.c.l.b16 %v6067
  %v6076 = vunpack.c.l.b16 %v6068
  %v6077 = vunpack.c.l.b16 %v6069
  %v6078 = vunpack.c.l.b16 %v6070
  %v6079 = vpack.c.b16 %v6076, %v6075
  %v6080 = vpack.c.b16 %v6078, %v6077
  %v6082 = vsel %vm143, %v6065, 0
  %v6085 = vsel %vm143, %v6079, 0
  %v6088 = vsel %vm143, %v6080, 0
  %6090 = vmatpush.bf16.xpose.msra.mxu0 0
  %6091 = vmatpush.bf16.xpose.msra.mxu0 0
  %6092 = vmatpush.bf16.xpose.msra.mxu0 0
  %6093 = vmatpush.bf16.xpose.msra.mxu0 0
  %6094 = vmatpush.bf16.xpose.msra.mxu0 0
  %6095 = vmatpush.bf16.xpose.msra.mxu0 0
  %6096 = vmatpush.bf16.xpose.msra.mxu0 %v6088
  %6097 = vmatpush.bf16.xpose.msra.mxu0 %v6085
  %6098 = vmatmul.bf16.gmra.mxu0 %v6082
  %v6099 = vpop.f32.mrf.mxu0
  %v6100 = vadd.f32 0.0, %v6099
  %v6101 = vpop.f32.mrf.mxu0
  %v6102 = vadd.f32 0.0, %v6101
  %6103 = vdwg.mxu0
  %v6104 = vadd.f32 %v5869, %v6100
  %v6105 = vadd.f32 %v5871, %v6102
  %s6106 = scalar_lea.vmem %s2, 1328
  %v6107 = vld [vmem:[%s6106] sm:$0xf]
  %v6108 = vld [vmem:[%s6106 + $0x4] sm:$0xf]
  %v6109 = vld [vmem:[%s6106 + $0x8] sm:$0xf]
  %v6110 = vld [vmem:[%s6106 + $0xc] sm:$0xf]
  %v6111 = vld [vmem:[%s4 + $0x84] sm:$0x1]
  %v6112 = vperm.slane %v6111, 0
  %v6117 = vunpack.c.l.b16 %v6107
  %v6118 = vunpack.c.l.b16 %v6108
  %v6119 = vunpack.c.l.b16 %v6109
  %v6120 = vunpack.c.l.b16 %v6110
  %v6121 = vpack.c.b16 %v6118, %v6117
  %v6122 = vpack.c.b16 %v6120, %v6119
  %6125 = vmatpush.bf16.msra.mxu0 0
  %6126 = vmatpush.bf16.msra.mxu0 0
  %6127 = vmatpush.bf16.msra.mxu0 0
  %6128 = vmatpush.bf16.msra.mxu0 0
  %6129 = vmatpush.bf16.msra.mxu0 0
  %6130 = vmatpush.bf16.msra.mxu0 0
  %6131 = vmatpush.bf16.msra.mxu0 %v6122
  %6132 = vmatpush.bf16.msra.mxu0 %v6121
  %6133 = vmatmul.bf16.gmra.mxu0 %v5428
  %v6134 = vpop.f32.mrf.mxu0
  %v6135 = vadd.f32 %v6112, %v6134
  %v6136 = vpop.f32.mrf.mxu0
  %v6137 = vadd.f32 %v6112, %v6136
  %6138 = vdwg.mxu0
  %s6139 = scalar_lea.vmem %s2, 1392
  %v6140 = vld [vmem:[%s6139] sm:$0xf]
  %v6141 = vld [vmem:[%s6139 + $0x4] sm:$0xf]
  %v6142 = vld [vmem:[%s6139 + $0x8] sm:$0xf]
  %v6143 = vld [vmem:[%s6139 + $0xc] sm:$0xf]
  %v6144 = vld [vmem:[%s4 + $0x88] sm:$0x1]
  %v6145 = vperm.slane %v6144, 0
  %v6150 = vunpack.c.l.b16 %v6140
  %v6151 = vunpack.c.l.b16 %v6141
  %v6152 = vunpack.c.l.b16 %v6142
  %v6153 = vunpack.c.l.b16 %v6143
  %v6154 = vpack.c.b16 %v6151, %v6150
  %v6155 = vpack.c.b16 %v6153, %v6152
  %6158 = vmatpush.bf16.msra.mxu0 0
  %6159 = vmatpush.bf16.msra.mxu0 0
  %6160 = vmatpush.bf16.msra.mxu0 0
  %6161 = vmatpush.bf16.msra.mxu0 0
  %6162 = vmatpush.bf16.msra.mxu0 0
  %6163 = vmatpush.bf16.msra.mxu0 0
  %6164 = vmatpush.bf16.msra.mxu0 %v6155
  %6165 = vmatpush.bf16.msra.mxu0 %v6154
  %6166 = vmatmul.bf16.gmra.mxu0 %v3347
  %v6167 = vpop.f32.mrf.mxu0
  %v6168 = vadd.f32 %v6145, %v6167
  %v6169 = vpop.f32.mrf.mxu0
  %v6170 = vadd.f32 %v6145, %v6169
  %6171 = vdwg.mxu0
  %s6172 = scalar_lea.vmem %s2, 1456
  %v6173 = vld [vmem:[%s6172] sm:$0xf]
  %v6174 = vld [vmem:[%s6172 + $0x4] sm:$0xf]
  %v6175 = vld [vmem:[%s6172 + $0x8] sm:$0xf]
  %v6176 = vld [vmem:[%s6172 + $0xc] sm:$0xf]
  %v6177 = vld [vmem:[%s4 + $0x8c] sm:$0x1]
  %v6178 = vperm.slane %v6177, 0
  %v6183 = vunpack.c.l.b16 %v6173
  %v6184 = vunpack.c.l.b16 %v6174
  %v6185 = vunpack.c.l.b16 %v6175
  %v6186 = vunpack.c.l.b16 %v6176
  %v6187 = vpack.c.b16 %v6184, %v6183
  %v6188 = vpack.c.b16 %v6186, %v6185
  %6191 = vmatpush.bf16.msra.mxu0 0
  %6192 = vmatpush.bf16.msra.mxu0 0
  %6193 = vmatpush.bf16.msra.mxu0 0
  %6194 = vmatpush.bf16.msra.mxu0 0
  %6195 = vmatpush.bf16.msra.mxu0 0
  %6196 = vmatpush.bf16.msra.mxu0 0
  %6197 = vmatpush.bf16.msra.mxu0 %v6188
  %6198 = vmatpush.bf16.msra.mxu0 %v6187
  %6199 = vmatmul.bf16.gmra.mxu0 %v3347
  %v6200 = vpop.f32.mrf.mxu0
  %v6201 = vadd.f32 %v6178, %v6200
  %v6202 = vpop.f32.mrf.mxu0
  %v6203 = vadd.f32 %v6178, %v6202
  %6204 = vdwg.mxu0
  %v6205 = vpack.c.bf16 %v6137, %v6135
  %v6206 = vpack.c.bf16 %v6170, %v6168
  %v6208 = vsel %vm143, %v6205, 0
  %v6211 = vsel %vm143, %v6206, 0
  %6213 = vmatpush.bf16.xpose.msra.mxu0 0
  %6214 = vmatpush.bf16.xpose.msra.mxu0 0
  %6215 = vmatpush.bf16.xpose.msra.mxu0 0
  %6216 = vmatpush.bf16.xpose.msra.mxu0 0
  %6217 = vmatpush.bf16.xpose.msra.mxu0 0
  %6218 = vmatpush.bf16.xpose.msra.mxu0 0
  %6219 = vmatpush.bf16.xpose.msra.mxu0 0
  %6220 = vmatpush.bf16.xpose.msra.mxu0 %v6211
  %6221 = vmatmul.bf16.gmra.mxu0 %v6208
  %v6222 = vpop.f32.mrf.mxu0
  %v6223 = vadd.f32 0.0, %v6222
  %v6224 = vpop.f32.mrf.mxu0
  %v6225 = vadd.f32 0.0, %v6224
  %6226 = vdwg.mxu0
  %v6227 = vmul.f32 %v6223, 0.35355338
  %v6228 = vmul.f32 %v6225, 0.35355338
  %v6229 = vadd.f32 %v6227, %v36
  %v6230 = vadd.f32 %v6228, %v37
  %v6231 = vsel %vm168, %v6229, -inf
  %6232 = vmax.xlane.f32.xlu0 %v6231
  %v6233 = vpop.xlane.xlu0 %6232
  %v6234 = vsel %vm168, %v6230, -inf
  %6235 = vmax.xlane.f32.xlu0 %v6234
  %v6236 = vpop.xlane.xlu0 %6235
  %v6237 = vsub.f32 %v6229, %v6233
  %v6238 = vsub.f32 %v6230, %v6236
  %v6239 = vmul.f32 %v6237, 1.442695
  %v6240 = vpow.pop %v6239
  %v6241 = vmul.f32 %v6238, 1.442695
  %v6242 = vpow.pop %v6241
  %v6243 = vsel %vm168, %v6240, 0.0
  %6244 = vadd.xlane.f32.xlu0 %v6243
  %v6245 = vpop.xlane.xlu0 %6244
  %v6246 = vsel %vm168, %v6242, 0.0
  %6247 = vadd.xlane.f32.xlu0 %v6246
  %v6248 = vpop.xlane.xlu0 %6247
  %v6249 = vrcp.pop %v6245
  %v6250 = vmul.f32 %v6245, %v6249
  %v6251 = vsub.f32 1.0, %v6250
  %v6252 = vmul.f32 %v6249, %v6251
  %v6253 = vadd.f32 %v6249, %v6252
  %vm6254 = vweird.f32 %v6245
  %vm6255 = vweird.f32 %v6249
  %vm6256 = vmor %vm6254, %vm6255
  %v6257 = vsel %vm6256, %v6249, %v6253
  %v6258 = vand.u32 2147483647, %v6245
  %vm6259 = vcmp.eq.f32.partialorder %v6258, 8.507059e+37
  %v6260 = vand.u32 %v6245, 2147483648
  %v6261 = vor.u32 1.1754944e-38, %v6260
  %v6262 = vsel %vm6259, %v6261, %v6257
  %v6263 = vmul.f32 %v6240, %v6262
  %v6264 = vrcp.pop %v6248
  %v6265 = vmul.f32 %v6248, %v6264
  %v6266 = vsub.f32 1.0, %v6265
  %v6267 = vmul.f32 %v6264, %v6266
  %v6268 = vadd.f32 %v6264, %v6267
  %vm6269 = vweird.f32 %v6248
  %vm6270 = vweird.f32 %v6264
  %vm6271 = vmor %vm6269, %vm6270
  %v6272 = vsel %vm6271, %v6264, %v6268
  %v6273 = vand.u32 2147483647, %v6248
  %vm6274 = vcmp.eq.f32.partialorder %v6273, 8.507059e+37
  %v6275 = vand.u32 %v6248, 2147483648
  %v6276 = vor.u32 1.1754944e-38, %v6275
  %v6277 = vsel %vm6274, %v6276, %v6272
  %v6278 = vmul.f32 %v6242, %v6277
  %v6279 = vpack.c.bf16 %v6278, %v6263
  %v6280 = vpack.c.bf16 %v6203, %v6201
  %v6282 = vsel %vm168, %v6279, 0
  %6284 = vmatpush.bf16.msra.mxu0 0
  %6285 = vmatpush.bf16.msra.mxu0 0
  %6286 = vmatpush.bf16.msra.mxu0 0
  %6287 = vmatpush.bf16.msra.mxu0 0
  %6288 = vmatpush.bf16.msra.mxu0 0
  %6289 = vmatpush.bf16.msra.mxu0 0
  %6290 = vmatpush.bf16.msra.mxu0 0
  %6291 = vmatpush.bf16.msra.mxu0 %v6280
  %6292 = vmatmul.bf16.gmra.mxu0 %v6282
  %v6293 = vpop.f32.mrf.mxu0
  %v6294 = vadd.f32 0.0, %v6293
  %v6295 = vpop.f32.mrf.mxu0
  %v6296 = vadd.f32 0.0, %v6295
  %6297 = vdwg.mxu0
  %v6298 = vpack.c.bf16 %v6296, %v6294
  %s6299 = scalar_lea.vmem %s2, 1520
  %v6300 = vld [vmem:[%s6299] sm:$0xf]
  %v6301 = vld [vmem:[%s6299 + $0x4] sm:$0xf]
  %v6302 = vld [vmem:[%s6299 + $0x8] sm:$0xf]
  %v6303 = vld [vmem:[%s6299 + $0xc] sm:$0xf]
  %v6308 = vunpack.c.l.b16 %v6300
  %v6309 = vunpack.c.l.b16 %v6301
  %v6310 = vunpack.c.l.b16 %v6302
  %v6311 = vunpack.c.l.b16 %v6303
  %v6312 = vpack.c.b16 %v6309, %v6308
  %v6313 = vpack.c.b16 %v6311, %v6310
  %v6315 = vsel %vm143, %v6298, 0
  %v6318 = vsel %vm143, %v6312, 0
  %v6321 = vsel %vm143, %v6313, 0
  %6323 = vmatpush.bf16.xpose.msra.mxu0 0
  %6324 = vmatpush.bf16.xpose.msra.mxu0 0
  %6325 = vmatpush.bf16.xpose.msra.mxu0 0
  %6326 = vmatpush.bf16.xpose.msra.mxu0 0
  %6327 = vmatpush.bf16.xpose.msra.mxu0 0
  %6328 = vmatpush.bf16.xpose.msra.mxu0 0
  %6329 = vmatpush.bf16.xpose.msra.mxu0 %v6321
  %6330 = vmatpush.bf16.xpose.msra.mxu0 %v6318
  %6331 = vmatmul.bf16.gmra.mxu0 %v6315
  %v6332 = vpop.f32.mrf.mxu0
  %v6333 = vadd.f32 0.0, %v6332
  %v6334 = vpop.f32.mrf.mxu0
  %v6335 = vadd.f32 0.0, %v6334
  %6336 = vdwg.mxu0
  %v6337 = vadd.f32 %v6104, %v6333
  %v6338 = vadd.f32 %v6105, %v6335
  %v6339 = vld [vmem:[%s4 + $0x8d] sm:$0x1]
  %v6340 = vperm.slane %v6339, 0
  %v6341 = vadd.f32 %v6337, %v6340
  %v6342 = vadd.f32 %v6338, %v6340
  %v6343 = vadd.f32 %v5405, %v6341
  %v6344 = vadd.f32 %v5406, %v6342
  %v6345 = vld [vmem:[%s4 + $0x9e] sm:$0x1]
  %v6346 = vld [vmem:[%s4 + $0x9f] sm:$0x1]
  %v6347 = vsel %vm57, %v6343, 0.0
  %6348 = vadd.xlane.f32.xlu0 %v6347
  %v6349 = vpop.xlane.xlu0 %6348
  %v6350 = vsel %vm57, %v6344, 0.0
  %6351 = vadd.xlane.f32.xlu0 %v6350
  %v6352 = vpop.xlane.xlu0 %6351
  %v6353 = vmul.f32 %v6349, %v992
  %v6354 = vmul.f32 %v6352, %v992
  %v6355 = vsub.f32 %v6343, %v6353
  %v6356 = vsub.f32 %v6344, %v6354
  %v6357 = vmul.f32 %v6355, %v6355
  %v6358 = vmul.f32 %v6356, %v6356
  %v6359 = vsel %vm57, %v6357, 0.0
  %6360 = vadd.xlane.f32.xlu0 %v6359
  %v6361 = vpop.xlane.xlu0 %6360
  %v6362 = vsel %vm57, %v6358, 0.0
  %6363 = vadd.xlane.f32.xlu0 %v6362
  %v6364 = vpop.xlane.xlu0 %6363
  %v6365 = vmul.f32 %v6361, %v992
  %v6366 = vmul.f32 %v6364, %v992
  %v6367 = vadd.f32 %v6365, 1e-05
  %v6368 = vadd.f32 %v6366, 1e-05
  %v6369 = vrsqrt.pop %v6367
  %v6370 = vmul.f32 %v6369, %v6367
  %v6371 = vmul.f32 %v6370, %v6369
  %v6372 = vmul.f32 0.5, %v6371
  %v6373 = vsub.f32 1.5, %v6372
  %v6374 = vmul.f32 %v6369, %v6373
  %vm6375 = vweird.f32 %v6367
  %vm6376 = vweird.f32 %v6369
  %vm6377 = vmor %vm6375, %vm6376
  %v6378 = vsel %vm6377, %v6369, %v6374
  %v6379 = vrsqrt.pop %v6368
  %v6380 = vmul.f32 %v6379, %v6368
  %v6381 = vmul.f32 %v6380, %v6379
  %v6382 = vmul.f32 0.5, %v6381
  %v6383 = vsub.f32 1.5, %v6382
  %v6384 = vmul.f32 %v6379, %v6383
  %vm6385 = vweird.f32 %v6368
  %vm6386 = vweird.f32 %v6379
  %vm6387 = vmor %vm6385, %vm6386
  %v6388 = vsel %vm6387, %v6379, %v6384
  %v6389 = vmul.f32 %v6355, %v6378
  %v6390 = vmul.f32 %v6356, %v6388
  %v6391 = vperm.slane %v6345, 0
  %v6392 = vmul.f32 %v6389, %v6391
  %v6393 = vmul.f32 %v6390, %v6391
  %v6394 = vperm.slane %v6346, 0
  %v6395 = vadd.f32 %v6392, %v6394
  %v6396 = vadd.f32 %v6393, %v6394
  %v6397 = vpack.c.bf16 %v6396, %v6395
  %s6398 = scalar_lea.vmem %s3, 96
  %v6399 = vld [vmem:[%s6398] sm:$0xf]
  %v6400 = vld [vmem:[%s6398 + $0x4] sm:$0xf]
  %v6401 = vld [vmem:[%s6398 + $0x8] sm:$0xf]
  %v6402 = vld [vmem:[%s6398 + $0xc] sm:$0xf]
  %s6403 = scalar_lea.vmem %s3, 112
  %v6404 = vld [vmem:[%s6403] sm:$0xf]
  %v6405 = vld [vmem:[%s6403 + $0x4] sm:$0xf]
  %v6406 = vld [vmem:[%s6403 + $0x8] sm:$0xf]
  %v6407 = vld [vmem:[%s6403 + $0xc] sm:$0xf]
  %v6408 = vld [vmem:[%s4 + $0xa8] sm:$0x1]
  %v6409 = vperm.slane %v6408, 0
  %v6414 = vunpack.c.l.b16 %v6399
  %v6415 = vunpack.c.l.b16 %v6400
  %v6416 = vunpack.c.l.b16 %v6401
  %v6417 = vunpack.c.l.b16 %v6402
  %v6418 = vpack.c.b16 %v6415, %v6414
  %v6419 = vpack.c.b16 %v6417, %v6416
  %v6423 = vsel %vm57, %v6397, 0
  %6425 = vmatpush.bf16.msra.mxu0 0
  %6426 = vmatpush.bf16.msra.mxu0 0
  %6427 = vmatpush.bf16.msra.mxu0 0
  %6428 = vmatpush.bf16.msra.mxu0 0
  %6429 = vmatpush.bf16.msra.mxu0 0
  %6430 = vmatpush.bf16.msra.mxu0 0
  %6431 = vmatpush.bf16.msra.mxu0 %v6419
  %6432 = vmatpush.bf16.msra.mxu0 %v6418
  %6433 = vmatmul.bf16.gmra.mxu0 %v6423
  %v6434 = vpop.f32.mrf.mxu0
  %v6435 = vadd.f32 %v6409, %v6434
  %v6436 = vpop.f32.mrf.mxu0
  %v6437 = vadd.f32 %v6409, %v6436
  %6438 = vdwg.mxu0
  %v6439 = vmax.f32 %v6435, 0.0
  %v6440 = vmax.f32 %v6437, 0.0
  %v6441 = vpack.c.bf16 %v6440, %v6439
  %v6442 = vld [vmem:[%s4 + $0xa9] sm:$0x1]
  %v6443 = vperm.slane %v6442, 0
  %v6448 = vunpack.c.l.b16 %v6404
  %v6449 = vunpack.c.l.b16 %v6405
  %v6450 = vunpack.c.l.b16 %v6406
  %v6451 = vunpack.c.l.b16 %v6407
  %v6452 = vpack.c.b16 %v6449, %v6448
  %v6453 = vpack.c.b16 %v6451, %v6450
  %v6455 = vsel %vm1093, %v6441, 0
  %v6458 = vsel %vm1093, %v6452, 0
  %v6461 = vsel %vm1093, %v6453, 0
  %6463 = vmatpush.bf16.xpose.msra.mxu0 0
  %6464 = vmatpush.bf16.xpose.msra.mxu0 0
  %6465 = vmatpush.bf16.xpose.msra.mxu0 0
  %6466 = vmatpush.bf16.xpose.msra.mxu0 0
  %6467 = vmatpush.bf16.xpose.msra.mxu0 0
  %6468 = vmatpush.bf16.xpose.msra.mxu0 0
  %6469 = vmatpush.bf16.xpose.msra.mxu0 %v6461
  %6470 = vmatpush.bf16.xpose.msra.mxu0 %v6458
  %6471 = vmatmul.bf16.gmra.mxu0 %v6455
  %v6472 = vpop.f32.mrf.mxu0
  %v6473 = vadd.f32 %v6443, %v6472
  %v6474 = vpop.f32.mrf.mxu0
  %v6475 = vadd.f32 %v6443, %v6474
  %6476 = vdwg.mxu0
  %v6477 = vadd.f32 %v6395, %v6473
  %v6478 = vadd.f32 %v6396, %v6475
  %v6479 = vld [vmem:[%s4 + $0xa0] sm:$0x1]
  %v6480 = vld [vmem:[%s4 + $0xa1] sm:$0x1]
  %v6481 = vsel %vm57, %v6477, 0.0
  %6482 = vadd.xlane.f32.xlu0 %v6481
  %v6483 = vpop.xlane.xlu0 %6482
  %v6484 = vsel %vm57, %v6478, 0.0
  %6485 = vadd.xlane.f32.xlu0 %v6484
  %v6486 = vpop.xlane.xlu0 %6485
  %v6487 = vmul.f32 %v6483, %v992
  %v6488 = vmul.f32 %v6486, %v992
  %v6489 = vsub.f32 %v6477, %v6487
  %v6490 = vsub.f32 %v6478, %v6488
  %v6491 = vmul.f32 %v6489, %v6489
  %v6492 = vmul.f32 %v6490, %v6490
  %v6493 = vsel %vm57, %v6491, 0.0
  %6494 = vadd.xlane.f32.xlu0 %v6493
  %v6495 = vpop.xlane.xlu0 %6494
  %v6496 = vsel %vm57, %v6492, 0.0
  %6497 = vadd.xlane.f32.xlu0 %v6496
  %v6498 = vpop.xlane.xlu0 %6497
  %v6499 = vmul.f32 %v6495, %v992
  %v6500 = vmul.f32 %v6498, %v992
  %v6501 = vadd.f32 %v6499, 1e-05
  %v6502 = vadd.f32 %v6500, 1e-05
  %v6503 = vrsqrt.pop %v6501
  %v6504 = vmul.f32 %v6503, %v6501
  %v6505 = vmul.f32 %v6504, %v6503
  %v6506 = vmul.f32 0.5, %v6505
  %v6507 = vsub.f32 1.5, %v6506
  %v6508 = vmul.f32 %v6503, %v6507
  %vm6509 = vweird.f32 %v6501
  %vm6510 = vweird.f32 %v6503
  %vm6511 = vmor %vm6509, %vm6510
  %v6512 = vsel %vm6511, %v6503, %v6508
  %v6513 = vrsqrt.pop %v6502
  %v6514 = vmul.f32 %v6513, %v6502
  %v6515 = vmul.f32 %v6514, %v6513
  %v6516 = vmul.f32 0.5, %v6515
  %v6517 = vsub.f32 1.5, %v6516
  %v6518 = vmul.f32 %v6513, %v6517
  %vm6519 = vweird.f32 %v6502
  %vm6520 = vweird.f32 %v6513
  %vm6521 = vmor %vm6519, %vm6520
  %v6522 = vsel %vm6521, %v6513, %v6518
  %v6523 = vmul.f32 %v6489, %v6512
  %v6524 = vmul.f32 %v6490, %v6522
  %v6525 = vperm.slane %v6479, 0
  %v6526 = vmul.f32 %v6523, %v6525
  %v6527 = vmul.f32 %v6524, %v6525
  %v6528 = vperm.slane %v6480, 0
  %v6529 = vadd.f32 %v6526, %v6528
  %v6530 = vadd.f32 %v6527, %v6528
  %6531 = vst.msk [vmem:[%s5] sm:$0xff] %vm57, %v6529
  %6532 = vst.msk [vmem:[%s5 + $0x8] sm:$0xff] %vm57, %v6530
  // Predicated region
  $region22: #{transformer_forward.1} parent=0 // pred_check
    _
  $region23: #{transformer_forward.1} parent=0 // pred_check_branch
    %6534 = sbr.rel (0) target = $region25
  $region24: #{transformer_forward.1} parent=0 // pred_region
    _
  $region25: #{transformer_forward.1} parent=0 // pred_fallthru
    _
  // Predicated region
  $region26: #{transformer_forward.1} parent=0 // pred_check
    _
  $region27: #{transformer_forward.1} parent=0 // pred_check_branch
    %6536 = sbr.rel (0) target = $region29
  $region28: #{transformer_forward.1} parent=0 // pred_region
    _
  $region29: #{transformer_forward.1} parent=0 // pred_fallthru
    _

</llo_original>
